<compile_context>
chip_gen: v7x
topology: tpu7x:2x2x1
jax: 0.10.0
libtpu: 0.0.40
codegen_flags: <defaults>
</compile_context>

<pallas_src>
import numpy as np
import jax
import jax.numpy as jnp
from jax.experimental import pallas as pl
from jax.experimental.pallas import tpu as pltpu

NEG_SLOPE = 0.01  # nn.LeakyReLU default


def _lrelu(x):
    return jnp.where(x > 0, x, NEG_SLOPE * x)


def _bmm(a, b):
    # bf16 MXU matmul with f32 accumulation (heavy feature matmuls).
    return jnp.dot(a.astype(jnp.bfloat16), b.astype(jnp.bfloat16),
                   preferred_element_type=jnp.float32)


def _fmm(a, b):
    # Exact f32 matmul for the tiny graph operators (one-hots / normalizations).
    return jnp.dot(a, b, preferred_element_type=jnp.float32,
                   precision=jax.lax.Precision.HIGHEST)


def _mlp2(x, w1, b1, w2, b2):
    # Linear -> LeakyReLU -> Linear -> LeakyReLU
    h = _lrelu(_bmm(x, w1) + b1)
    return _lrelu(_bmm(h, w2) + b2)


WEIGHT_ORDER = ("w1n", "b1n", "w2n", "b2n",
                "w1e", "b1e", "w2e", "b2e",
                "w1g", "b1g", "w2g", "b2g",
                "we_src", "we_dst", "we_e", "we_u", "be",
                "wn_v", "wn_ef", "wn_u", "bn",
                "wg_n", "wg_e", "wg_u", "bg")
N_WEIGHT_REFS = len(WEIGHT_ORDER)


# --------------------------------- Pallas kernel ---------------------------------
def megnet_stack_kernel(xn_ref, xe_ref, xg_ref,
                        src_oh_ref, dst_oh_ref, dst_agg_ref,
                        pool_n_ref, pool_e_ref, bcast_n_ref, bcast_e_ref,
                        *rest):
    w_refs = rest[:N_WEIGHT_REFS]
    on_ref, oe_ref, og_ref = rest[N_WEIGHT_REFS:]
    layer = pl.program_id(1)

    @pl.when(layer == 0)
    def _():
        on_ref[...] = xn_ref[...]
        oe_ref[...] = xe_ref[...]
        og_ref[...] = xg_ref[...]

    # Per-layer weight slices.  The full (L, ...) stacks are VMEM-resident (constant-index
    # BlockSpec); only this layer's slice is pulled into vregs here.
    (w1n, b1n, w2n, b2n,
     w1e, b1e, w2e, b2e,
     w1g, b1g, w2g, b2g,
     we_src, we_dst, we_e, we_u, be,
     wn_v, wn_ef, wn_u, bn,
     wg_n, wg_e, wg_u, bg) = [r[layer] for r in w_refs]

    xn = on_ref[0]              # (Mn, Dp) f32 residual stream (Gb graphs' nodes packed)
    xe = oe_ref[0]              # (Me, Dp) f32 residual stream (edges)
    xg = og_ref[0]              # (Gp, Dp) f32 compact per-graph state (one row per graph)

    # ff_node / ff_edge / ff_graph (graphs share weights -> one large-M matmul per stream)
    v = _mlp2(xn, w1n, b1n, w2n, b2n)       # (Mn, Hp)
    e = _mlp2(xe, w1e, b1e, w2e, b2e)       # (Me, Hp)
    u = _mlp2(xg, w1g, b1g, w2g, b2g)       # (Gp, Hp)

    # apply_edges: endpoint gathers via block-diagonal one-hot matmuls (exact in bf16)
    v_b = v.astype(jnp.bfloat16)
    src_v = jnp.dot(src_oh_ref[0], v_b, preferred_element_type=jnp.float32)   # (Me, Hp)
    dst_v = jnp.dot(dst_oh_ref[0], v_b, preferred_element_type=jnp.float32)   # (Me, Hp)

    # Edge update: sum-of-matmuls (no lane-unaligned concat); the per-graph u term is
    # computed compactly and broadcast to edge rows with a tiny MXU matmul.
    u_edge = _fmm(bcast_e_ref[0], _bmm(u, we_u))                               # (Me, Dp)
    e_new = _lrelu(_bmm(src_v, we_src) + _bmm(dst_v, we_dst)
                   + _bmm(e, we_e) + u_edge + be)                              # (Me, Dp)

    # update_all: mean of incoming edge messages (1/in_degree folded into dst_agg, f32)
    ef = _fmm(dst_agg_ref[0], e_new)                                           # (Mn, Dp)

    # Node update (same sum-of-matmuls scheme)
    u_node = _fmm(bcast_n_ref[0], _bmm(u, wn_u))                               # (Mn, Dp)
    n_new = _lrelu(_bmm(v, wn_v) + _bmm(ef, wn_ef) + u_node + bn)              # (Mn, Dp)

    # Megnet_pooling on the MXU: masked per-graph mean weights (pad rows weigh 0)
    node_pool = _fmm(pool_n_ref[0], n_new)                                     # (Gp, Dp)
    edge_pool = _fmm(pool_e_ref[0], e_new)                                     # (Gp, Dp)
    graph_pool = u                                                             # (Gp, Hp), u is constant per graph

    # Graph update (compact per-graph representation)
    g_new = _lrelu(_bmm(node_pool, wg_n) + _bmm(edge_pool, wg_e)
                   + _bmm(graph_pool, wg_u) + bg)                              # (Gp, Dp)

    # TODO(synk): nn.Dropout(0.1) is treated as identity (inference / eval mode).
    on_ref[0] = n_new + xn
    oe_ref[0] = e_new + xe
    og_ref[0] = g_new + xg


# --------------------------------- wrapper ---------------------------------
def megnets_pallas(xn_pad, xe_pad, xg_c, graph_ops, stacked_params, *, core_parallel=False):
    """Runs the whole MegNet stack in one pallas_call: grid = (graph_blocks, layers)."""
    GB = xn_pad.shape[0]
    L = stacked_params[0].shape[0]
    feat_inputs = [xn_pad, xe_pad, xg_c]
    op_inputs = list(graph_ops)

    def per_block(a):
        # One graph block per grid step along axis 0; constant across the layer axis.
        return pl.BlockSpec((1,) + tuple(a.shape[1:]), lambda b, l: (b, 0, 0))

    def resident(a):
        # Whole stacked weight array kept VMEM-resident for the entire grid
        # (constant block index => single DMA; the kernel slices w_ref[layer]).
        nd = a.ndim
        return pl.BlockSpec(tuple(a.shape), lambda b, l: (0,) * nd)

    in_specs = ([per_block(a) for a in feat_inputs + op_inputs]
                + [resident(w) for w in stacked_params])
    out_specs = tuple(per_block(a) for a in feat_inputs)
    out_shape = tuple(jax.ShapeDtypeStruct(a.shape, jnp.float32) for a in feat_inputs)

    # On v7x, set core_parallel=True to shard graph blocks across the two TensorCores.
    graph_axis = pltpu.CORE_PARALLEL if core_parallel else "parallel"
    return pl.pallas_call(
        megnet_stack_kernel,
        grid=(GB, L),
        in_specs=in_specs,
        out_specs=out_specs,
        out_shape=out_shape,
        compiler_params=pltpu.CompilerParams(
            dimension_semantics=(graph_axis, "arbitrary"),
            vmem_limit_bytes=32 * 1024 * 1024),  # explicit budget; safe on v5e/v6e/v7x
    )(*(feat_inputs + op_inputs + list(stacked_params)))


# ------------------- pure-JAX reference (flat batched graph, torch semantics) -------------------
def megnet_layer_ref(xn, xe, xg, src, dst, node_gid, edge_gid, n_counts, e_counts, p):
    N, D = xn.shape
    G = n_counts.shape[0]
    v = _mlp2(xn, p["w1n"], p["b1n"], p["w2n"], p["b2n"])
    e = _mlp2(xe, p["w1e"], p["b1e"], p["w2e"], p["b2e"])
    u = _mlp2(xg, p["w1g"], p["b1g"], p["w2g"], p["b2g"])          # node-aligned (N, H)
    We = jnp.concatenate([p["we_src"], p["we_dst"], p["we_e"], p["we_u"]], axis=0)
    cat_e = jnp.concatenate([v[src], v[dst], e, u[dst]], axis=-1)
    e_new = _lrelu(_bmm(cat_e, We) + p["be"])
    indeg = jnp.zeros((N,), jnp.float32).at[dst].add(1.0)
    ef = jnp.zeros((N, D), jnp.float32).at[dst].add(e_new) / jnp.maximum(indeg, 1.0)[:, None]
    Wn = jnp.concatenate([p["wn_v"], p["wn_ef"], p["wn_u"]], axis=0)
    cat_n = jnp.concatenate([v, ef, u], axis=-1)
    n_new = _lrelu(_bmm(cat_n, Wn) + p["bn"])
    node_pool = jnp.zeros((G, D), jnp.float32).at[node_gid].add(n_new) / n_counts[:, None]
    edge_pool = jnp.zeros((G, D), jnp.float32).at[edge_gid].add(e_new) / e_counts[:, None]
    graph_pool = jnp.zeros((G, u.shape[1]), jnp.float32).at[node_gid].add(u) / n_counts[:, None]
    Wg = jnp.concatenate([p["wg_n"], p["wg_e"], p["wg_u"]], axis=0)
    cat_g = jnp.concatenate([node_pool, edge_pool, graph_pool], axis=-1)
    g_new = _lrelu(_bmm(cat_g, Wg) + p["bg"])
    return n_new + xn, e_new + xe, g_new[node_gid] + xg


# ----------------------------- parameter construction -----------------------------
def linear_params(key, fan_in, fan_out):
    kw, kb = jax.random.split(key)
    bound = 1.0 / (fan_in ** 0.5)
    w = jax.random.uniform(kw, (fan_in, fan_out), jnp.float32, -bound, bound)
    b = jax.random.uniform(kb, (1, fan_out), jnp.float32, -bound, bound)
    return w, b


def init_layer_params(key, D, H):
    """True-size (unpadded, f32) parameters of one MegNet_layer, in per-segment form."""
    ks = jax.random.split(key, 9)
    w1n, b1n = linear_params(ks[0], D, D)
    w2n, b2n = linear_params(ks[1], D, H)
    w1e, b1e = linear_params(ks[2], D, D)
    w2e, b2e = linear_params(ks[3], D, H)
    w1g, b1g = linear_params(ks[4], D, D)
    w2g, b2g = linear_params(ks[5], D, H)
    we, be = linear_params(ks[6], 4 * H, D)        # edge_update_linear
    wn, bn = linear_params(ks[7], 2 * H + D, D)    # node_update_linear
    wg, bg = linear_params(ks[8], 2 * D + H, D)    # graph_update_linear
    return dict(w1n=w1n, b1n=b1n, w2n=w2n, b2n=b2n,
                w1e=w1e, b1e=b1e, w2e=w2e, b2e=b2e,
                w1g=w1g, b1g=b1g, w2g=w2g, b2g=b2g,
                we_src=we[:H], we_dst=we[H:2 * H], we_e=we[2 * H:3 * H], we_u=we[3 * H:], be=be,
                wn_v=wn[:H], wn_ef=wn[H:H + D], wn_u=wn[H + D:], bn=bn,
                wg_n=wg[:D], wg_e=wg[D:2 * D], wg_u=wg[2 * D:], bg=bg)


def pack_params(layer_params, dp):
    """Zero-pad every weight/bias to dp lanes, stack across layers.

    Matrices ship in bf16 (MXU), biases stay f32.  Padded rows/cols are zero so padded
    feature lanes stay exactly zero through LeakyReLU and the residual stream."""
    stacked = []
    for name in WEIGHT_ORDER:
        mats = []
        for p in layer_params:
            w = np.asarray(p[name], np.float32)
            if name.startswith("b"):
                out = np.zeros((1, dp), np.float32)
                out[0, :w.shape[-1]] = w[0]
            else:
                out = np.zeros((dp, dp), np.float32)
                out[:w.shape[0], :w.shape[1]] = w
            mats.append(out)
        arr = np.stack(mats)
        dtype = jnp.float32 if name.startswith("b") else jnp.bfloat16
        stacked.append(jnp.asarray(arr, dtype))
    return stacked


if __name__ == "__main__":
    D, H, n_layers = 32, 32, 4      # MegNets(in_dim=32, hidden_dims=[32], n_layers=4)
    DP = 128                        # lane-padded feature width (lane-dense loads/stores)
    Gb = 4                          # graphs packed per grid step (scale up so Gb*Pn >= 128/256 in prod)

    # Batched graph: 8 directed rings, DGL-batch ordering (nodes/edges of graph 0 first, ...).
    node_counts = np.array([6, 10, 8, 12, 5, 9, 7, 11], dtype=np.int64)
    G = len(node_counts)
    assert G % Gb == 0
    GB = G // Gb
    node_offsets = np.concatenate([[0], np.cumsum(node_counts)[:-1]])
    N = int(node_counts.sum())
    node_gid = np.repeat(np.arange(G), node_counts)

    src_list, dst_list = [], []
    for g in range(G):
        n, off = int(node_counts[g]), int(node_offsets[g])
        for i in range(n):
            src_list.append(off + i)
            dst_list.append(off + (i + 1) % n)
    src = np.array(src_list, dtype=np.int64)
    dst = np.array(dst_list, dtype=np.int64)
    E = len(src)
    edge_gid = node_gid[src]
    edge_counts = np.bincount(edge_gid, minlength=G)
    edge_offsets = np.concatenate([[0], np.cumsum(edge_counts)[:-1]])

    def round_up(x, m):
        return int(-(-x // m) * m)

    Pn = round_up(int(node_counts.max()), 8)
    Pe = round_up(int(edge_counts.max()), 8)
    Mn, Me = Gb * Pn, Gb * Pe       # packed rows per graph block
    Gp = round_up(Gb, 8)            # sublane-padded graphs-per-block

    node_local = np.arange(N) - node_offsets[node_gid]
    edge_local = np.arange(E) - edge_offsets[edge_gid]
    b_of_node, s_of_node = node_gid // Gb, node_gid % Gb
    b_of_edge, s_of_edge = edge_gid // Gb, edge_gid % Gb
    node_row = s_of_node * Pn + node_local
    edge_row = s_of_edge * Pe + edge_local
    src_row = s_of_edge * Pn + (src - node_offsets[edge_gid])
    dst_row = s_of_edge * Pn + (dst - node_offsets[edge_gid])
    indeg = np.bincount(dst, minlength=N).astype(np.float32)

    # Per-block graph operators (block-diagonal across the Gb graphs of each block).
    src_oh = np.zeros((GB, Me, Mn), np.float32)
    src_oh[b_of_edge, edge_row, src_row] = 1.0
    dst_oh = np.zeros((GB, Me, Mn), np.float32)
    dst_oh[b_of_edge, edge_row, dst_row] = 1.0
    dst_agg = np.zeros((GB, Mn, Me), np.float32)      # 1/in_degree folded in (mean of messages)
    dst_agg[b_of_edge, dst_row, edge_row] = 1.0 / np.maximum(indeg[dst], 1.0)
    pool_n = np.zeros((GB, Gp, Mn), np.float32)       # masked 1/|V_g| per-graph mean pooling
    pool_n[b_of_node, s_of_node, node_row] = 1.0 / node_counts[node_gid]
    pool_e = np.zeros((GB, Gp, Me), np.float32)       # masked 1/|E_g|
    pool_e[b_of_edge, s_of_edge, edge_row] = 1.0 / edge_counts[edge_gid]
    bcast_n = np.zeros((GB, Mn, Gp), np.float32)      # per-graph row -> node rows broadcast
    bcast_n[b_of_node, node_row, s_of_node] = 1.0
    bcast_e = np.zeros((GB, Me, Gp), np.float32)      # per-graph row -> edge rows broadcast
    bcast_e[b_of_edge, edge_row, s_of_edge] = 1.0

    graph_ops = (jnp.asarray(src_oh, jnp.bfloat16), jnp.asarray(dst_oh, jnp.bfloat16),
                 jnp.asarray(dst_agg), jnp.asarray(pool_n), jnp.asarray(pool_e),
                 jnp.asarray(bcast_n), jnp.asarray(bcast_e))

    # Input features (graph_feats is node-aligned and constant per graph, as the module implies).
    key = jax.random.PRNGKey(0)
    k_n, k_e, k_g, k_p = jax.random.split(key, 4)
    node_feats = jax.random.normal(k_n, (N, D), jnp.float32)
    edge_feats = jax.random.normal(k_e, (E, D), jnp.float32)
    graph_vals = jax.random.normal(k_g, (G, D), jnp.float32)
    graph_feats = graph_vals[node_gid]

    # Pack into per-block padded, lane-dense (128-wide) slabs; compact graph state = row/graph.
    g_idx = np.arange(G)
    xn_np = np.zeros((GB, Mn, DP), np.float32)
    xn_np[b_of_node, node_row, :D] = np.asarray(node_feats)
    xe_np = np.zeros((GB, Me, DP), np.float32)
    xe_np[b_of_edge, edge_row, :D] = np.asarray(edge_feats)
    xg_np = np.zeros((GB, Gp, DP), np.float32)
    xg_np[g_idx // Gb, g_idx % Gb, :D] = np.asarray(graph_vals)
    xn_pad, xe_pad, xg_c = jnp.asarray(xn_np), jnp.asarray(xe_np), jnp.asarray(xg_np)

    layer_params = [init_layer_params(k, D, H) for k in jax.random.split(k_p, n_layers)]
    stacked_params = pack_params(layer_params, DP)

    on_pad, oe_pad, og_c = jax.block_until_ready(
        megnets_pallas(xn_pad, xe_pad, xg_c, graph_ops, stacked_params))

    on_np, oe_np, og_np = np.asarray(on_pad), np.asarray(oe_pad), np.asarray(og_c)
    out_n = on_np[b_of_node, node_row, :D]
    out_e = oe_np[b_of_edge, edge_row, :D]
    out_g = og_np[g_idx // Gb, g_idx % Gb, :D][node_gid]      # back to node-aligned layout

    # Reference on the flat batched graph (PyTorch/DGL semantics, bf16 feature matmuls).
    rn, re, rg = node_feats, edge_feats, graph_feats
    nc = jnp.asarray(node_counts, jnp.float32)
    ec = jnp.asarray(edge_counts, jnp.float32)
    j_src, j_dst = jnp.asarray(src), jnp.asarray(dst)
    j_ngid, j_egid = jnp.asarray(node_gid), jnp.asarray(edge_gid)
    for p in layer_params:
        rn, re, rg = megnet_layer_ref(rn, re, rg, j_src, j_dst, j_ngid, j_egid, nc, ec, p)
    rn, re, rg = np.asarray(rn), np.asarray(re), np.asarray(rg)

    assert np.all(np.isfinite(out_n)) and np.all(np.isfinite(out_e)) and np.all(np.isfinite(out_g))
    assert np.allclose(out_n, rn, atol=2e-2, rtol=2e-2), float(np.max(np.abs(out_n - rn)))
    assert np.allclose(out_e, re, atol=2e-2, rtol=2e-2), float(np.max(np.abs(out_e - re)))
    assert np.allclose(out_g, rg, atol=2e-2, rtol=2e-2), float(np.max(np.abs(out_g - rg)))
    print("KERNEL_OK")
</pallas_src>

<mosaic_0001>
module attributes {stable_mosaic.version = 11 : i64} {
  func.func @megnet_stack_kernel(%arg0: i32, %arg1: i32, %arg2: memref<1x64x128xf32, #tpu.memory_space<vmem>>, %arg3: memref<1x64x128xf32, #tpu.memory_space<vmem>>, %arg4: memref<1x8x128xf32, #tpu.memory_space<vmem>>, %arg5: memref<1x64x64xbf16, #tpu.memory_space<vmem>>, %arg6: memref<1x64x64xbf16, #tpu.memory_space<vmem>>, %arg7: memref<1x64x64xf32, #tpu.memory_space<vmem>>, %arg8: memref<1x8x64xf32, #tpu.memory_space<vmem>>, %arg9: memref<1x8x64xf32, #tpu.memory_space<vmem>>, %arg10: memref<1x64x8xf32, #tpu.memory_space<vmem>>, %arg11: memref<1x64x8xf32, #tpu.memory_space<vmem>>, %arg12: memref<4x128x128xbf16, #tpu.memory_space<vmem>>, %arg13: memref<4x1x128xf32, #tpu.memory_space<vmem>>, %arg14: memref<4x128x128xbf16, #tpu.memory_space<vmem>>, %arg15: memref<4x1x128xf32, #tpu.memory_space<vmem>>, %arg16: memref<4x128x128xbf16, #tpu.memory_space<vmem>>, %arg17: memref<4x1x128xf32, #tpu.memory_space<vmem>>, %arg18: memref<4x128x128xbf16, #tpu.memory_space<vmem>>, %arg19: memref<4x1x128xf32, #tpu.memory_space<vmem>>, %arg20: memref<4x128x128xbf16, #tpu.memory_space<vmem>>, %arg21: memref<4x1x128xf32, #tpu.memory_space<vmem>>, %arg22: memref<4x128x128xbf16, #tpu.memory_space<vmem>>, %arg23: memref<4x1x128xf32, #tpu.memory_space<vmem>>, %arg24: memref<4x128x128xbf16, #tpu.memory_space<vmem>>, %arg25: memref<4x128x128xbf16, #tpu.memory_space<vmem>>, %arg26: memref<4x128x128xbf16, #tpu.memory_space<vmem>>, %arg27: memref<4x128x128xbf16, #tpu.memory_space<vmem>>, %arg28: memref<4x1x128xf32, #tpu.memory_space<vmem>>, %arg29: memref<4x128x128xbf16, #tpu.memory_space<vmem>>, %arg30: memref<4x128x128xbf16, #tpu.memory_space<vmem>>, %arg31: memref<4x128x128xbf16, #tpu.memory_space<vmem>>, %arg32: memref<4x1x128xf32, #tpu.memory_space<vmem>>, %arg33: memref<4x128x128xbf16, #tpu.memory_space<vmem>>, %arg34: memref<4x128x128xbf16, #tpu.memory_space<vmem>>, %arg35: memref<4x128x128xbf16, #tpu.memory_space<vmem>>, %arg36: memref<4x1x128xf32, #tpu.memory_space<vmem>>, %arg37: memref<1x64x128xf32, #tpu.memory_space<vmem>>, %arg38: memref<1x64x128xf32, #tpu.memory_space<vmem>>, %arg39: memref<1x8x128xf32, #tpu.memory_space<vmem>>) attributes {dimension_semantics = [#tpu.dimension_semantics<parallel>, #tpu.dimension_semantics<arbitrary>], iteration_bounds = array<i64: 2, 4>, scalar_prefetch = 0 : i64, scratch_operands = 0 : i64, tpu.core_type = #tpu.core_type<tc>, window_params = [{transform_indices = @transform_0, window_bounds = array<i64: 1, 64, 128>}, {transform_indices = @transform_1, window_bounds = array<i64: 1, 64, 128>}, {transform_indices = @transform_2, window_bounds = array<i64: 1, 8, 128>}, {transform_indices = @transform_3, window_bounds = array<i64: 1, 64, 64>}, {transform_indices = @transform_4, window_bounds = array<i64: 1, 64, 64>}, {transform_indices = @transform_5, window_bounds = array<i64: 1, 64, 64>}, {transform_indices = @transform_6, window_bounds = array<i64: 1, 8, 64>}, {transform_indices = @transform_7, window_bounds = array<i64: 1, 8, 64>}, {transform_indices = @transform_8, window_bounds = array<i64: 1, 64, 8>}, {transform_indices = @transform_9, window_bounds = array<i64: 1, 64, 8>}, {pipeline_mode = #tpu.pipeline_mode<synchronous>, transform_indices = @transform_10, window_bounds = array<i64: 4, 128, 128>}, {pipeline_mode = #tpu.pipeline_mode<synchronous>, transform_indices = @transform_11, window_bounds = array<i64: 4, 1, 128>}, {pipeline_mode = #tpu.pipeline_mode<synchronous>, transform_indices = @transform_12, window_bounds = array<i64: 4, 128, 128>}, {pipeline_mode = #tpu.pipeline_mode<synchronous>, transform_indices = @transform_13, window_bounds = array<i64: 4, 1, 128>}, {pipeline_mode = #tpu.pipeline_mode<synchronous>, transform_indices = @transform_14, window_bounds = array<i64: 4, 128, 128>}, {pipeline_mode = #tpu.pipeline_mode<synchronous>, transform_indices = @transform_15, window_bounds = array<i64: 4, 1, 128>}, {pipeline_mode = #tpu.pipeline_mode<synchronous>, transform_indices = @transform_16, window_bounds = array<i64: 4, 128, 128>}, {pipeline_mode = #tpu.pipeline_mode<synchronous>, transform_indices = @transform_17, window_bounds = array<i64: 4, 1, 128>}, {pipeline_mode = #tpu.pipeline_mode<synchronous>, transform_indices = @transform_18, window_bounds = array<i64: 4, 128, 128>}, {pipeline_mode = #tpu.pipeline_mode<synchronous>, transform_indices = @transform_19, window_bounds = array<i64: 4, 1, 128>}, {pipeline_mode = #tpu.pipeline_mode<synchronous>, transform_indices = @transform_20, window_bounds = array<i64: 4, 128, 128>}, {pipeline_mode = #tpu.pipeline_mode<synchronous>, transform_indices = @transform_21, window_bounds = array<i64: 4, 1, 128>}, {pipeline_mode = #tpu.pipeline_mode<synchronous>, transform_indices = @transform_22, window_bounds = array<i64: 4, 128, 128>}, {pipeline_mode = #tpu.pipeline_mode<synchronous>, transform_indices = @transform_23, window_bounds = array<i64: 4, 128, 128>}, {pipeline_mode = #tpu.pipeline_mode<synchronous>, transform_indices = @transform_24, window_bounds = array<i64: 4, 128, 128>}, {pipeline_mode = #tpu.pipeline_mode<synchronous>, transform_indices = @transform_25, window_bounds = array<i64: 4, 128, 128>}, {pipeline_mode = #tpu.pipeline_mode<synchronous>, transform_indices = @transform_26, window_bounds = array<i64: 4, 1, 128>}, {pipeline_mode = #tpu.pipeline_mode<synchronous>, transform_indices = @transform_27, window_bounds = array<i64: 4, 128, 128>}, {pipeline_mode = #tpu.pipeline_mode<synchronous>, transform_indices = @transform_28, window_bounds = array<i64: 4, 128, 128>}, {pipeline_mode = #tpu.pipeline_mode<synchronous>, transform_indices = @transform_29, window_bounds = array<i64: 4, 128, 128>}, {pipeline_mode = #tpu.pipeline_mode<synchronous>, transform_indices = @transform_30, window_bounds = array<i64: 4, 1, 128>}, {pipeline_mode = #tpu.pipeline_mode<synchronous>, transform_indices = @transform_31, window_bounds = array<i64: 4, 128, 128>}, {pipeline_mode = #tpu.pipeline_mode<synchronous>, transform_indices = @transform_32, window_bounds = array<i64: 4, 128, 128>}, {pipeline_mode = #tpu.pipeline_mode<synchronous>, transform_indices = @transform_33, window_bounds = array<i64: 4, 128, 128>}, {pipeline_mode = #tpu.pipeline_mode<synchronous>, transform_indices = @transform_34, window_bounds = array<i64: 4, 1, 128>}, {transform_indices = @transform_35, window_bounds = array<i64: 1, 64, 128>}, {transform_indices = @transform_36, window_bounds = array<i64: 1, 64, 128>}, {transform_indices = @transform_37, window_bounds = array<i64: 1, 8, 128>}]} {
    %c0_i32 = arith.constant 0 : i32
    %0 = arith.cmpi eq, %arg1, %c0_i32 : i32
    %1 = arith.extui %0 : i1 to i32
    %c0_i32_0 = arith.constant 0 : i32
    %2 = arith.cmpi ne, %1, %c0_i32_0 : i32
    scf.if %2 {
      %c0_129 = arith.constant 0 : index
      %c0_130 = arith.constant 0 : index
      %c0_131 = arith.constant 0 : index
      %220 = vector.load %arg2[%c0_129, %c0_130, %c0_131] : memref<1x64x128xf32, #tpu.memory_space<vmem>>, vector<1x64x128xf32>
      %c0_132 = arith.constant 0 : index
      %c0_133 = arith.constant 0 : index
      %c0_134 = arith.constant 0 : index
      %221 = vector.load %arg37[%c0_132, %c0_133, %c0_134] : memref<1x64x128xf32, #tpu.memory_space<vmem>>, vector<1x64x128xf32>
      tpu.vector_store %arg37[%c0_132, %c0_133, %c0_134], %220 {strides = array<i32>} : memref<1x64x128xf32, #tpu.memory_space<vmem>>, vector<1x64x128xf32>,
      %c0_135 = arith.constant 0 : index
      %c0_136 = arith.constant 0 : index
      %c0_137 = arith.constant 0 : index
      %222 = vector.load %arg3[%c0_135, %c0_136, %c0_137] : memref<1x64x128xf32, #tpu.memory_space<vmem>>, vector<1x64x128xf32>
      %c0_138 = arith.constant 0 : index
      %c0_139 = arith.constant 0 : index
      %c0_140 = arith.constant 0 : index
      %223 = vector.load %arg38[%c0_138, %c0_139, %c0_140] : memref<1x64x128xf32, #tpu.memory_space<vmem>>, vector<1x64x128xf32>
      tpu.vector_store %arg38[%c0_138, %c0_139, %c0_140], %222 {strides = array<i32>} : memref<1x64x128xf32, #tpu.memory_space<vmem>>, vector<1x64x128xf32>,
      %c0_141 = arith.constant 0 : index
      %c0_142 = arith.constant 0 : index
      %c0_143 = arith.constant 0 : index
      %224 = vector.load %arg4[%c0_141, %c0_142, %c0_143] : memref<1x8x128xf32, #tpu.memory_space<vmem>>, vector<1x8x128xf32>
      %c0_144 = arith.constant 0 : index
      %c0_145 = arith.constant 0 : index
      %c0_146 = arith.constant 0 : index
      %225 = vector.load %arg39[%c0_144, %c0_145, %c0_146] : memref<1x8x128xf32, #tpu.memory_space<vmem>>, vector<1x8x128xf32>
      tpu.vector_store %arg39[%c0_144, %c0_145, %c0_146], %224 {strides = array<i32>} : memref<1x8x128xf32, #tpu.memory_space<vmem>>, vector<1x8x128xf32>,
    } else {
    }
    %3 = arith.index_cast %arg1 : i32 to index
    %c0 = arith.constant 0 : index
    %c0_1 = arith.constant 0 : index
    %4 = vector.load %arg12[%3, %c0, %c0_1] : memref<4x128x128xbf16, #tpu.memory_space<vmem>>, vector<1x128x128xbf16>
    %5 = vector.shape_cast %4 : vector<1x128x128xbf16> to vector<128x128xbf16>
    %6 = arith.index_cast %arg1 : i32 to index
    %c0_2 = arith.constant 0 : index
    %c0_3 = arith.constant 0 : index
    %7 = vector.load %arg13[%6, %c0_2, %c0_3] : memref<4x1x128xf32, #tpu.memory_space<vmem>>, vector<1x1x128xf32>
    %8 = vector.shape_cast %7 : vector<1x1x128xf32> to vector<1x128xf32>
    %9 = arith.index_cast %arg1 : i32 to index
    %c0_4 = arith.constant 0 : index
    %c0_5 = arith.constant 0 : index
    %10 = vector.load %arg14[%9, %c0_4, %c0_5] : memref<4x128x128xbf16, #tpu.memory_space<vmem>>, vector<1x128x128xbf16>
    %11 = vector.shape_cast %10 : vector<1x128x128xbf16> to vector<128x128xbf16>
    %12 = arith.index_cast %arg1 : i32 to index
    %c0_6 = arith.constant 0 : index
    %c0_7 = arith.constant 0 : index
    %13 = vector.load %arg15[%12, %c0_6, %c0_7] : memref<4x1x128xf32, #tpu.memory_space<vmem>>, vector<1x1x128xf32>
    %14 = vector.shape_cast %13 : vector<1x1x128xf32> to vector<1x128xf32>
    %15 = arith.index_cast %arg1 : i32 to index
    %c0_8 = arith.constant 0 : index
    %c0_9 = arith.constant 0 : index
    %16 = vector.load %arg16[%15, %c0_8, %c0_9] : memref<4x128x128xbf16, #tpu.memory_space<vmem>>, vector<1x128x128xbf16>
    %17 = vector.shape_cast %16 : vector<1x128x128xbf16> to vector<128x128xbf16>
    %18 = arith.index_cast %arg1 : i32 to index
    %c0_10 = arith.constant 0 : index
    %c0_11 = arith.constant 0 : index
    %19 = vector.load %arg17[%18, %c0_10, %c0_11] : memref<4x1x128xf32, #tpu.memory_space<vmem>>, vector<1x1x128xf32>
    %20 = vector.shape_cast %19 : vector<1x1x128xf32> to vector<1x128xf32>
    %21 = arith.index_cast %arg1 : i32 to index
    %c0_12 = arith.constant 0 : index
    %c0_13 = arith.constant 0 : index
    %22 = vector.load %arg18[%21, %c0_12, %c0_13] : memref<4x128x128xbf16, #tpu.memory_space<vmem>>, vector<1x128x128xbf16>
    %23 = vector.shape_cast %22 : vector<1x128x128xbf16> to vector<128x128xbf16>
    %24 = arith.index_cast %arg1 : i32 to index
    %c0_14 = arith.constant 0 : index
    %c0_15 = arith.constant 0 : index
    %25 = vector.load %arg19[%24, %c0_14, %c0_15] : memref<4x1x128xf32, #tpu.memory_space<vmem>>, vector<1x1x128xf32>
    %26 = vector.shape_cast %25 : vector<1x1x128xf32> to vector<1x128xf32>
    %27 = arith.index_cast %arg1 : i32 to index
    %c0_16 = arith.constant 0 : index
    %c0_17 = arith.constant 0 : index
    %28 = vector.load %arg20[%27, %c0_16, %c0_17] : memref<4x128x128xbf16, #tpu.memory_space<vmem>>, vector<1x128x128xbf16>
    %29 = vector.shape_cast %28 : vector<1x128x128xbf16> to vector<128x128xbf16>
    %30 = arith.index_cast %arg1 : i32 to index
    %c0_18 = arith.constant 0 : index
    %c0_19 = arith.constant 0 : index
    %31 = vector.load %arg21[%30, %c0_18, %c0_19] : memref<4x1x128xf32, #tpu.memory_space<vmem>>, vector<1x1x128xf32>
    %32 = vector.shape_cast %31 : vector<1x1x128xf32> to vector<1x128xf32>
    %33 = arith.index_cast %arg1 : i32 to index
    %c0_20 = arith.constant 0 : index
    %c0_21 = arith.constant 0 : index
    %34 = vector.load %arg22[%33, %c0_20, %c0_21] : memref<4x128x128xbf16, #tpu.memory_space<vmem>>, vector<1x128x128xbf16>
    %35 = vector.shape_cast %34 : vector<1x128x128xbf16> to vector<128x128xbf16>
    %36 = arith.index_cast %arg1 : i32 to index
    %c0_22 = arith.constant 0 : index
    %c0_23 = arith.constant 0 : index
    %37 = vector.load %arg23[%36, %c0_22, %c0_23] : memref<4x1x128xf32, #tpu.memory_space<vmem>>, vector<1x1x128xf32>
    %38 = vector.shape_cast %37 : vector<1x1x128xf32> to vector<1x128xf32>
    %39 = arith.index_cast %arg1 : i32 to index
    %c0_24 = arith.constant 0 : index
    %c0_25 = arith.constant 0 : index
    %40 = vector.load %arg24[%39, %c0_24, %c0_25] : memref<4x128x128xbf16, #tpu.memory_space<vmem>>, vector<1x128x128xbf16>
    %41 = vector.shape_cast %40 : vector<1x128x128xbf16> to vector<128x128xbf16>
    %42 = arith.index_cast %arg1 : i32 to index
    %c0_26 = arith.constant 0 : index
    %c0_27 = arith.constant 0 : index
    %43 = vector.load %arg25[%42, %c0_26, %c0_27] : memref<4x128x128xbf16, #tpu.memory_space<vmem>>, vector<1x128x128xbf16>
    %44 = vector.shape_cast %43 : vector<1x128x128xbf16> to vector<128x128xbf16>
    %45 = arith.index_cast %arg1 : i32 to index
    %c0_28 = arith.constant 0 : index
    %c0_29 = arith.constant 0 : index
    %46 = vector.load %arg26[%45, %c0_28, %c0_29] : memref<4x128x128xbf16, #tpu.memory_space<vmem>>, vector<1x128x128xbf16>
    %47 = vector.shape_cast %46 : vector<1x128x128xbf16> to vector<128x128xbf16>
    %48 = arith.index_cast %arg1 : i32 to index
    %c0_30 = arith.constant 0 : index
    %c0_31 = arith.constant 0 : index
    %49 = vector.load %arg27[%48, %c0_30, %c0_31] : memref<4x128x128xbf16, #tpu.memory_space<vmem>>, vector<1x128x128xbf16>
    %50 = vector.shape_cast %49 : vector<1x128x128xbf16> to vector<128x128xbf16>
    %51 = arith.index_cast %arg1 : i32 to index
    %c0_32 = arith.constant 0 : index
    %c0_33 = arith.constant 0 : index
    %52 = vector.load %arg28[%51, %c0_32, %c0_33] : memref<4x1x128xf32, #tpu.memory_space<vmem>>, vector<1x1x128xf32>
    %53 = vector.shape_cast %52 : vector<1x1x128xf32> to vector<1x128xf32>
    %54 = arith.index_cast %arg1 : i32 to index
    %c0_34 = arith.constant 0 : index
    %c0_35 = arith.constant 0 : index
    %55 = vector.load %arg29[%54, %c0_34, %c0_35] : memref<4x128x128xbf16, #tpu.memory_space<vmem>>, vector<1x128x128xbf16>
    %56 = vector.shape_cast %55 : vector<1x128x128xbf16> to vector<128x128xbf16>
    %57 = arith.index_cast %arg1 : i32 to index
    %c0_36 = arith.constant 0 : index
    %c0_37 = arith.constant 0 : index
    %58 = vector.load %arg30[%57, %c0_36, %c0_37] : memref<4x128x128xbf16, #tpu.memory_space<vmem>>, vector<1x128x128xbf16>
    %59 = vector.shape_cast %58 : vector<1x128x128xbf16> to vector<128x128xbf16>
    %60 = arith.index_cast %arg1 : i32 to index
    %c0_38 = arith.constant 0 : index
    %c0_39 = arith.constant 0 : index
    %61 = vector.load %arg31[%60, %c0_38, %c0_39] : memref<4x128x128xbf16, #tpu.memory_space<vmem>>, vector<1x128x128xbf16>
    %62 = vector.shape_cast %61 : vector<1x128x128xbf16> to vector<128x128xbf16>
    %63 = arith.index_cast %arg1 : i32 to index
    %c0_40 = arith.constant 0 : index
    %c0_41 = arith.constant 0 : index
    %64 = vector.load %arg32[%63, %c0_40, %c0_41] : memref<4x1x128xf32, #tpu.memory_space<vmem>>, vector<1x1x128xf32>
    %65 = vector.shape_cast %64 : vector<1x1x128xf32> to vector<1x128xf32>
    %66 = arith.index_cast %arg1 : i32 to index
    %c0_42 = arith.constant 0 : index
    %c0_43 = arith.constant 0 : index
    %67 = vector.load %arg33[%66, %c0_42, %c0_43] : memref<4x128x128xbf16, #tpu.memory_space<vmem>>, vector<1x128x128xbf16>
    %68 = vector.shape_cast %67 : vector<1x128x128xbf16> to vector<128x128xbf16>
    %69 = arith.index_cast %arg1 : i32 to index
    %c0_44 = arith.constant 0 : index
    %c0_45 = arith.constant 0 : index
    %70 = vector.load %arg34[%69, %c0_44, %c0_45] : memref<4x128x128xbf16, #tpu.memory_space<vmem>>, vector<1x128x128xbf16>
    %71 = vector.shape_cast %70 : vector<1x128x128xbf16> to vector<128x128xbf16>
    %72 = arith.index_cast %arg1 : i32 to index
    %c0_46 = arith.constant 0 : index
    %c0_47 = arith.constant 0 : index
    %73 = vector.load %arg35[%72, %c0_46, %c0_47] : memref<4x128x128xbf16, #tpu.memory_space<vmem>>, vector<1x128x128xbf16>
    %74 = vector.shape_cast %73 : vector<1x128x128xbf16> to vector<128x128xbf16>
    %75 = arith.index_cast %arg1 : i32 to index
    %c0_48 = arith.constant 0 : index
    %c0_49 = arith.constant 0 : index
    %76 = vector.load %arg36[%75, %c0_48, %c0_49] : memref<4x1x128xf32, #tpu.memory_space<vmem>>, vector<1x1x128xf32>
    %77 = vector.shape_cast %76 : vector<1x1x128xf32> to vector<1x128xf32>
    %c0_50 = arith.constant 0 : index
    %c0_51 = arith.constant 0 : index
    %c0_52 = arith.constant 0 : index
    %78 = vector.load %arg37[%c0_50, %c0_51, %c0_52] : memref<1x64x128xf32, #tpu.memory_space<vmem>>, vector<1x64x128xf32>
    %79 = vector.shape_cast %78 : vector<1x64x128xf32> to vector<64x128xf32>
    %c0_53 = arith.constant 0 : index
    %c0_54 = arith.constant 0 : index
    %c0_55 = arith.constant 0 : index
    %80 = vector.load %arg38[%c0_53, %c0_54, %c0_55] : memref<1x64x128xf32, #tpu.memory_space<vmem>>, vector<1x64x128xf32>
    %81 = vector.shape_cast %80 : vector<1x64x128xf32> to vector<64x128xf32>
    %c0_56 = arith.constant 0 : index
    %c0_57 = arith.constant 0 : index
    %c0_58 = arith.constant 0 : index
    %82 = vector.load %arg39[%c0_56, %c0_57, %c0_58] : memref<1x8x128xf32, #tpu.memory_space<vmem>>, vector<1x8x128xf32>
    %83 = vector.shape_cast %82 : vector<1x8x128xf32> to vector<8x128xf32>
    %84 = arith.truncf %79 : vector<64x128xf32> to vector<64x128xbf16>
    %cst = arith.constant dense<0.000000e+00> : vector<64x128xf32>
    %85 = tpu.matmul %84, %5, %cst {dimension_numbers = #tpu.dot_dimension_numbers<[1], [0], [0], [1], [0, 0, 1, 1], [], []>} : vector<64x128xbf16>, vector<128x128xbf16>, vector<64x128xf32> -> vector<64x128xf32>
    %86 = vector.broadcast %8 : vector<1x128xf32> to vector<64x128xf32>
    %87 = arith.addf %85, %86 : vector<64x128xf32>
    %cst_59 = arith.constant 0.000000e+00 : f32
    %88 = vector.broadcast %cst_59 : f32 to vector<64x128xf32>
    %89 = arith.cmpf ogt, %87, %88 : vector<64x128xf32>
    %cst_60 = arith.constant 0.00999999977 : f32
    %90 = vector.broadcast %cst_60 : f32 to vector<64x128xf32>
    %91 = arith.mulf %90, %87 : vector<64x128xf32>
    %92 = arith.select %89, %87, %91 : vector<64x128xi1>, vector<64x128xf32>
    %93 = arith.truncf %92 : vector<64x128xf32> to vector<64x128xbf16>
    %cst_61 = arith.constant dense<0.000000e+00> : vector<64x128xf32>
    %94 = tpu.matmul %93, %11, %cst_61 {dimension_numbers = #tpu.dot_dimension_numbers<[1], [0], [0], [1], [0, 0, 1, 1], [], []>} : vector<64x128xbf16>, vector<128x128xbf16>, vector<64x128xf32> -> vector<64x128xf32>
    %95 = vector.broadcast %14 : vector<1x128xf32> to vector<64x128xf32>
    %96 = arith.addf %94, %95 : vector<64x128xf32>
    %cst_62 = arith.constant 0.000000e+00 : f32
    %97 = vector.broadcast %cst_62 : f32 to vector<64x128xf32>
    %98 = arith.cmpf ogt, %96, %97 : vector<64x128xf32>
    %cst_63 = arith.constant 0.00999999977 : f32
    %99 = vector.broadcast %cst_63 : f32 to vector<64x128xf32>
    %100 = arith.mulf %99, %96 : vector<64x128xf32>
    %101 = arith.select %98, %96, %100 : vector<64x128xi1>, vector<64x128xf32>
    %102 = arith.truncf %81 : vector<64x128xf32> to vector<64x128xbf16>
    %cst_64 = arith.constant dense<0.000000e+00> : vector<64x128xf32>
    %103 = tpu.matmul %102, %17, %cst_64 {dimension_numbers = #tpu.dot_dimension_numbers<[1], [0], [0], [1], [0, 0, 1, 1], [], []>} : vector<64x128xbf16>, vector<128x128xbf16>, vector<64x128xf32> -> vector<64x128xf32>
    %104 = vector.broadcast %20 : vector<1x128xf32> to vector<64x128xf32>
    %105 = arith.addf %103, %104 : vector<64x128xf32>
    %cst_65 = arith.constant 0.000000e+00 : f32
    %106 = vector.broadcast %cst_65 : f32 to vector<64x128xf32>
    %107 = arith.cmpf ogt, %105, %106 : vector<64x128xf32>
    %cst_66 = arith.constant 0.00999999977 : f32
    %108 = vector.broadcast %cst_66 : f32 to vector<64x128xf32>
    %109 = arith.mulf %108, %105 : vector<64x128xf32>
    %110 = arith.select %107, %105, %109 : vector<64x128xi1>, vector<64x128xf32>
    %111 = arith.truncf %110 : vector<64x128xf32> to vector<64x128xbf16>
    %cst_67 = arith.constant dense<0.000000e+00> : vector<64x128xf32>
    %112 = tpu.matmul %111, %23, %cst_67 {dimension_numbers = #tpu.dot_dimension_numbers<[1], [0], [0], [1], [0, 0, 1, 1], [], []>} : vector<64x128xbf16>, vector<128x128xbf16>, vector<64x128xf32> -> vector<64x128xf32>
    %113 = vector.broadcast %26 : vector<1x128xf32> to vector<64x128xf32>
    %114 = arith.addf %112, %113 : vector<64x128xf32>
    %cst_68 = arith.constant 0.000000e+00 : f32
    %115 = vector.broadcast %cst_68 : f32 to vector<64x128xf32>
    %116 = arith.cmpf ogt, %114, %115 : vector<64x128xf32>
    %cst_69 = arith.constant 0.00999999977 : f32
    %117 = vector.broadcast %cst_69 : f32 to vector<64x128xf32>
    %118 = arith.mulf %117, %114 : vector<64x128xf32>
    %119 = arith.select %116, %114, %118 : vector<64x128xi1>, vector<64x128xf32>
    %120 = arith.truncf %83 : vector<8x128xf32> to vector<8x128xbf16>
    %cst_70 = arith.constant dense<0.000000e+00> : vector<8x128xf32>
    %121 = tpu.matmul %120, %29, %cst_70 {dimension_numbers = #tpu.dot_dimension_numbers<[1], [0], [0], [1], [0, 0, 1, 1], [], []>} : vector<8x128xbf16>, vector<128x128xbf16>, vector<8x128xf32> -> vector<8x128xf32>
    %122 = vector.broadcast %32 : vector<1x128xf32> to vector<8x128xf32>
    %123 = arith.addf %121, %122 : vector<8x128xf32>
    %cst_71 = arith.constant 0.000000e+00 : f32
    %124 = vector.broadcast %cst_71 : f32 to vector<8x128xf32>
    %125 = arith.cmpf ogt, %123, %124 : vector<8x128xf32>
    %cst_72 = arith.constant 0.00999999977 : f32
    %126 = vector.broadcast %cst_72 : f32 to vector<8x128xf32>
    %127 = arith.mulf %126, %123 : vector<8x128xf32>
    %128 = arith.select %125, %123, %127 : vector<8x128xi1>, vector<8x128xf32>
    %129 = arith.truncf %128 : vector<8x128xf32> to vector<8x128xbf16>
    %cst_73 = arith.constant dense<0.000000e+00> : vector<8x128xf32>
    %130 = tpu.matmul %129, %35, %cst_73 {dimension_numbers = #tpu.dot_dimension_numbers<[1], [0], [0], [1], [0, 0, 1, 1], [], []>} : vector<8x128xbf16>, vector<128x128xbf16>, vector<8x128xf32> -> vector<8x128xf32>
    %131 = vector.broadcast %38 : vector<1x128xf32> to vector<8x128xf32>
    %132 = arith.addf %130, %131 : vector<8x128xf32>
    %cst_74 = arith.constant 0.000000e+00 : f32
    %133 = vector.broadcast %cst_74 : f32 to vector<8x128xf32>
    %134 = arith.cmpf ogt, %132, %133 : vector<8x128xf32>
    %cst_75 = arith.constant 0.00999999977 : f32
    %135 = vector.broadcast %cst_75 : f32 to vector<8x128xf32>
    %136 = arith.mulf %135, %132 : vector<8x128xf32>
    %137 = arith.select %134, %132, %136 : vector<8x128xi1>, vector<8x128xf32>
    %138 = arith.truncf %101 : vector<64x128xf32> to vector<64x128xbf16>
    %c0_76 = arith.constant 0 : index
    %c0_77 = arith.constant 0 : index
    %c0_78 = arith.constant 0 : index
    %139 = vector.load %arg5[%c0_76, %c0_77, %c0_78] : memref<1x64x64xbf16, #tpu.memory_space<vmem>>, vector<1x64x64xbf16>
    %140 = vector.shape_cast %139 : vector<1x64x64xbf16> to vector<64x64xbf16>
    %cst_79 = arith.constant dense<0.000000e+00> : vector<64x128xf32>
    %141 = tpu.matmul %140, %138, %cst_79 {dimension_numbers = #tpu.dot_dimension_numbers<[1], [0], [0], [1], [0, 0, 1, 1], [], []>} : vector<64x64xbf16>, vector<64x128xbf16>, vector<64x128xf32> -> vector<64x128xf32>
    %c0_80 = arith.constant 0 : index
    %c0_81 = arith.constant 0 : index
    %c0_82 = arith.constant 0 : index
    %142 = vector.load %arg6[%c0_80, %c0_81, %c0_82] : memref<1x64x64xbf16, #tpu.memory_space<vmem>>, vector<1x64x64xbf16>
    %143 = vector.shape_cast %142 : vector<1x64x64xbf16> to vector<64x64xbf16>
    %cst_83 = arith.constant dense<0.000000e+00> : vector<64x128xf32>
    %144 = tpu.matmul %143, %138, %cst_83 {dimension_numbers = #tpu.dot_dimension_numbers<[1], [0], [0], [1], [0, 0, 1, 1], [], []>} : vector<64x64xbf16>, vector<64x128xbf16>, vector<64x128xf32> -> vector<64x128xf32>
    %c0_84 = arith.constant 0 : index
    %c0_85 = arith.constant 0 : index
    %c0_86 = arith.constant 0 : index
    %145 = vector.load %arg11[%c0_84, %c0_85, %c0_86] : memref<1x64x8xf32, #tpu.memory_space<vmem>>, vector<1x64x8xf32>
    %146 = vector.shape_cast %145 : vector<1x64x8xf32> to vector<64x8xf32>
    %147 = arith.truncf %137 : vector<8x128xf32> to vector<8x128xbf16>
    %cst_87 = arith.constant dense<0.000000e+00> : vector<8x128xf32>
    %148 = tpu.matmul %147, %50, %cst_87 {dimension_numbers = #tpu.dot_dimension_numbers<[1], [0], [0], [1], [0, 0, 1, 1], [], []>} : vector<8x128xbf16>, vector<128x128xbf16>, vector<8x128xf32> -> vector<8x128xf32>
    %cst_88 = arith.constant dense<0.000000e+00> : vector<64x128xf32>
    %149 = tpu.matmul %146, %148, %cst_88 {dimension_numbers = #tpu.dot_dimension_numbers<[1], [0], [0], [1], [0, 0, 1, 1], [], []>, precision = #tpu.contract_precision<fp32>} : vector<64x8xf32>, vector<8x128xf32>, vector<64x128xf32> -> vector<64x128xf32>
    %150 = arith.truncf %141 : vector<64x128xf32> to vector<64x128xbf16>
    %cst_89 = arith.constant dense<0.000000e+00> : vector<64x128xf32>
    %151 = tpu.matmul %150, %41, %cst_89 {dimension_numbers = #tpu.dot_dimension_numbers<[1], [0], [0], [1], [0, 0, 1, 1], [], []>} : vector<64x128xbf16>, vector<128x128xbf16>, vector<64x128xf32> -> vector<64x128xf32>
    %152 = arith.truncf %144 : vector<64x128xf32> to vector<64x128xbf16>
    %cst_90 = arith.constant dense<0.000000e+00> : vector<64x128xf32>
    %153 = tpu.matmul %152, %44, %cst_90 {dimension_numbers = #tpu.dot_dimension_numbers<[1], [0], [0], [1], [0, 0, 1, 1], [], []>} : vector<64x128xbf16>, vector<128x128xbf16>, vector<64x128xf32> -> vector<64x128xf32>
    %154 = arith.addf %151, %153 : vector<64x128xf32>
    %155 = arith.truncf %119 : vector<64x128xf32> to vector<64x128xbf16>
    %cst_91 = arith.constant dense<0.000000e+00> : vector<64x128xf32>
    %156 = tpu.matmul %155, %47, %cst_91 {dimension_numbers = #tpu.dot_dimension_numbers<[1], [0], [0], [1], [0, 0, 1, 1], [], []>} : vector<64x128xbf16>, vector<128x128xbf16>, vector<64x128xf32> -> vector<64x128xf32>
    %157 = arith.addf %154, %156 : vector<64x128xf32>
    %158 = arith.addf %157, %149 : vector<64x128xf32>
    %159 = vector.broadcast %53 : vector<1x128xf32> to vector<64x128xf32>
    %160 = arith.addf %158, %159 : vector<64x128xf32>
    %cst_92 = arith.constant 0.000000e+00 : f32
    %161 = vector.broadcast %cst_92 : f32 to vector<64x128xf32>
    %162 = arith.cmpf ogt, %160, %161 : vector<64x128xf32>
    %cst_93 = arith.constant 0.00999999977 : f32
    %163 = vector.broadcast %cst_93 : f32 to vector<64x128xf32>
    %164 = arith.mulf %163, %160 : vector<64x128xf32>
    %165 = arith.select %162, %160, %164 : vector<64x128xi1>, vector<64x128xf32>
    %c0_94 = arith.constant 0 : index
    %c0_95 = arith.constant 0 : index
    %c0_96 = arith.constant 0 : index
    %166 = vector.load %arg7[%c0_94, %c0_95, %c0_96] : memref<1x64x64xf32, #tpu.memory_space<vmem>>, vector<1x64x64xf32>
    %167 = vector.shape_cast %166 : vector<1x64x64xf32> to vector<64x64xf32>
    %cst_97 = arith.constant dense<0.000000e+00> : vector<64x128xf32>
    %168 = tpu.matmul %167, %165, %cst_97 {dimension_numbers = #tpu.dot_dimension_numbers<[1], [0], [0], [1], [0, 0, 1, 1], [], []>, precision = #tpu.contract_precision<fp32>} : vector<64x64xf32>, vector<64x128xf32>, vector<64x128xf32> -> vector<64x128xf32>
    %c0_98 = arith.constant 0 : index
    %c0_99 = arith.constant 0 : index
    %c0_100 = arith.constant 0 : index
    %169 = vector.load %arg10[%c0_98, %c0_99, %c0_100] : memref<1x64x8xf32, #tpu.memory_space<vmem>>, vector<1x64x8xf32>
    %170 = vector.shape_cast %169 : vector<1x64x8xf32> to vector<64x8xf32>
    %171 = arith.truncf %137 : vector<8x128xf32> to vector<8x128xbf16>
    %cst_101 = arith.constant dense<0.000000e+00> : vector<8x128xf32>
    %172 = tpu.matmul %171, %62, %cst_101 {dimension_numbers = #tpu.dot_dimension_numbers<[1], [0], [0], [1], [0, 0, 1, 1], [], []>} : vector<8x128xbf16>, vector<128x128xbf16>, vector<8x128xf32> -> vector<8x128xf32>
    %cst_102 = arith.constant dense<0.000000e+00> : vector<64x128xf32>
    %173 = tpu.matmul %170, %172, %cst_102 {dimension_numbers = #tpu.dot_dimension_numbers<[1], [0], [0], [1], [0, 0, 1, 1], [], []>, precision = #tpu.contract_precision<fp32>} : vector<64x8xf32>, vector<8x128xf32>, vector<64x128xf32> -> vector<64x128xf32>
    %174 = arith.truncf %101 : vector<64x128xf32> to vector<64x128xbf16>
    %cst_103 = arith.constant dense<0.000000e+00> : vector<64x128xf32>
    %175 = tpu.matmul %174, %56, %cst_103 {dimension_numbers = #tpu.dot_dimension_numbers<[1], [0], [0], [1], [0, 0, 1, 1], [], []>} : vector<64x128xbf16>, vector<128x128xbf16>, vector<64x128xf32> -> vector<64x128xf32>
    %176 = arith.truncf %168 : vector<64x128xf32> to vector<64x128xbf16>
    %cst_104 = arith.constant dense<0.000000e+00> : vector<64x128xf32>
    %177 = tpu.matmul %176, %59, %cst_104 {dimension_numbers = #tpu.dot_dimension_numbers<[1], [0], [0], [1], [0, 0, 1, 1], [], []>} : vector<64x128xbf16>, vector<128x128xbf16>, vector<64x128xf32> -> vector<64x128xf32>
    %178 = arith.addf %175, %177 : vector<64x128xf32>
    %179 = arith.addf %178, %173 : vector<64x128xf32>
    %180 = vector.broadcast %65 : vector<1x128xf32> to vector<64x128xf32>
    %181 = arith.addf %179, %180 : vector<64x128xf32>
    %cst_105 = arith.constant 0.000000e+00 : f32
    %182 = vector.broadcast %cst_105 : f32 to vector<64x128xf32>
    %183 = arith.cmpf ogt, %181, %182 : vector<64x128xf32>
    %cst_106 = arith.constant 0.00999999977 : f32
    %184 = vector.broadcast %cst_106 : f32 to vector<64x128xf32>
    %185 = arith.mulf %184, %181 : vector<64x128xf32>
    %186 = arith.select %183, %181, %185 : vector<64x128xi1>, vector<64x128xf32>
    %c0_107 = arith.constant 0 : index
    %c0_108 = arith.constant 0 : index
    %c0_109 = arith.constant 0 : index
    %187 = vector.load %arg8[%c0_107, %c0_108, %c0_109] : memref<1x8x64xf32, #tpu.memory_space<vmem>>, vector<1x8x64xf32>
    %188 = vector.shape_cast %187 : vector<1x8x64xf32> to vector<8x64xf32>
    %cst_110 = arith.constant dense<0.000000e+00> : vector<8x128xf32>
    %189 = tpu.matmul %188, %186, %cst_110 {dimension_numbers = #tpu.dot_dimension_numbers<[1], [0], [0], [1], [0, 0, 1, 1], [], []>, precision = #tpu.contract_precision<fp32>} : vector<8x64xf32>, vector<64x128xf32>, vector<8x128xf32> -> vector<8x128xf32>
    %c0_111 = arith.constant 0 : index
    %c0_112 = arith.constant 0 : index
    %c0_113 = arith.constant 0 : index
    %190 = vector.load %arg9[%c0_111, %c0_112, %c0_113] : memref<1x8x64xf32, #tpu.memory_space<vmem>>, vector<1x8x64xf32>
    %191 = vector.shape_cast %190 : vector<1x8x64xf32> to vector<8x64xf32>
    %cst_114 = arith.constant dense<0.000000e+00> : vector<8x128xf32>
    %192 = tpu.matmul %191, %165, %cst_114 {dimension_numbers = #tpu.dot_dimension_numbers<[1], [0], [0], [1], [0, 0, 1, 1], [], []>, precision = #tpu.contract_precision<fp32>} : vector<8x64xf32>, vector<64x128xf32>, vector<8x128xf32> -> vector<8x128xf32>
    %193 = arith.truncf %189 : vector<8x128xf32> to vector<8x128xbf16>
    %cst_115 = arith.constant dense<0.000000e+00> : vector<8x128xf32>
    %194 = tpu.matmul %193, %68, %cst_115 {dimension_numbers = #tpu.dot_dimension_numbers<[1], [0], [0], [1], [0, 0, 1, 1], [], []>} : vector<8x128xbf16>, vector<128x128xbf16>, vector<8x128xf32> -> vector<8x128xf32>
    %195 = arith.truncf %192 : vector<8x128xf32> to vector<8x128xbf16>
    %cst_116 = arith.constant dense<0.000000e+00> : vector<8x128xf32>
    %196 = tpu.matmul %195, %71, %cst_116 {dimension_numbers = #tpu.dot_dimension_numbers<[1], [0], [0], [1], [0, 0, 1, 1], [], []>} : vector<8x128xbf16>, vector<128x128xbf16>, vector<8x128xf32> -> vector<8x128xf32>
    %197 = arith.addf %194, %196 : vector<8x128xf32>
    %198 = arith.truncf %137 : vector<8x128xf32> to vector<8x128xbf16>
    %cst_117 = arith.constant dense<0.000000e+00> : vector<8x128xf32>
    %199 = tpu.matmul %198, %74, %cst_117 {dimension_numbers = #tpu.dot_dimension_numbers<[1], [0], [0], [1], [0, 0, 1, 1], [], []>} : vector<8x128xbf16>, vector<128x128xbf16>, vector<8x128xf32> -> vector<8x128xf32>
    %200 = arith.addf %197, %199 : vector<8x128xf32>
    %201 = vector.broadcast %77 : vector<1x128xf32> to vector<8x128xf32>
    %202 = arith.addf %200, %201 : vector<8x128xf32>
    %cst_118 = arith.constant 0.000000e+00 : f32
    %203 = vector.broadcast %cst_118 : f32 to vector<8x128xf32>
    %204 = arith.cmpf ogt, %202, %203 : vector<8x128xf32>
    %cst_119 = arith.constant 0.00999999977 : f32
    %205 = vector.broadcast %cst_119 : f32 to vector<8x128xf32>
    %206 = arith.mulf %205, %202 : vector<8x128xf32>
    %207 = arith.select %204, %202, %206 : vector<8x128xi1>, vector<8x128xf32>
    %208 = arith.addf %186, %79 : vector<64x128xf32>
    %c0_120 = arith.constant 0 : index
    %c0_121 = arith.constant 0 : index
    %c0_122 = arith.constant 0 : index
    %209 = vector.load %arg37[%c0_120, %c0_121, %c0_122] : memref<1x64x128xf32, #tpu.memory_space<vmem>>, vector<1x64x128xf32>
    %210 = vector.shape_cast %209 : vector<1x64x128xf32> to vector<64x128xf32>
    %211 = vector.shape_cast %208 : vector<64x128xf32> to vector<1x64x128xf32>
    tpu.vector_store %arg37[%c0_120, %c0_121, %c0_122], %211 {strides = array<i32>} : memref<1x64x128xf32, #tpu.memory_space<vmem>>, vector<1x64x128xf32>,
    %212 = arith.addf %165, %81 : vector<64x128xf32>
    %c0_123 = arith.constant 0 : index
    %c0_124 = arith.constant 0 : index
    %c0_125 = arith.constant 0 : index
    %213 = vector.load %arg38[%c0_123, %c0_124, %c0_125] : memref<1x64x128xf32, #tpu.memory_space<vmem>>, vector<1x64x128xf32>
    %214 = vector.shape_cast %213 : vector<1x64x128xf32> to vector<64x128xf32>
    %215 = vector.shape_cast %212 : vector<64x128xf32> to vector<1x64x128xf32>
    tpu.vector_store %arg38[%c0_123, %c0_124, %c0_125], %215 {strides = array<i32>} : memref<1x64x128xf32, #tpu.memory_space<vmem>>, vector<1x64x128xf32>,
    %216 = arith.addf %207, %83 : vector<8x128xf32>
    %c0_126 = arith.constant 0 : index
    %c0_127 = arith.constant 0 : index
    %c0_128 = arith.constant 0 : index
    %217 = vector.load %arg39[%c0_126, %c0_127, %c0_128] : memref<1x8x128xf32, #tpu.memory_space<vmem>>, vector<1x8x128xf32>
    %218 = vector.shape_cast %217 : vector<1x8x128xf32> to vector<8x128xf32>
    %219 = vector.shape_cast %216 : vector<8x128xf32> to vector<1x8x128xf32>
    tpu.vector_store %arg39[%c0_126, %c0_127, %c0_128], %219 {strides = array<i32>} : memref<1x8x128xf32, #tpu.memory_space<vmem>>, vector<1x8x128xf32>,
    return
  }
  func.func @transform_0(%arg0: i32, %arg1: i32) -> (i32, i32, i32) {
    %c0_i32 = arith.constant 0 : i32
    %c0_i32_0 = arith.constant 0 : i32
    %c0_i32_1 = arith.constant 0 : i32
    return %arg0, %c0_i32, %c0_i32_0 : i32, i32, i32
  }
  func.func @transform_1(%arg0: i32, %arg1: i32) -> (i32, i32, i32) {
    %c0_i32 = arith.constant 0 : i32
    %c0_i32_0 = arith.constant 0 : i32
    %c0_i32_1 = arith.constant 0 : i32
    return %arg0, %c0_i32, %c0_i32_0 : i32, i32, i32
  }
  func.func @transform_2(%arg0: i32, %arg1: i32) -> (i32, i32, i32) {
    %c0_i32 = arith.constant 0 : i32
    %c0_i32_0 = arith.constant 0 : i32
    %c0_i32_1 = arith.constant 0 : i32
    return %arg0, %c0_i32, %c0_i32_0 : i32, i32, i32
  }
  func.func @transform_3(%arg0: i32, %arg1: i32) -> (i32, i32, i32) {
    %c0_i32 = arith.constant 0 : i32
    %c0_i32_0 = arith.constant 0 : i32
    %c0_i32_1 = arith.constant 0 : i32
    return %arg0, %c0_i32, %c0_i32_0 : i32, i32, i32
  }
  func.func @transform_4(%arg0: i32, %arg1: i32) -> (i32, i32, i32) {
    %c0_i32 = arith.constant 0 : i32
    %c0_i32_0 = arith.constant 0 : i32
    %c0_i32_1 = arith.constant 0 : i32
    return %arg0, %c0_i32, %c0_i32_0 : i32, i32, i32
  }
  func.func @transform_5(%arg0: i32, %arg1: i32) -> (i32, i32, i32) {
    %c0_i32 = arith.constant 0 : i32
    %c0_i32_0 = arith.constant 0 : i32
    %c0_i32_1 = arith.constant 0 : i32
    return %arg0, %c0_i32, %c0_i32_0 : i32, i32, i32
  }
  func.func @transform_6(%arg0: i32, %arg1: i32) -> (i32, i32, i32) {
    %c0_i32 = arith.constant 0 : i32
    %c0_i32_0 = arith.constant 0 : i32
    %c0_i32_1 = arith.constant 0 : i32
    return %arg0, %c0_i32, %c0_i32_0 : i32, i32, i32
  }
  func.func @transform_7(%arg0: i32, %arg1: i32) -> (i32, i32, i32) {
    %c0_i32 = arith.constant 0 : i32
    %c0_i32_0 = arith.constant 0 : i32
    %c0_i32_1 = arith.constant 0 : i32
    return %arg0, %c0_i32, %c0_i32_0 : i32, i32, i32
  }
  func.func @transform_8(%arg0: i32, %arg1: i32) -> (i32, i32, i32) {
    %c0_i32 = arith.constant 0 : i32
    %c0_i32_0 = arith.constant 0 : i32
    %c0_i32_1 = arith.constant 0 : i32
    return %arg0, %c0_i32, %c0_i32_0 : i32, i32, i32
  }
  func.func @transform_9(%arg0: i32, %arg1: i32) -> (i32, i32, i32) {
    %c0_i32 = arith.constant 0 : i32
    %c0_i32_0 = arith.constant 0 : i32
    %c0_i32_1 = arith.constant 0 : i32
    return %arg0, %c0_i32, %c0_i32_0 : i32, i32, i32
  }
  func.func @transform_10(%arg0: i32, %arg1: i32) -> (i32, i32, i32) {
    %c0_i32 = arith.constant 0 : i32
    %c0_i32_0 = arith.constant 0 : i32
    %c0_i32_1 = arith.constant 0 : i32
    %c0_i32_2 = arith.constant 0 : i32
    return %c0_i32, %c0_i32_0, %c0_i32_1 : i32, i32, i32
  }
  func.func @transform_11(%arg0: i32, %arg1: i32) -> (i32, i32, i32) {
    %c0_i32 = arith.constant 0 : i32
    %c0_i32_0 = arith.constant 0 : i32
    %c0_i32_1 = arith.constant 0 : i32
    %c0_i32_2 = arith.constant 0 : i32
    return %c0_i32, %c0_i32_0, %c0_i32_1 : i32, i32, i32
  }
  func.func @transform_12(%arg0: i32, %arg1: i32) -> (i32, i32, i32) {
    %c0_i32 = arith.constant 0 : i32
    %c0_i32_0 = arith.constant 0 : i32
    %c0_i32_1 = arith.constant 0 : i32
    %c0_i32_2 = arith.constant 0 : i32
    return %c0_i32, %c0_i32_0, %c0_i32_1 : i32, i32, i32
  }
  func.func @transform_13(%arg0: i32, %arg1: i32) -> (i32, i32, i32) {
    %c0_i32 = arith.constant 0 : i32
    %c0_i32_0 = arith.constant 0 : i32
    %c0_i32_1 = arith.constant 0 : i32
    %c0_i32_2 = arith.constant 0 : i32
    return %c0_i32, %c0_i32_0, %c0_i32_1 : i32, i32, i32
  }
  func.func @transform_14(%arg0: i32, %arg1: i32) -> (i32, i32, i32) {
    %c0_i32 = arith.constant 0 : i32
    %c0_i32_0 = arith.constant 0 : i32
    %c0_i32_1 = arith.constant 0 : i32
    %c0_i32_2 = arith.constant 0 : i32
    return %c0_i32, %c0_i32_0, %c0_i32_1 : i32, i32, i32
  }
  func.func @transform_15(%arg0: i32, %arg1: i32) -> (i32, i32, i32) {
    %c0_i32 = arith.constant 0 : i32
    %c0_i32_0 = arith.constant 0 : i32
    %c0_i32_1 = arith.constant 0 : i32
    %c0_i32_2 = arith.constant 0 : i32
    return %c0_i32, %c0_i32_0, %c0_i32_1 : i32, i32, i32
  }
  func.func @transform_16(%arg0: i32, %arg1: i32) -> (i32, i32, i32) {
    %c0_i32 = arith.constant 0 : i32
    %c0_i32_0 = arith.constant 0 : i32
    %c0_i32_1 = arith.constant 0 : i32
    %c0_i32_2 = arith.constant 0 : i32
    return %c0_i32, %c0_i32_0, %c0_i32_1 : i32, i32, i32
  }
  func.func @transform_17(%arg0: i32, %arg1: i32) -> (i32, i32, i32) {
    %c0_i32 = arith.constant 0 : i32
    %c0_i32_0 = arith.constant 0 : i32
    %c0_i32_1 = arith.constant 0 : i32
    %c0_i32_2 = arith.constant 0 : i32
    return %c0_i32, %c0_i32_0, %c0_i32_1 : i32, i32, i32
  }
  func.func @transform_18(%arg0: i32, %arg1: i32) -> (i32, i32, i32) {
    %c0_i32 = arith.constant 0 : i32
    %c0_i32_0 = arith.constant 0 : i32
    %c0_i32_1 = arith.constant 0 : i32
    %c0_i32_2 = arith.constant 0 : i32
    return %c0_i32, %c0_i32_0, %c0_i32_1 : i32, i32, i32
  }
  func.func @transform_19(%arg0: i32, %arg1: i32) -> (i32, i32, i32) {
    %c0_i32 = arith.constant 0 : i32
    %c0_i32_0 = arith.constant 0 : i32
    %c0_i32_1 = arith.constant 0 : i32
    %c0_i32_2 = arith.constant 0 : i32
    return %c0_i32, %c0_i32_0, %c0_i32_1 : i32, i32, i32
  }
  func.func @transform_20(%arg0: i32, %arg1: i32) -> (i32, i32, i32) {
    %c0_i32 = arith.constant 0 : i32
    %c0_i32_0 = arith.constant 0 : i32
    %c0_i32_1 = arith.constant 0 : i32
    %c0_i32_2 = arith.constant 0 : i32
    return %c0_i32, %c0_i32_0, %c0_i32_1 : i32, i32, i32
  }
  func.func @transform_21(%arg0: i32, %arg1: i32) -> (i32, i32, i32) {
    %c0_i32 = arith.constant 0 : i32
    %c0_i32_0 = arith.constant 0 : i32
    %c0_i32_1 = arith.constant 0 : i32
    %c0_i32_2 = arith.constant 0 : i32
    return %c0_i32, %c0_i32_0, %c0_i32_1 : i32, i32, i32
  }
  func.func @transform_22(%arg0: i32, %arg1: i32) -> (i32, i32, i32) {
    %c0_i32 = arith.constant 0 : i32
    %c0_i32_0 = arith.constant 0 : i32
    %c0_i32_1 = arith.constant 0 : i32
    %c0_i32_2 = arith.constant 0 : i32
    return %c0_i32, %c0_i32_0, %c0_i32_1 : i32, i32, i32
  }
  func.func @transform_23(%arg0: i32, %arg1: i32) -> (i32, i32, i32) {
    %c0_i32 = arith.constant 0 : i32
    %c0_i32_0 = arith.constant 0 : i32
    %c0_i32_1 = arith.constant 0 : i32
    %c0_i32_2 = arith.constant 0 : i32
    return %c0_i32, %c0_i32_0, %c0_i32_1 : i32, i32, i32
  }
  func.func @transform_24(%arg0: i32, %arg1: i32) -> (i32, i32, i32) {
    %c0_i32 = arith.constant 0 : i32
    %c0_i32_0 = arith.constant 0 : i32
    %c0_i32_1 = arith.constant 0 : i32
    %c0_i32_2 = arith.constant 0 : i32
    return %c0_i32, %c0_i32_0, %c0_i32_1 : i32, i32, i32
  }
  func.func @transform_25(%arg0: i32, %arg1: i32) -> (i32, i32, i32) {
    %c0_i32 = arith.constant 0 : i32
    %c0_i32_0 = arith.constant 0 : i32
    %c0_i32_1 = arith.constant 0 : i32
    %c0_i32_2 = arith.constant 0 : i32
    return %c0_i32, %c0_i32_0, %c0_i32_1 : i32, i32, i32
  }
  func.func @transform_26(%arg0: i32, %arg1: i32) -> (i32, i32, i32) {
    %c0_i32 = arith.constant 0 : i32
    %c0_i32_0 = arith.constant 0 : i32
    %c0_i32_1 = arith.constant 0 : i32
    %c0_i32_2 = arith.constant 0 : i32
    return %c0_i32, %c0_i32_0, %c0_i32_1 : i32, i32, i32
  }
  func.func @transform_27(%arg0: i32, %arg1: i32) -> (i32, i32, i32) {
    %c0_i32 = arith.constant 0 : i32
    %c0_i32_0 = arith.constant 0 : i32
    %c0_i32_1 = arith.constant 0 : i32
    %c0_i32_2 = arith.constant 0 : i32
    return %c0_i32, %c0_i32_0, %c0_i32_1 : i32, i32, i32
  }
  func.func @transform_28(%arg0: i32, %arg1: i32) -> (i32, i32, i32) {
    %c0_i32 = arith.constant 0 : i32
    %c0_i32_0 = arith.constant 0 : i32
    %c0_i32_1 = arith.constant 0 : i32
    %c0_i32_2 = arith.constant 0 : i32
    return %c0_i32, %c0_i32_0, %c0_i32_1 : i32, i32, i32
  }
  func.func @transform_29(%arg0: i32, %arg1: i32) -> (i32, i32, i32) {
    %c0_i32 = arith.constant 0 : i32
    %c0_i32_0 = arith.constant 0 : i32
    %c0_i32_1 = arith.constant 0 : i32
    %c0_i32_2 = arith.constant 0 : i32
    return %c0_i32, %c0_i32_0, %c0_i32_1 : i32, i32, i32
  }
  func.func @transform_30(%arg0: i32, %arg1: i32) -> (i32, i32, i32) {
    %c0_i32 = arith.constant 0 : i32
    %c0_i32_0 = arith.constant 0 : i32
    %c0_i32_1 = arith.constant 0 : i32
    %c0_i32_2 = arith.constant 0 : i32
    return %c0_i32, %c0_i32_0, %c0_i32_1 : i32, i32, i32
  }
  func.func @transform_31(%arg0: i32, %arg1: i32) -> (i32, i32, i32) {
    %c0_i32 = arith.constant 0 : i32
    %c0_i32_0 = arith.constant 0 : i32
    %c0_i32_1 = arith.constant 0 : i32
    %c0_i32_2 = arith.constant 0 : i32
    return %c0_i32, %c0_i32_0, %c0_i32_1 : i32, i32, i32
  }
  func.func @transform_32(%arg0: i32, %arg1: i32) -> (i32, i32, i32) {
    %c0_i32 = arith.constant 0 : i32
    %c0_i32_0 = arith.constant 0 : i32
    %c0_i32_1 = arith.constant 0 : i32
    %c0_i32_2 = arith.constant 0 : i32
    return %c0_i32, %c0_i32_0, %c0_i32_1 : i32, i32, i32
  }
  func.func @transform_33(%arg0: i32, %arg1: i32) -> (i32, i32, i32) {
    %c0_i32 = arith.constant 0 : i32
    %c0_i32_0 = arith.constant 0 : i32
    %c0_i32_1 = arith.constant 0 : i32
    %c0_i32_2 = arith.constant 0 : i32
    return %c0_i32, %c0_i32_0, %c0_i32_1 : i32, i32, i32
  }
  func.func @transform_34(%arg0: i32, %arg1: i32) -> (i32, i32, i32) {
    %c0_i32 = arith.constant 0 : i32
    %c0_i32_0 = arith.constant 0 : i32
    %c0_i32_1 = arith.constant 0 : i32
    %c0_i32_2 = arith.constant 0 : i32
    return %c0_i32, %c0_i32_0, %c0_i32_1 : i32, i32, i32
  }
  func.func @transform_35(%arg0: i32, %arg1: i32) -> (i32, i32, i32) {
    %c0_i32 = arith.constant 0 : i32
    %c0_i32_0 = arith.constant 0 : i32
    %c0_i32_1 = arith.constant 0 : i32
    return %arg0, %c0_i32, %c0_i32_0 : i32, i32, i32
  }
  func.func @transform_36(%arg0: i32, %arg1: i32) -> (i32, i32, i32) {
    %c0_i32 = arith.constant 0 : i32
    %c0_i32_0 = arith.constant 0 : i32
    %c0_i32_1 = arith.constant 0 : i32
    return %arg0, %c0_i32, %c0_i32_0 : i32, i32, i32
  }
  func.func @transform_37(%arg0: i32, %arg1: i32) -> (i32, i32, i32) {
    %c0_i32 = arith.constant 0 : i32
    %c0_i32_0 = arith.constant 0 : i32
    %c0_i32_1 = arith.constant 0 : i32
    return %arg0, %c0_i32, %c0_i32_0 : i32, i32, i32
  }
}

</mosaic_0001>

<llo_original>
// kernel: tpu_custom_call.1
$region0: #{tpu_custom_call.1}
  #allocation0 [shape = 'u32[]', space=smem, size = 0x4, offset = 0x4, fixed_abs, tag = 'smem constant byte address 0x4 - core index']
  #allocation1 [shape = 'u32[144,128]{1,0:T(1,128)}', space=vmem, size = 0x12000, scoped, tag = 'internal scratch']
  %s0 = inlined_call_operand.smem [shape: u32[38], index: -1, kind: input, shape index: {}]
  %s1 = sld [smem:[%s0]]
  %s2 = scalar_lea.smem %s0, 1
  %s3 = sld [smem:[%s2]]
  %s4 = scalar_lea.smem %s0, 2
  %s5 = sld [smem:[%s4]]
  %s6 = scalar_lea.smem %s0, 3
  %s7 = sld [smem:[%s6]]
  %s8 = scalar_lea.smem %s0, 4
  %s9 = sld [smem:[%s8]]
  %s10 = scalar_lea.smem %s0, 5
  %s11 = sld [smem:[%s10]]
  %s12 = scalar_lea.smem %s0, 6
  %s13 = sld [smem:[%s12]]
  %s14 = scalar_lea.smem %s0, 7
  %s15 = sld [smem:[%s14]]
  %s16 = scalar_lea.smem %s0, 8
  %s17 = sld [smem:[%s16]]
  %s18 = scalar_lea.smem %s0, 9
  %s19 = sld [smem:[%s18]]
  %s20 = scalar_lea.smem %s0, 10
  %s21 = sld [smem:[%s20]]
  %s22 = scalar_lea.smem %s0, 11
  %s23 = sld [smem:[%s22]]
  %s24 = scalar_lea.smem %s0, 12
  %s25 = sld [smem:[%s24]]
  %s26 = scalar_lea.smem %s0, 13
  %s27 = sld [smem:[%s26]]
  %s28 = scalar_lea.smem %s0, 14
  %s29 = sld [smem:[%s28]]
  %s30 = scalar_lea.smem %s0, 15
  %s31 = sld [smem:[%s30]]
  %s32 = scalar_lea.smem %s0, 16
  %s33 = sld [smem:[%s32]]
  %s34 = scalar_lea.smem %s0, 17
  %s35 = sld [smem:[%s34]]
  %s36 = scalar_lea.smem %s0, 18
  %s37 = sld [smem:[%s36]]
  %s38 = scalar_lea.smem %s0, 19
  %s39 = sld [smem:[%s38]]
  %s40 = scalar_lea.smem %s0, 20
  %s41 = sld [smem:[%s40]]
  %s42 = scalar_lea.smem %s0, 21
  %s43 = sld [smem:[%s42]]
  %s44 = scalar_lea.smem %s0, 22
  %s45 = sld [smem:[%s44]]
  %s46 = scalar_lea.smem %s0, 23
  %s47 = sld [smem:[%s46]]
  %s48 = scalar_lea.smem %s0, 24
  %s49 = sld [smem:[%s48]]
  %s50 = scalar_lea.smem %s0, 25
  %s51 = sld [smem:[%s50]]
  %s52 = scalar_lea.smem %s0, 26
  %s53 = sld [smem:[%s52]]
  %s54 = scalar_lea.smem %s0, 27
  %s55 = sld [smem:[%s54]]
  %s56 = scalar_lea.smem %s0, 28
  %s57 = sld [smem:[%s56]]
  %s58 = scalar_lea.smem %s0, 29
  %s59 = sld [smem:[%s58]]
  %s60 = scalar_lea.smem %s0, 30
  %s61 = sld [smem:[%s60]]
  %s62 = scalar_lea.smem %s0, 31
  %s63 = sld [smem:[%s62]]
  %s64 = scalar_lea.smem %s0, 32
  %s65 = sld [smem:[%s64]]
  %s66 = scalar_lea.smem %s0, 33
  %s67 = sld [smem:[%s66]]
  %s68 = scalar_lea.smem %s0, 34
  %s69 = sld [smem:[%s68]]
  %s70 = scalar_lea.smem %s0, 35
  %s71 = sld [smem:[%s70]]
  %s72 = scalar_lea.smem %s0, 36
  %s73 = sld [smem:[%s72]]
  %s74 = scalar_lea.smem %s0, 37
  %s75 = sld [smem:[%s74]]
  %76 = xla_tuple %s71, %s73, %s75
  %s77 = sld [smem:[#allocation0]]
  $region281: #{tpu_custom_call.1} parent=0
    _
  %s79 = ssub.s32 1, %s77
  %s80 = scalar_select 0, %s79, %s77
  $region1: #{tpu_custom_call.1} parent=0
    #allocation2 [shape = 'u8[65536]{0}', space=vmem, size = 0x10000, scoped, tag = 'input window, operand 0']
    #allocation3 [shape = 's32[2]{0}', space=sflag, size = 0x8, scoped, tag = 'scoped memory for tpu_custom_call.1']
    #allocation4 [shape = 's32[2]{0}', space=sflag, size = 0x8, scoped, tag = 'scoped memory for tpu_custom_call.1']
    #allocation5 [shape = 'u8[65536]{0}', space=vmem, size = 0x10000, scoped, tag = 'input window, operand 1']
    #allocation6 [shape = 's32[2]{0}', space=sflag, size = 0x8, scoped, tag = 'scoped memory for tpu_custom_call.1']
    #allocation7 [shape = 'u8[8192]{0}', space=vmem, size = 0x2000, scoped, tag = 'input window, operand 2']
    #allocation8 [shape = 'u8[32768]{0}', space=vmem, size = 0x8000, scoped, tag = 'input window, operand 4']
    #allocation9 [shape = 's32[2]{0}', space=sflag, size = 0x8, scoped, tag = 'scoped memory for tpu_custom_call.1']
    #allocation10 [shape = 'u8[65536]{0}', space=vmem, size = 0x10000, scoped, tag = 'input window, operand 5']
    #allocation11 [shape = 'u8[8192]{0}', space=vmem, size = 0x2000, scoped, tag = 'input window, operand 6']
    #allocation12 [shape = 's32[2]{0}', space=sflag, size = 0x8, scoped, tag = 'scoped memory for tpu_custom_call.1']
    #allocation13 [shape = 'u8[8192]{0}', space=vmem, size = 0x2000, scoped, tag = 'input window, operand 7']
    #allocation14 [shape = 'u8[131072]{0}', space=vmem, size = 0x20000, scoped, tag = 'input window, operand 12, single buffered']
    #allocation15 [shape = 's32[1]{0}', space=sflag, size = 0x4, scoped, tag = 'scoped memory for tpu_custom_call.1']
    #allocation16 [shape = 'u8[131072]{0}', space=vmem, size = 0x20000, scoped, tag = 'input window, operand 14, single buffered']
    #allocation17 [shape = 'u8[131072]{0}', space=vmem, size = 0x20000, scoped, tag = 'input window, operand 16, single buffered']
    #allocation18 [shape = 's32[1]{0}', space=sflag, size = 0x4, scoped, tag = 'scoped memory for tpu_custom_call.1']
    #allocation19 [shape = 'u8[131072]{0}', space=vmem, size = 0x20000, scoped, tag = 'input window, operand 18, single buffered']
    #allocation20 [shape = 'u8[131072]{0}', space=vmem, size = 0x20000, scoped, tag = 'input window, operand 20, single buffered']
    #allocation21 [shape = 's32[1]{0}', space=sflag, size = 0x4, scoped, tag = 'scoped memory for tpu_custom_call.1']
    #allocation22 [shape = 'u8[131072]{0}', space=vmem, size = 0x20000, scoped, tag = 'input window, operand 22, single buffered']
    #allocation23 [shape = 'u8[131072]{0}', space=vmem, size = 0x20000, scoped, tag = 'input window, operand 23, single buffered']
    #allocation24 [shape = 's32[1]{0}', space=sflag, size = 0x4, scoped, tag = 'scoped memory for tpu_custom_call.1']
    #allocation25 [shape = 'u8[131072]{0}', space=vmem, size = 0x20000, scoped, tag = 'input window, operand 24, single buffered']
    #allocation26 [shape = 'u8[131072]{0}', space=vmem, size = 0x20000, scoped, tag = 'input window, operand 25, single buffered']
    #allocation27 [shape = 's32[1]{0}', space=sflag, size = 0x4, scoped, tag = 'scoped memory for tpu_custom_call.1']
    #allocation28 [shape = 'u8[131072]{0}', space=vmem, size = 0x20000, scoped, tag = 'input window, operand 27, single buffered']
    #allocation29 [shape = 'u8[131072]{0}', space=vmem, size = 0x20000, scoped, tag = 'input window, operand 28, single buffered']
    #allocation30 [shape = 's32[1]{0}', space=sflag, size = 0x4, scoped, tag = 'scoped memory for tpu_custom_call.1']
    #allocation31 [shape = 'u8[131072]{0}', space=vmem, size = 0x20000, scoped, tag = 'input window, operand 29, single buffered']
    #allocation32 [shape = 'u8[131072]{0}', space=vmem, size = 0x20000, scoped, tag = 'input window, operand 31, single buffered']
    #allocation33 [shape = 's32[1]{0}', space=sflag, size = 0x4, scoped, tag = 'scoped memory for tpu_custom_call.1']
    #allocation34 [shape = 'u8[131072]{0}', space=vmem, size = 0x20000, scoped, tag = 'input window, operand 32, single buffered']
    #allocation35 [shape = 'u8[131072]{0}', space=vmem, size = 0x20000, scoped, tag = 'input window, operand 33, single buffered']
    #allocation36 [shape = 's32[1]{0}', space=sflag, size = 0x4, scoped, tag = 'scoped memory for tpu_custom_call.1']
    #allocation37 [shape = 'u8[65536]{0}', space=vmem, size = 0x10000, scoped, tag = 'output window, operand 0']
    #allocation38 [shape = 'u8[65536]{0}', space=vmem, size = 0x10000, scoped, tag = 'output window, operand 1']
    #allocation39 [shape = 's32[2]{0}', space=sflag, size = 0x8, scoped, tag = 'scoped memory for tpu_custom_call.1']
    #allocation40 [shape = 'u8[8192]{0}', space=vmem, size = 0x2000, scoped, tag = 'output window, operand 2']
    %81 = vsyncpa [#allocation3], 0
    %s82 = scalar_lea.sflag [#allocation3], 1
    %83 = vsyncpa %s82, 0
    %84 = vsyncpa [#allocation6], 0
    %s85 = scalar_lea.sflag [#allocation6], 1
    %86 = vsyncpa %s85, 0
    %87 = vsyncpa [#allocation9], 0
    %s88 = scalar_lea.sflag [#allocation9], 1
    %89 = vsyncpa %s88, 0
    %90 = vsyncpa [#allocation12], 0
    %s91 = scalar_lea.sflag [#allocation12], 1
    %92 = vsyncpa %s91, 0
    %93 = vsyncpa [#allocation15], 0
    %94 = vsyncpa [#allocation18], 0
    %95 = vsyncpa [#allocation21], 0
    %96 = vsyncpa [#allocation24], 0
    %97 = vsyncpa [#allocation27], 0
    %98 = vsyncpa [#allocation30], 0
    %99 = vsyncpa [#allocation33], 0
    %100 = vsyncpa [#allocation36], 0
    %101 = vsyncpa [#allocation4], 0
    %s102 = scalar_lea.sflag [#allocation4], 1
    %103 = vsyncpa %s102, 0
    %104 = vsyncpa [#allocation39], 0
    %s105 = scalar_lea.sflag [#allocation39], 1
    %106 = vsyncpa %s105, 0
    loop: start=0, step=1, limit=10
    $region2: #{tpu_custom_call.1} parent=1 // loop_pre_header
      _
    $region3: #{tpu_custom_call.1} parent=1 // loop_header
      %s108 = sphi 0, %s112
      %p109 = scmp.ge.s32.totalorder %s108, 10
      %s115 = sphi 0, %s127
      %s116 = sphi 0, %s123
      %s117 = sphi 0, %s115
      %s118 = sphi 0, %s116
      %s119 = sphi 0, %s117
      %s120 = sphi 0, %s118
      %s130 = sphi 0, %s132
      %s133 = sphi 0, %s130
      %s134 = sphi 0, %s133
      %s150 = sphi 0, %s134
      %s156 = sphi 0, %s158
      %s159 = sphi 0, %s156
      %s160 = sphi 0, %s159
      %s176 = sphi 0, %s160
      %s182 = sphi 0, %s184
      %s185 = sphi 0, %s182
      %s186 = sphi 0, %s185
      %s202 = sphi 0, %s186
      %s208 = sphi 0, %s210
      %s211 = sphi 0, %s208
      %s212 = sphi 0, %s211
      %s228 = sphi 0, %s212
      %s234 = sphi 0, %s236
      %s237 = sphi 0, %s234
      %s238 = sphi 0, %s237
      %s254 = sphi 0, %s238
      %s260 = sphi 0, %s262
      %s263 = sphi 0, %s260
      %s264 = sphi 0, %s263
      %s280 = sphi 0, %s264
      %s286 = sphi 0, %s288
      %s289 = sphi 0, %s286
      %s290 = sphi 0, %s289
      %s306 = sphi 0, %s290
      %s312 = sphi 0, %s314
      %s315 = sphi 0, %s312
      %s316 = sphi 0, %s315
      %s332 = sphi 0, %s316
      %s338 = sphi 0, %s340
      %s341 = sphi 0, %s338
      %s342 = sphi 0, %s341
      %s358 = sphi 0, %s342
      %s364 = sphi 0, %s366
      %s367 = sphi 0, %s364
      %s368 = sphi 0, %s367
      %s384 = sphi 0, %s368
      %s388 = sphi 0, %s388
      %s390 = sphi 0, %s388
      %s391 = sphi 0, %s390
      %s405 = sphi 0, %s391
      %s409 = sphi 0, %s409
      %s411 = sphi 0, %s409
      %s412 = sphi 0, %s411
      %s426 = sphi 0, %s412
      %s430 = sphi 0, %s430
      %s432 = sphi 0, %s430
      %s433 = sphi 0, %s432
      %s447 = sphi 0, %s433
      %s451 = sphi 0, %s451
      %s453 = sphi 0, %s451
      %s454 = sphi 0, %s453
      %s468 = sphi 0, %s454
      %s472 = sphi 0, %s472
      %s474 = sphi 0, %s472
      %s475 = sphi 0, %s474
      %s489 = sphi 0, %s475
      %s493 = sphi 0, %s493
      %s495 = sphi 0, %s493
      %s496 = sphi 0, %s495
      %s510 = sphi 0, %s496
      %s514 = sphi 0, %s514
      %s516 = sphi 0, %s514
      %s517 = sphi 0, %s516
      %s531 = sphi 0, %s517
      %s535 = sphi 0, %s535
      %s537 = sphi 0, %s535
      %s538 = sphi 0, %s537
      %s552 = sphi 0, %s538
      %s556 = sphi 0, %s556
      %s558 = sphi 0, %s556
      %s559 = sphi 0, %s558
      %s573 = sphi 0, %s559
      %s577 = sphi 0, %s577
      %s579 = sphi 0, %s577
      %s580 = sphi 0, %s579
      %s594 = sphi 0, %s580
      %s598 = sphi 0, %s598
      %s600 = sphi 0, %s598
      %s601 = sphi 0, %s600
      %s615 = sphi 0, %s601
      %s619 = sphi 0, %s619
      %s621 = sphi 0, %s619
      %s622 = sphi 0, %s621
      %s636 = sphi 0, %s622
      %s640 = sphi 0, %s640
      %s642 = sphi 0, %s640
      %s643 = sphi 0, %s642
      %s657 = sphi 0, %s643
      %s661 = sphi 0, %s661
      %s663 = sphi 0, %s661
      %s664 = sphi 0, %s663
      %s678 = sphi 0, %s664
      %s682 = sphi 0, %s682
      %s684 = sphi 0, %s682
      %s685 = sphi 0, %s684
      %s699 = sphi 0, %s685
      %s703 = sphi 0, %s703
      %s705 = sphi 0, %s703
      %s706 = sphi 0, %s705
      %s720 = sphi 0, %s706
      %s724 = sphi 0, %s724
      %s726 = sphi 0, %s724
      %s727 = sphi 0, %s726
      %s741 = sphi 0, %s727
      %s745 = sphi 0, %s745
      %s747 = sphi 0, %s745
      %s748 = sphi 0, %s747
      %s762 = sphi 0, %s748
      %s766 = sphi 0, %s766
      %s768 = sphi 0, %s766
      %s769 = sphi 0, %s768
      %s783 = sphi 0, %s769
      %s787 = sphi 0, %s787
      %s789 = sphi 0, %s787
      %s790 = sphi 0, %s789
      %s804 = sphi 0, %s790
      %s808 = sphi 0, %s808
      %s810 = sphi 0, %s808
      %s811 = sphi 0, %s810
      %s825 = sphi 0, %s811
      %s829 = sphi 0, %s829
      %s831 = sphi 0, %s829
      %s832 = sphi 0, %s831
      %s846 = sphi 0, %s832
      %s850 = sphi 0, %s850
      %s852 = sphi 0, %s850
      %s853 = sphi 0, %s852
      %s867 = sphi 0, %s853
      %s871 = sphi 0, %s871
      %s873 = sphi 0, %s871
      %s874 = sphi 0, %s873
      %s888 = sphi 0, %s874
      %s892 = sphi 0, %s892
      %s894 = sphi 0, %s892
      %s895 = sphi 0, %s894
      %s909 = sphi 0, %s895
      %s915 = sphi 0, %s917
      %s918 = sphi 0, %s915
      %s919 = sphi 0, %s918
      %s935 = sphi 0, %s919
      %s941 = sphi 0, %s943
      %s944 = sphi 0, %s941
      %s945 = sphi 0, %s944
      %s961 = sphi 0, %s945
      %s967 = sphi 0, %s969
      %s970 = sphi 0, %s967
      %s971 = sphi 0, %s970
      %s987 = sphi 0, %s971
    $region4: #{tpu_custom_call.1} parent=1 // loop_header_branch
      %111 = sbr.rel (%p109) target = $region8
    $region5: #{tpu_custom_call.1} parent=1 // loop_body
      %s113 = ssub.s32 %s108, 1
      %s114 = ssub.s32 %s108, 2
      %s121 = sadd.s32 1, %s116
      %p122 = scmp.ge.s32.totalorder %s121, 4
      %s123 = scalar_select %p122, 0, %s121
      %s124 = sadd.s32 1, %s115
      %s125 = scalar_select %p122, %s124, %s115
      %p126 = scmp.ge.s32.totalorder %s125, 2
      %s127 = scalar_select %p126, 0, %s125
      %s128 = ssub.s32 %s115, %s127
      %p129 = scmp.eq.s32.totalorder %s128, 0
      %s131 = sadd.s32 %s130, 1
      %s132 = scalar_select %p129, %s130, %s131
      %p135 = pneg %p129
      %p136 = scmp.eq.s32.totalorder %s108, 7
      %p137 = por %p135, %p136
      %p138 = scmp.ne.s32.totalorder %s130, %s133
      %p139 = scmp.eq.s32.totalorder %s108, 0
      %p140 = por %p138, %p139
      %p141 = scmp.ne.s32.totalorder %s130, %s133
      %p142 = scmp.eq.s32.totalorder %s113, 7
      %p143 = por %p141, %p142
      %p144 = scmp.ne.s32.totalorder %s133, %s134
      %p145 = scmp.eq.s32.totalorder %s113, 0
      %p146 = por %p144, %p145
      %p147 = scmp.ne.s32.totalorder %s133, %s134
      %p148 = scmp.eq.s32.totalorder %s114, 7
      %p149 = por %p147, %p148
      %p151 = scmp.ne.s32.totalorder %s134, %s150
      %p152 = scmp.eq.s32.totalorder %s114, 0
      %p153 = por %p151, %p152
      %s154 = ssub.s32 %s115, %s127
      %p155 = scmp.eq.s32.totalorder %s154, 0
      %s157 = sadd.s32 %s156, 1
      %s158 = scalar_select %p155, %s156, %s157
      %p161 = pneg %p155
      %p162 = scmp.eq.s32.totalorder %s108, 7
      %p163 = por %p161, %p162
      %p164 = scmp.ne.s32.totalorder %s156, %s159
      %p165 = scmp.eq.s32.totalorder %s108, 0
      %p166 = por %p164, %p165
      %p167 = scmp.ne.s32.totalorder %s156, %s159
      %p168 = scmp.eq.s32.totalorder %s113, 7
      %p169 = por %p167, %p168
      %p170 = scmp.ne.s32.totalorder %s159, %s160
      %p171 = scmp.eq.s32.totalorder %s113, 0
      %p172 = por %p170, %p171
      %p173 = scmp.ne.s32.totalorder %s159, %s160
      %p174 = scmp.eq.s32.totalorder %s114, 7
      %p175 = por %p173, %p174
      %p177 = scmp.ne.s32.totalorder %s160, %s176
      %p178 = scmp.eq.s32.totalorder %s114, 0
      %p179 = por %p177, %p178
      %s180 = ssub.s32 %s115, %s127
      %p181 = scmp.eq.s32.totalorder %s180, 0
      %s183 = sadd.s32 %s182, 1
      %s184 = scalar_select %p181, %s182, %s183
      %p187 = pneg %p181
      %p188 = scmp.eq.s32.totalorder %s108, 7
      %p189 = por %p187, %p188
      %p190 = scmp.ne.s32.totalorder %s182, %s185
      %p191 = scmp.eq.s32.totalorder %s108, 0
      %p192 = por %p190, %p191
      %p193 = scmp.ne.s32.totalorder %s182, %s185
      %p194 = scmp.eq.s32.totalorder %s113, 7
      %p195 = por %p193, %p194
      %p196 = scmp.ne.s32.totalorder %s185, %s186
      %p197 = scmp.eq.s32.totalorder %s113, 0
      %p198 = por %p196, %p197
      %p199 = scmp.ne.s32.totalorder %s185, %s186
      %p200 = scmp.eq.s32.totalorder %s114, 7
      %p201 = por %p199, %p200
      %p203 = scmp.ne.s32.totalorder %s186, %s202
      %p204 = scmp.eq.s32.totalorder %s114, 0
      %p205 = por %p203, %p204
      %s206 = ssub.s32 %s115, %s127
      %p207 = scmp.eq.s32.totalorder %s206, 0
      %s209 = sadd.s32 %s208, 1
      %s210 = scalar_select %p207, %s208, %s209
      %p213 = pneg %p207
      %p214 = scmp.eq.s32.totalorder %s108, 7
      %p215 = por %p213, %p214
      %p216 = scmp.ne.s32.totalorder %s208, %s211
      %p217 = scmp.eq.s32.totalorder %s108, 0
      %p218 = por %p216, %p217
      %p219 = scmp.ne.s32.totalorder %s208, %s211
      %p220 = scmp.eq.s32.totalorder %s113, 7
      %p221 = por %p219, %p220
      %p222 = scmp.ne.s32.totalorder %s211, %s212
      %p223 = scmp.eq.s32.totalorder %s113, 0
      %p224 = por %p222, %p223
      %p225 = scmp.ne.s32.totalorder %s211, %s212
      %p226 = scmp.eq.s32.totalorder %s114, 7
      %p227 = por %p225, %p226
      %p229 = scmp.ne.s32.totalorder %s212, %s228
      %p230 = scmp.eq.s32.totalorder %s114, 0
      %p231 = por %p229, %p230
      %s232 = ssub.s32 %s115, %s127
      %p233 = scmp.eq.s32.totalorder %s232, 0
      %s235 = sadd.s32 %s234, 1
      %s236 = scalar_select %p233, %s234, %s235
      %p239 = pneg %p233
      %p240 = scmp.eq.s32.totalorder %s108, 7
      %p241 = por %p239, %p240
      %p242 = scmp.ne.s32.totalorder %s234, %s237
      %p243 = scmp.eq.s32.totalorder %s108, 0
      %p244 = por %p242, %p243
      %p245 = scmp.ne.s32.totalorder %s234, %s237
      %p246 = scmp.eq.s32.totalorder %s113, 7
      %p247 = por %p245, %p246
      %p248 = scmp.ne.s32.totalorder %s237, %s238
      %p249 = scmp.eq.s32.totalorder %s113, 0
      %p250 = por %p248, %p249
      %p251 = scmp.ne.s32.totalorder %s237, %s238
      %p252 = scmp.eq.s32.totalorder %s114, 7
      %p253 = por %p251, %p252
      %p255 = scmp.ne.s32.totalorder %s238, %s254
      %p256 = scmp.eq.s32.totalorder %s114, 0
      %p257 = por %p255, %p256
      %s258 = ssub.s32 %s115, %s127
      %p259 = scmp.eq.s32.totalorder %s258, 0
      %s261 = sadd.s32 %s260, 1
      %s262 = scalar_select %p259, %s260, %s261
      %p265 = pneg %p259
      %p266 = scmp.eq.s32.totalorder %s108, 7
      %p267 = por %p265, %p266
      %p268 = scmp.ne.s32.totalorder %s260, %s263
      %p269 = scmp.eq.s32.totalorder %s108, 0
      %p270 = por %p268, %p269
      %p271 = scmp.ne.s32.totalorder %s260, %s263
      %p272 = scmp.eq.s32.totalorder %s113, 7
      %p273 = por %p271, %p272
      %p274 = scmp.ne.s32.totalorder %s263, %s264
      %p275 = scmp.eq.s32.totalorder %s113, 0
      %p276 = por %p274, %p275
      %p277 = scmp.ne.s32.totalorder %s263, %s264
      %p278 = scmp.eq.s32.totalorder %s114, 7
      %p279 = por %p277, %p278
      %p281 = scmp.ne.s32.totalorder %s264, %s280
      %p282 = scmp.eq.s32.totalorder %s114, 0
      %p283 = por %p281, %p282
      %s284 = ssub.s32 %s115, %s127
      %p285 = scmp.eq.s32.totalorder %s284, 0
      %s287 = sadd.s32 %s286, 1
      %s288 = scalar_select %p285, %s286, %s287
      %p291 = pneg %p285
      %p292 = scmp.eq.s32.totalorder %s108, 7
      %p293 = por %p291, %p292
      %p294 = scmp.ne.s32.totalorder %s286, %s289
      %p295 = scmp.eq.s32.totalorder %s108, 0
      %p296 = por %p294, %p295
      %p297 = scmp.ne.s32.totalorder %s286, %s289
      %p298 = scmp.eq.s32.totalorder %s113, 7
      %p299 = por %p297, %p298
      %p300 = scmp.ne.s32.totalorder %s289, %s290
      %p301 = scmp.eq.s32.totalorder %s113, 0
      %p302 = por %p300, %p301
      %p303 = scmp.ne.s32.totalorder %s289, %s290
      %p304 = scmp.eq.s32.totalorder %s114, 7
      %p305 = por %p303, %p304
      %p307 = scmp.ne.s32.totalorder %s290, %s306
      %p308 = scmp.eq.s32.totalorder %s114, 0
      %p309 = por %p307, %p308
      %s310 = ssub.s32 %s115, %s127
      %p311 = scmp.eq.s32.totalorder %s310, 0
      %s313 = sadd.s32 %s312, 1
      %s314 = scalar_select %p311, %s312, %s313
      %p317 = pneg %p311
      %p318 = scmp.eq.s32.totalorder %s108, 7
      %p319 = por %p317, %p318
      %p320 = scmp.ne.s32.totalorder %s312, %s315
      %p321 = scmp.eq.s32.totalorder %s108, 0
      %p322 = por %p320, %p321
      %p323 = scmp.ne.s32.totalorder %s312, %s315
      %p324 = scmp.eq.s32.totalorder %s113, 7
      %p325 = por %p323, %p324
      %p326 = scmp.ne.s32.totalorder %s315, %s316
      %p327 = scmp.eq.s32.totalorder %s113, 0
      %p328 = por %p326, %p327
      %p329 = scmp.ne.s32.totalorder %s315, %s316
      %p330 = scmp.eq.s32.totalorder %s114, 7
      %p331 = por %p329, %p330
      %p333 = scmp.ne.s32.totalorder %s316, %s332
      %p334 = scmp.eq.s32.totalorder %s114, 0
      %p335 = por %p333, %p334
      %s336 = ssub.s32 %s115, %s127
      %p337 = scmp.eq.s32.totalorder %s336, 0
      %s339 = sadd.s32 %s338, 1
      %s340 = scalar_select %p337, %s338, %s339
      %p343 = pneg %p337
      %p344 = scmp.eq.s32.totalorder %s108, 7
      %p345 = por %p343, %p344
      %p346 = scmp.ne.s32.totalorder %s338, %s341
      %p347 = scmp.eq.s32.totalorder %s108, 0
      %p348 = por %p346, %p347
      %p349 = scmp.ne.s32.totalorder %s338, %s341
      %p350 = scmp.eq.s32.totalorder %s113, 7
      %p351 = por %p349, %p350
      %p352 = scmp.ne.s32.totalorder %s341, %s342
      %p353 = scmp.eq.s32.totalorder %s113, 0
      %p354 = por %p352, %p353
      %p355 = scmp.ne.s32.totalorder %s341, %s342
      %p356 = scmp.eq.s32.totalorder %s114, 7
      %p357 = por %p355, %p356
      %p359 = scmp.ne.s32.totalorder %s342, %s358
      %p360 = scmp.eq.s32.totalorder %s114, 0
      %p361 = por %p359, %p360
      %s362 = ssub.s32 %s115, %s127
      %p363 = scmp.eq.s32.totalorder %s362, 0
      %s365 = sadd.s32 %s364, 1
      %s366 = scalar_select %p363, %s364, %s365
      %p369 = pneg %p363
      %p370 = scmp.eq.s32.totalorder %s108, 7
      %p371 = por %p369, %p370
      %p372 = scmp.ne.s32.totalorder %s364, %s367
      %p373 = scmp.eq.s32.totalorder %s108, 0
      %p374 = por %p372, %p373
      %p375 = scmp.ne.s32.totalorder %s364, %s367
      %p376 = scmp.eq.s32.totalorder %s113, 7
      %p377 = por %p375, %p376
      %p378 = scmp.ne.s32.totalorder %s367, %s368
      %p379 = scmp.eq.s32.totalorder %s113, 0
      %p380 = por %p378, %p379
      %p381 = scmp.ne.s32.totalorder %s367, %s368
      %p382 = scmp.eq.s32.totalorder %s114, 7
      %p383 = por %p381, %p382
      %p385 = scmp.ne.s32.totalorder %s368, %s384
      %p386 = scmp.eq.s32.totalorder %s114, 0
      %p387 = por %p385, %p386
      %s389 = sadd.s32 %s388, 1
      %p392 = scmp.eq.s32.totalorder %s108, 7
      %p393 = scmp.ne.s32.totalorder %s388, %s390
      %p394 = scmp.eq.s32.totalorder %s108, 0
      %p395 = por %p393, %p394
      %p396 = scmp.ne.s32.totalorder %s388, %s390
      %p397 = scmp.eq.s32.totalorder %s113, 7
      %p398 = por %p396, %p397
      %p399 = scmp.ne.s32.totalorder %s390, %s391
      %p400 = scmp.eq.s32.totalorder %s113, 0
      %p401 = por %p399, %p400
      %p402 = scmp.ne.s32.totalorder %s390, %s391
      %p403 = scmp.eq.s32.totalorder %s114, 7
      %p404 = por %p402, %p403
      %p406 = scmp.ne.s32.totalorder %s391, %s405
      %p407 = scmp.eq.s32.totalorder %s114, 0
      %p408 = por %p406, %p407
      %s410 = sadd.s32 %s409, 1
      %p413 = scmp.eq.s32.totalorder %s108, 7
      %p414 = scmp.ne.s32.totalorder %s409, %s411
      %p415 = scmp.eq.s32.totalorder %s108, 0
      %p416 = por %p414, %p415
      %p417 = scmp.ne.s32.totalorder %s409, %s411
      %p418 = scmp.eq.s32.totalorder %s113, 7
      %p419 = por %p417, %p418
      %p420 = scmp.ne.s32.totalorder %s411, %s412
      %p421 = scmp.eq.s32.totalorder %s113, 0
      %p422 = por %p420, %p421
      %p423 = scmp.ne.s32.totalorder %s411, %s412
      %p424 = scmp.eq.s32.totalorder %s114, 7
      %p425 = por %p423, %p424
      %p427 = scmp.ne.s32.totalorder %s412, %s426
      %p428 = scmp.eq.s32.totalorder %s114, 0
      %p429 = por %p427, %p428
      %s431 = sadd.s32 %s430, 1
      %p434 = scmp.eq.s32.totalorder %s108, 7
      %p435 = scmp.ne.s32.totalorder %s430, %s432
      %p436 = scmp.eq.s32.totalorder %s108, 0
      %p437 = por %p435, %p436
      %p438 = scmp.ne.s32.totalorder %s430, %s432
      %p439 = scmp.eq.s32.totalorder %s113, 7
      %p440 = por %p438, %p439
      %p441 = scmp.ne.s32.totalorder %s432, %s433
      %p442 = scmp.eq.s32.totalorder %s113, 0
      %p443 = por %p441, %p442
      %p444 = scmp.ne.s32.totalorder %s432, %s433
      %p445 = scmp.eq.s32.totalorder %s114, 7
      %p446 = por %p444, %p445
      %p448 = scmp.ne.s32.totalorder %s433, %s447
      %p449 = scmp.eq.s32.totalorder %s114, 0
      %p450 = por %p448, %p449
      %s452 = sadd.s32 %s451, 1
      %p455 = scmp.eq.s32.totalorder %s108, 7
      %p456 = scmp.ne.s32.totalorder %s451, %s453
      %p457 = scmp.eq.s32.totalorder %s108, 0
      %p458 = por %p456, %p457
      %p459 = scmp.ne.s32.totalorder %s451, %s453
      %p460 = scmp.eq.s32.totalorder %s113, 7
      %p461 = por %p459, %p460
      %p462 = scmp.ne.s32.totalorder %s453, %s454
      %p463 = scmp.eq.s32.totalorder %s113, 0
      %p464 = por %p462, %p463
      %p465 = scmp.ne.s32.totalorder %s453, %s454
      %p466 = scmp.eq.s32.totalorder %s114, 7
      %p467 = por %p465, %p466
      %p469 = scmp.ne.s32.totalorder %s454, %s468
      %p470 = scmp.eq.s32.totalorder %s114, 0
      %p471 = por %p469, %p470
      %s473 = sadd.s32 %s472, 1
      %p476 = scmp.eq.s32.totalorder %s108, 7
      %p477 = scmp.ne.s32.totalorder %s472, %s474
      %p478 = scmp.eq.s32.totalorder %s108, 0
      %p479 = por %p477, %p478
      %p480 = scmp.ne.s32.totalorder %s472, %s474
      %p481 = scmp.eq.s32.totalorder %s113, 7
      %p482 = por %p480, %p481
      %p483 = scmp.ne.s32.totalorder %s474, %s475
      %p484 = scmp.eq.s32.totalorder %s113, 0
      %p485 = por %p483, %p484
      %p486 = scmp.ne.s32.totalorder %s474, %s475
      %p487 = scmp.eq.s32.totalorder %s114, 7
      %p488 = por %p486, %p487
      %p490 = scmp.ne.s32.totalorder %s475, %s489
      %p491 = scmp.eq.s32.totalorder %s114, 0
      %p492 = por %p490, %p491
      %s494 = sadd.s32 %s493, 1
      %p497 = scmp.eq.s32.totalorder %s108, 7
      %p498 = scmp.ne.s32.totalorder %s493, %s495
      %p499 = scmp.eq.s32.totalorder %s108, 0
      %p500 = por %p498, %p499
      %p501 = scmp.ne.s32.totalorder %s493, %s495
      %p502 = scmp.eq.s32.totalorder %s113, 7
      %p503 = por %p501, %p502
      %p504 = scmp.ne.s32.totalorder %s495, %s496
      %p505 = scmp.eq.s32.totalorder %s113, 0
      %p506 = por %p504, %p505
      %p507 = scmp.ne.s32.totalorder %s495, %s496
      %p508 = scmp.eq.s32.totalorder %s114, 7
      %p509 = por %p507, %p508
      %p511 = scmp.ne.s32.totalorder %s496, %s510
      %p512 = scmp.eq.s32.totalorder %s114, 0
      %p513 = por %p511, %p512
      %s515 = sadd.s32 %s514, 1
      %p518 = scmp.eq.s32.totalorder %s108, 7
      %p519 = scmp.ne.s32.totalorder %s514, %s516
      %p520 = scmp.eq.s32.totalorder %s108, 0
      %p521 = por %p519, %p520
      %p522 = scmp.ne.s32.totalorder %s514, %s516
      %p523 = scmp.eq.s32.totalorder %s113, 7
      %p524 = por %p522, %p523
      %p525 = scmp.ne.s32.totalorder %s516, %s517
      %p526 = scmp.eq.s32.totalorder %s113, 0
      %p527 = por %p525, %p526
      %p528 = scmp.ne.s32.totalorder %s516, %s517
      %p529 = scmp.eq.s32.totalorder %s114, 7
      %p530 = por %p528, %p529
      %p532 = scmp.ne.s32.totalorder %s517, %s531
      %p533 = scmp.eq.s32.totalorder %s114, 0
      %p534 = por %p532, %p533
      %s536 = sadd.s32 %s535, 1
      %p539 = scmp.eq.s32.totalorder %s108, 7
      %p540 = scmp.ne.s32.totalorder %s535, %s537
      %p541 = scmp.eq.s32.totalorder %s108, 0
      %p542 = por %p540, %p541
      %p543 = scmp.ne.s32.totalorder %s535, %s537
      %p544 = scmp.eq.s32.totalorder %s113, 7
      %p545 = por %p543, %p544
      %p546 = scmp.ne.s32.totalorder %s537, %s538
      %p547 = scmp.eq.s32.totalorder %s113, 0
      %p548 = por %p546, %p547
      %p549 = scmp.ne.s32.totalorder %s537, %s538
      %p550 = scmp.eq.s32.totalorder %s114, 7
      %p551 = por %p549, %p550
      %p553 = scmp.ne.s32.totalorder %s538, %s552
      %p554 = scmp.eq.s32.totalorder %s114, 0
      %p555 = por %p553, %p554
      %s557 = sadd.s32 %s556, 1
      %p560 = scmp.eq.s32.totalorder %s108, 7
      %p561 = scmp.ne.s32.totalorder %s556, %s558
      %p562 = scmp.eq.s32.totalorder %s108, 0
      %p563 = por %p561, %p562
      %p564 = scmp.ne.s32.totalorder %s556, %s558
      %p565 = scmp.eq.s32.totalorder %s113, 7
      %p566 = por %p564, %p565
      %p567 = scmp.ne.s32.totalorder %s558, %s559
      %p568 = scmp.eq.s32.totalorder %s113, 0
      %p569 = por %p567, %p568
      %p570 = scmp.ne.s32.totalorder %s558, %s559
      %p571 = scmp.eq.s32.totalorder %s114, 7
      %p572 = por %p570, %p571
      %p574 = scmp.ne.s32.totalorder %s559, %s573
      %p575 = scmp.eq.s32.totalorder %s114, 0
      %p576 = por %p574, %p575
      %s578 = sadd.s32 %s577, 1
      %p581 = scmp.eq.s32.totalorder %s108, 7
      %p582 = scmp.ne.s32.totalorder %s577, %s579
      %p583 = scmp.eq.s32.totalorder %s108, 0
      %p584 = por %p582, %p583
      %p585 = scmp.ne.s32.totalorder %s577, %s579
      %p586 = scmp.eq.s32.totalorder %s113, 7
      %p587 = por %p585, %p586
      %p588 = scmp.ne.s32.totalorder %s579, %s580
      %p589 = scmp.eq.s32.totalorder %s113, 0
      %p590 = por %p588, %p589
      %p591 = scmp.ne.s32.totalorder %s579, %s580
      %p592 = scmp.eq.s32.totalorder %s114, 7
      %p593 = por %p591, %p592
      %p595 = scmp.ne.s32.totalorder %s580, %s594
      %p596 = scmp.eq.s32.totalorder %s114, 0
      %p597 = por %p595, %p596
      %s599 = sadd.s32 %s598, 1
      %p602 = scmp.eq.s32.totalorder %s108, 7
      %p603 = scmp.ne.s32.totalorder %s598, %s600
      %p604 = scmp.eq.s32.totalorder %s108, 0
      %p605 = por %p603, %p604
      %p606 = scmp.ne.s32.totalorder %s598, %s600
      %p607 = scmp.eq.s32.totalorder %s113, 7
      %p608 = por %p606, %p607
      %p609 = scmp.ne.s32.totalorder %s600, %s601
      %p610 = scmp.eq.s32.totalorder %s113, 0
      %p611 = por %p609, %p610
      %p612 = scmp.ne.s32.totalorder %s600, %s601
      %p613 = scmp.eq.s32.totalorder %s114, 7
      %p614 = por %p612, %p613
      %p616 = scmp.ne.s32.totalorder %s601, %s615
      %p617 = scmp.eq.s32.totalorder %s114, 0
      %p618 = por %p616, %p617
      %s620 = sadd.s32 %s619, 1
      %p623 = scmp.eq.s32.totalorder %s108, 7
      %p624 = scmp.ne.s32.totalorder %s619, %s621
      %p625 = scmp.eq.s32.totalorder %s108, 0
      %p626 = por %p624, %p625
      %p627 = scmp.ne.s32.totalorder %s619, %s621
      %p628 = scmp.eq.s32.totalorder %s113, 7
      %p629 = por %p627, %p628
      %p630 = scmp.ne.s32.totalorder %s621, %s622
      %p631 = scmp.eq.s32.totalorder %s113, 0
      %p632 = por %p630, %p631
      %p633 = scmp.ne.s32.totalorder %s621, %s622
      %p634 = scmp.eq.s32.totalorder %s114, 7
      %p635 = por %p633, %p634
      %p637 = scmp.ne.s32.totalorder %s622, %s636
      %p638 = scmp.eq.s32.totalorder %s114, 0
      %p639 = por %p637, %p638
      %s641 = sadd.s32 %s640, 1
      %p644 = scmp.eq.s32.totalorder %s108, 7
      %p645 = scmp.ne.s32.totalorder %s640, %s642
      %p646 = scmp.eq.s32.totalorder %s108, 0
      %p647 = por %p645, %p646
      %p648 = scmp.ne.s32.totalorder %s640, %s642
      %p649 = scmp.eq.s32.totalorder %s113, 7
      %p650 = por %p648, %p649
      %p651 = scmp.ne.s32.totalorder %s642, %s643
      %p652 = scmp.eq.s32.totalorder %s113, 0
      %p653 = por %p651, %p652
      %p654 = scmp.ne.s32.totalorder %s642, %s643
      %p655 = scmp.eq.s32.totalorder %s114, 7
      %p656 = por %p654, %p655
      %p658 = scmp.ne.s32.totalorder %s643, %s657
      %p659 = scmp.eq.s32.totalorder %s114, 0
      %p660 = por %p658, %p659
      %s662 = sadd.s32 %s661, 1
      %p665 = scmp.eq.s32.totalorder %s108, 7
      %p666 = scmp.ne.s32.totalorder %s661, %s663
      %p667 = scmp.eq.s32.totalorder %s108, 0
      %p668 = por %p666, %p667
      %p669 = scmp.ne.s32.totalorder %s661, %s663
      %p670 = scmp.eq.s32.totalorder %s113, 7
      %p671 = por %p669, %p670
      %p672 = scmp.ne.s32.totalorder %s663, %s664
      %p673 = scmp.eq.s32.totalorder %s113, 0
      %p674 = por %p672, %p673
      %p675 = scmp.ne.s32.totalorder %s663, %s664
      %p676 = scmp.eq.s32.totalorder %s114, 7
      %p677 = por %p675, %p676
      %p679 = scmp.ne.s32.totalorder %s664, %s678
      %p680 = scmp.eq.s32.totalorder %s114, 0
      %p681 = por %p679, %p680
      %s683 = sadd.s32 %s682, 1
      %p686 = scmp.eq.s32.totalorder %s108, 7
      %p687 = scmp.ne.s32.totalorder %s682, %s684
      %p688 = scmp.eq.s32.totalorder %s108, 0
      %p689 = por %p687, %p688
      %p690 = scmp.ne.s32.totalorder %s682, %s684
      %p691 = scmp.eq.s32.totalorder %s113, 7
      %p692 = por %p690, %p691
      %p693 = scmp.ne.s32.totalorder %s684, %s685
      %p694 = scmp.eq.s32.totalorder %s113, 0
      %p695 = por %p693, %p694
      %p696 = scmp.ne.s32.totalorder %s684, %s685
      %p697 = scmp.eq.s32.totalorder %s114, 7
      %p698 = por %p696, %p697
      %p700 = scmp.ne.s32.totalorder %s685, %s699
      %p701 = scmp.eq.s32.totalorder %s114, 0
      %p702 = por %p700, %p701
      %s704 = sadd.s32 %s703, 1
      %p707 = scmp.eq.s32.totalorder %s108, 7
      %p708 = scmp.ne.s32.totalorder %s703, %s705
      %p709 = scmp.eq.s32.totalorder %s108, 0
      %p710 = por %p708, %p709
      %p711 = scmp.ne.s32.totalorder %s703, %s705
      %p712 = scmp.eq.s32.totalorder %s113, 7
      %p713 = por %p711, %p712
      %p714 = scmp.ne.s32.totalorder %s705, %s706
      %p715 = scmp.eq.s32.totalorder %s113, 0
      %p716 = por %p714, %p715
      %p717 = scmp.ne.s32.totalorder %s705, %s706
      %p718 = scmp.eq.s32.totalorder %s114, 7
      %p719 = por %p717, %p718
      %p721 = scmp.ne.s32.totalorder %s706, %s720
      %p722 = scmp.eq.s32.totalorder %s114, 0
      %p723 = por %p721, %p722
      %s725 = sadd.s32 %s724, 1
      %p728 = scmp.eq.s32.totalorder %s108, 7
      %p729 = scmp.ne.s32.totalorder %s724, %s726
      %p730 = scmp.eq.s32.totalorder %s108, 0
      %p731 = por %p729, %p730
      %p732 = scmp.ne.s32.totalorder %s724, %s726
      %p733 = scmp.eq.s32.totalorder %s113, 7
      %p734 = por %p732, %p733
      %p735 = scmp.ne.s32.totalorder %s726, %s727
      %p736 = scmp.eq.s32.totalorder %s113, 0
      %p737 = por %p735, %p736
      %p738 = scmp.ne.s32.totalorder %s726, %s727
      %p739 = scmp.eq.s32.totalorder %s114, 7
      %p740 = por %p738, %p739
      %p742 = scmp.ne.s32.totalorder %s727, %s741
      %p743 = scmp.eq.s32.totalorder %s114, 0
      %p744 = por %p742, %p743
      %s746 = sadd.s32 %s745, 1
      %p749 = scmp.eq.s32.totalorder %s108, 7
      %p750 = scmp.ne.s32.totalorder %s745, %s747
      %p751 = scmp.eq.s32.totalorder %s108, 0
      %p752 = por %p750, %p751
      %p753 = scmp.ne.s32.totalorder %s745, %s747
      %p754 = scmp.eq.s32.totalorder %s113, 7
      %p755 = por %p753, %p754
      %p756 = scmp.ne.s32.totalorder %s747, %s748
      %p757 = scmp.eq.s32.totalorder %s113, 0
      %p758 = por %p756, %p757
      %p759 = scmp.ne.s32.totalorder %s747, %s748
      %p760 = scmp.eq.s32.totalorder %s114, 7
      %p761 = por %p759, %p760
      %p763 = scmp.ne.s32.totalorder %s748, %s762
      %p764 = scmp.eq.s32.totalorder %s114, 0
      %p765 = por %p763, %p764
      %s767 = sadd.s32 %s766, 1
      %p770 = scmp.eq.s32.totalorder %s108, 7
      %p771 = scmp.ne.s32.totalorder %s766, %s768
      %p772 = scmp.eq.s32.totalorder %s108, 0
      %p773 = por %p771, %p772
      %p774 = scmp.ne.s32.totalorder %s766, %s768
      %p775 = scmp.eq.s32.totalorder %s113, 7
      %p776 = por %p774, %p775
      %p777 = scmp.ne.s32.totalorder %s768, %s769
      %p778 = scmp.eq.s32.totalorder %s113, 0
      %p779 = por %p777, %p778
      %p780 = scmp.ne.s32.totalorder %s768, %s769
      %p781 = scmp.eq.s32.totalorder %s114, 7
      %p782 = por %p780, %p781
      %p784 = scmp.ne.s32.totalorder %s769, %s783
      %p785 = scmp.eq.s32.totalorder %s114, 0
      %p786 = por %p784, %p785
      %s788 = sadd.s32 %s787, 1
      %p791 = scmp.eq.s32.totalorder %s108, 7
      %p792 = scmp.ne.s32.totalorder %s787, %s789
      %p793 = scmp.eq.s32.totalorder %s108, 0
      %p794 = por %p792, %p793
      %p795 = scmp.ne.s32.totalorder %s787, %s789
      %p796 = scmp.eq.s32.totalorder %s113, 7
      %p797 = por %p795, %p796
      %p798 = scmp.ne.s32.totalorder %s789, %s790
      %p799 = scmp.eq.s32.totalorder %s113, 0
      %p800 = por %p798, %p799
      %p801 = scmp.ne.s32.totalorder %s789, %s790
      %p802 = scmp.eq.s32.totalorder %s114, 7
      %p803 = por %p801, %p802
      %p805 = scmp.ne.s32.totalorder %s790, %s804
      %p806 = scmp.eq.s32.totalorder %s114, 0
      %p807 = por %p805, %p806
      %s809 = sadd.s32 %s808, 1
      %p812 = scmp.eq.s32.totalorder %s108, 7
      %p813 = scmp.ne.s32.totalorder %s808, %s810
      %p814 = scmp.eq.s32.totalorder %s108, 0
      %p815 = por %p813, %p814
      %p816 = scmp.ne.s32.totalorder %s808, %s810
      %p817 = scmp.eq.s32.totalorder %s113, 7
      %p818 = por %p816, %p817
      %p819 = scmp.ne.s32.totalorder %s810, %s811
      %p820 = scmp.eq.s32.totalorder %s113, 0
      %p821 = por %p819, %p820
      %p822 = scmp.ne.s32.totalorder %s810, %s811
      %p823 = scmp.eq.s32.totalorder %s114, 7
      %p824 = por %p822, %p823
      %p826 = scmp.ne.s32.totalorder %s811, %s825
      %p827 = scmp.eq.s32.totalorder %s114, 0
      %p828 = por %p826, %p827
      %s830 = sadd.s32 %s829, 1
      %p833 = scmp.eq.s32.totalorder %s108, 7
      %p834 = scmp.ne.s32.totalorder %s829, %s831
      %p835 = scmp.eq.s32.totalorder %s108, 0
      %p836 = por %p834, %p835
      %p837 = scmp.ne.s32.totalorder %s829, %s831
      %p838 = scmp.eq.s32.totalorder %s113, 7
      %p839 = por %p837, %p838
      %p840 = scmp.ne.s32.totalorder %s831, %s832
      %p841 = scmp.eq.s32.totalorder %s113, 0
      %p842 = por %p840, %p841
      %p843 = scmp.ne.s32.totalorder %s831, %s832
      %p844 = scmp.eq.s32.totalorder %s114, 7
      %p845 = por %p843, %p844
      %p847 = scmp.ne.s32.totalorder %s832, %s846
      %p848 = scmp.eq.s32.totalorder %s114, 0
      %p849 = por %p847, %p848
      %s851 = sadd.s32 %s850, 1
      %p854 = scmp.eq.s32.totalorder %s108, 7
      %p855 = scmp.ne.s32.totalorder %s850, %s852
      %p856 = scmp.eq.s32.totalorder %s108, 0
      %p857 = por %p855, %p856
      %p858 = scmp.ne.s32.totalorder %s850, %s852
      %p859 = scmp.eq.s32.totalorder %s113, 7
      %p860 = por %p858, %p859
      %p861 = scmp.ne.s32.totalorder %s852, %s853
      %p862 = scmp.eq.s32.totalorder %s113, 0
      %p863 = por %p861, %p862
      %p864 = scmp.ne.s32.totalorder %s852, %s853
      %p865 = scmp.eq.s32.totalorder %s114, 7
      %p866 = por %p864, %p865
      %p868 = scmp.ne.s32.totalorder %s853, %s867
      %p869 = scmp.eq.s32.totalorder %s114, 0
      %p870 = por %p868, %p869
      %s872 = sadd.s32 %s871, 1
      %p875 = scmp.eq.s32.totalorder %s108, 7
      %p876 = scmp.ne.s32.totalorder %s871, %s873
      %p877 = scmp.eq.s32.totalorder %s108, 0
      %p878 = por %p876, %p877
      %p879 = scmp.ne.s32.totalorder %s871, %s873
      %p880 = scmp.eq.s32.totalorder %s113, 7
      %p881 = por %p879, %p880
      %p882 = scmp.ne.s32.totalorder %s873, %s874
      %p883 = scmp.eq.s32.totalorder %s113, 0
      %p884 = por %p882, %p883
      %p885 = scmp.ne.s32.totalorder %s873, %s874
      %p886 = scmp.eq.s32.totalorder %s114, 7
      %p887 = por %p885, %p886
      %p889 = scmp.ne.s32.totalorder %s874, %s888
      %p890 = scmp.eq.s32.totalorder %s114, 0
      %p891 = por %p889, %p890
      %s893 = sadd.s32 %s892, 1
      %p896 = scmp.eq.s32.totalorder %s108, 7
      %p897 = scmp.ne.s32.totalorder %s892, %s894
      %p898 = scmp.eq.s32.totalorder %s108, 0
      %p899 = por %p897, %p898
      %p900 = scmp.ne.s32.totalorder %s892, %s894
      %p901 = scmp.eq.s32.totalorder %s113, 7
      %p902 = por %p900, %p901
      %p903 = scmp.ne.s32.totalorder %s894, %s895
      %p904 = scmp.eq.s32.totalorder %s113, 0
      %p905 = por %p903, %p904
      %p906 = scmp.ne.s32.totalorder %s894, %s895
      %p907 = scmp.eq.s32.totalorder %s114, 7
      %p908 = por %p906, %p907
      %p910 = scmp.ne.s32.totalorder %s895, %s909
      %p911 = scmp.eq.s32.totalorder %s114, 0
      %p912 = por %p910, %p911
      %s913 = ssub.s32 %s115, %s127
      %p914 = scmp.eq.s32.totalorder %s913, 0
      %s916 = sadd.s32 %s915, 1
      %s917 = scalar_select %p914, %s915, %s916
      %p920 = pneg %p914
      %p921 = scmp.eq.s32.totalorder %s108, 7
      %p922 = por %p920, %p921
      %p923 = scmp.ne.s32.totalorder %s915, %s918
      %p924 = scmp.eq.s32.totalorder %s108, 0
      %p925 = por %p923, %p924
      %p926 = scmp.ne.s32.totalorder %s915, %s918
      %p927 = scmp.eq.s32.totalorder %s113, 7
      %p928 = por %p926, %p927
      %p929 = scmp.ne.s32.totalorder %s918, %s919
      %p930 = scmp.eq.s32.totalorder %s113, 0
      %p931 = por %p929, %p930
      %p932 = scmp.ne.s32.totalorder %s918, %s919
      %p933 = scmp.eq.s32.totalorder %s114, 7
      %p934 = por %p932, %p933
      %p936 = scmp.ne.s32.totalorder %s919, %s935
      %p937 = scmp.eq.s32.totalorder %s114, 0
      %p938 = por %p936, %p937
      %s939 = ssub.s32 %s115, %s127
      %p940 = scmp.eq.s32.totalorder %s939, 0
      %s942 = sadd.s32 %s941, 1
      %s943 = scalar_select %p940, %s941, %s942
      %p946 = pneg %p940
      %p947 = scmp.eq.s32.totalorder %s108, 7
      %p948 = por %p946, %p947
      %p949 = scmp.ne.s32.totalorder %s941, %s944
      %p950 = scmp.eq.s32.totalorder %s108, 0
      %p951 = por %p949, %p950
      %p952 = scmp.ne.s32.totalorder %s941, %s944
      %p953 = scmp.eq.s32.totalorder %s113, 7
      %p954 = por %p952, %p953
      %p955 = scmp.ne.s32.totalorder %s944, %s945
      %p956 = scmp.eq.s32.totalorder %s113, 0
      %p957 = por %p955, %p956
      %p958 = scmp.ne.s32.totalorder %s944, %s945
      %p959 = scmp.eq.s32.totalorder %s114, 7
      %p960 = por %p958, %p959
      %p962 = scmp.ne.s32.totalorder %s945, %s961
      %p963 = scmp.eq.s32.totalorder %s114, 0
      %p964 = por %p962, %p963
      %s965 = ssub.s32 %s115, %s127
      %p966 = scmp.eq.s32.totalorder %s965, 0
      %s968 = sadd.s32 %s967, 1
      %s969 = scalar_select %p966, %s967, %s968
      %p972 = pneg %p966
      %p973 = scmp.eq.s32.totalorder %s108, 7
      %p974 = por %p972, %p973
      %p975 = scmp.ne.s32.totalorder %s967, %s970
      %p976 = scmp.eq.s32.totalorder %s108, 0
      %p977 = por %p975, %p976
      %p978 = scmp.ne.s32.totalorder %s967, %s970
      %p979 = scmp.eq.s32.totalorder %s113, 7
      %p980 = por %p978, %p979
      %p981 = scmp.ne.s32.totalorder %s970, %s971
      %p982 = scmp.eq.s32.totalorder %s113, 0
      %p983 = por %p981, %p982
      %p984 = scmp.ne.s32.totalorder %s970, %s971
      %p985 = scmp.eq.s32.totalorder %s114, 7
      %p986 = por %p984, %p985
      %p988 = scmp.ne.s32.totalorder %s971, %s987
      %p989 = scmp.eq.s32.totalorder %s114, 0
      %p990 = por %p988, %p989
      %p991 = scmp.le.s32.totalorder 1, %s108
      %p992 = scmp.lt.s32.totalorder %s108, 9
      %p993 = pnand %p991, %p992
      %p994 = pneg %p993
      // Predicated region
      $region9: #{tpu_custom_call.1} parent=5 // pred_check
        _
      $region10: #{tpu_custom_call.1} parent=5 // pred_check_branch
        %996 = sbr.rel (%p993) target = $region12
      $region11: #{tpu_custom_call.1} parent=5 // pred_region
        %s997 = ssub.s32 %s108, 1
        // Predicated region
        $region13: #{tpu_custom_call.1} parent=11 // pred_check
          %p998 = pneg %p401
        $region14: #{tpu_custom_call.1} parent=11 // pred_check_branch
          %1000 = sbr.rel (%p998) target = $region16
        $region15: #{tpu_custom_call.1} parent=11 // pred_region
          _
        $region16: #{tpu_custom_call.1} parent=11 // pred_fallthru
          _
        // Predicated region
        $region17: #{tpu_custom_call.1} parent=11 // pred_check
          %p1001 = pneg %p422
        $region18: #{tpu_custom_call.1} parent=11 // pred_check_branch
          %1003 = sbr.rel (%p1001) target = $region20
        $region19: #{tpu_custom_call.1} parent=11 // pred_region
          _
        $region20: #{tpu_custom_call.1} parent=11 // pred_fallthru
          _
        // Predicated region
        $region21: #{tpu_custom_call.1} parent=11 // pred_check
          %p1004 = pneg %p443
        $region22: #{tpu_custom_call.1} parent=11 // pred_check_branch
          %1006 = sbr.rel (%p1004) target = $region24
        $region23: #{tpu_custom_call.1} parent=11 // pred_region
          %s1008 = ssub.s32 4096, 4096
          %1009 = vsyncadd [#allocation15], %s1008
          %s1010 = sshll.u32 [#allocation14], 4
          %s1011 = int_to_ptr.vmem [resolvable:$true] %s1010
          %1016 = dma.hbm_to_vmem [thread:$0]  %s25, 4096, %s1011, [#allocation15], 64, 64, 4
        $region24: #{tpu_custom_call.1} parent=11 // pred_fallthru
          _
        // Predicated region
        $region25: #{tpu_custom_call.1} parent=11 // pred_check
          %p1017 = pneg %p464
        $region26: #{tpu_custom_call.1} parent=11 // pred_check_branch
          %1019 = sbr.rel (%p1017) target = $region28
        $region27: #{tpu_custom_call.1} parent=11 // pred_region
          _
        $region28: #{tpu_custom_call.1} parent=11 // pred_fallthru
          _
        // Predicated region
        $region29: #{tpu_custom_call.1} parent=11 // pred_check
          %p1020 = pneg %p485
        $region30: #{tpu_custom_call.1} parent=11 // pred_check_branch
          %1022 = sbr.rel (%p1020) target = $region32
        $region31: #{tpu_custom_call.1} parent=11 // pred_region
          %s1024 = ssub.s32 4096, 4096
          %1025 = vsyncadd [#allocation15], %s1024
          %s1026 = sshll.u32 [#allocation16], 4
          %s1027 = int_to_ptr.vmem [resolvable:$true] %s1026
          %1032 = dma.hbm_to_vmem [thread:$0]  %s29, 4096, %s1027, [#allocation15], 64, 64, 4
        $region32: #{tpu_custom_call.1} parent=11 // pred_fallthru
          _
        // Predicated region
        $region33: #{tpu_custom_call.1} parent=11 // pred_check
          %p1033 = pneg %p506
        $region34: #{tpu_custom_call.1} parent=11 // pred_check_branch
          %1035 = sbr.rel (%p1033) target = $region36
        $region35: #{tpu_custom_call.1} parent=11 // pred_region
          _
        $region36: #{tpu_custom_call.1} parent=11 // pred_fallthru
          _
        // Predicated region
        $region37: #{tpu_custom_call.1} parent=11 // pred_check
          %p1036 = pneg %p527
        $region38: #{tpu_custom_call.1} parent=11 // pred_check_branch
          %1038 = sbr.rel (%p1036) target = $region40
        $region39: #{tpu_custom_call.1} parent=11 // pred_region
          %s1040 = ssub.s32 4096, 4096
          %1041 = vsyncadd [#allocation18], %s1040
          %s1042 = sshll.u32 [#allocation17], 4
          %s1043 = int_to_ptr.vmem [resolvable:$true] %s1042
          %1048 = dma.hbm_to_vmem [thread:$0]  %s33, 4096, %s1043, [#allocation18], 64, 64, 4
        $region40: #{tpu_custom_call.1} parent=11 // pred_fallthru
          _
        // Predicated region
        $region41: #{tpu_custom_call.1} parent=11 // pred_check
          %p1049 = pneg %p548
        $region42: #{tpu_custom_call.1} parent=11 // pred_check_branch
          %1051 = sbr.rel (%p1049) target = $region44
        $region43: #{tpu_custom_call.1} parent=11 // pred_region
          _
        $region44: #{tpu_custom_call.1} parent=11 // pred_fallthru
          _
        // Predicated region
        $region45: #{tpu_custom_call.1} parent=11 // pred_check
          %p1052 = pneg %p569
        $region46: #{tpu_custom_call.1} parent=11 // pred_check_branch
          %1054 = sbr.rel (%p1052) target = $region48
        $region47: #{tpu_custom_call.1} parent=11 // pred_region
          %s1056 = ssub.s32 4096, 4096
          %1057 = vsyncadd [#allocation18], %s1056
          %s1058 = sshll.u32 [#allocation19], 4
          %s1059 = int_to_ptr.vmem [resolvable:$true] %s1058
          %1064 = dma.hbm_to_vmem [thread:$0]  %s37, 4096, %s1059, [#allocation18], 64, 64, 4
        $region48: #{tpu_custom_call.1} parent=11 // pred_fallthru
          _
        // Predicated region
        $region49: #{tpu_custom_call.1} parent=11 // pred_check
          %p1065 = pneg %p590
        $region50: #{tpu_custom_call.1} parent=11 // pred_check_branch
          %1067 = sbr.rel (%p1065) target = $region52
        $region51: #{tpu_custom_call.1} parent=11 // pred_region
          _
        $region52: #{tpu_custom_call.1} parent=11 // pred_fallthru
          _
        // Predicated region
        $region53: #{tpu_custom_call.1} parent=11 // pred_check
          %p1068 = pneg %p611
        $region54: #{tpu_custom_call.1} parent=11 // pred_check_branch
          %1070 = sbr.rel (%p1068) target = $region56
        $region55: #{tpu_custom_call.1} parent=11 // pred_region
          %s1072 = ssub.s32 4096, 4096
          %1073 = vsyncadd [#allocation21], %s1072
          %s1074 = sshll.u32 [#allocation20], 4
          %s1075 = int_to_ptr.vmem [resolvable:$true] %s1074
          %1080 = dma.hbm_to_vmem [thread:$0]  %s41, 4096, %s1075, [#allocation21], 64, 64, 4
        $region56: #{tpu_custom_call.1} parent=11 // pred_fallthru
          _
        // Predicated region
        $region57: #{tpu_custom_call.1} parent=11 // pred_check
          %p1081 = pneg %p632
        $region58: #{tpu_custom_call.1} parent=11 // pred_check_branch
          %1083 = sbr.rel (%p1081) target = $region60
        $region59: #{tpu_custom_call.1} parent=11 // pred_region
          _
        $region60: #{tpu_custom_call.1} parent=11 // pred_fallthru
          _
        // Predicated region
        $region61: #{tpu_custom_call.1} parent=11 // pred_check
          %p1084 = pneg %p653
        $region62: #{tpu_custom_call.1} parent=11 // pred_check_branch
          %1086 = sbr.rel (%p1084) target = $region64
        $region63: #{tpu_custom_call.1} parent=11 // pred_region
          %s1088 = ssub.s32 4096, 4096
          %1089 = vsyncadd [#allocation21], %s1088
          %s1090 = sshll.u32 [#allocation22], 4
          %s1091 = int_to_ptr.vmem [resolvable:$true] %s1090
          %1096 = dma.hbm_to_vmem [thread:$0]  %s45, 4096, %s1091, [#allocation21], 64, 64, 4
        $region64: #{tpu_custom_call.1} parent=11 // pred_fallthru
          _
        // Predicated region
        $region65: #{tpu_custom_call.1} parent=11 // pred_check
          %p1097 = pneg %p674
        $region66: #{tpu_custom_call.1} parent=11 // pred_check_branch
          %1099 = sbr.rel (%p1097) target = $region68
        $region67: #{tpu_custom_call.1} parent=11 // pred_region
          %s1101 = ssub.s32 4096, 4096
          %1102 = vsyncadd [#allocation24], %s1101
          %s1103 = sshll.u32 [#allocation23], 4
          %s1104 = int_to_ptr.vmem [resolvable:$true] %s1103
          %1109 = dma.hbm_to_vmem [thread:$0]  %s47, 4096, %s1104, [#allocation24], 64, 64, 4
        $region68: #{tpu_custom_call.1} parent=11 // pred_fallthru
          _
        // Predicated region
        $region69: #{tpu_custom_call.1} parent=11 // pred_check
          %p1110 = pneg %p695
        $region70: #{tpu_custom_call.1} parent=11 // pred_check_branch
          %1112 = sbr.rel (%p1110) target = $region72
        $region71: #{tpu_custom_call.1} parent=11 // pred_region
          %s1114 = ssub.s32 4096, 4096
          %1115 = vsyncadd [#allocation24], %s1114
          %s1116 = sshll.u32 [#allocation25], 4
          %s1117 = int_to_ptr.vmem [resolvable:$true] %s1116
          %1122 = dma.hbm_to_vmem [thread:$0]  %s49, 4096, %s1117, [#allocation24], 64, 64, 4
        $region72: #{tpu_custom_call.1} parent=11 // pred_fallthru
          _
        // Predicated region
        $region73: #{tpu_custom_call.1} parent=11 // pred_check
          %p1123 = pneg %p716
        $region74: #{tpu_custom_call.1} parent=11 // pred_check_branch
          %1125 = sbr.rel (%p1123) target = $region76
        $region75: #{tpu_custom_call.1} parent=11 // pred_region
          %s1127 = ssub.s32 4096, 4096
          %1128 = vsyncadd [#allocation27], %s1127
          %s1129 = sshll.u32 [#allocation26], 4
          %s1130 = int_to_ptr.vmem [resolvable:$true] %s1129
          %1135 = dma.hbm_to_vmem [thread:$0]  %s51, 4096, %s1130, [#allocation27], 64, 64, 4
        $region76: #{tpu_custom_call.1} parent=11 // pred_fallthru
          _
        // Predicated region
        $region77: #{tpu_custom_call.1} parent=11 // pred_check
          %p1136 = pneg %p737
        $region78: #{tpu_custom_call.1} parent=11 // pred_check_branch
          %1138 = sbr.rel (%p1136) target = $region80
        $region79: #{tpu_custom_call.1} parent=11 // pred_region
          _
        $region80: #{tpu_custom_call.1} parent=11 // pred_fallthru
          _
        // Predicated region
        $region81: #{tpu_custom_call.1} parent=11 // pred_check
          %p1139 = pneg %p758
        $region82: #{tpu_custom_call.1} parent=11 // pred_check_branch
          %1141 = sbr.rel (%p1139) target = $region84
        $region83: #{tpu_custom_call.1} parent=11 // pred_region
          %s1143 = ssub.s32 4096, 4096
          %1144 = vsyncadd [#allocation27], %s1143
          %s1145 = sshll.u32 [#allocation28], 4
          %s1146 = int_to_ptr.vmem [resolvable:$true] %s1145
          %1151 = dma.hbm_to_vmem [thread:$0]  %s55, 4096, %s1146, [#allocation27], 64, 64, 4
        $region84: #{tpu_custom_call.1} parent=11 // pred_fallthru
          _
        // Predicated region
        $region85: #{tpu_custom_call.1} parent=11 // pred_check
          %p1152 = pneg %p779
        $region86: #{tpu_custom_call.1} parent=11 // pred_check_branch
          %1154 = sbr.rel (%p1152) target = $region88
        $region87: #{tpu_custom_call.1} parent=11 // pred_region
          %s1156 = ssub.s32 4096, 4096
          %1157 = vsyncadd [#allocation30], %s1156
          %s1158 = sshll.u32 [#allocation29], 4
          %s1159 = int_to_ptr.vmem [resolvable:$true] %s1158
          %1164 = dma.hbm_to_vmem [thread:$0]  %s57, 4096, %s1159, [#allocation30], 64, 64, 4
        $region88: #{tpu_custom_call.1} parent=11 // pred_fallthru
          _
        // Predicated region
        $region89: #{tpu_custom_call.1} parent=11 // pred_check
          %p1165 = pneg %p800
        $region90: #{tpu_custom_call.1} parent=11 // pred_check_branch
          %1167 = sbr.rel (%p1165) target = $region92
        $region91: #{tpu_custom_call.1} parent=11 // pred_region
          %s1169 = ssub.s32 4096, 4096
          %1170 = vsyncadd [#allocation30], %s1169
          %s1171 = sshll.u32 [#allocation31], 4
          %s1172 = int_to_ptr.vmem [resolvable:$true] %s1171
          %1177 = dma.hbm_to_vmem [thread:$0]  %s59, 4096, %s1172, [#allocation30], 64, 64, 4
        $region92: #{tpu_custom_call.1} parent=11 // pred_fallthru
          _
        // Predicated region
        $region93: #{tpu_custom_call.1} parent=11 // pred_check
          %p1178 = pneg %p821
        $region94: #{tpu_custom_call.1} parent=11 // pred_check_branch
          %1180 = sbr.rel (%p1178) target = $region96
        $region95: #{tpu_custom_call.1} parent=11 // pred_region
          _
        $region96: #{tpu_custom_call.1} parent=11 // pred_fallthru
          _
        // Predicated region
        $region97: #{tpu_custom_call.1} parent=11 // pred_check
          %p1181 = pneg %p842
        $region98: #{tpu_custom_call.1} parent=11 // pred_check_branch
          %1183 = sbr.rel (%p1181) target = $region100
        $region99: #{tpu_custom_call.1} parent=11 // pred_region
          %s1185 = ssub.s32 4096, 4096
          %1186 = vsyncadd [#allocation33], %s1185
          %s1187 = sshll.u32 [#allocation32], 4
          %s1188 = int_to_ptr.vmem [resolvable:$true] %s1187
          %1193 = dma.hbm_to_vmem [thread:$0]  %s63, 4096, %s1188, [#allocation33], 64, 64, 4
        $region100: #{tpu_custom_call.1} parent=11 // pred_fallthru
          _
        // Predicated region
        $region101: #{tpu_custom_call.1} parent=11 // pred_check
          %p1194 = pneg %p863
        $region102: #{tpu_custom_call.1} parent=11 // pred_check_branch
          %1196 = sbr.rel (%p1194) target = $region104
        $region103: #{tpu_custom_call.1} parent=11 // pred_region
          %s1198 = ssub.s32 4096, 4096
          %1199 = vsyncadd [#allocation33], %s1198
          %s1200 = sshll.u32 [#allocation34], 4
          %s1201 = int_to_ptr.vmem [resolvable:$true] %s1200
          %1206 = dma.hbm_to_vmem [thread:$0]  %s65, 4096, %s1201, [#allocation33], 64, 64, 4
        $region104: #{tpu_custom_call.1} parent=11 // pred_fallthru
          _
        // Predicated region
        $region105: #{tpu_custom_call.1} parent=11 // pred_check
          %p1207 = pneg %p884
        $region106: #{tpu_custom_call.1} parent=11 // pred_check_branch
          %1209 = sbr.rel (%p1207) target = $region108
        $region107: #{tpu_custom_call.1} parent=11 // pred_region
          %s1211 = ssub.s32 4096, 4096
          %1212 = vsyncadd [#allocation36], %s1211
          %s1213 = sshll.u32 [#allocation35], 4
          %s1214 = int_to_ptr.vmem [resolvable:$true] %s1213
          %1219 = dma.hbm_to_vmem [thread:$0]  %s67, 4096, %s1214, [#allocation36], 64, 64, 4
        $region108: #{tpu_custom_call.1} parent=11 // pred_fallthru
          _
        // Predicated region
        $region109: #{tpu_custom_call.1} parent=11 // pred_check
          %p1220 = pneg %p905
        $region110: #{tpu_custom_call.1} parent=11 // pred_check_branch
          %1222 = sbr.rel (%p1220) target = $region112
        $region111: #{tpu_custom_call.1} parent=11 // pred_region
          _
        $region112: #{tpu_custom_call.1} parent=11 // pred_fallthru
          _
      $region12: #{tpu_custom_call.1} parent=5 // pred_fallthru
        _
      %p1223 = scmp.lt.s32.totalorder %s108, 8
      // Predicated region
      $region113: #{tpu_custom_call.1} parent=5 // pred_check
        %p1224 = pneg %p1223
      $region114: #{tpu_custom_call.1} parent=5 // pred_check_branch
        %1226 = sbr.rel (%p1224) target = $region116
      $region115: #{tpu_custom_call.1} parent=5 // pred_region
        // Predicated region
        $region117: #{tpu_custom_call.1} parent=115 // pred_check
          %p1227 = pneg %p140
        $region118: #{tpu_custom_call.1} parent=115 // pred_check_branch
          %1229 = sbr.rel (%p1227) target = $region120
        $region119: #{tpu_custom_call.1} parent=115 // pred_region
          %s1230 = sand.u32 %s130, 1
          %s1231 = scalar_lea.sflag [#allocation3], %s1230
          %s1232 = sand.u32 %s130, 1
          %s1233 = smul.addr %s1232, 64
          %s1234 = scalar_lea.vmem [#allocation2], %s1233
          %s1236 = ssub.s32 1024, 1024
          %1237 = vsyncadd %s1231, %s1236
          %s1238 = smul.addr %s115, 8
          %s1239 = smul.addr %s1238, 128
          %s1240 = scalar_lea.hbm %s1, %s1239
          %s1241 = sshll.u32 %s1234, 4
          %s1242 = int_to_ptr.vmem [resolvable:$true] %s1241
          %1247 = dma.hbm_to_vmem [thread:$0]  %s1240, 1024, %s1242, %s1231, 128, 128, 8
        $region120: #{tpu_custom_call.1} parent=115 // pred_fallthru
          _
        // Predicated region
        $region121: #{tpu_custom_call.1} parent=115 // pred_check
          %p1248 = pneg %p166
        $region122: #{tpu_custom_call.1} parent=115 // pred_check_branch
          %1250 = sbr.rel (%p1248) target = $region124
        $region123: #{tpu_custom_call.1} parent=115 // pred_region
          %s1251 = sand.u32 %s108, 1
          %s1252 = scalar_lea.sflag [#allocation6], %s1251
          %s1253 = sand.u32 %s156, 1
          %s1254 = smul.addr %s1253, 64
          %s1255 = scalar_lea.vmem [#allocation5], %s1254
          %s1257 = ssub.s32 1024, 1024
          %1258 = vsyncadd %s1252, %s1257
          %s1259 = smul.addr %s115, 8
          %s1260 = smul.addr %s1259, 128
          %s1261 = scalar_lea.hbm %s3, %s1260
          %s1262 = sshll.u32 %s1255, 4
          %s1263 = int_to_ptr.vmem [resolvable:$true] %s1262
          %1268 = dma.hbm_to_vmem [thread:$0]  %s1261, 1024, %s1263, %s1252, 128, 128, 8
        $region124: #{tpu_custom_call.1} parent=115 // pred_fallthru
          _
        // Predicated region
        $region125: #{tpu_custom_call.1} parent=115 // pred_check
          %p1269 = pneg %p192
        $region126: #{tpu_custom_call.1} parent=115 // pred_check_branch
          %1271 = sbr.rel (%p1269) target = $region128
        $region127: #{tpu_custom_call.1} parent=115 // pred_region
          %s1272 = sand.u32 %s108, 1
          %s1273 = scalar_lea.sflag [#allocation6], %s1272
          %s1274 = sand.u32 %s182, 1
          %s1275 = smul.addr %s1274, 8
          %s1276 = scalar_lea.vmem [#allocation7], %s1275
          %s1278 = ssub.s32 128, 128
          %1279 = vsyncadd %s1273, %s1278
          %s1280 = smul.addr %s115, 128
          %s1281 = scalar_lea.hbm %s5, %s1280
          %s1283 = sshll.u32 %s1276, 4
          %s1284 = int_to_ptr.vmem [resolvable:$true] %s1283
          %1286 = dma.hbm_to_vmem [thread:$0]  %s1281, 128, %s1284, %s1273
        $region128: #{tpu_custom_call.1} parent=115 // pred_fallthru
          _
        // Predicated region
        $region129: #{tpu_custom_call.1} parent=115 // pred_check
          %p1287 = pneg %p218
        $region130: #{tpu_custom_call.1} parent=115 // pred_check_branch
          %1289 = sbr.rel (%p1287) target = $region132
        $region131: #{tpu_custom_call.1} parent=115 // pred_region
          %p1290 = scmp.lt.s32.totalorder %s115, 1
          %s1291 = scalar_select %p1290, %s115, 1
          %s1292 = smul.addr %s1291, 8
          %s1293 = smul.addr %s1292, 4
          %s1294 = scalar_lea.vmem %s7, %s1293
        $region132: #{tpu_custom_call.1} parent=115 // pred_fallthru
          _
        // Predicated region
        $region133: #{tpu_custom_call.1} parent=115 // pred_check
          %p1295 = pneg %p244
        $region134: #{tpu_custom_call.1} parent=115 // pred_check_branch
          %1297 = sbr.rel (%p1295) target = $region136
        $region135: #{tpu_custom_call.1} parent=115 // pred_region
          %s1298 = sand.u32 %s108, 1
          %s1299 = scalar_lea.sflag [#allocation9], %s1298
          %s1300 = sand.u32 %s234, 1
          %s1301 = smul.addr %s1300, 32
          %s1302 = scalar_lea.vmem [#allocation8], %s1301
          %s1304 = ssub.s32 512, 512
          %1305 = vsyncadd %s1299, %s1304
          %s1306 = smul.addr %s115, 8
          %s1307 = smul.addr %s1306, 64
          %s1308 = scalar_lea.hbm %s9, %s1307
          %s1309 = sshll.u32 %s1302, 4
          %s1310 = int_to_ptr.vmem [resolvable:$true] %s1309
          %1315 = dma.hbm_to_vmem [thread:$0]  %s1308, 512, %s1310, %s1299, 64, 64, 4
        $region136: #{tpu_custom_call.1} parent=115 // pred_fallthru
          _
        // Predicated region
        $region137: #{tpu_custom_call.1} parent=115 // pred_check
          %p1316 = pneg %p270
        $region138: #{tpu_custom_call.1} parent=115 // pred_check_branch
          %1318 = sbr.rel (%p1316) target = $region140
        $region139: #{tpu_custom_call.1} parent=115 // pred_region
          %s1319 = sand.u32 %s108, 1
          %s1320 = scalar_lea.sflag [#allocation9], %s1319
          %s1321 = sand.u32 %s260, 1
          %s1322 = smul.addr %s1321, 64
          %s1323 = scalar_lea.vmem [#allocation10], %s1322
          %s1325 = ssub.s32 1024, 1024
          %1326 = vsyncadd %s1320, %s1325
          %s1327 = smul.addr %s115, 8
          %s1328 = smul.addr %s1327, 128
          %s1329 = scalar_lea.hbm %s11, %s1328
          %s1330 = sshll.u32 %s1323, 4
          %s1331 = int_to_ptr.vmem [resolvable:$true] %s1330
          %1336 = dma.hbm_to_vmem [thread:$0]  %s1329, 1024, %s1331, %s1320, 128, 128, 8
        $region140: #{tpu_custom_call.1} parent=115 // pred_fallthru
          _
        // Predicated region
        $region141: #{tpu_custom_call.1} parent=115 // pred_check
          %p1337 = pneg %p296
        $region142: #{tpu_custom_call.1} parent=115 // pred_check_branch
          %1339 = sbr.rel (%p1337) target = $region144
        $region143: #{tpu_custom_call.1} parent=115 // pred_region
          %s1340 = sand.u32 %s108, 1
          %s1341 = scalar_lea.sflag [#allocation12], %s1340
          %s1342 = sand.u32 %s286, 1
          %s1343 = smul.addr %s1342, 8
          %s1344 = scalar_lea.vmem [#allocation11], %s1343
          %s1346 = ssub.s32 128, 128
          %1347 = vsyncadd %s1341, %s1346
          %s1348 = smul.addr %s115, 128
          %s1349 = scalar_lea.hbm %s13, %s1348
          %s1351 = sshll.u32 %s1344, 4
          %s1352 = int_to_ptr.vmem [resolvable:$true] %s1351
          %1354 = dma.hbm_to_vmem [thread:$0]  %s1349, 128, %s1352, %s1341
        $region144: #{tpu_custom_call.1} parent=115 // pred_fallthru
          _
        // Predicated region
        $region145: #{tpu_custom_call.1} parent=115 // pred_check
          %p1355 = pneg %p322
        $region146: #{tpu_custom_call.1} parent=115 // pred_check_branch
          %1357 = sbr.rel (%p1355) target = $region148
        $region147: #{tpu_custom_call.1} parent=115 // pred_region
          %s1358 = sand.u32 %s108, 1
          %s1359 = scalar_lea.sflag [#allocation12], %s1358
          %s1360 = sand.u32 %s312, 1
          %s1361 = smul.addr %s1360, 8
          %s1362 = scalar_lea.vmem [#allocation13], %s1361
          %s1364 = ssub.s32 128, 128
          %1365 = vsyncadd %s1359, %s1364
          %s1366 = smul.addr %s115, 128
          %s1367 = scalar_lea.hbm %s15, %s1366
          %s1369 = sshll.u32 %s1362, 4
          %s1370 = int_to_ptr.vmem [resolvable:$true] %s1369
          %1372 = dma.hbm_to_vmem [thread:$0]  %s1367, 128, %s1370, %s1359
        $region148: #{tpu_custom_call.1} parent=115 // pred_fallthru
          _
        // Predicated region
        $region149: #{tpu_custom_call.1} parent=115 // pred_check
          %p1373 = pneg %p348
        $region150: #{tpu_custom_call.1} parent=115 // pred_check_branch
          %1375 = sbr.rel (%p1373) target = $region152
        $region151: #{tpu_custom_call.1} parent=115 // pred_region
          %p1376 = scmp.lt.s32.totalorder %s115, 1
          %s1377 = scalar_select %p1376, %s115, 1
          %s1378 = smul.addr %s1377, 8
          %s1379 = smul.addr %s1378, 8
          %s1380 = scalar_lea.vmem %s17, %s1379
        $region152: #{tpu_custom_call.1} parent=115 // pred_fallthru
          _
        // Predicated region
        $region153: #{tpu_custom_call.1} parent=115 // pred_check
          %p1381 = pneg %p374
        $region154: #{tpu_custom_call.1} parent=115 // pred_check_branch
          %1383 = sbr.rel (%p1381) target = $region156
        $region155: #{tpu_custom_call.1} parent=115 // pred_region
          %p1384 = scmp.lt.s32.totalorder %s115, 1
          %s1385 = scalar_select %p1384, %s115, 1
          %s1386 = smul.addr %s1385, 8
          %s1387 = smul.addr %s1386, 8
          %s1388 = scalar_lea.vmem %s19, %s1387
        $region156: #{tpu_custom_call.1} parent=115 // pred_fallthru
          _
      $region116: #{tpu_custom_call.1} parent=5 // pred_fallthru
        _
      %p1389 = scmp.le.s32.totalorder 1, %s108
      %p1390 = scmp.lt.s32.totalorder %s108, 9
      %p1391 = pnand %p1389, %p1390
      %p1392 = pneg %p1391
      // Predicated region
      $region157: #{tpu_custom_call.1} parent=5 // pred_check
        _
      $region158: #{tpu_custom_call.1} parent=5 // pred_check_branch
        %1394 = sbr.rel (%p1391) target = $region160
      $region159: #{tpu_custom_call.1} parent=5 // pred_region
        %s1395 = ssub.s32 %s108, 1
        %s1396 = sand.u32 %s133, 1
        %s1397 = scalar_lea.sflag [#allocation3], %s1396
        %s1398 = sand.u32 %s133, 1
        %s1399 = smul.addr %s1398, 64
        %s1400 = scalar_lea.vmem [#allocation2], %s1399
        // Predicated region
        $region161: #{tpu_custom_call.1} parent=159 // pred_check
          %p1401 = pneg %p146
        $region162: #{tpu_custom_call.1} parent=159 // pred_check_branch
          %1403 = sbr.rel (%p1401) target = $region164
        $region163: #{tpu_custom_call.1} parent=159 // pred_region
          %1404 = dma.done %s1397, 1024
        $region164: #{tpu_custom_call.1} parent=159 // pred_fallthru
          _
        %s1405 = sand.u32 %s113, 1
        %s1406 = scalar_lea.sflag [#allocation6], %s1405
        %s1407 = sand.u32 %s159, 1
        %s1408 = smul.addr %s1407, 64
        %s1409 = scalar_lea.vmem [#allocation5], %s1408
        // Predicated region
        $region165: #{tpu_custom_call.1} parent=159 // pred_check
          %p1410 = pneg %p172
        $region166: #{tpu_custom_call.1} parent=159 // pred_check_branch
          %1412 = sbr.rel (%p1410) target = $region168
        $region167: #{tpu_custom_call.1} parent=159 // pred_region
          %1413 = dma.done %s1406, 1024
        $region168: #{tpu_custom_call.1} parent=159 // pred_fallthru
          _
        %s1414 = sand.u32 %s113, 1
        %s1415 = scalar_lea.sflag [#allocation6], %s1414
        %s1416 = sand.u32 %s185, 1
        %s1417 = smul.addr %s1416, 8
        %s1418 = scalar_lea.vmem [#allocation7], %s1417
        // Predicated region
        $region169: #{tpu_custom_call.1} parent=159 // pred_check
          %p1419 = pneg %p198
        $region170: #{tpu_custom_call.1} parent=159 // pred_check_branch
          %1421 = sbr.rel (%p1419) target = $region172
        $region171: #{tpu_custom_call.1} parent=159 // pred_region
          %1422 = dma.done %s1415, 128
        $region172: #{tpu_custom_call.1} parent=159 // pred_fallthru
          _
        %s1423 = sand.u32 %s113, 1
        %s1424 = scalar_lea.sflag [#allocation9], %s1423
        %s1425 = sand.u32 %s237, 1
        %s1426 = smul.addr %s1425, 32
        %s1427 = scalar_lea.vmem [#allocation8], %s1426
        // Predicated region
        $region173: #{tpu_custom_call.1} parent=159 // pred_check
          %p1428 = pneg %p250
        $region174: #{tpu_custom_call.1} parent=159 // pred_check_branch
          %1430 = sbr.rel (%p1428) target = $region176
        $region175: #{tpu_custom_call.1} parent=159 // pred_region
          %1431 = dma.done %s1424, 512
        $region176: #{tpu_custom_call.1} parent=159 // pred_fallthru
          _
        %s1432 = sand.u32 %s113, 1
        %s1433 = scalar_lea.sflag [#allocation9], %s1432
        %s1434 = sand.u32 %s263, 1
        %s1435 = smul.addr %s1434, 64
        %s1436 = scalar_lea.vmem [#allocation10], %s1435
        // Predicated region
        $region177: #{tpu_custom_call.1} parent=159 // pred_check
          %p1437 = pneg %p276
        $region178: #{tpu_custom_call.1} parent=159 // pred_check_branch
          %1439 = sbr.rel (%p1437) target = $region180
        $region179: #{tpu_custom_call.1} parent=159 // pred_region
          %1440 = dma.done %s1433, 1024
        $region180: #{tpu_custom_call.1} parent=159 // pred_fallthru
          _
        %s1441 = sand.u32 %s113, 1
        %s1442 = scalar_lea.sflag [#allocation12], %s1441
        %s1443 = sand.u32 %s289, 1
        %s1444 = smul.addr %s1443, 8
        %s1445 = scalar_lea.vmem [#allocation11], %s1444
        // Predicated region
        $region181: #{tpu_custom_call.1} parent=159 // pred_check
          %p1446 = pneg %p302
        $region182: #{tpu_custom_call.1} parent=159 // pred_check_branch
          %1448 = sbr.rel (%p1446) target = $region184
        $region183: #{tpu_custom_call.1} parent=159 // pred_region
          %1449 = dma.done %s1442, 128
        $region184: #{tpu_custom_call.1} parent=159 // pred_fallthru
          _
        %s1450 = sand.u32 %s113, 1
        %s1451 = scalar_lea.sflag [#allocation12], %s1450
        %s1452 = sand.u32 %s315, 1
        %s1453 = smul.addr %s1452, 8
        %s1454 = scalar_lea.vmem [#allocation13], %s1453
        // Predicated region
        $region185: #{tpu_custom_call.1} parent=159 // pred_check
          %p1455 = pneg %p328
        $region186: #{tpu_custom_call.1} parent=159 // pred_check_branch
          %1457 = sbr.rel (%p1455) target = $region188
        $region187: #{tpu_custom_call.1} parent=159 // pred_region
          %1458 = dma.done %s1451, 128
        $region188: #{tpu_custom_call.1} parent=159 // pred_fallthru
          _
        // Predicated region
        $region189: #{tpu_custom_call.1} parent=159 // pred_check
          %p1459 = pneg %p443
        $region190: #{tpu_custom_call.1} parent=159 // pred_check_branch
          %1461 = sbr.rel (%p1459) target = $region192
        $region191: #{tpu_custom_call.1} parent=159 // pred_region
          %1462 = dma.done [#allocation15], 4096
        $region192: #{tpu_custom_call.1} parent=159 // pred_fallthru
          _
        // Predicated region
        $region193: #{tpu_custom_call.1} parent=159 // pred_check
          %p1463 = pneg %p485
        $region194: #{tpu_custom_call.1} parent=159 // pred_check_branch
          %1465 = sbr.rel (%p1463) target = $region196
        $region195: #{tpu_custom_call.1} parent=159 // pred_region
          %1466 = dma.done [#allocation15], 4096
        $region196: #{tpu_custom_call.1} parent=159 // pred_fallthru
          _
        // Predicated region
        $region197: #{tpu_custom_call.1} parent=159 // pred_check
          %p1467 = pneg %p527
        $region198: #{tpu_custom_call.1} parent=159 // pred_check_branch
          %1469 = sbr.rel (%p1467) target = $region200
        $region199: #{tpu_custom_call.1} parent=159 // pred_region
          %1470 = dma.done [#allocation18], 4096
        $region200: #{tpu_custom_call.1} parent=159 // pred_fallthru
          _
        // Predicated region
        $region201: #{tpu_custom_call.1} parent=159 // pred_check
          %p1471 = pneg %p569
        $region202: #{tpu_custom_call.1} parent=159 // pred_check_branch
          %1473 = sbr.rel (%p1471) target = $region204
        $region203: #{tpu_custom_call.1} parent=159 // pred_region
          %1474 = dma.done [#allocation18], 4096
        $region204: #{tpu_custom_call.1} parent=159 // pred_fallthru
          _
        // Predicated region
        $region205: #{tpu_custom_call.1} parent=159 // pred_check
          %p1475 = pneg %p611
        $region206: #{tpu_custom_call.1} parent=159 // pred_check_branch
          %1477 = sbr.rel (%p1475) target = $region208
        $region207: #{tpu_custom_call.1} parent=159 // pred_region
          %1478 = dma.done [#allocation21], 4096
        $region208: #{tpu_custom_call.1} parent=159 // pred_fallthru
          _
        // Predicated region
        $region209: #{tpu_custom_call.1} parent=159 // pred_check
          %p1479 = pneg %p653
        $region210: #{tpu_custom_call.1} parent=159 // pred_check_branch
          %1481 = sbr.rel (%p1479) target = $region212
        $region211: #{tpu_custom_call.1} parent=159 // pred_region
          %1482 = dma.done [#allocation21], 4096
        $region212: #{tpu_custom_call.1} parent=159 // pred_fallthru
          _
        // Predicated region
        $region213: #{tpu_custom_call.1} parent=159 // pred_check
          %p1483 = pneg %p674
        $region214: #{tpu_custom_call.1} parent=159 // pred_check_branch
          %1485 = sbr.rel (%p1483) target = $region216
        $region215: #{tpu_custom_call.1} parent=159 // pred_region
          %1486 = dma.done [#allocation24], 4096
        $region216: #{tpu_custom_call.1} parent=159 // pred_fallthru
          _
        // Predicated region
        $region217: #{tpu_custom_call.1} parent=159 // pred_check
          %p1487 = pneg %p695
        $region218: #{tpu_custom_call.1} parent=159 // pred_check_branch
          %1489 = sbr.rel (%p1487) target = $region220
        $region219: #{tpu_custom_call.1} parent=159 // pred_region
          %1490 = dma.done [#allocation24], 4096
        $region220: #{tpu_custom_call.1} parent=159 // pred_fallthru
          _
        // Predicated region
        $region221: #{tpu_custom_call.1} parent=159 // pred_check
          %p1491 = pneg %p716
        $region222: #{tpu_custom_call.1} parent=159 // pred_check_branch
          %1493 = sbr.rel (%p1491) target = $region224
        $region223: #{tpu_custom_call.1} parent=159 // pred_region
          %1494 = dma.done [#allocation27], 4096
        $region224: #{tpu_custom_call.1} parent=159 // pred_fallthru
          _
        // Predicated region
        $region225: #{tpu_custom_call.1} parent=159 // pred_check
          %p1495 = pneg %p758
        $region226: #{tpu_custom_call.1} parent=159 // pred_check_branch
          %1497 = sbr.rel (%p1495) target = $region228
        $region227: #{tpu_custom_call.1} parent=159 // pred_region
          %1498 = dma.done [#allocation27], 4096
        $region228: #{tpu_custom_call.1} parent=159 // pred_fallthru
          _
        // Predicated region
        $region229: #{tpu_custom_call.1} parent=159 // pred_check
          %p1499 = pneg %p779
        $region230: #{tpu_custom_call.1} parent=159 // pred_check_branch
          %1501 = sbr.rel (%p1499) target = $region232
        $region231: #{tpu_custom_call.1} parent=159 // pred_region
          %1502 = dma.done [#allocation30], 4096
        $region232: #{tpu_custom_call.1} parent=159 // pred_fallthru
          _
        // Predicated region
        $region233: #{tpu_custom_call.1} parent=159 // pred_check
          %p1503 = pneg %p800
        $region234: #{tpu_custom_call.1} parent=159 // pred_check_branch
          %1505 = sbr.rel (%p1503) target = $region236
        $region235: #{tpu_custom_call.1} parent=159 // pred_region
          %1506 = dma.done [#allocation30], 4096
        $region236: #{tpu_custom_call.1} parent=159 // pred_fallthru
          _
        // Predicated region
        $region237: #{tpu_custom_call.1} parent=159 // pred_check
          %p1507 = pneg %p842
        $region238: #{tpu_custom_call.1} parent=159 // pred_check_branch
          %1509 = sbr.rel (%p1507) target = $region240
        $region239: #{tpu_custom_call.1} parent=159 // pred_region
          %1510 = dma.done [#allocation33], 4096
        $region240: #{tpu_custom_call.1} parent=159 // pred_fallthru
          _
        // Predicated region
        $region241: #{tpu_custom_call.1} parent=159 // pred_check
          %p1511 = pneg %p863
        $region242: #{tpu_custom_call.1} parent=159 // pred_check_branch
          %1513 = sbr.rel (%p1511) target = $region244
        $region243: #{tpu_custom_call.1} parent=159 // pred_region
          %1514 = dma.done [#allocation33], 4096
        $region244: #{tpu_custom_call.1} parent=159 // pred_fallthru
          _
        // Predicated region
        $region245: #{tpu_custom_call.1} parent=159 // pred_check
          %p1515 = pneg %p884
        $region246: #{tpu_custom_call.1} parent=159 // pred_check_branch
          %1517 = sbr.rel (%p1515) target = $region248
        $region247: #{tpu_custom_call.1} parent=159 // pred_region
          %1518 = dma.done [#allocation36], 4096
        $region248: #{tpu_custom_call.1} parent=159 // pred_fallthru
          _
        %s1519 = sand.u32 %s133, 1
        %s1520 = scalar_lea.sflag [#allocation3], %s1519
        %s1521 = sand.u32 %s133, 1
        %s1522 = smul.addr %s1521, 64
        %s1523 = scalar_lea.vmem [#allocation2], %s1522
        %p1524 = pneg %p146
        %p1525 = pneg %p143
        %s1526 = sand.u32 %s113, 1
        %s1527 = scalar_lea.sflag [#allocation6], %s1526
        %s1528 = sand.u32 %s159, 1
        %s1529 = smul.addr %s1528, 64
        %s1530 = scalar_lea.vmem [#allocation5], %s1529
        %p1531 = pneg %p172
        %p1532 = pneg %p169
        %s1533 = sand.u32 %s113, 1
        %s1534 = scalar_lea.sflag [#allocation6], %s1533
        %s1535 = sand.u32 %s185, 1
        %s1536 = smul.addr %s1535, 8
        %s1537 = scalar_lea.vmem [#allocation7], %s1536
        %p1538 = pneg %p198
        %p1539 = pneg %p195
        %p1540 = scmp.lt.s32.totalorder %s117, 1
        %s1541 = scalar_select %p1540, %s117, 1
        %s1542 = smul.addr %s1541, 8
        %s1543 = smul.addr %s1542, 4
        %s1544 = scalar_lea.vmem %s7, %s1543
        %p1545 = pneg %p224
        %p1546 = pneg %p221
        %s1547 = sand.u32 %s113, 1
        %s1548 = scalar_lea.sflag [#allocation9], %s1547
        %s1549 = sand.u32 %s237, 1
        %s1550 = smul.addr %s1549, 32
        %s1551 = scalar_lea.vmem [#allocation8], %s1550
        %p1552 = pneg %p250
        %p1553 = pneg %p247
        %s1554 = sand.u32 %s113, 1
        %s1555 = scalar_lea.sflag [#allocation9], %s1554
        %s1556 = sand.u32 %s263, 1
        %s1557 = smul.addr %s1556, 64
        %s1558 = scalar_lea.vmem [#allocation10], %s1557
        %p1559 = pneg %p276
        %p1560 = pneg %p273
        %s1561 = sand.u32 %s113, 1
        %s1562 = scalar_lea.sflag [#allocation12], %s1561
        %s1563 = sand.u32 %s289, 1
        %s1564 = smul.addr %s1563, 8
        %s1565 = scalar_lea.vmem [#allocation11], %s1564
        %p1566 = pneg %p302
        %p1567 = pneg %p299
        %s1568 = sand.u32 %s113, 1
        %s1569 = scalar_lea.sflag [#allocation12], %s1568
        %s1570 = sand.u32 %s315, 1
        %s1571 = smul.addr %s1570, 8
        %s1572 = scalar_lea.vmem [#allocation13], %s1571
        %p1573 = pneg %p328
        %p1574 = pneg %p325
        %p1575 = scmp.lt.s32.totalorder %s117, 1
        %s1576 = scalar_select %p1575, %s117, 1
        %s1577 = smul.addr %s1576, 8
        %s1578 = smul.addr %s1577, 8
        %s1579 = scalar_lea.vmem %s17, %s1578
        %p1580 = pneg %p354
        %p1581 = pneg %p351
        %p1582 = scmp.lt.s32.totalorder %s117, 1
        %s1583 = scalar_select %p1582, %s117, 1
        %s1584 = smul.addr %s1583, 8
        %s1585 = smul.addr %s1584, 8
        %s1586 = scalar_lea.vmem %s19, %s1585
        %p1587 = pneg %p380
        %p1588 = pneg %p377
        %p1589 = pneg %p401
        %p1590 = pneg %p398
        %p1591 = pneg %p422
        %p1592 = pneg %p419
        %p1593 = pneg %p443
        %p1594 = pneg %p440
        %p1595 = pneg %p464
        %p1596 = pneg %p461
        %p1597 = pneg %p485
        %p1598 = pneg %p482
        %p1599 = pneg %p506
        %p1600 = pneg %p503
        %p1601 = pneg %p527
        %p1602 = pneg %p524
        %p1603 = pneg %p548
        %p1604 = pneg %p545
        %p1605 = pneg %p569
        %p1606 = pneg %p566
        %p1607 = pneg %p590
        %p1608 = pneg %p587
        %p1609 = pneg %p611
        %p1610 = pneg %p608
        %p1611 = pneg %p632
        %p1612 = pneg %p629
        %p1613 = pneg %p653
        %p1614 = pneg %p650
        %p1615 = pneg %p674
        %p1616 = pneg %p671
        %p1617 = pneg %p695
        %p1618 = pneg %p692
        %p1619 = pneg %p716
        %p1620 = pneg %p713
        %p1621 = pneg %p737
        %p1622 = pneg %p734
        %p1623 = pneg %p758
        %p1624 = pneg %p755
        %p1625 = pneg %p779
        %p1626 = pneg %p776
        %p1627 = pneg %p800
        %p1628 = pneg %p797
        %p1629 = pneg %p821
        %p1630 = pneg %p818
        %p1631 = pneg %p842
        %p1632 = pneg %p839
        %p1633 = pneg %p863
        %p1634 = pneg %p860
        %p1635 = pneg %p884
        %p1636 = pneg %p881
        %p1637 = pneg %p905
        %p1638 = pneg %p902
        %p1639 = pneg %p931
        %p1640 = pneg %p928
        %s1641 = sand.u32 %s918, 1
        %s1642 = scalar_lea.sflag [#allocation4], %s1641
        %s1643 = sand.u32 %s918, 1
        %s1644 = smul.addr %s1643, 64
        %s1645 = scalar_lea.vmem [#allocation37], %s1644
        %p1646 = pneg %p957
        %p1647 = pneg %p954
        %s1648 = sand.u32 %s113, 1
        %s1649 = scalar_lea.sflag [#allocation39], %s1648
        %s1650 = sand.u32 %s944, 1
        %s1651 = smul.addr %s1650, 64
        %s1652 = scalar_lea.vmem [#allocation38], %s1651
        %p1653 = pneg %p983
        %p1654 = pneg %p980
        %s1655 = sand.u32 %s113, 1
        %s1656 = scalar_lea.sflag [#allocation39], %s1655
        %s1657 = sand.u32 %s970, 1
        %s1658 = smul.addr %s1657, 8
        %s1659 = scalar_lea.vmem [#allocation40], %s1658
        %p1660 = scmp.lt.s32.totalorder %s117, 1
        %s1661 = scalar_select %p1660, %s117, 1
        %s1662 = smul.addr %s1661, 8
        %s1663 = smul.addr %s1662, 4
        %s1664 = scalar_lea.vmem %s7, %s1663
        %p1665 = scmp.lt.s32.totalorder %s117, 1
        %s1666 = scalar_select %p1665, %s117, 1
        %s1667 = smul.addr %s1666, 8
        %s1668 = smul.addr %s1667, 8
        %s1669 = scalar_lea.vmem %s17, %s1668
        %p1670 = scmp.lt.s32.totalorder %s117, 1
        %s1671 = scalar_select %p1670, %s117, 1
        %s1672 = smul.addr %s1671, 8
        %s1673 = smul.addr %s1672, 8
        %s1674 = scalar_lea.vmem %s19, %s1673
        %p1676 = scmp.eq.s32.totalorder %s118, 0
        // Predicated region
        $region249: #{tpu_custom_call.1} parent=159 // pred_check
          %p1677 = pneg %p1676
        $region250: #{tpu_custom_call.1} parent=159 // pred_check_branch
          %1679 = sbr.rel (%p1677) target = $region252
        $region251: #{tpu_custom_call.1} parent=159 // pred_region
          %v1680 = vld [vmem:[%s1400] sm:$0xff]
          %v1681 = vld [vmem:[%s1400 + $0x8] sm:$0xff]
          %v1682 = vld [vmem:[%s1400 + $0x10] sm:$0xff]
          %v1683 = vld [vmem:[%s1400 + $0x18] sm:$0xff]
          %v1684 = vld [vmem:[%s1400 + $0x20] sm:$0xff]
          %v1685 = vld [vmem:[%s1400 + $0x28] sm:$0xff]
          %v1686 = vld [vmem:[%s1400 + $0x30] sm:$0xff]
          %v1687 = vld [vmem:[%s1400 + $0x38] sm:$0xff]
          %1688 = vst [vmem:[%s1645] sm:$0xff] %v1680
          %1689 = vst [vmem:[%s1645 + $0x8] sm:$0xff] %v1681
          %1690 = vst [vmem:[%s1645 + $0x10] sm:$0xff] %v1682
          %1691 = vst [vmem:[%s1645 + $0x18] sm:$0xff] %v1683
          %1692 = vst [vmem:[%s1645 + $0x20] sm:$0xff] %v1684
          %1693 = vst [vmem:[%s1645 + $0x28] sm:$0xff] %v1685
          %1694 = vst [vmem:[%s1645 + $0x30] sm:$0xff] %v1686
          %1695 = vst [vmem:[%s1645 + $0x38] sm:$0xff] %v1687
          %v1696 = vld [vmem:[%s1409] sm:$0xff]
          %v1697 = vld [vmem:[%s1409 + $0x8] sm:$0xff]
          %v1698 = vld [vmem:[%s1409 + $0x10] sm:$0xff]
          %v1699 = vld [vmem:[%s1409 + $0x18] sm:$0xff]
          %v1700 = vld [vmem:[%s1409 + $0x20] sm:$0xff]
          %v1701 = vld [vmem:[%s1409 + $0x28] sm:$0xff]
          %v1702 = vld [vmem:[%s1409 + $0x30] sm:$0xff]
          %v1703 = vld [vmem:[%s1409 + $0x38] sm:$0xff]
          %1704 = vst [vmem:[%s1652] sm:$0xff] %v1696
          %1705 = vst [vmem:[%s1652 + $0x8] sm:$0xff] %v1697
          %1706 = vst [vmem:[%s1652 + $0x10] sm:$0xff] %v1698
          %1707 = vst [vmem:[%s1652 + $0x18] sm:$0xff] %v1699
          %1708 = vst [vmem:[%s1652 + $0x20] sm:$0xff] %v1700
          %1709 = vst [vmem:[%s1652 + $0x28] sm:$0xff] %v1701
          %1710 = vst [vmem:[%s1652 + $0x30] sm:$0xff] %v1702
          %1711 = vst [vmem:[%s1652 + $0x38] sm:$0xff] %v1703
          %v1712 = vld [vmem:[%s1418] sm:$0xff]
          %1713 = vst [vmem:[%s1659] sm:$0xff] %v1712
        $region252: #{tpu_custom_call.1} parent=159 // pred_fallthru
          _
        %s1714 = smul.u32 %s118, 16
        %s1715 = smul.addr %s1714, 4
        %s1716 = scalar_lea.vmem %s21, %s1715
        %v1717 = vld [vmem:[%s1716] sm:$0xf]
        %v1718 = vld [vmem:[%s1716 + $0x4] sm:$0xf]
        %v1719 = vld [vmem:[%s1716 + $0x8] sm:$0xf]
        %v1720 = vld [vmem:[%s1716 + $0xc] sm:$0xf]
        %v1721 = vld [vmem:[%s1716 + $0x10] sm:$0xf]
        %v1722 = vld [vmem:[%s1716 + $0x14] sm:$0xf]
        %v1723 = vld [vmem:[%s1716 + $0x18] sm:$0xf]
        %v1724 = vld [vmem:[%s1716 + $0x1c] sm:$0xf]
        %v1725 = vld [vmem:[%s1716 + $0x20] sm:$0xf]
        %v1726 = vld [vmem:[%s1716 + $0x24] sm:$0xf]
        %v1727 = vld [vmem:[%s1716 + $0x28] sm:$0xf]
        %v1728 = vld [vmem:[%s1716 + $0x2c] sm:$0xf]
        %v1729 = vld [vmem:[%s1716 + $0x30] sm:$0xf]
        %v1730 = vld [vmem:[%s1716 + $0x34] sm:$0xf]
        %v1731 = vld [vmem:[%s1716 + $0x38] sm:$0xf]
        %v1732 = vld [vmem:[%s1716 + $0x3c] sm:$0xf]
        %s1733 = scalar_lea.vmem %s23, %s118
        %v1734 = vld [vmem:[%s1733] sm:$0x1]
        %s1735 = smul.addr %s1714, 4
        %s1736 = scalar_lea.vmem [#allocation14], %s1735
        %v1737 = vld [vmem:[%s1736] sm:$0xf]
        %v1738 = vld [vmem:[%s1736 + $0x4] sm:$0xf]
        %v1739 = vld [vmem:[%s1736 + $0x8] sm:$0xf]
        %v1740 = vld [vmem:[%s1736 + $0xc] sm:$0xf]
        %v1741 = vld [vmem:[%s1736 + $0x10] sm:$0xf]
        %v1742 = vld [vmem:[%s1736 + $0x14] sm:$0xf]
        %v1743 = vld [vmem:[%s1736 + $0x18] sm:$0xf]
        %v1744 = vld [vmem:[%s1736 + $0x1c] sm:$0xf]
        %v1745 = vld [vmem:[%s1736 + $0x20] sm:$0xf]
        %v1746 = vld [vmem:[%s1736 + $0x24] sm:$0xf]
        %v1747 = vld [vmem:[%s1736 + $0x28] sm:$0xf]
        %v1748 = vld [vmem:[%s1736 + $0x2c] sm:$0xf]
        %v1749 = vld [vmem:[%s1736 + $0x30] sm:$0xf]
        %v1750 = vld [vmem:[%s1736 + $0x34] sm:$0xf]
        %v1751 = vld [vmem:[%s1736 + $0x38] sm:$0xf]
        %v1752 = vld [vmem:[%s1736 + $0x3c] sm:$0xf]
        %s1753 = scalar_lea.vmem %s27, %s118
        %v1754 = vld [vmem:[%s1753] sm:$0x1]
        %s1755 = smul.addr %s1714, 4
        %s1756 = scalar_lea.vmem [#allocation16], %s1755
        %v1757 = vld [vmem:[%s1756] sm:$0xf]
        %v1758 = vld [vmem:[%s1756 + $0x4] sm:$0xf]
        %v1759 = vld [vmem:[%s1756 + $0x8] sm:$0xf]
        %v1760 = vld [vmem:[%s1756 + $0xc] sm:$0xf]
        %v1761 = vld [vmem:[%s1756 + $0x10] sm:$0xf]
        %v1762 = vld [vmem:[%s1756 + $0x14] sm:$0xf]
        %v1763 = vld [vmem:[%s1756 + $0x18] sm:$0xf]
        %v1764 = vld [vmem:[%s1756 + $0x1c] sm:$0xf]
        %v1765 = vld [vmem:[%s1756 + $0x20] sm:$0xf]
        %v1766 = vld [vmem:[%s1756 + $0x24] sm:$0xf]
        %v1767 = vld [vmem:[%s1756 + $0x28] sm:$0xf]
        %v1768 = vld [vmem:[%s1756 + $0x2c] sm:$0xf]
        %v1769 = vld [vmem:[%s1756 + $0x30] sm:$0xf]
        %v1770 = vld [vmem:[%s1756 + $0x34] sm:$0xf]
        %v1771 = vld [vmem:[%s1756 + $0x38] sm:$0xf]
        %v1772 = vld [vmem:[%s1756 + $0x3c] sm:$0xf]
        %s1773 = scalar_lea.vmem %s31, %s118
        %v1774 = vld [vmem:[%s1773] sm:$0x1]
        %s1775 = smul.addr %s1714, 4
        %s1776 = scalar_lea.vmem [#allocation17], %s1775
        %v1777 = vld [vmem:[%s1776] sm:$0xf]
        %v1778 = vld [vmem:[%s1776 + $0x4] sm:$0xf]
        %v1779 = vld [vmem:[%s1776 + $0x8] sm:$0xf]
        %v1780 = vld [vmem:[%s1776 + $0xc] sm:$0xf]
        %v1781 = vld [vmem:[%s1776 + $0x10] sm:$0xf]
        %v1782 = vld [vmem:[%s1776 + $0x14] sm:$0xf]
        %v1783 = vld [vmem:[%s1776 + $0x18] sm:$0xf]
        %v1784 = vld [vmem:[%s1776 + $0x1c] sm:$0xf]
        %v1785 = vld [vmem:[%s1776 + $0x20] sm:$0xf]
        %v1786 = vld [vmem:[%s1776 + $0x24] sm:$0xf]
        %v1787 = vld [vmem:[%s1776 + $0x28] sm:$0xf]
        %v1788 = vld [vmem:[%s1776 + $0x2c] sm:$0xf]
        %v1789 = vld [vmem:[%s1776 + $0x30] sm:$0xf]
        %v1790 = vld [vmem:[%s1776 + $0x34] sm:$0xf]
        %v1791 = vld [vmem:[%s1776 + $0x38] sm:$0xf]
        %v1792 = vld [vmem:[%s1776 + $0x3c] sm:$0xf]
        %s1793 = scalar_lea.vmem %s35, %s118
        %v1794 = vld [vmem:[%s1793] sm:$0x1]
        %s1795 = smul.addr %s1714, 4
        %s1796 = scalar_lea.vmem [#allocation19], %s1795
        %v1797 = vld [vmem:[%s1796] sm:$0xf]
        %v1798 = vld [vmem:[%s1796 + $0x4] sm:$0xf]
        %v1799 = vld [vmem:[%s1796 + $0x8] sm:$0xf]
        %v1800 = vld [vmem:[%s1796 + $0xc] sm:$0xf]
        %v1801 = vld [vmem:[%s1796 + $0x10] sm:$0xf]
        %v1802 = vld [vmem:[%s1796 + $0x14] sm:$0xf]
        %v1803 = vld [vmem:[%s1796 + $0x18] sm:$0xf]
        %v1804 = vld [vmem:[%s1796 + $0x1c] sm:$0xf]
        %v1805 = vld [vmem:[%s1796 + $0x20] sm:$0xf]
        %v1806 = vld [vmem:[%s1796 + $0x24] sm:$0xf]
        %v1807 = vld [vmem:[%s1796 + $0x28] sm:$0xf]
        %v1808 = vld [vmem:[%s1796 + $0x2c] sm:$0xf]
        %v1809 = vld [vmem:[%s1796 + $0x30] sm:$0xf]
        %v1810 = vld [vmem:[%s1796 + $0x34] sm:$0xf]
        %v1811 = vld [vmem:[%s1796 + $0x38] sm:$0xf]
        %v1812 = vld [vmem:[%s1796 + $0x3c] sm:$0xf]
        %s1813 = scalar_lea.vmem %s39, %s118
        %v1814 = vld [vmem:[%s1813] sm:$0x1]
        %s1815 = smul.addr %s1714, 4
        %s1816 = scalar_lea.vmem [#allocation20], %s1815
        %v1817 = vld [vmem:[%s1816] sm:$0xf]
        %v1818 = vld [vmem:[%s1816 + $0x4] sm:$0xf]
        %v1819 = vld [vmem:[%s1816 + $0x8] sm:$0xf]
        %v1820 = vld [vmem:[%s1816 + $0xc] sm:$0xf]
        %v1821 = vld [vmem:[%s1816 + $0x10] sm:$0xf]
        %v1822 = vld [vmem:[%s1816 + $0x14] sm:$0xf]
        %v1823 = vld [vmem:[%s1816 + $0x18] sm:$0xf]
        %v1824 = vld [vmem:[%s1816 + $0x1c] sm:$0xf]
        %v1825 = vld [vmem:[%s1816 + $0x20] sm:$0xf]
        %v1826 = vld [vmem:[%s1816 + $0x24] sm:$0xf]
        %v1827 = vld [vmem:[%s1816 + $0x28] sm:$0xf]
        %v1828 = vld [vmem:[%s1816 + $0x2c] sm:$0xf]
        %v1829 = vld [vmem:[%s1816 + $0x30] sm:$0xf]
        %v1830 = vld [vmem:[%s1816 + $0x34] sm:$0xf]
        %v1831 = vld [vmem:[%s1816 + $0x38] sm:$0xf]
        %v1832 = vld [vmem:[%s1816 + $0x3c] sm:$0xf]
        %s1833 = scalar_lea.vmem %s43, %s118
        %v1834 = vld [vmem:[%s1833] sm:$0x1]
        %s1835 = smul.addr %s1714, 4
        %s1836 = scalar_lea.vmem [#allocation22], %s1835
        %v1837 = vld [vmem:[%s1836] sm:$0xf]
        %v1838 = vld [vmem:[%s1836 + $0x4] sm:$0xf]
        %v1839 = vld [vmem:[%s1836 + $0x8] sm:$0xf]
        %v1840 = vld [vmem:[%s1836 + $0xc] sm:$0xf]
        %v1841 = vld [vmem:[%s1836 + $0x10] sm:$0xf]
        %v1842 = vld [vmem:[%s1836 + $0x14] sm:$0xf]
        %v1843 = vld [vmem:[%s1836 + $0x18] sm:$0xf]
        %v1844 = vld [vmem:[%s1836 + $0x1c] sm:$0xf]
        %v1845 = vld [vmem:[%s1836 + $0x20] sm:$0xf]
        %v1846 = vld [vmem:[%s1836 + $0x24] sm:$0xf]
        %v1847 = vld [vmem:[%s1836 + $0x28] sm:$0xf]
        %v1848 = vld [vmem:[%s1836 + $0x2c] sm:$0xf]
        %v1849 = vld [vmem:[%s1836 + $0x30] sm:$0xf]
        %v1850 = vld [vmem:[%s1836 + $0x34] sm:$0xf]
        %v1851 = vld [vmem:[%s1836 + $0x38] sm:$0xf]
        %v1852 = vld [vmem:[%s1836 + $0x3c] sm:$0xf]
        %s1853 = smul.addr %s1714, 4
        %s1854 = scalar_lea.vmem [#allocation23], %s1853
        %v1855 = vld [vmem:[%s1854] sm:$0xf]
        %v1856 = vld [vmem:[%s1854 + $0x4] sm:$0xf]
        %v1857 = vld [vmem:[%s1854 + $0x8] sm:$0xf]
        %v1858 = vld [vmem:[%s1854 + $0xc] sm:$0xf]
        %v1859 = vld [vmem:[%s1854 + $0x10] sm:$0xf]
        %v1860 = vld [vmem:[%s1854 + $0x14] sm:$0xf]
        %v1861 = vld [vmem:[%s1854 + $0x18] sm:$0xf]
        %v1862 = vld [vmem:[%s1854 + $0x1c] sm:$0xf]
        %v1863 = vld [vmem:[%s1854 + $0x20] sm:$0xf]
        %v1864 = vld [vmem:[%s1854 + $0x24] sm:$0xf]
        %v1865 = vld [vmem:[%s1854 + $0x28] sm:$0xf]
        %v1866 = vld [vmem:[%s1854 + $0x2c] sm:$0xf]
        %v1867 = vld [vmem:[%s1854 + $0x30] sm:$0xf]
        %v1868 = vld [vmem:[%s1854 + $0x34] sm:$0xf]
        %v1869 = vld [vmem:[%s1854 + $0x38] sm:$0xf]
        %v1870 = vld [vmem:[%s1854 + $0x3c] sm:$0xf]
        %s1871 = smul.addr %s1714, 4
        %s1872 = scalar_lea.vmem [#allocation25], %s1871
        %v1873 = vld [vmem:[%s1872] sm:$0xf]
        %v1874 = vld [vmem:[%s1872 + $0x4] sm:$0xf]
        %v1875 = vld [vmem:[%s1872 + $0x8] sm:$0xf]
        %v1876 = vld [vmem:[%s1872 + $0xc] sm:$0xf]
        %v1877 = vld [vmem:[%s1872 + $0x10] sm:$0xf]
        %v1878 = vld [vmem:[%s1872 + $0x14] sm:$0xf]
        %v1879 = vld [vmem:[%s1872 + $0x18] sm:$0xf]
        %v1880 = vld [vmem:[%s1872 + $0x1c] sm:$0xf]
        %v1881 = vld [vmem:[%s1872 + $0x20] sm:$0xf]
        %v1882 = vld [vmem:[%s1872 + $0x24] sm:$0xf]
        %v1883 = vld [vmem:[%s1872 + $0x28] sm:$0xf]
        %v1884 = vld [vmem:[%s1872 + $0x2c] sm:$0xf]
        %v1885 = vld [vmem:[%s1872 + $0x30] sm:$0xf]
        %v1886 = vld [vmem:[%s1872 + $0x34] sm:$0xf]
        %v1887 = vld [vmem:[%s1872 + $0x38] sm:$0xf]
        %v1888 = vld [vmem:[%s1872 + $0x3c] sm:$0xf]
        %s1889 = smul.addr %s1714, 4
        %s1890 = scalar_lea.vmem [#allocation26], %s1889
        %v1891 = vld [vmem:[%s1890] sm:$0xf]
        %v1892 = vld [vmem:[%s1890 + $0x4] sm:$0xf]
        %v1893 = vld [vmem:[%s1890 + $0x8] sm:$0xf]
        %v1894 = vld [vmem:[%s1890 + $0xc] sm:$0xf]
        %v1895 = vld [vmem:[%s1890 + $0x10] sm:$0xf]
        %v1896 = vld [vmem:[%s1890 + $0x14] sm:$0xf]
        %v1897 = vld [vmem:[%s1890 + $0x18] sm:$0xf]
        %v1898 = vld [vmem:[%s1890 + $0x1c] sm:$0xf]
        %v1899 = vld [vmem:[%s1890 + $0x20] sm:$0xf]
        %v1900 = vld [vmem:[%s1890 + $0x24] sm:$0xf]
        %v1901 = vld [vmem:[%s1890 + $0x28] sm:$0xf]
        %v1902 = vld [vmem:[%s1890 + $0x2c] sm:$0xf]
        %v1903 = vld [vmem:[%s1890 + $0x30] sm:$0xf]
        %v1904 = vld [vmem:[%s1890 + $0x34] sm:$0xf]
        %v1905 = vld [vmem:[%s1890 + $0x38] sm:$0xf]
        %v1906 = vld [vmem:[%s1890 + $0x3c] sm:$0xf]
        %s1907 = scalar_lea.vmem %s53, %s118
        %v1908 = vld [vmem:[%s1907] sm:$0x1]
        %s1909 = smul.addr %s1714, 4
        %s1910 = scalar_lea.vmem [#allocation28], %s1909
        %v1911 = vld [vmem:[%s1910] sm:$0xf]
        %v1912 = vld [vmem:[%s1910 + $0x4] sm:$0xf]
        %v1913 = vld [vmem:[%s1910 + $0x8] sm:$0xf]
        %v1914 = vld [vmem:[%s1910 + $0xc] sm:$0xf]
        %v1915 = vld [vmem:[%s1910 + $0x10] sm:$0xf]
        %v1916 = vld [vmem:[%s1910 + $0x14] sm:$0xf]
        %v1917 = vld [vmem:[%s1910 + $0x18] sm:$0xf]
        %v1918 = vld [vmem:[%s1910 + $0x1c] sm:$0xf]
        %v1919 = vld [vmem:[%s1910 + $0x20] sm:$0xf]
        %v1920 = vld [vmem:[%s1910 + $0x24] sm:$0xf]
        %v1921 = vld [vmem:[%s1910 + $0x28] sm:$0xf]
        %v1922 = vld [vmem:[%s1910 + $0x2c] sm:$0xf]
        %v1923 = vld [vmem:[%s1910 + $0x30] sm:$0xf]
        %v1924 = vld [vmem:[%s1910 + $0x34] sm:$0xf]
        %v1925 = vld [vmem:[%s1910 + $0x38] sm:$0xf]
        %v1926 = vld [vmem:[%s1910 + $0x3c] sm:$0xf]
        %s1927 = smul.addr %s1714, 4
        %s1928 = scalar_lea.vmem [#allocation29], %s1927
        %v1929 = vld [vmem:[%s1928] sm:$0xf]
        %v1930 = vld [vmem:[%s1928 + $0x4] sm:$0xf]
        %v1931 = vld [vmem:[%s1928 + $0x8] sm:$0xf]
        %v1932 = vld [vmem:[%s1928 + $0xc] sm:$0xf]
        %v1933 = vld [vmem:[%s1928 + $0x10] sm:$0xf]
        %v1934 = vld [vmem:[%s1928 + $0x14] sm:$0xf]
        %v1935 = vld [vmem:[%s1928 + $0x18] sm:$0xf]
        %v1936 = vld [vmem:[%s1928 + $0x1c] sm:$0xf]
        %v1937 = vld [vmem:[%s1928 + $0x20] sm:$0xf]
        %v1938 = vld [vmem:[%s1928 + $0x24] sm:$0xf]
        %v1939 = vld [vmem:[%s1928 + $0x28] sm:$0xf]
        %v1940 = vld [vmem:[%s1928 + $0x2c] sm:$0xf]
        %v1941 = vld [vmem:[%s1928 + $0x30] sm:$0xf]
        %v1942 = vld [vmem:[%s1928 + $0x34] sm:$0xf]
        %v1943 = vld [vmem:[%s1928 + $0x38] sm:$0xf]
        %v1944 = vld [vmem:[%s1928 + $0x3c] sm:$0xf]
        %s1945 = smul.addr %s1714, 4
        %s1946 = scalar_lea.vmem [#allocation31], %s1945
        %v1947 = vld [vmem:[%s1946] sm:$0xf]
        %v1948 = vld [vmem:[%s1946 + $0x4] sm:$0xf]
        %v1949 = vld [vmem:[%s1946 + $0x8] sm:$0xf]
        %v1950 = vld [vmem:[%s1946 + $0xc] sm:$0xf]
        %v1951 = vld [vmem:[%s1946 + $0x10] sm:$0xf]
        %v1952 = vld [vmem:[%s1946 + $0x14] sm:$0xf]
        %v1953 = vld [vmem:[%s1946 + $0x18] sm:$0xf]
        %v1954 = vld [vmem:[%s1946 + $0x1c] sm:$0xf]
        %v1955 = vld [vmem:[%s1946 + $0x20] sm:$0xf]
        %v1956 = vld [vmem:[%s1946 + $0x24] sm:$0xf]
        %v1957 = vld [vmem:[%s1946 + $0x28] sm:$0xf]
        %v1958 = vld [vmem:[%s1946 + $0x2c] sm:$0xf]
        %v1959 = vld [vmem:[%s1946 + $0x30] sm:$0xf]
        %v1960 = vld [vmem:[%s1946 + $0x34] sm:$0xf]
        %v1961 = vld [vmem:[%s1946 + $0x38] sm:$0xf]
        %v1962 = vld [vmem:[%s1946 + $0x3c] sm:$0xf]
        %s1963 = scalar_lea.vmem %s61, %s118
        %v1964 = vld [vmem:[%s1963] sm:$0x1]
        %s1965 = smul.addr %s1714, 4
        %s1966 = scalar_lea.vmem [#allocation32], %s1965
        %v1967 = vld [vmem:[%s1966] sm:$0xf]
        %v1968 = vld [vmem:[%s1966 + $0x4] sm:$0xf]
        %v1969 = vld [vmem:[%s1966 + $0x8] sm:$0xf]
        %v1970 = vld [vmem:[%s1966 + $0xc] sm:$0xf]
        %v1971 = vld [vmem:[%s1966 + $0x10] sm:$0xf]
        %v1972 = vld [vmem:[%s1966 + $0x14] sm:$0xf]
        %v1973 = vld [vmem:[%s1966 + $0x18] sm:$0xf]
        %v1974 = vld [vmem:[%s1966 + $0x1c] sm:$0xf]
        %v1975 = vld [vmem:[%s1966 + $0x20] sm:$0xf]
        %v1976 = vld [vmem:[%s1966 + $0x24] sm:$0xf]
        %v1977 = vld [vmem:[%s1966 + $0x28] sm:$0xf]
        %v1978 = vld [vmem:[%s1966 + $0x2c] sm:$0xf]
        %v1979 = vld [vmem:[%s1966 + $0x30] sm:$0xf]
        %v1980 = vld [vmem:[%s1966 + $0x34] sm:$0xf]
        %v1981 = vld [vmem:[%s1966 + $0x38] sm:$0xf]
        %v1982 = vld [vmem:[%s1966 + $0x3c] sm:$0xf]
        %s1983 = smul.addr %s1714, 4
        %s1984 = scalar_lea.vmem [#allocation34], %s1983
        %v1985 = vld [vmem:[%s1984] sm:$0xf]
        %v1986 = vld [vmem:[%s1984 + $0x4] sm:$0xf]
        %v1987 = vld [vmem:[%s1984 + $0x8] sm:$0xf]
        %v1988 = vld [vmem:[%s1984 + $0xc] sm:$0xf]
        %v1989 = vld [vmem:[%s1984 + $0x10] sm:$0xf]
        %v1990 = vld [vmem:[%s1984 + $0x14] sm:$0xf]
        %v1991 = vld [vmem:[%s1984 + $0x18] sm:$0xf]
        %v1992 = vld [vmem:[%s1984 + $0x1c] sm:$0xf]
        %v1993 = vld [vmem:[%s1984 + $0x20] sm:$0xf]
        %v1994 = vld [vmem:[%s1984 + $0x24] sm:$0xf]
        %v1995 = vld [vmem:[%s1984 + $0x28] sm:$0xf]
        %v1996 = vld [vmem:[%s1984 + $0x2c] sm:$0xf]
        %v1997 = vld [vmem:[%s1984 + $0x30] sm:$0xf]
        %v1998 = vld [vmem:[%s1984 + $0x34] sm:$0xf]
        %v1999 = vld [vmem:[%s1984 + $0x38] sm:$0xf]
        %v2000 = vld [vmem:[%s1984 + $0x3c] sm:$0xf]
        %s2001 = smul.addr %s1714, 4
        %s2002 = scalar_lea.vmem [#allocation35], %s2001
        %v2003 = vld [vmem:[%s2002] sm:$0xf]
        %v2004 = vld [vmem:[%s2002 + $0x4] sm:$0xf]
        %v2005 = vld [vmem:[%s2002 + $0x8] sm:$0xf]
        %v2006 = vld [vmem:[%s2002 + $0xc] sm:$0xf]
        %v2007 = vld [vmem:[%s2002 + $0x10] sm:$0xf]
        %v2008 = vld [vmem:[%s2002 + $0x14] sm:$0xf]
        %v2009 = vld [vmem:[%s2002 + $0x18] sm:$0xf]
        %v2010 = vld [vmem:[%s2002 + $0x1c] sm:$0xf]
        %v2011 = vld [vmem:[%s2002 + $0x20] sm:$0xf]
        %v2012 = vld [vmem:[%s2002 + $0x24] sm:$0xf]
        %v2013 = vld [vmem:[%s2002 + $0x28] sm:$0xf]
        %v2014 = vld [vmem:[%s2002 + $0x2c] sm:$0xf]
        %v2015 = vld [vmem:[%s2002 + $0x30] sm:$0xf]
        %v2016 = vld [vmem:[%s2002 + $0x34] sm:$0xf]
        %v2017 = vld [vmem:[%s2002 + $0x38] sm:$0xf]
        %v2018 = vld [vmem:[%s2002 + $0x3c] sm:$0xf]
        %s2019 = scalar_lea.vmem %s69, %s118
        %v2020 = vld [vmem:[%s2019] sm:$0x1]
        %v2021 = vld [vmem:[%s1645] sm:$0xff]
        %v2022 = vld [vmem:[%s1645 + $0x8] sm:$0xff]
        %v2023 = vld [vmem:[%s1645 + $0x10] sm:$0xff]
        %v2024 = vld [vmem:[%s1645 + $0x18] sm:$0xff]
        %v2025 = vld [vmem:[%s1645 + $0x20] sm:$0xff]
        %v2026 = vld [vmem:[%s1645 + $0x28] sm:$0xff]
        %v2027 = vld [vmem:[%s1645 + $0x30] sm:$0xff]
        %v2028 = vld [vmem:[%s1645 + $0x38] sm:$0xff]
        %v2029 = vld [vmem:[%s1652] sm:$0xff]
        %v2030 = vld [vmem:[%s1652 + $0x8] sm:$0xff]
        %v2031 = vld [vmem:[%s1652 + $0x10] sm:$0xff]
        %v2032 = vld [vmem:[%s1652 + $0x18] sm:$0xff]
        %v2033 = vld [vmem:[%s1652 + $0x20] sm:$0xff]
        %v2034 = vld [vmem:[%s1652 + $0x28] sm:$0xff]
        %v2035 = vld [vmem:[%s1652 + $0x30] sm:$0xff]
        %v2036 = vld [vmem:[%s1652 + $0x38] sm:$0xff]
        %v2037 = vld [vmem:[%s1659] sm:$0xff]
        %v2038 = vpack.c.bf16 %v2022, %v2021
        %v2039 = vpack.c.bf16 %v2024, %v2023
        %v2040 = vpack.c.bf16 %v2026, %v2025
        %v2041 = vpack.c.bf16 %v2028, %v2027
        %v2043 = vlaneseq
        %v2044 = vshrl.u32 %v2043, 7
        %v2045 = vsub.s32 0, %v2044
        %v2046 = vrot.slane %v1734, %v2045
        %v2064 = vunpack.c.l.b16 %v1717
        %v2065 = vunpack.c.l.b16 %v1718
        %v2066 = vunpack.c.l.b16 %v1719
        %v2067 = vunpack.c.l.b16 %v1720
        %v2068 = vunpack.c.l.b16 %v1721
        %v2069 = vunpack.c.l.b16 %v1722
        %v2070 = vunpack.c.l.b16 %v1723
        %v2071 = vunpack.c.l.b16 %v1724
        %v2072 = vunpack.c.l.b16 %v1725
        %v2073 = vunpack.c.l.b16 %v1726
        %v2074 = vunpack.c.l.b16 %v1727
        %v2075 = vunpack.c.l.b16 %v1728
        %v2076 = vunpack.c.l.b16 %v1729
        %v2077 = vunpack.c.l.b16 %v1730
        %v2078 = vunpack.c.l.b16 %v1731
        %v2079 = vunpack.c.l.b16 %v1732
        %v2080 = vpack.c.b16 %v2065, %v2064
        %v2081 = vpack.c.b16 %v2067, %v2066
        %v2082 = vpack.c.b16 %v2069, %v2068
        %v2083 = vpack.c.b16 %v2071, %v2070
        %v2084 = vpack.c.b16 %v2073, %v2072
        %v2085 = vpack.c.b16 %v2075, %v2074
        %v2086 = vpack.c.b16 %v2077, %v2076
        %v2087 = vpack.c.b16 %v2079, %v2078
        %2096 = vmatprep.subr.bf16.mxu0 0
        %2097 = vmatpush1.bf16.msra.mxu0 %v2080
        %2098 = vmatprep.subr.bf16.mxu0 0
        %2099 = vmatpush1.bf16.msra.mxu0 %v2081
        %2100 = vmatprep.subr.bf16.mxu0 0
        %2101 = vmatpush1.bf16.msra.mxu0 %v2082
        %2102 = vmatprep.subr.bf16.mxu0 0
        %2103 = vmatpush1.bf16.msra.mxu0 %v2083
        %2104 = vmatprep.subr.bf16.mxu0 0
        %2105 = vmatpush1.bf16.msra.mxu0 %v2084
        %2106 = vmatprep.subr.bf16.mxu0 0
        %2107 = vmatpush1.bf16.msra.mxu0 %v2085
        %2108 = vmatprep.subr.bf16.mxu0 0
        %2109 = vmatpush1.bf16.msra.mxu0 %v2086
        %2110 = vmatprep.subr.bf16.mxu0 0
        %2111 = vmatpush1.bf16.msra.mxu0 %v2087
        %2112 = vmatprep.subr.bf16.mxu0 0
        %2113 = vmatpush1.bf16.msra.mxu0 0
        %2114 = vmatprep.subr.bf16.mxu0 0
        %2115 = vmatpush1.bf16.msra.mxu0 0
        %2116 = vmatprep.subr.bf16.mxu0 0
        %2117 = vmatpush1.bf16.msra.mxu0 0
        %2118 = vmatprep.subr.bf16.mxu0 0
        %2119 = vmatpush1.bf16.msra.mxu0 0
        %2120 = vmatprep.subr.bf16.mxu0 0
        %2121 = vmatpush1.bf16.msra.mxu0 0
        %2122 = vmatprep.subr.bf16.mxu0 0
        %2123 = vmatpush1.bf16.msra.mxu0 0
        %2124 = vmatprep.subr.bf16.mxu0 0
        %2125 = vmatpush1.bf16.msra.mxu0 0
        %2126 = vmatprep.subr.bf16.mxu0 0
        %2127 = vmatpush1.bf16.msra.mxu0 0
        %2128 = vmatprep.mubr.bf16.mxu0 0
        %2129 = vmatmul.mubr.bf16.gmra.mrb[0].mxu0 %v2038
        %v2130 = vpop.f32.mrb[0].mxu0
        %v2131 = vadd.f32 %v2046, %v2130
        %v2132 = vpop.f32.mrb[0].mxu0
        %v2133 = vpop.f32.mrb[0].mxu0
        %v2134 = vadd.f32 %v2046, %v2133
        %v2135 = vpop.f32.mrb[0].mxu0
        %2136 = vmatprep.mubr.bf16.mxu0 0
        %2137 = vmatmul.mubr.bf16.gmra.mrb[0].mxu0 %v2039
        %v2138 = vpop.f32.mrb[0].mxu0
        %v2139 = vadd.f32 %v2046, %v2138
        %v2140 = vpop.f32.mrb[0].mxu0
        %v2141 = vpop.f32.mrb[0].mxu0
        %v2142 = vadd.f32 %v2046, %v2141
        %v2143 = vpop.f32.mrb[0].mxu0
        %2144 = vmatprep.mubr.bf16.mxu0 0
        %2145 = vmatmul.mubr.bf16.gmra.mrb[0].mxu0 %v2040
        %v2146 = vpop.f32.mrb[0].mxu0
        %v2147 = vadd.f32 %v2046, %v2146
        %v2148 = vpop.f32.mrb[0].mxu0
        %v2149 = vpop.f32.mrb[0].mxu0
        %v2150 = vadd.f32 %v2046, %v2149
        %v2151 = vpop.f32.mrb[0].mxu0
        %2152 = vmatprep.mubr.bf16.mxu0 0
        %2153 = vmatmul.mubr.bf16.gmra.mrb[0].mxu0 %v2041
        %v2154 = vpop.f32.mrb[0].mxu0
        %v2155 = vadd.f32 %v2046, %v2154
        %v2156 = vpop.f32.mrb[0].mxu0
        %v2157 = vpop.f32.mrb[0].mxu0
        %v2158 = vadd.f32 %v2046, %v2157
        %v2159 = vpop.f32.mrb[0].mxu0
        %2160 = vdwg.mxu0
        %vm2161 = vcmp.gt.f32.partialorder %v2131, 0.0
        %vm2162 = vcmp.gt.f32.partialorder %v2134, 0.0
        %vm2163 = vcmp.gt.f32.partialorder %v2139, 0.0
        %vm2164 = vcmp.gt.f32.partialorder %v2142, 0.0
        %vm2165 = vcmp.gt.f32.partialorder %v2147, 0.0
        %vm2166 = vcmp.gt.f32.partialorder %v2150, 0.0
        %vm2167 = vcmp.gt.f32.partialorder %v2155, 0.0
        %vm2168 = vcmp.gt.f32.partialorder %v2158, 0.0
        %v2169 = vmul.f32 %v2131, 0.01
        %v2170 = vmul.f32 %v2134, 0.01
        %v2171 = vmul.f32 %v2139, 0.01
        %v2172 = vmul.f32 %v2142, 0.01
        %v2173 = vmul.f32 %v2147, 0.01
        %v2174 = vmul.f32 %v2150, 0.01
        %v2175 = vmul.f32 %v2155, 0.01
        %v2176 = vmul.f32 %v2158, 0.01
        %v2177 = vsel %vm2161, %v2131, %v2169
        %v2178 = vsel %vm2162, %v2134, %v2170
        %v2179 = vsel %vm2163, %v2139, %v2171
        %v2180 = vsel %vm2164, %v2142, %v2172
        %v2181 = vsel %vm2165, %v2147, %v2173
        %v2182 = vsel %vm2166, %v2150, %v2174
        %v2183 = vsel %vm2167, %v2155, %v2175
        %v2184 = vsel %vm2168, %v2158, %v2176
        %v2185 = vpack.c.bf16 %v2178, %v2177
        %v2186 = vpack.c.bf16 %v2180, %v2179
        %v2187 = vpack.c.bf16 %v2182, %v2181
        %v2188 = vpack.c.bf16 %v2184, %v2183
        %v2190 = vlaneseq
        %v2191 = vshrl.u32 %v2190, 7
        %v2192 = vsub.s32 0, %v2191
        %v2193 = vrot.slane %v1754, %v2192
        %v2211 = vunpack.c.l.b16 %v1737
        %v2212 = vunpack.c.l.b16 %v1738
        %v2213 = vunpack.c.l.b16 %v1739
        %v2214 = vunpack.c.l.b16 %v1740
        %v2215 = vunpack.c.l.b16 %v1741
        %v2216 = vunpack.c.l.b16 %v1742
        %v2217 = vunpack.c.l.b16 %v1743
        %v2218 = vunpack.c.l.b16 %v1744
        %v2219 = vunpack.c.l.b16 %v1745
        %v2220 = vunpack.c.l.b16 %v1746
        %v2221 = vunpack.c.l.b16 %v1747
        %v2222 = vunpack.c.l.b16 %v1748
        %v2223 = vunpack.c.l.b16 %v1749
        %v2224 = vunpack.c.l.b16 %v1750
        %v2225 = vunpack.c.l.b16 %v1751
        %v2226 = vunpack.c.l.b16 %v1752
        %v2227 = vpack.c.b16 %v2212, %v2211
        %v2228 = vpack.c.b16 %v2214, %v2213
        %v2229 = vpack.c.b16 %v2216, %v2215
        %v2230 = vpack.c.b16 %v2218, %v2217
        %v2231 = vpack.c.b16 %v2220, %v2219
        %v2232 = vpack.c.b16 %v2222, %v2221
        %v2233 = vpack.c.b16 %v2224, %v2223
        %v2234 = vpack.c.b16 %v2226, %v2225
        %2243 = vmatprep.subr.bf16.mxu0 0
        %2244 = vmatpush1.bf16.msra.mxu0 %v2227
        %2245 = vmatprep.subr.bf16.mxu0 0
        %2246 = vmatpush1.bf16.msra.mxu0 %v2228
        %2247 = vmatprep.subr.bf16.mxu0 0
        %2248 = vmatpush1.bf16.msra.mxu0 %v2229
        %2249 = vmatprep.subr.bf16.mxu0 0
        %2250 = vmatpush1.bf16.msra.mxu0 %v2230
        %2251 = vmatprep.subr.bf16.mxu0 0
        %2252 = vmatpush1.bf16.msra.mxu0 %v2231
        %2253 = vmatprep.subr.bf16.mxu0 0
        %2254 = vmatpush1.bf16.msra.mxu0 %v2232
        %2255 = vmatprep.subr.bf16.mxu0 0
        %2256 = vmatpush1.bf16.msra.mxu0 %v2233
        %2257 = vmatprep.subr.bf16.mxu0 0
        %2258 = vmatpush1.bf16.msra.mxu0 %v2234
        %2259 = vmatprep.subr.bf16.mxu0 0
        %2260 = vmatpush1.bf16.msra.mxu0 0
        %2261 = vmatprep.subr.bf16.mxu0 0
        %2262 = vmatpush1.bf16.msra.mxu0 0
        %2263 = vmatprep.subr.bf16.mxu0 0
        %2264 = vmatpush1.bf16.msra.mxu0 0
        %2265 = vmatprep.subr.bf16.mxu0 0
        %2266 = vmatpush1.bf16.msra.mxu0 0
        %2267 = vmatprep.subr.bf16.mxu0 0
        %2268 = vmatpush1.bf16.msra.mxu0 0
        %2269 = vmatprep.subr.bf16.mxu0 0
        %2270 = vmatpush1.bf16.msra.mxu0 0
        %2271 = vmatprep.subr.bf16.mxu0 0
        %2272 = vmatpush1.bf16.msra.mxu0 0
        %2273 = vmatprep.subr.bf16.mxu0 0
        %2274 = vmatpush1.bf16.msra.mxu0 0
        %2275 = vmatprep.mubr.bf16.mxu0 0
        %2276 = vmatmul.mubr.bf16.gmra.mrb[0].mxu0 %v2185
        %v2277 = vpop.f32.mrb[0].mxu0
        %v2278 = vadd.f32 %v2193, %v2277
        %v2279 = vpop.f32.mrb[0].mxu0
        %v2280 = vpop.f32.mrb[0].mxu0
        %v2281 = vadd.f32 %v2193, %v2280
        %v2282 = vpop.f32.mrb[0].mxu0
        %2283 = vmatprep.mubr.bf16.mxu0 0
        %2284 = vmatmul.mubr.bf16.gmra.mrb[0].mxu0 %v2186
        %v2285 = vpop.f32.mrb[0].mxu0
        %v2286 = vadd.f32 %v2193, %v2285
        %v2287 = vpop.f32.mrb[0].mxu0
        %v2288 = vpop.f32.mrb[0].mxu0
        %v2289 = vadd.f32 %v2193, %v2288
        %v2290 = vpop.f32.mrb[0].mxu0
        %2291 = vmatprep.mubr.bf16.mxu0 0
        %2292 = vmatmul.mubr.bf16.gmra.mrb[0].mxu0 %v2187
        %v2293 = vpop.f32.mrb[0].mxu0
        %v2294 = vadd.f32 %v2193, %v2293
        %v2295 = vpop.f32.mrb[0].mxu0
        %v2296 = vpop.f32.mrb[0].mxu0
        %v2297 = vadd.f32 %v2193, %v2296
        %v2298 = vpop.f32.mrb[0].mxu0
        %2299 = vmatprep.mubr.bf16.mxu0 0
        %2300 = vmatmul.mubr.bf16.gmra.mrb[0].mxu0 %v2188
        %v2301 = vpop.f32.mrb[0].mxu0
        %v2302 = vadd.f32 %v2193, %v2301
        %v2303 = vpop.f32.mrb[0].mxu0
        %v2304 = vpop.f32.mrb[0].mxu0
        %v2305 = vadd.f32 %v2193, %v2304
        %v2306 = vpop.f32.mrb[0].mxu0
        %2307 = vdwg.mxu0
        %vm2308 = vcmp.gt.f32.partialorder %v2278, 0.0
        %vm2309 = vcmp.gt.f32.partialorder %v2281, 0.0
        %vm2310 = vcmp.gt.f32.partialorder %v2286, 0.0
        %vm2311 = vcmp.gt.f32.partialorder %v2289, 0.0
        %vm2312 = vcmp.gt.f32.partialorder %v2294, 0.0
        %vm2313 = vcmp.gt.f32.partialorder %v2297, 0.0
        %vm2314 = vcmp.gt.f32.partialorder %v2302, 0.0
        %vm2315 = vcmp.gt.f32.partialorder %v2305, 0.0
        %v2316 = vmul.f32 %v2278, 0.01
        %v2317 = vmul.f32 %v2281, 0.01
        %v2318 = vmul.f32 %v2286, 0.01
        %v2319 = vmul.f32 %v2289, 0.01
        %v2320 = vmul.f32 %v2294, 0.01
        %v2321 = vmul.f32 %v2297, 0.01
        %v2322 = vmul.f32 %v2302, 0.01
        %v2323 = vmul.f32 %v2305, 0.01
        %v2324 = vsel %vm2308, %v2278, %v2316
        %v2325 = vsel %vm2309, %v2281, %v2317
        %v2326 = vsel %vm2310, %v2286, %v2318
        %v2327 = vsel %vm2311, %v2289, %v2319
        %v2328 = vsel %vm2312, %v2294, %v2320
        %v2329 = vsel %vm2313, %v2297, %v2321
        %v2330 = vsel %vm2314, %v2302, %v2322
        %v2331 = vsel %vm2315, %v2305, %v2323
        %v2332 = vpack.c.bf16 %v2030, %v2029
        %v2333 = vpack.c.bf16 %v2032, %v2031
        %v2334 = vpack.c.bf16 %v2034, %v2033
        %v2335 = vpack.c.bf16 %v2036, %v2035
        %v2337 = vlaneseq
        %v2338 = vshrl.u32 %v2337, 7
        %v2339 = vsub.s32 0, %v2338
        %v2340 = vrot.slane %v1774, %v2339
        %v2358 = vunpack.c.l.b16 %v1757
        %v2359 = vunpack.c.l.b16 %v1758
        %v2360 = vunpack.c.l.b16 %v1759
        %v2361 = vunpack.c.l.b16 %v1760
        %v2362 = vunpack.c.l.b16 %v1761
        %v2363 = vunpack.c.l.b16 %v1762
        %v2364 = vunpack.c.l.b16 %v1763
        %v2365 = vunpack.c.l.b16 %v1764
        %v2366 = vunpack.c.l.b16 %v1765
        %v2367 = vunpack.c.l.b16 %v1766
        %v2368 = vunpack.c.l.b16 %v1767
        %v2369 = vunpack.c.l.b16 %v1768
        %v2370 = vunpack.c.l.b16 %v1769
        %v2371 = vunpack.c.l.b16 %v1770
        %v2372 = vunpack.c.l.b16 %v1771
        %v2373 = vunpack.c.l.b16 %v1772
        %v2374 = vpack.c.b16 %v2359, %v2358
        %v2375 = vpack.c.b16 %v2361, %v2360
        %v2376 = vpack.c.b16 %v2363, %v2362
        %v2377 = vpack.c.b16 %v2365, %v2364
        %v2378 = vpack.c.b16 %v2367, %v2366
        %v2379 = vpack.c.b16 %v2369, %v2368
        %v2380 = vpack.c.b16 %v2371, %v2370
        %v2381 = vpack.c.b16 %v2373, %v2372
        %2390 = vmatprep.subr.bf16.mxu0 0
        %2391 = vmatpush1.bf16.msra.mxu0 %v2374
        %2392 = vmatprep.subr.bf16.mxu0 0
        %2393 = vmatpush1.bf16.msra.mxu0 %v2375
        %2394 = vmatprep.subr.bf16.mxu0 0
        %2395 = vmatpush1.bf16.msra.mxu0 %v2376
        %2396 = vmatprep.subr.bf16.mxu0 0
        %2397 = vmatpush1.bf16.msra.mxu0 %v2377
        %2398 = vmatprep.subr.bf16.mxu0 0
        %2399 = vmatpush1.bf16.msra.mxu0 %v2378
        %2400 = vmatprep.subr.bf16.mxu0 0
        %2401 = vmatpush1.bf16.msra.mxu0 %v2379
        %2402 = vmatprep.subr.bf16.mxu0 0
        %2403 = vmatpush1.bf16.msra.mxu0 %v2380
        %2404 = vmatprep.subr.bf16.mxu0 0
        %2405 = vmatpush1.bf16.msra.mxu0 %v2381
        %2406 = vmatprep.subr.bf16.mxu0 0
        %2407 = vmatpush1.bf16.msra.mxu0 0
        %2408 = vmatprep.subr.bf16.mxu0 0
        %2409 = vmatpush1.bf16.msra.mxu0 0
        %2410 = vmatprep.subr.bf16.mxu0 0
        %2411 = vmatpush1.bf16.msra.mxu0 0
        %2412 = vmatprep.subr.bf16.mxu0 0
        %2413 = vmatpush1.bf16.msra.mxu0 0
        %2414 = vmatprep.subr.bf16.mxu0 0
        %2415 = vmatpush1.bf16.msra.mxu0 0
        %2416 = vmatprep.subr.bf16.mxu0 0
        %2417 = vmatpush1.bf16.msra.mxu0 0
        %2418 = vmatprep.subr.bf16.mxu0 0
        %2419 = vmatpush1.bf16.msra.mxu0 0
        %2420 = vmatprep.subr.bf16.mxu0 0
        %2421 = vmatpush1.bf16.msra.mxu0 0
        %2422 = vmatprep.mubr.bf16.mxu0 0
        %2423 = vmatmul.mubr.bf16.gmra.mrb[0].mxu0 %v2332
        %v2424 = vpop.f32.mrb[0].mxu0
        %v2425 = vadd.f32 %v2340, %v2424
        %v2426 = vpop.f32.mrb[0].mxu0
        %v2427 = vpop.f32.mrb[0].mxu0
        %v2428 = vadd.f32 %v2340, %v2427
        %v2429 = vpop.f32.mrb[0].mxu0
        %2430 = vmatprep.mubr.bf16.mxu0 0
        %2431 = vmatmul.mubr.bf16.gmra.mrb[0].mxu0 %v2333
        %v2432 = vpop.f32.mrb[0].mxu0
        %v2433 = vadd.f32 %v2340, %v2432
        %v2434 = vpop.f32.mrb[0].mxu0
        %v2435 = vpop.f32.mrb[0].mxu0
        %v2436 = vadd.f32 %v2340, %v2435
        %v2437 = vpop.f32.mrb[0].mxu0
        %2438 = vmatprep.mubr.bf16.mxu0 0
        %2439 = vmatmul.mubr.bf16.gmra.mrb[0].mxu0 %v2334
        %v2440 = vpop.f32.mrb[0].mxu0
        %v2441 = vadd.f32 %v2340, %v2440
        %v2442 = vpop.f32.mrb[0].mxu0
        %v2443 = vpop.f32.mrb[0].mxu0
        %v2444 = vadd.f32 %v2340, %v2443
        %v2445 = vpop.f32.mrb[0].mxu0
        %2446 = vmatprep.mubr.bf16.mxu0 0
        %2447 = vmatmul.mubr.bf16.gmra.mrb[0].mxu0 %v2335
        %v2448 = vpop.f32.mrb[0].mxu0
        %v2449 = vadd.f32 %v2340, %v2448
        %v2450 = vpop.f32.mrb[0].mxu0
        %v2451 = vpop.f32.mrb[0].mxu0
        %v2452 = vadd.f32 %v2340, %v2451
        %v2453 = vpop.f32.mrb[0].mxu0
        %2454 = vdwg.mxu0
        %vm2455 = vcmp.gt.f32.partialorder %v2425, 0.0
        %vm2456 = vcmp.gt.f32.partialorder %v2428, 0.0
        %vm2457 = vcmp.gt.f32.partialorder %v2433, 0.0
        %vm2458 = vcmp.gt.f32.partialorder %v2436, 0.0
        %vm2459 = vcmp.gt.f32.partialorder %v2441, 0.0
        %vm2460 = vcmp.gt.f32.partialorder %v2444, 0.0
        %vm2461 = vcmp.gt.f32.partialorder %v2449, 0.0
        %vm2462 = vcmp.gt.f32.partialorder %v2452, 0.0
        %v2463 = vmul.f32 %v2425, 0.01
        %v2464 = vmul.f32 %v2428, 0.01
        %v2465 = vmul.f32 %v2433, 0.01
        %v2466 = vmul.f32 %v2436, 0.01
        %v2467 = vmul.f32 %v2441, 0.01
        %v2468 = vmul.f32 %v2444, 0.01
        %v2469 = vmul.f32 %v2449, 0.01
        %v2470 = vmul.f32 %v2452, 0.01
        %v2471 = vsel %vm2455, %v2425, %v2463
        %v2472 = vsel %vm2456, %v2428, %v2464
        %v2473 = vsel %vm2457, %v2433, %v2465
        %v2474 = vsel %vm2458, %v2436, %v2466
        %v2475 = vsel %vm2459, %v2441, %v2467
        %v2476 = vsel %vm2460, %v2444, %v2468
        %v2477 = vsel %vm2461, %v2449, %v2469
        %v2478 = vsel %vm2462, %v2452, %v2470
        %v2479 = vpack.c.bf16 %v2472, %v2471
        %v2480 = vpack.c.bf16 %v2474, %v2473
        %v2481 = vpack.c.bf16 %v2476, %v2475
        %v2482 = vpack.c.bf16 %v2478, %v2477
        %v2484 = vlaneseq
        %v2485 = vshrl.u32 %v2484, 7
        %v2486 = vsub.s32 0, %v2485
        %v2487 = vrot.slane %v1794, %v2486
        %v2505 = vunpack.c.l.b16 %v1777
        %v2506 = vunpack.c.l.b16 %v1778
        %v2507 = vunpack.c.l.b16 %v1779
        %v2508 = vunpack.c.l.b16 %v1780
        %v2509 = vunpack.c.l.b16 %v1781
        %v2510 = vunpack.c.l.b16 %v1782
        %v2511 = vunpack.c.l.b16 %v1783
        %v2512 = vunpack.c.l.b16 %v1784
        %v2513 = vunpack.c.l.b16 %v1785
        %v2514 = vunpack.c.l.b16 %v1786
        %v2515 = vunpack.c.l.b16 %v1787
        %v2516 = vunpack.c.l.b16 %v1788
        %v2517 = vunpack.c.l.b16 %v1789
        %v2518 = vunpack.c.l.b16 %v1790
        %v2519 = vunpack.c.l.b16 %v1791
        %v2520 = vunpack.c.l.b16 %v1792
        %v2521 = vpack.c.b16 %v2506, %v2505
        %v2522 = vpack.c.b16 %v2508, %v2507
        %v2523 = vpack.c.b16 %v2510, %v2509
        %v2524 = vpack.c.b16 %v2512, %v2511
        %v2525 = vpack.c.b16 %v2514, %v2513
        %v2526 = vpack.c.b16 %v2516, %v2515
        %v2527 = vpack.c.b16 %v2518, %v2517
        %v2528 = vpack.c.b16 %v2520, %v2519
        %2537 = vmatprep.subr.bf16.mxu0 0
        %2538 = vmatpush1.bf16.msra.mxu0 %v2521
        %2539 = vmatprep.subr.bf16.mxu0 0
        %2540 = vmatpush1.bf16.msra.mxu0 %v2522
        %2541 = vmatprep.subr.bf16.mxu0 0
        %2542 = vmatpush1.bf16.msra.mxu0 %v2523
        %2543 = vmatprep.subr.bf16.mxu0 0
        %2544 = vmatpush1.bf16.msra.mxu0 %v2524
        %2545 = vmatprep.subr.bf16.mxu0 0
        %2546 = vmatpush1.bf16.msra.mxu0 %v2525
        %2547 = vmatprep.subr.bf16.mxu0 0
        %2548 = vmatpush1.bf16.msra.mxu0 %v2526
        %2549 = vmatprep.subr.bf16.mxu0 0
        %2550 = vmatpush1.bf16.msra.mxu0 %v2527
        %2551 = vmatprep.subr.bf16.mxu0 0
        %2552 = vmatpush1.bf16.msra.mxu0 %v2528
        %2553 = vmatprep.subr.bf16.mxu0 0
        %2554 = vmatpush1.bf16.msra.mxu0 0
        %2555 = vmatprep.subr.bf16.mxu0 0
        %2556 = vmatpush1.bf16.msra.mxu0 0
        %2557 = vmatprep.subr.bf16.mxu0 0
        %2558 = vmatpush1.bf16.msra.mxu0 0
        %2559 = vmatprep.subr.bf16.mxu0 0
        %2560 = vmatpush1.bf16.msra.mxu0 0
        %2561 = vmatprep.subr.bf16.mxu0 0
        %2562 = vmatpush1.bf16.msra.mxu0 0
        %2563 = vmatprep.subr.bf16.mxu0 0
        %2564 = vmatpush1.bf16.msra.mxu0 0
        %2565 = vmatprep.subr.bf16.mxu0 0
        %2566 = vmatpush1.bf16.msra.mxu0 0
        %2567 = vmatprep.subr.bf16.mxu0 0
        %2568 = vmatpush1.bf16.msra.mxu0 0
        %2569 = vmatprep.mubr.bf16.mxu0 0
        %2570 = vmatmul.mubr.bf16.gmra.mrb[0].mxu0 %v2479
        %v2571 = vpop.f32.mrb[0].mxu0
        %v2572 = vadd.f32 %v2487, %v2571
        %v2573 = vpop.f32.mrb[0].mxu0
        %v2574 = vpop.f32.mrb[0].mxu0
        %v2575 = vadd.f32 %v2487, %v2574
        %v2576 = vpop.f32.mrb[0].mxu0
        %2577 = vmatprep.mubr.bf16.mxu0 0
        %2578 = vmatmul.mubr.bf16.gmra.mrb[0].mxu0 %v2480
        %v2579 = vpop.f32.mrb[0].mxu0
        %v2580 = vadd.f32 %v2487, %v2579
        %v2581 = vpop.f32.mrb[0].mxu0
        %v2582 = vpop.f32.mrb[0].mxu0
        %v2583 = vadd.f32 %v2487, %v2582
        %v2584 = vpop.f32.mrb[0].mxu0
        %2585 = vmatprep.mubr.bf16.mxu0 0
        %2586 = vmatmul.mubr.bf16.gmra.mrb[0].mxu0 %v2481
        %v2587 = vpop.f32.mrb[0].mxu0
        %v2588 = vadd.f32 %v2487, %v2587
        %v2589 = vpop.f32.mrb[0].mxu0
        %v2590 = vpop.f32.mrb[0].mxu0
        %v2591 = vadd.f32 %v2487, %v2590
        %v2592 = vpop.f32.mrb[0].mxu0
        %2593 = vmatprep.mubr.bf16.mxu0 0
        %2594 = vmatmul.mubr.bf16.gmra.mrb[0].mxu0 %v2482
        %v2595 = vpop.f32.mrb[0].mxu0
        %v2596 = vadd.f32 %v2487, %v2595
        %v2597 = vpop.f32.mrb[0].mxu0
        %v2598 = vpop.f32.mrb[0].mxu0
        %v2599 = vadd.f32 %v2487, %v2598
        %v2600 = vpop.f32.mrb[0].mxu0
        %2601 = vdwg.mxu0
        %vm2602 = vcmp.gt.f32.partialorder %v2572, 0.0
        %vm2603 = vcmp.gt.f32.partialorder %v2575, 0.0
        %vm2604 = vcmp.gt.f32.partialorder %v2580, 0.0
        %vm2605 = vcmp.gt.f32.partialorder %v2583, 0.0
        %vm2606 = vcmp.gt.f32.partialorder %v2588, 0.0
        %vm2607 = vcmp.gt.f32.partialorder %v2591, 0.0
        %vm2608 = vcmp.gt.f32.partialorder %v2596, 0.0
        %vm2609 = vcmp.gt.f32.partialorder %v2599, 0.0
        %v2610 = vmul.f32 %v2572, 0.01
        %v2611 = vmul.f32 %v2575, 0.01
        %v2612 = vmul.f32 %v2580, 0.01
        %v2613 = vmul.f32 %v2583, 0.01
        %v2614 = vmul.f32 %v2588, 0.01
        %v2615 = vmul.f32 %v2591, 0.01
        %v2616 = vmul.f32 %v2596, 0.01
        %v2617 = vmul.f32 %v2599, 0.01
        %v2618 = vsel %vm2602, %v2572, %v2610
        %v2619 = vsel %vm2603, %v2575, %v2611
        %v2620 = vsel %vm2604, %v2580, %v2612
        %v2621 = vsel %vm2605, %v2583, %v2613
        %v2622 = vsel %vm2606, %v2588, %v2614
        %v2623 = vsel %vm2607, %v2591, %v2615
        %v2624 = vsel %vm2608, %v2596, %v2616
        %v2625 = vsel %vm2609, %v2599, %v2617
        %v2626 = vpack.c.bf16 %v2037, %v2037
        %v2628 = vlaneseq
        %v2629 = vshrl.u32 %v2628, 7
        %v2630 = vsub.s32 0, %v2629
        %v2631 = vrot.slane %v1814, %v2630
        %v2649 = vunpack.c.l.b16 %v1797
        %v2650 = vunpack.c.l.b16 %v1798
        %v2651 = vunpack.c.l.b16 %v1799
        %v2652 = vunpack.c.l.b16 %v1800
        %v2653 = vunpack.c.l.b16 %v1801
        %v2654 = vunpack.c.l.b16 %v1802
        %v2655 = vunpack.c.l.b16 %v1803
        %v2656 = vunpack.c.l.b16 %v1804
        %v2657 = vunpack.c.l.b16 %v1805
        %v2658 = vunpack.c.l.b16 %v1806
        %v2659 = vunpack.c.l.b16 %v1807
        %v2660 = vunpack.c.l.b16 %v1808
        %v2661 = vunpack.c.l.b16 %v1809
        %v2662 = vunpack.c.l.b16 %v1810
        %v2663 = vunpack.c.l.b16 %v1811
        %v2664 = vunpack.c.l.b16 %v1812
        %v2665 = vpack.c.b16 %v2650, %v2649
        %v2666 = vpack.c.b16 %v2652, %v2651
        %v2667 = vpack.c.b16 %v2654, %v2653
        %v2668 = vpack.c.b16 %v2656, %v2655
        %v2669 = vpack.c.b16 %v2658, %v2657
        %v2670 = vpack.c.b16 %v2660, %v2659
        %v2671 = vpack.c.b16 %v2662, %v2661
        %v2672 = vpack.c.b16 %v2664, %v2663
        %2681 = vmatprep.subr.bf16.mxu0 0
        %2682 = vmatpush1.bf16.msra.mxu0 %v2665
        %2683 = vmatprep.subr.bf16.mxu0 0
        %2684 = vmatpush1.bf16.msra.mxu0 %v2666
        %2685 = vmatprep.subr.bf16.mxu0 0
        %2686 = vmatpush1.bf16.msra.mxu0 %v2667
        %2687 = vmatprep.subr.bf16.mxu0 0
        %2688 = vmatpush1.bf16.msra.mxu0 %v2668
        %2689 = vmatprep.subr.bf16.mxu0 0
        %2690 = vmatpush1.bf16.msra.mxu0 %v2669
        %2691 = vmatprep.subr.bf16.mxu0 0
        %2692 = vmatpush1.bf16.msra.mxu0 %v2670
        %2693 = vmatprep.subr.bf16.mxu0 0
        %2694 = vmatpush1.bf16.msra.mxu0 %v2671
        %2695 = vmatprep.subr.bf16.mxu0 0
        %2696 = vmatpush1.bf16.msra.mxu0 %v2672
        %2697 = vmatprep.subr.bf16.mxu0 0
        %2698 = vmatpush1.bf16.msra.mxu0 0
        %2699 = vmatprep.subr.bf16.mxu0 0
        %2700 = vmatpush1.bf16.msra.mxu0 0
        %2701 = vmatprep.subr.bf16.mxu0 0
        %2702 = vmatpush1.bf16.msra.mxu0 0
        %2703 = vmatprep.subr.bf16.mxu0 0
        %2704 = vmatpush1.bf16.msra.mxu0 0
        %2705 = vmatprep.subr.bf16.mxu0 0
        %2706 = vmatpush1.bf16.msra.mxu0 0
        %2707 = vmatprep.subr.bf16.mxu0 0
        %2708 = vmatpush1.bf16.msra.mxu0 0
        %2709 = vmatprep.subr.bf16.mxu0 0
        %2710 = vmatpush1.bf16.msra.mxu0 0
        %2711 = vmatprep.subr.bf16.mxu0 0
        %2712 = vmatpush1.bf16.msra.mxu0 0
        %2713 = vmatprep.mubr.bf16.mxu0 0
        %2714 = vmatmul.mubr.bf16.gmra.mrb[0].mxu0 %v2626
        %v2715 = vpop.f32.mrb[0].mxu0
        %v2716 = vadd.f32 %v2631, %v2715
        %v2717 = vpop.f32.mrb[0].mxu0
        %v2718 = vpop.f32.mrb[0].mxu0
        %v2719 = vpop.f32.mrb[0].mxu0
        %2720 = vdwg.mxu0
        %vm2721 = vcmp.gt.f32.partialorder %v2716, 0.0
        %v2722 = vmul.f32 %v2716, 0.01
        %v2723 = vsel %vm2721, %v2716, %v2722
        %v2724 = vpack.c.bf16 %v2723, %v2723
        %v2726 = vlaneseq
        %v2727 = vshrl.u32 %v2726, 7
        %v2728 = vsub.s32 0, %v2727
        %v2729 = vrot.slane %v1834, %v2728
        %v2747 = vunpack.c.l.b16 %v1817
        %v2748 = vunpack.c.l.b16 %v1818
        %v2749 = vunpack.c.l.b16 %v1819
        %v2750 = vunpack.c.l.b16 %v1820
        %v2751 = vunpack.c.l.b16 %v1821
        %v2752 = vunpack.c.l.b16 %v1822
        %v2753 = vunpack.c.l.b16 %v1823
        %v2754 = vunpack.c.l.b16 %v1824
        %v2755 = vunpack.c.l.b16 %v1825
        %v2756 = vunpack.c.l.b16 %v1826
        %v2757 = vunpack.c.l.b16 %v1827
        %v2758 = vunpack.c.l.b16 %v1828
        %v2759 = vunpack.c.l.b16 %v1829
        %v2760 = vunpack.c.l.b16 %v1830
        %v2761 = vunpack.c.l.b16 %v1831
        %v2762 = vunpack.c.l.b16 %v1832
        %v2763 = vpack.c.b16 %v2748, %v2747
        %v2764 = vpack.c.b16 %v2750, %v2749
        %v2765 = vpack.c.b16 %v2752, %v2751
        %v2766 = vpack.c.b16 %v2754, %v2753
        %v2767 = vpack.c.b16 %v2756, %v2755
        %v2768 = vpack.c.b16 %v2758, %v2757
        %v2769 = vpack.c.b16 %v2760, %v2759
        %v2770 = vpack.c.b16 %v2762, %v2761
        %2779 = vmatprep.subr.bf16.mxu0 0
        %2780 = vmatpush1.bf16.msra.mxu0 %v2763
        %2781 = vmatprep.subr.bf16.mxu0 0
        %2782 = vmatpush1.bf16.msra.mxu0 %v2764
        %2783 = vmatprep.subr.bf16.mxu0 0
        %2784 = vmatpush1.bf16.msra.mxu0 %v2765
        %2785 = vmatprep.subr.bf16.mxu0 0
        %2786 = vmatpush1.bf16.msra.mxu0 %v2766
        %2787 = vmatprep.subr.bf16.mxu0 0
        %2788 = vmatpush1.bf16.msra.mxu0 %v2767
        %2789 = vmatprep.subr.bf16.mxu0 0
        %2790 = vmatpush1.bf16.msra.mxu0 %v2768
        %2791 = vmatprep.subr.bf16.mxu0 0
        %2792 = vmatpush1.bf16.msra.mxu0 %v2769
        %2793 = vmatprep.subr.bf16.mxu0 0
        %2794 = vmatpush1.bf16.msra.mxu0 %v2770
        %2795 = vmatprep.subr.bf16.mxu0 0
        %2796 = vmatpush1.bf16.msra.mxu0 0
        %2797 = vmatprep.subr.bf16.mxu0 0
        %2798 = vmatpush1.bf16.msra.mxu0 0
        %2799 = vmatprep.subr.bf16.mxu0 0
        %2800 = vmatpush1.bf16.msra.mxu0 0
        %2801 = vmatprep.subr.bf16.mxu0 0
        %2802 = vmatpush1.bf16.msra.mxu0 0
        %2803 = vmatprep.subr.bf16.mxu0 0
        %2804 = vmatpush1.bf16.msra.mxu0 0
        %2805 = vmatprep.subr.bf16.mxu0 0
        %2806 = vmatpush1.bf16.msra.mxu0 0
        %2807 = vmatprep.subr.bf16.mxu0 0
        %2808 = vmatpush1.bf16.msra.mxu0 0
        %2809 = vmatprep.subr.bf16.mxu0 0
        %2810 = vmatpush1.bf16.msra.mxu0 0
        %2811 = vmatprep.mubr.bf16.mxu0 0
        %2812 = vmatmul.mubr.bf16.gmra.mrb[0].mxu0 %v2724
        %v2813 = vpop.f32.mrb[0].mxu0
        %v2814 = vadd.f32 %v2729, %v2813
        %v2815 = vpop.f32.mrb[0].mxu0
        %v2816 = vpop.f32.mrb[0].mxu0
        %v2817 = vpop.f32.mrb[0].mxu0
        %2818 = vdwg.mxu0
        %vm2819 = vcmp.gt.f32.partialorder %v2814, 0.0
        %v2820 = vmul.f32 %v2814, 0.01
        %v2821 = vsel %vm2819, %v2814, %v2820
        %v2822 = vpack.c.bf16 %v2325, %v2324
        %v2823 = vpack.c.bf16 %v2327, %v2326
        %v2824 = vpack.c.bf16 %v2329, %v2328
        %v2825 = vpack.c.bf16 %v2331, %v2330
        %v2826 = vld [vmem:[%s1664] sm:$0xf]
        %v2827 = vld [vmem:[%s1664 + $0x4] sm:$0xf]
        %v2828 = vld [vmem:[%s1664 + $0x8] sm:$0xf]
        %v2829 = vld [vmem:[%s1664 + $0xc] sm:$0xf]
        %v2830 = vld [vmem:[%s1664 + $0x10] sm:$0xf]
        %v2831 = vld [vmem:[%s1664 + $0x14] sm:$0xf]
        %v2832 = vld [vmem:[%s1664 + $0x18] sm:$0xf]
        %v2833 = vld [vmem:[%s1664 + $0x1c] sm:$0xf]
        %v2842 = vunpack.c.l.b16 %v2826
        %v2843 = vunpack.c.l.b16 %v2827
        %v2844 = vunpack.c.l.b16 %v2828
        %v2845 = vunpack.c.l.b16 %v2829
        %v2846 = vunpack.c.l.b16 %v2830
        %v2847 = vunpack.c.l.b16 %v2831
        %v2848 = vunpack.c.l.b16 %v2832
        %v2849 = vunpack.c.l.b16 %v2833
        %v2850 = vpack.c.b16 %v2843, %v2842
        %v2851 = vpack.c.b16 %v2845, %v2844
        %v2852 = vpack.c.b16 %v2847, %v2846
        %v2853 = vpack.c.b16 %v2849, %v2848
        %vm2854 = vcmask 523264
        %v2856 = vsel %vm2854, %v2850, 0
        %v2859 = vsel %vm2854, %v2851, 0
        %v2862 = vsel %vm2854, %v2852, 0
        %v2865 = vsel %vm2854, %v2853, 0
        %2867 = vmatprep.subr.bf16.mxu0 0
        %2868 = vmatpush1.bf16.msra.mxu0 %v2822
        %2869 = vmatprep.subr.bf16.mxu0 0
        %2870 = vmatpush1.bf16.msra.mxu0 %v2823
        %2871 = vmatprep.subr.bf16.mxu0 0
        %2872 = vmatpush1.bf16.msra.mxu0 %v2824
        %2873 = vmatprep.subr.bf16.mxu0 0
        %2874 = vmatpush1.bf16.msra.mxu0 %v2825
        %2875 = vmatprep.subr.bf16.mxu0 0
        %2876 = vmatpush1.bf16.msra.mxu0 0
        %2877 = vmatprep.subr.bf16.mxu0 0
        %2878 = vmatpush1.bf16.msra.mxu0 0
        %2879 = vmatprep.subr.bf16.mxu0 0
        %2880 = vmatpush1.bf16.msra.mxu0 0
        %2881 = vmatprep.subr.bf16.mxu0 0
        %2882 = vmatpush1.bf16.msra.mxu0 0
        %2883 = vmatprep.subr.bf16.mxu0 0
        %2884 = vmatpush1.bf16.msra.mxu0 0
        %2885 = vmatprep.subr.bf16.mxu0 0
        %2886 = vmatpush1.bf16.msra.mxu0 0
        %2887 = vmatprep.subr.bf16.mxu0 0
        %2888 = vmatpush1.bf16.msra.mxu0 0
        %2889 = vmatprep.subr.bf16.mxu0 0
        %2890 = vmatpush1.bf16.msra.mxu0 0
        %2891 = vmatprep.subr.bf16.mxu0 0
        %2892 = vmatpush1.bf16.msra.mxu0 0
        %2893 = vmatprep.subr.bf16.mxu0 0
        %2894 = vmatpush1.bf16.msra.mxu0 0
        %2895 = vmatprep.subr.bf16.mxu0 0
        %2896 = vmatpush1.bf16.msra.mxu0 0
        %2897 = vmatprep.subr.bf16.mxu0 0
        %2898 = vmatpush1.bf16.msra.mxu0 0
        %2899 = vmatprep.mubr.bf16.mxu0 0
        %2900 = vmatmul.mubr.bf16.gmra.mrb[0].mxu0 %v2856
        %v2901 = vpop.f32.mrb[0].mxu0
        %v2902 = vadd.f32 0.0, %v2901
        %v2903 = vpop.f32.mrb[0].mxu0
        %v2904 = vpop.f32.mrb[0].mxu0
        %v2905 = vadd.f32 0.0, %v2904
        %v2906 = vpop.f32.mrb[0].mxu0
        %2907 = vmatprep.mubr.bf16.mxu0 0
        %2908 = vmatmul.mubr.bf16.gmra.mrb[0].mxu0 %v2859
        %v2909 = vpop.f32.mrb[0].mxu0
        %v2910 = vadd.f32 0.0, %v2909
        %v2911 = vpop.f32.mrb[0].mxu0
        %v2912 = vpop.f32.mrb[0].mxu0
        %v2913 = vadd.f32 0.0, %v2912
        %v2914 = vpop.f32.mrb[0].mxu0
        %2915 = vmatprep.mubr.bf16.mxu0 0
        %2916 = vmatmul.mubr.bf16.gmra.mrb[0].mxu0 %v2862
        %v2917 = vpop.f32.mrb[0].mxu0
        %v2918 = vadd.f32 0.0, %v2917
        %v2919 = vpop.f32.mrb[0].mxu0
        %v2920 = vpop.f32.mrb[0].mxu0
        %v2921 = vadd.f32 0.0, %v2920
        %v2922 = vpop.f32.mrb[0].mxu0
        %2923 = vmatprep.mubr.bf16.mxu0 0
        %2924 = vmatmul.mubr.bf16.gmra.mrb[0].mxu0 %v2865
        %v2925 = vpop.f32.mrb[0].mxu0
        %v2926 = vadd.f32 0.0, %v2925
        %v2927 = vpop.f32.mrb[0].mxu0
        %v2928 = vpop.f32.mrb[0].mxu0
        %v2929 = vadd.f32 0.0, %v2928
        %v2930 = vpop.f32.mrb[0].mxu0
        %2931 = vdwg.mxu0
        %v2932 = vld [vmem:[%s1427] sm:$0xf]
        %v2933 = vld [vmem:[%s1427 + $0x4] sm:$0xf]
        %v2934 = vld [vmem:[%s1427 + $0x8] sm:$0xf]
        %v2935 = vld [vmem:[%s1427 + $0xc] sm:$0xf]
        %v2936 = vld [vmem:[%s1427 + $0x10] sm:$0xf]
        %v2937 = vld [vmem:[%s1427 + $0x14] sm:$0xf]
        %v2938 = vld [vmem:[%s1427 + $0x18] sm:$0xf]
        %v2939 = vld [vmem:[%s1427 + $0x1c] sm:$0xf]
        %v2948 = vunpack.c.l.b16 %v2932
        %v2949 = vunpack.c.l.b16 %v2933
        %v2950 = vunpack.c.l.b16 %v2934
        %v2951 = vunpack.c.l.b16 %v2935
        %v2952 = vunpack.c.l.b16 %v2936
        %v2953 = vunpack.c.l.b16 %v2937
        %v2954 = vunpack.c.l.b16 %v2938
        %v2955 = vunpack.c.l.b16 %v2939
        %v2956 = vpack.c.b16 %v2949, %v2948
        %v2957 = vpack.c.b16 %v2951, %v2950
        %v2958 = vpack.c.b16 %v2953, %v2952
        %v2959 = vpack.c.b16 %v2955, %v2954
        %v2961 = vsel %vm2854, %v2956, 0
        %v2964 = vsel %vm2854, %v2957, 0
        %v2967 = vsel %vm2854, %v2958, 0
        %v2970 = vsel %vm2854, %v2959, 0
        %2972 = vmatprep.subr.bf16.mxu0 0
        %2973 = vmatpush1.bf16.msra.mxu0 %v2822
        %2974 = vmatprep.subr.bf16.mxu0 0
        %2975 = vmatpush1.bf16.msra.mxu0 %v2823
        %2976 = vmatprep.subr.bf16.mxu0 0
        %2977 = vmatpush1.bf16.msra.mxu0 %v2824
        %2978 = vmatprep.subr.bf16.mxu0 0
        %2979 = vmatpush1.bf16.msra.mxu0 %v2825
        %2980 = vmatprep.subr.bf16.mxu0 0
        %2981 = vmatpush1.bf16.msra.mxu0 0
        %2982 = vmatprep.subr.bf16.mxu0 0
        %2983 = vmatpush1.bf16.msra.mxu0 0
        %2984 = vmatprep.subr.bf16.mxu0 0
        %2985 = vmatpush1.bf16.msra.mxu0 0
        %2986 = vmatprep.subr.bf16.mxu0 0
        %2987 = vmatpush1.bf16.msra.mxu0 0
        %2988 = vmatprep.subr.bf16.mxu0 0
        %2989 = vmatpush1.bf16.msra.mxu0 0
        %2990 = vmatprep.subr.bf16.mxu0 0
        %2991 = vmatpush1.bf16.msra.mxu0 0
        %2992 = vmatprep.subr.bf16.mxu0 0
        %2993 = vmatpush1.bf16.msra.mxu0 0
        %2994 = vmatprep.subr.bf16.mxu0 0
        %2995 = vmatpush1.bf16.msra.mxu0 0
        %2996 = vmatprep.subr.bf16.mxu0 0
        %2997 = vmatpush1.bf16.msra.mxu0 0
        %2998 = vmatprep.subr.bf16.mxu0 0
        %2999 = vmatpush1.bf16.msra.mxu0 0
        %3000 = vmatprep.subr.bf16.mxu0 0
        %3001 = vmatpush1.bf16.msra.mxu0 0
        %3002 = vmatprep.subr.bf16.mxu0 0
        %3003 = vmatpush1.bf16.msra.mxu0 0
        %3004 = vmatprep.mubr.bf16.mxu0 0
        %3005 = vmatmul.mubr.bf16.gmra.mrb[0].mxu0 %v2961
        %v3006 = vpop.f32.mrb[0].mxu0
        %v3007 = vadd.f32 0.0, %v3006
        %v3008 = vpop.f32.mrb[0].mxu0
        %v3009 = vpop.f32.mrb[0].mxu0
        %v3010 = vadd.f32 0.0, %v3009
        %v3011 = vpop.f32.mrb[0].mxu0
        %3012 = vmatprep.mubr.bf16.mxu0 0
        %3013 = vmatmul.mubr.bf16.gmra.mrb[0].mxu0 %v2964
        %v3014 = vpop.f32.mrb[0].mxu0
        %v3015 = vadd.f32 0.0, %v3014
        %v3016 = vpop.f32.mrb[0].mxu0
        %v3017 = vpop.f32.mrb[0].mxu0
        %v3018 = vadd.f32 0.0, %v3017
        %v3019 = vpop.f32.mrb[0].mxu0
        %3020 = vmatprep.mubr.bf16.mxu0 0
        %3021 = vmatmul.mubr.bf16.gmra.mrb[0].mxu0 %v2967
        %v3022 = vpop.f32.mrb[0].mxu0
        %v3023 = vadd.f32 0.0, %v3022
        %v3024 = vpop.f32.mrb[0].mxu0
        %v3025 = vpop.f32.mrb[0].mxu0
        %v3026 = vadd.f32 0.0, %v3025
        %v3027 = vpop.f32.mrb[0].mxu0
        %3028 = vmatprep.mubr.bf16.mxu0 0
        %3029 = vmatmul.mubr.bf16.gmra.mrb[0].mxu0 %v2970
        %v3030 = vpop.f32.mrb[0].mxu0
        %v3031 = vadd.f32 0.0, %v3030
        %v3032 = vpop.f32.mrb[0].mxu0
        %v3033 = vpop.f32.mrb[0].mxu0
        %v3034 = vadd.f32 0.0, %v3033
        %v3035 = vpop.f32.mrb[0].mxu0
        %3036 = vdwg.mxu0
        %v3037 = vld [vmem:[%s1674] sm:$0xff]
        %v3038 = vld [vmem:[%s1674 + $0x8] sm:$0xff]
        %v3039 = vld [vmem:[%s1674 + $0x10] sm:$0xff]
        %v3040 = vld [vmem:[%s1674 + $0x18] sm:$0xff]
        %v3041 = vld [vmem:[%s1674 + $0x20] sm:$0xff]
        %v3042 = vld [vmem:[%s1674 + $0x28] sm:$0xff]
        %v3043 = vld [vmem:[%s1674 + $0x30] sm:$0xff]
        %v3044 = vld [vmem:[%s1674 + $0x38] sm:$0xff]
        %v3045 = vpack.c.bf16 %v2821, %v2821
        %v3062 = vunpack.c.l.b16 %v1891
        %v3063 = vunpack.c.l.b16 %v1892
        %v3064 = vunpack.c.l.b16 %v1893
        %v3065 = vunpack.c.l.b16 %v1894
        %v3066 = vunpack.c.l.b16 %v1895
        %v3067 = vunpack.c.l.b16 %v1896
        %v3068 = vunpack.c.l.b16 %v1897
        %v3069 = vunpack.c.l.b16 %v1898
        %v3070 = vunpack.c.l.b16 %v1899
        %v3071 = vunpack.c.l.b16 %v1900
        %v3072 = vunpack.c.l.b16 %v1901
        %v3073 = vunpack.c.l.b16 %v1902
        %v3074 = vunpack.c.l.b16 %v1903
        %v3075 = vunpack.c.l.b16 %v1904
        %v3076 = vunpack.c.l.b16 %v1905
        %v3077 = vunpack.c.l.b16 %v1906
        %v3078 = vpack.c.b16 %v3063, %v3062
        %v3079 = vpack.c.b16 %v3065, %v3064
        %v3080 = vpack.c.b16 %v3067, %v3066
        %v3081 = vpack.c.b16 %v3069, %v3068
        %v3082 = vpack.c.b16 %v3071, %v3070
        %v3083 = vpack.c.b16 %v3073, %v3072
        %v3084 = vpack.c.b16 %v3075, %v3074
        %v3085 = vpack.c.b16 %v3077, %v3076
        %3094 = vmatprep.subr.bf16.mxu0 0
        %3095 = vmatpush1.bf16.msra.mxu0 %v3078
        %3096 = vmatprep.subr.bf16.mxu0 0
        %3097 = vmatpush1.bf16.msra.mxu0 %v3079
        %3098 = vmatprep.subr.bf16.mxu0 0
        %3099 = vmatpush1.bf16.msra.mxu0 %v3080
        %3100 = vmatprep.subr.bf16.mxu0 0
        %3101 = vmatpush1.bf16.msra.mxu0 %v3081
        %3102 = vmatprep.subr.bf16.mxu0 0
        %3103 = vmatpush1.bf16.msra.mxu0 %v3082
        %3104 = vmatprep.subr.bf16.mxu0 0
        %3105 = vmatpush1.bf16.msra.mxu0 %v3083
        %3106 = vmatprep.subr.bf16.mxu0 0
        %3107 = vmatpush1.bf16.msra.mxu0 %v3084
        %3108 = vmatprep.subr.bf16.mxu0 0
        %3109 = vmatpush1.bf16.msra.mxu0 %v3085
        %3110 = vmatprep.subr.bf16.mxu0 0
        %3111 = vmatpush1.bf16.msra.mxu0 0
        %3112 = vmatprep.subr.bf16.mxu0 0
        %3113 = vmatpush1.bf16.msra.mxu0 0
        %3114 = vmatprep.subr.bf16.mxu0 0
        %3115 = vmatpush1.bf16.msra.mxu0 0
        %3116 = vmatprep.subr.bf16.mxu0 0
        %3117 = vmatpush1.bf16.msra.mxu0 0
        %3118 = vmatprep.subr.bf16.mxu0 0
        %3119 = vmatpush1.bf16.msra.mxu0 0
        %3120 = vmatprep.subr.bf16.mxu0 0
        %3121 = vmatpush1.bf16.msra.mxu0 0
        %3122 = vmatprep.subr.bf16.mxu0 0
        %3123 = vmatpush1.bf16.msra.mxu0 0
        %3124 = vmatprep.subr.bf16.mxu0 0
        %3125 = vmatpush1.bf16.msra.mxu0 0
        %3126 = vmatprep.mubr.bf16.mxu0 0
        %3127 = vmatmul.mubr.bf16.gmra.mrb[0].mxu0 %v3045
        %v3128 = vpop.f32.mrb[0].mxu0
        %v3129 = vadd.f32 0.0, %v3128
        %v3130 = vpop.f32.mrb[0].mxu0
        %v3131 = vpop.f32.mrb[0].mxu0
        %v3132 = vpop.f32.mrb[0].mxu0
        %3133 = vdwg.mxu0
        %vm3134 = vcmask 64512
        %v3136 = vsel %vm3134, %v3037, 0
        %v3139 = vsel %vm3134, %v3038, 0
        %v3142 = vsel %vm3134, %v3039, 0
        %v3145 = vsel %vm3134, %v3040, 0
        %v3148 = vsel %vm3134, %v3041, 0
        %v3151 = vsel %vm3134, %v3042, 0
        %v3154 = vsel %vm3134, %v3043, 0
        %v3157 = vsel %vm3134, %v3044, 0
        %3159 = vmatprep.subr.mxu0 0.0
        %v3160 = vand.u32 %v3129, 4294901760
        %3161 = vmatpush1.msra.mxu0 %v3160
        %3162 = vmatprep.subr.mxu0 0.0
        %3163 = vmatpush1.msra.mxu0 0.0
        %3164 = vmatprep.subr.mxu0 0.0
        %3165 = vmatpush1.msra.mxu0 0.0
        %3166 = vmatprep.subr.mxu0 0.0
        %3167 = vmatpush1.msra.mxu0 0.0
        %3168 = vmatprep.subr.mxu0 0.0
        %3169 = vmatpush1.msra.mxu0 0.0
        %3170 = vmatprep.subr.mxu0 0.0
        %3171 = vmatpush1.msra.mxu0 0.0
        %3172 = vmatprep.subr.mxu0 0.0
        %3173 = vmatpush1.msra.mxu0 0.0
        %3174 = vmatprep.subr.mxu0 0.0
        %3175 = vmatpush1.msra.mxu0 0.0
        %3176 = vmatprep.subr.mxu0 0.0
        %3177 = vmatpush1.msra.mxu0 0.0
        %3178 = vmatprep.subr.mxu0 0.0
        %3179 = vmatpush1.msra.mxu0 0.0
        %3180 = vmatprep.subr.mxu0 0.0
        %3181 = vmatpush1.msra.mxu0 0.0
        %3182 = vmatprep.subr.mxu0 0.0
        %3183 = vmatpush1.msra.mxu0 0.0
        %3184 = vmatprep.subr.mxu0 0.0
        %3185 = vmatpush1.msra.mxu0 0.0
        %3186 = vmatprep.subr.mxu0 0.0
        %3187 = vmatpush1.msra.mxu0 0.0
        %3188 = vmatprep.subr.mxu0 0.0
        %3189 = vmatpush1.msra.mxu0 0.0
        %3190 = vmatprep.subr.mxu0 0.0
        %3191 = vmatpush1.msra.mxu0 0.0
        %3192 = vmatprep.subr.mxu0 0.0
        %3193 = vmatpush1.msra.mxu0 0.0
        %3194 = vmatprep.subr.mxu0 0.0
        %3195 = vmatpush1.msra.mxu0 0.0
        %3196 = vmatprep.subr.mxu0 0.0
        %3197 = vmatpush1.msra.mxu0 0.0
        %3198 = vmatprep.subr.mxu0 0.0
        %3199 = vmatpush1.msra.mxu0 0.0
        %3200 = vmatprep.subr.mxu0 0.0
        %3201 = vmatpush1.msra.mxu0 0.0
        %3202 = vmatprep.subr.mxu0 0.0
        %3203 = vmatpush1.msra.mxu0 0.0
        %3204 = vmatprep.subr.mxu0 0.0
        %3205 = vmatpush1.msra.mxu0 0.0
        %3206 = vmatprep.subr.mxu0 0.0
        %3207 = vmatpush1.msra.mxu0 0.0
        %3208 = vmatprep.subr.mxu0 0.0
        %3209 = vmatpush1.msra.mxu0 0.0
        %3210 = vmatprep.subr.mxu0 0.0
        %3211 = vmatpush1.msra.mxu0 0.0
        %3212 = vmatprep.subr.mxu0 0.0
        %3213 = vmatpush1.msra.mxu0 0.0
        %3214 = vmatprep.subr.mxu0 0.0
        %3215 = vmatpush1.msra.mxu0 0.0
        %3216 = vmatprep.subr.mxu0 0.0
        %3217 = vmatpush1.msra.mxu0 0.0
        %3218 = vmatprep.subr.mxu0 0.0
        %3219 = vmatpush1.msra.mxu0 0.0
        %3220 = vmatprep.subr.mxu0 0.0
        %3221 = vmatpush1.msra.mxu0 0.0
        %3222 = vmatprep.subr.mxu0 0.0
        %3223 = vmatpush1.msra.mxu0 0.0
        %3224 = vmatprep.mubr.f32.mxu0 0.0
        %v3225 = vand.u32 %v3136, 4294901760
        %v3226 = vsub.f32 %v3136, %v3225
        %v3227 = vand.u32 %v3226, 4294901760
        %v3228 = vsub.f32 %v3226, %v3227
        %v3229 = vand.u32 %v3228, 4294901760
        %3230 = vmatmul.mubr.f32.gmra.mrb[0].mxu0 %v3229
        %v3231 = vpop.f32.mrb[0].mxu0
        %v3232 = vadd.f32 0.0, %v3231
        %v3233 = vpop.f32.mrb[0].mxu0
        %3234 = vmatprep.mubr.f32.mxu0 0.0
        %v3235 = vand.u32 %v3139, 4294901760
        %v3236 = vsub.f32 %v3139, %v3235
        %v3237 = vand.u32 %v3236, 4294901760
        %v3238 = vsub.f32 %v3236, %v3237
        %v3239 = vand.u32 %v3238, 4294901760
        %3240 = vmatmul.mubr.f32.gmra.mrb[0].mxu0 %v3239
        %v3241 = vpop.f32.mrb[0].mxu0
        %v3242 = vadd.f32 0.0, %v3241
        %v3243 = vpop.f32.mrb[0].mxu0
        %3244 = vmatprep.mubr.f32.mxu0 0.0
        %v3245 = vand.u32 %v3142, 4294901760
        %v3246 = vsub.f32 %v3142, %v3245
        %v3247 = vand.u32 %v3246, 4294901760
        %v3248 = vsub.f32 %v3246, %v3247
        %v3249 = vand.u32 %v3248, 4294901760
        %3250 = vmatmul.mubr.f32.gmra.mrb[0].mxu0 %v3249
        %v3251 = vpop.f32.mrb[0].mxu0
        %v3252 = vadd.f32 0.0, %v3251
        %v3253 = vpop.f32.mrb[0].mxu0
        %3254 = vmatprep.mubr.f32.mxu0 0.0
        %v3255 = vand.u32 %v3145, 4294901760
        %v3256 = vsub.f32 %v3145, %v3255
        %v3257 = vand.u32 %v3256, 4294901760
        %v3258 = vsub.f32 %v3256, %v3257
        %v3259 = vand.u32 %v3258, 4294901760
        %3260 = vmatmul.mubr.f32.gmra.mrb[0].mxu0 %v3259
        %v3261 = vpop.f32.mrb[0].mxu0
        %v3262 = vadd.f32 0.0, %v3261
        %v3263 = vpop.f32.mrb[0].mxu0
        %3264 = vmatprep.mubr.f32.mxu0 0.0
        %v3265 = vand.u32 %v3148, 4294901760
        %v3266 = vsub.f32 %v3148, %v3265
        %v3267 = vand.u32 %v3266, 4294901760
        %v3268 = vsub.f32 %v3266, %v3267
        %v3269 = vand.u32 %v3268, 4294901760
        %3270 = vmatmul.mubr.f32.gmra.mrb[0].mxu0 %v3269
        %v3271 = vpop.f32.mrb[0].mxu0
        %v3272 = vadd.f32 0.0, %v3271
        %v3273 = vpop.f32.mrb[0].mxu0
        %3274 = vmatprep.mubr.f32.mxu0 0.0
        %v3275 = vand.u32 %v3151, 4294901760
        %v3276 = vsub.f32 %v3151, %v3275
        %v3277 = vand.u32 %v3276, 4294901760
        %v3278 = vsub.f32 %v3276, %v3277
        %v3279 = vand.u32 %v3278, 4294901760
        %3280 = vmatmul.mubr.f32.gmra.mrb[0].mxu0 %v3279
        %v3281 = vpop.f32.mrb[0].mxu0
        %v3282 = vadd.f32 0.0, %v3281
        %v3283 = vpop.f32.mrb[0].mxu0
        %3284 = vmatprep.mubr.f32.mxu0 0.0
        %v3285 = vand.u32 %v3154, 4294901760
        %v3286 = vsub.f32 %v3154, %v3285
        %v3287 = vand.u32 %v3286, 4294901760
        %v3288 = vsub.f32 %v3286, %v3287
        %v3289 = vand.u32 %v3288, 4294901760
        %3290 = vmatmul.mubr.f32.gmra.mrb[0].mxu0 %v3289
        %v3291 = vpop.f32.mrb[0].mxu0
        %v3292 = vadd.f32 0.0, %v3291
        %v3293 = vpop.f32.mrb[0].mxu0
        %3294 = vmatprep.mubr.f32.mxu0 0.0
        %v3295 = vand.u32 %v3157, 4294901760
        %v3296 = vsub.f32 %v3157, %v3295
        %v3297 = vand.u32 %v3296, 4294901760
        %v3298 = vsub.f32 %v3296, %v3297
        %v3299 = vand.u32 %v3298, 4294901760
        %3300 = vmatmul.mubr.f32.gmra.mrb[0].mxu0 %v3299
        %v3301 = vpop.f32.mrb[0].mxu0
        %v3302 = vadd.f32 0.0, %v3301
        %v3303 = vpop.f32.mrb[0].mxu0
        %3304 = vdwg.mxu0
        %3305 = vmatprep.subr.mxu0 0.0
        %v3306 = vand.u32 %v3129, 4294901760
        %v3307 = vsub.f32 %v3129, %v3306
        %v3308 = vand.u32 %v3307, 4294901760
        %v3309 = vsub.f32 %v3307, %v3308
        %v3310 = vand.u32 %v3309, 4294901760
        %3311 = vmatpush1.msra.mxu0 %v3310
        %3312 = vmatprep.subr.mxu0 0.0
        %3313 = vmatpush1.msra.mxu0 0.0
        %3314 = vmatprep.subr.mxu0 0.0
        %3315 = vmatpush1.msra.mxu0 0.0
        %3316 = vmatprep.subr.mxu0 0.0
        %3317 = vmatpush1.msra.mxu0 0.0
        %3318 = vmatprep.subr.mxu0 0.0
        %3319 = vmatpush1.msra.mxu0 0.0
        %3320 = vmatprep.subr.mxu0 0.0
        %3321 = vmatpush1.msra.mxu0 0.0
        %3322 = vmatprep.subr.mxu0 0.0
        %3323 = vmatpush1.msra.mxu0 0.0
        %3324 = vmatprep.subr.mxu0 0.0
        %3325 = vmatpush1.msra.mxu0 0.0
        %3326 = vmatprep.subr.mxu0 0.0
        %3327 = vmatpush1.msra.mxu0 0.0
        %3328 = vmatprep.subr.mxu0 0.0
        %3329 = vmatpush1.msra.mxu0 0.0
        %3330 = vmatprep.subr.mxu0 0.0
        %3331 = vmatpush1.msra.mxu0 0.0
        %3332 = vmatprep.subr.mxu0 0.0
        %3333 = vmatpush1.msra.mxu0 0.0
        %3334 = vmatprep.subr.mxu0 0.0
        %3335 = vmatpush1.msra.mxu0 0.0
        %3336 = vmatprep.subr.mxu0 0.0
        %3337 = vmatpush1.msra.mxu0 0.0
        %3338 = vmatprep.subr.mxu0 0.0
        %3339 = vmatpush1.msra.mxu0 0.0
        %3340 = vmatprep.subr.mxu0 0.0
        %3341 = vmatpush1.msra.mxu0 0.0
        %3342 = vmatprep.subr.mxu0 0.0
        %3343 = vmatpush1.msra.mxu0 0.0
        %3344 = vmatprep.subr.mxu0 0.0
        %3345 = vmatpush1.msra.mxu0 0.0
        %3346 = vmatprep.subr.mxu0 0.0
        %3347 = vmatpush1.msra.mxu0 0.0
        %3348 = vmatprep.subr.mxu0 0.0
        %3349 = vmatpush1.msra.mxu0 0.0
        %3350 = vmatprep.subr.mxu0 0.0
        %3351 = vmatpush1.msra.mxu0 0.0
        %3352 = vmatprep.subr.mxu0 0.0
        %3353 = vmatpush1.msra.mxu0 0.0
        %3354 = vmatprep.subr.mxu0 0.0
        %3355 = vmatpush1.msra.mxu0 0.0
        %3356 = vmatprep.subr.mxu0 0.0
        %3357 = vmatpush1.msra.mxu0 0.0
        %3358 = vmatprep.subr.mxu0 0.0
        %3359 = vmatpush1.msra.mxu0 0.0
        %3360 = vmatprep.subr.mxu0 0.0
        %3361 = vmatpush1.msra.mxu0 0.0
        %3362 = vmatprep.subr.mxu0 0.0
        %3363 = vmatpush1.msra.mxu0 0.0
        %3364 = vmatprep.subr.mxu0 0.0
        %3365 = vmatpush1.msra.mxu0 0.0
        %3366 = vmatprep.subr.mxu0 0.0
        %3367 = vmatpush1.msra.mxu0 0.0
        %3368 = vmatprep.subr.mxu0 0.0
        %3369 = vmatpush1.msra.mxu0 0.0
        %3370 = vmatprep.subr.mxu0 0.0
        %3371 = vmatpush1.msra.mxu0 0.0
        %3372 = vmatprep.subr.mxu0 0.0
        %3373 = vmatpush1.msra.mxu0 0.0
        %3374 = vmatprep.mubr.f32.mxu0 0.0
        %v3375 = vand.u32 %v3136, 4294901760
        %3376 = vmatmul.mubr.f32.gmra.mrb[0].mxu0 %v3375
        %v3377 = vpop.f32.mrb[0].mxu0
        %v3378 = vadd.f32 %v3232, %v3377
        %v3379 = vpop.f32.mrb[0].mxu0
        %3380 = vmatprep.mubr.f32.mxu0 0.0
        %v3381 = vand.u32 %v3139, 4294901760
        %3382 = vmatmul.mubr.f32.gmra.mrb[0].mxu0 %v3381
        %v3383 = vpop.f32.mrb[0].mxu0
        %v3384 = vadd.f32 %v3242, %v3383
        %v3385 = vpop.f32.mrb[0].mxu0
        %3386 = vmatprep.mubr.f32.mxu0 0.0
        %v3387 = vand.u32 %v3142, 4294901760
        %3388 = vmatmul.mubr.f32.gmra.mrb[0].mxu0 %v3387
        %v3389 = vpop.f32.mrb[0].mxu0
        %v3390 = vadd.f32 %v3252, %v3389
        %v3391 = vpop.f32.mrb[0].mxu0
        %3392 = vmatprep.mubr.f32.mxu0 0.0
        %v3393 = vand.u32 %v3145, 4294901760
        %3394 = vmatmul.mubr.f32.gmra.mrb[0].mxu0 %v3393
        %v3395 = vpop.f32.mrb[0].mxu0
        %v3396 = vadd.f32 %v3262, %v3395
        %v3397 = vpop.f32.mrb[0].mxu0
        %3398 = vmatprep.mubr.f32.mxu0 0.0
        %v3399 = vand.u32 %v3148, 4294901760
        %3400 = vmatmul.mubr.f32.gmra.mrb[0].mxu0 %v3399
        %v3401 = vpop.f32.mrb[0].mxu0
        %v3402 = vadd.f32 %v3272, %v3401
        %v3403 = vpop.f32.mrb[0].mxu0
        %3404 = vmatprep.mubr.f32.mxu0 0.0
        %v3405 = vand.u32 %v3151, 4294901760
        %3406 = vmatmul.mubr.f32.gmra.mrb[0].mxu0 %v3405
        %v3407 = vpop.f32.mrb[0].mxu0
        %v3408 = vadd.f32 %v3282, %v3407
        %v3409 = vpop.f32.mrb[0].mxu0
        %3410 = vmatprep.mubr.f32.mxu0 0.0
        %v3411 = vand.u32 %v3154, 4294901760
        %3412 = vmatmul.mubr.f32.gmra.mrb[0].mxu0 %v3411
        %v3413 = vpop.f32.mrb[0].mxu0
        %v3414 = vadd.f32 %v3292, %v3413
        %v3415 = vpop.f32.mrb[0].mxu0
        %3416 = vmatprep.mubr.f32.mxu0 0.0
        %v3417 = vand.u32 %v3157, 4294901760
        %3418 = vmatmul.mubr.f32.gmra.mrb[0].mxu0 %v3417
        %v3419 = vpop.f32.mrb[0].mxu0
        %v3420 = vadd.f32 %v3302, %v3419
        %v3421 = vpop.f32.mrb[0].mxu0
        %3422 = vdwg.mxu0
        %3423 = vmatprep.subr.mxu0 0.0
        %v3424 = vand.u32 %v3129, 4294901760
        %v3425 = vsub.f32 %v3129, %v3424
        %3426 = vmatpush1.msra.mxu0 %v3425
        %3427 = vmatprep.subr.mxu0 0.0
        %3428 = vmatpush1.msra.mxu0 0.0
        %3429 = vmatprep.subr.mxu0 0.0
        %3430 = vmatpush1.msra.mxu0 0.0
        %3431 = vmatprep.subr.mxu0 0.0
        %3432 = vmatpush1.msra.mxu0 0.0
        %3433 = vmatprep.subr.mxu0 0.0
        %3434 = vmatpush1.msra.mxu0 0.0
        %3435 = vmatprep.subr.mxu0 0.0
        %3436 = vmatpush1.msra.mxu0 0.0
        %3437 = vmatprep.subr.mxu0 0.0
        %3438 = vmatpush1.msra.mxu0 0.0
        %3439 = vmatprep.subr.mxu0 0.0
        %3440 = vmatpush1.msra.mxu0 0.0
        %3441 = vmatprep.subr.mxu0 0.0
        %3442 = vmatpush1.msra.mxu0 0.0
        %3443 = vmatprep.subr.mxu0 0.0
        %3444 = vmatpush1.msra.mxu0 0.0
        %3445 = vmatprep.subr.mxu0 0.0
        %3446 = vmatpush1.msra.mxu0 0.0
        %3447 = vmatprep.subr.mxu0 0.0
        %3448 = vmatpush1.msra.mxu0 0.0
        %3449 = vmatprep.subr.mxu0 0.0
        %3450 = vmatpush1.msra.mxu0 0.0
        %3451 = vmatprep.subr.mxu0 0.0
        %3452 = vmatpush1.msra.mxu0 0.0
        %3453 = vmatprep.subr.mxu0 0.0
        %3454 = vmatpush1.msra.mxu0 0.0
        %3455 = vmatprep.subr.mxu0 0.0
        %3456 = vmatpush1.msra.mxu0 0.0
        %3457 = vmatprep.subr.mxu0 0.0
        %3458 = vmatpush1.msra.mxu0 0.0
        %3459 = vmatprep.subr.mxu0 0.0
        %3460 = vmatpush1.msra.mxu0 0.0
        %3461 = vmatprep.subr.mxu0 0.0
        %3462 = vmatpush1.msra.mxu0 0.0
        %3463 = vmatprep.subr.mxu0 0.0
        %3464 = vmatpush1.msra.mxu0 0.0
        %3465 = vmatprep.subr.mxu0 0.0
        %3466 = vmatpush1.msra.mxu0 0.0
        %3467 = vmatprep.subr.mxu0 0.0
        %3468 = vmatpush1.msra.mxu0 0.0
        %3469 = vmatprep.subr.mxu0 0.0
        %3470 = vmatpush1.msra.mxu0 0.0
        %3471 = vmatprep.subr.mxu0 0.0
        %3472 = vmatpush1.msra.mxu0 0.0
        %3473 = vmatprep.subr.mxu0 0.0
        %3474 = vmatpush1.msra.mxu0 0.0
        %3475 = vmatprep.subr.mxu0 0.0
        %3476 = vmatpush1.msra.mxu0 0.0
        %3477 = vmatprep.subr.mxu0 0.0
        %3478 = vmatpush1.msra.mxu0 0.0
        %3479 = vmatprep.subr.mxu0 0.0
        %3480 = vmatpush1.msra.mxu0 0.0
        %3481 = vmatprep.subr.mxu0 0.0
        %3482 = vmatpush1.msra.mxu0 0.0
        %3483 = vmatprep.subr.mxu0 0.0
        %3484 = vmatpush1.msra.mxu0 0.0
        %3485 = vmatprep.subr.mxu0 0.0
        %3486 = vmatpush1.msra.mxu0 0.0
        %3487 = vmatprep.subr.mxu0 0.0
        %3488 = vmatpush1.msra.mxu0 0.0
        %3489 = vmatprep.mubr.f32.mxu0 0.0
        %v3490 = vand.u32 %v3136, 4294901760
        %v3491 = vsub.f32 %v3136, %v3490
        %3492 = vmatmul.mubr.f32.gmra.mrb[0].mxu0 %v3491
        %v3493 = vpop.f32.mrb[0].mxu0
        %v3494 = vadd.f32 %v3378, %v3493
        %v3495 = vpop.f32.mrb[0].mxu0
        %3496 = vmatprep.mubr.f32.mxu0 0.0
        %v3497 = vand.u32 %v3139, 4294901760
        %v3498 = vsub.f32 %v3139, %v3497
        %3499 = vmatmul.mubr.f32.gmra.mrb[0].mxu0 %v3498
        %v3500 = vpop.f32.mrb[0].mxu0
        %v3501 = vadd.f32 %v3384, %v3500
        %v3502 = vpop.f32.mrb[0].mxu0
        %3503 = vmatprep.mubr.f32.mxu0 0.0
        %v3504 = vand.u32 %v3142, 4294901760
        %v3505 = vsub.f32 %v3142, %v3504
        %3506 = vmatmul.mubr.f32.gmra.mrb[0].mxu0 %v3505
        %v3507 = vpop.f32.mrb[0].mxu0
        %v3508 = vadd.f32 %v3390, %v3507
        %v3509 = vpop.f32.mrb[0].mxu0
        %3510 = vmatprep.mubr.f32.mxu0 0.0
        %v3511 = vand.u32 %v3145, 4294901760
        %v3512 = vsub.f32 %v3145, %v3511
        %3513 = vmatmul.mubr.f32.gmra.mrb[0].mxu0 %v3512
        %v3514 = vpop.f32.mrb[0].mxu0
        %v3515 = vadd.f32 %v3396, %v3514
        %v3516 = vpop.f32.mrb[0].mxu0
        %3517 = vmatprep.mubr.f32.mxu0 0.0
        %v3518 = vand.u32 %v3148, 4294901760
        %v3519 = vsub.f32 %v3148, %v3518
        %3520 = vmatmul.mubr.f32.gmra.mrb[0].mxu0 %v3519
        %v3521 = vpop.f32.mrb[0].mxu0
        %v3522 = vadd.f32 %v3402, %v3521
        %v3523 = vpop.f32.mrb[0].mxu0
        %3524 = vmatprep.mubr.f32.mxu0 0.0
        %v3525 = vand.u32 %v3151, 4294901760
        %v3526 = vsub.f32 %v3151, %v3525
        %3527 = vmatmul.mubr.f32.gmra.mrb[0].mxu0 %v3526
        %v3528 = vpop.f32.mrb[0].mxu0
        %v3529 = vadd.f32 %v3408, %v3528
        %v3530 = vpop.f32.mrb[0].mxu0
        %3531 = vmatprep.mubr.f32.mxu0 0.0
        %v3532 = vand.u32 %v3154, 4294901760
        %v3533 = vsub.f32 %v3154, %v3532
        %3534 = vmatmul.mubr.f32.gmra.mrb[0].mxu0 %v3533
        %v3535 = vpop.f32.mrb[0].mxu0
        %v3536 = vadd.f32 %v3414, %v3535
        %v3537 = vpop.f32.mrb[0].mxu0
        %3538 = vmatprep.mubr.f32.mxu0 0.0
        %v3539 = vand.u32 %v3157, 4294901760
        %v3540 = vsub.f32 %v3157, %v3539
        %3541 = vmatmul.mubr.f32.gmra.mrb[0].mxu0 %v3540
        %v3542 = vpop.f32.mrb[0].mxu0
        %v3543 = vadd.f32 %v3420, %v3542
        %v3544 = vpop.f32.mrb[0].mxu0
        %3545 = vdwg.mxu0
        %3546 = vmatprep.subr.mxu0 0.0
        %v3547 = vand.u32 %v3129, 4294901760
        %3548 = vmatpush1.msra.mxu0 %v3547
        %3549 = vmatprep.subr.mxu0 0.0
        %3550 = vmatpush1.msra.mxu0 0.0
        %3551 = vmatprep.subr.mxu0 0.0
        %3552 = vmatpush1.msra.mxu0 0.0
        %3553 = vmatprep.subr.mxu0 0.0
        %3554 = vmatpush1.msra.mxu0 0.0
        %3555 = vmatprep.subr.mxu0 0.0
        %3556 = vmatpush1.msra.mxu0 0.0
        %3557 = vmatprep.subr.mxu0 0.0
        %3558 = vmatpush1.msra.mxu0 0.0
        %3559 = vmatprep.subr.mxu0 0.0
        %3560 = vmatpush1.msra.mxu0 0.0
        %3561 = vmatprep.subr.mxu0 0.0
        %3562 = vmatpush1.msra.mxu0 0.0
        %3563 = vmatprep.subr.mxu0 0.0
        %3564 = vmatpush1.msra.mxu0 0.0
        %3565 = vmatprep.subr.mxu0 0.0
        %3566 = vmatpush1.msra.mxu0 0.0
        %3567 = vmatprep.subr.mxu0 0.0
        %3568 = vmatpush1.msra.mxu0 0.0
        %3569 = vmatprep.subr.mxu0 0.0
        %3570 = vmatpush1.msra.mxu0 0.0
        %3571 = vmatprep.subr.mxu0 0.0
        %3572 = vmatpush1.msra.mxu0 0.0
        %3573 = vmatprep.subr.mxu0 0.0
        %3574 = vmatpush1.msra.mxu0 0.0
        %3575 = vmatprep.subr.mxu0 0.0
        %3576 = vmatpush1.msra.mxu0 0.0
        %3577 = vmatprep.subr.mxu0 0.0
        %3578 = vmatpush1.msra.mxu0 0.0
        %3579 = vmatprep.subr.mxu0 0.0
        %3580 = vmatpush1.msra.mxu0 0.0
        %3581 = vmatprep.subr.mxu0 0.0
        %3582 = vmatpush1.msra.mxu0 0.0
        %3583 = vmatprep.subr.mxu0 0.0
        %3584 = vmatpush1.msra.mxu0 0.0
        %3585 = vmatprep.subr.mxu0 0.0
        %3586 = vmatpush1.msra.mxu0 0.0
        %3587 = vmatprep.subr.mxu0 0.0
        %3588 = vmatpush1.msra.mxu0 0.0
        %3589 = vmatprep.subr.mxu0 0.0
        %3590 = vmatpush1.msra.mxu0 0.0
        %3591 = vmatprep.subr.mxu0 0.0
        %3592 = vmatpush1.msra.mxu0 0.0
        %3593 = vmatprep.subr.mxu0 0.0
        %3594 = vmatpush1.msra.mxu0 0.0
        %3595 = vmatprep.subr.mxu0 0.0
        %3596 = vmatpush1.msra.mxu0 0.0
        %3597 = vmatprep.subr.mxu0 0.0
        %3598 = vmatpush1.msra.mxu0 0.0
        %3599 = vmatprep.subr.mxu0 0.0
        %3600 = vmatpush1.msra.mxu0 0.0
        %3601 = vmatprep.subr.mxu0 0.0
        %3602 = vmatpush1.msra.mxu0 0.0
        %3603 = vmatprep.subr.mxu0 0.0
        %3604 = vmatpush1.msra.mxu0 0.0
        %3605 = vmatprep.subr.mxu0 0.0
        %3606 = vmatpush1.msra.mxu0 0.0
        %3607 = vmatprep.subr.mxu0 0.0
        %3608 = vmatpush1.msra.mxu0 0.0
        %3609 = vmatprep.subr.mxu0 0.0
        %3610 = vmatpush1.msra.mxu0 0.0
        %3611 = vmatprep.mubr.f32.mxu0 0.0
        %v3612 = vand.u32 %v3136, 4294901760
        %v3613 = vsub.f32 %v3136, %v3612
        %v3614 = vand.u32 %v3613, 4294901760
        %3615 = vmatmul.mubr.f32.gmra.mrb[0].mxu0 %v3614
        %v3616 = vpop.f32.mrb[0].mxu0
        %v3617 = vadd.f32 %v3494, %v3616
        %v3618 = vpop.f32.mrb[0].mxu0
        %3619 = vmatprep.mubr.f32.mxu0 0.0
        %v3620 = vand.u32 %v3139, 4294901760
        %v3621 = vsub.f32 %v3139, %v3620
        %v3622 = vand.u32 %v3621, 4294901760
        %3623 = vmatmul.mubr.f32.gmra.mrb[0].mxu0 %v3622
        %v3624 = vpop.f32.mrb[0].mxu0
        %v3625 = vadd.f32 %v3501, %v3624
        %v3626 = vpop.f32.mrb[0].mxu0
        %3627 = vmatprep.mubr.f32.mxu0 0.0
        %v3628 = vand.u32 %v3142, 4294901760
        %v3629 = vsub.f32 %v3142, %v3628
        %v3630 = vand.u32 %v3629, 4294901760
        %3631 = vmatmul.mubr.f32.gmra.mrb[0].mxu0 %v3630
        %v3632 = vpop.f32.mrb[0].mxu0
        %v3633 = vadd.f32 %v3508, %v3632
        %v3634 = vpop.f32.mrb[0].mxu0
        %3635 = vmatprep.mubr.f32.mxu0 0.0
        %v3636 = vand.u32 %v3145, 4294901760
        %v3637 = vsub.f32 %v3145, %v3636
        %v3638 = vand.u32 %v3637, 4294901760
        %3639 = vmatmul.mubr.f32.gmra.mrb[0].mxu0 %v3638
        %v3640 = vpop.f32.mrb[0].mxu0
        %v3641 = vadd.f32 %v3515, %v3640
        %v3642 = vpop.f32.mrb[0].mxu0
        %3643 = vmatprep.mubr.f32.mxu0 0.0
        %v3644 = vand.u32 %v3148, 4294901760
        %v3645 = vsub.f32 %v3148, %v3644
        %v3646 = vand.u32 %v3645, 4294901760
        %3647 = vmatmul.mubr.f32.gmra.mrb[0].mxu0 %v3646
        %v3648 = vpop.f32.mrb[0].mxu0
        %v3649 = vadd.f32 %v3522, %v3648
        %v3650 = vpop.f32.mrb[0].mxu0
        %3651 = vmatprep.mubr.f32.mxu0 0.0
        %v3652 = vand.u32 %v3151, 4294901760
        %v3653 = vsub.f32 %v3151, %v3652
        %v3654 = vand.u32 %v3653, 4294901760
        %3655 = vmatmul.mubr.f32.gmra.mrb[0].mxu0 %v3654
        %v3656 = vpop.f32.mrb[0].mxu0
        %v3657 = vadd.f32 %v3529, %v3656
        %v3658 = vpop.f32.mrb[0].mxu0
        %3659 = vmatprep.mubr.f32.mxu0 0.0
        %v3660 = vand.u32 %v3154, 4294901760
        %v3661 = vsub.f32 %v3154, %v3660
        %v3662 = vand.u32 %v3661, 4294901760
        %3663 = vmatmul.mubr.f32.gmra.mrb[0].mxu0 %v3662
        %v3664 = vpop.f32.mrb[0].mxu0
        %v3665 = vadd.f32 %v3536, %v3664
        %v3666 = vpop.f32.mrb[0].mxu0
        %3667 = vmatprep.mubr.f32.mxu0 0.0
        %v3668 = vand.u32 %v3157, 4294901760
        %v3669 = vsub.f32 %v3157, %v3668
        %v3670 = vand.u32 %v3669, 4294901760
        %3671 = vmatmul.mubr.f32.gmra.mrb[0].mxu0 %v3670
        %v3672 = vpop.f32.mrb[0].mxu0
        %v3673 = vadd.f32 %v3543, %v3672
        %v3674 = vpop.f32.mrb[0].mxu0
        %3675 = vdwg.mxu0
        %3676 = vmatprep.subr.mxu0 0.0
        %v3677 = vand.u32 %v3129, 4294901760
        %v3678 = vsub.f32 %v3129, %v3677
        %v3679 = vand.u32 %v3678, 4294901760
        %3680 = vmatpush1.msra.mxu0 %v3679
        %3681 = vmatprep.subr.mxu0 0.0
        %3682 = vmatpush1.msra.mxu0 0.0
        %3683 = vmatprep.subr.mxu0 0.0
        %3684 = vmatpush1.msra.mxu0 0.0
        %3685 = vmatprep.subr.mxu0 0.0
        %3686 = vmatpush1.msra.mxu0 0.0
        %3687 = vmatprep.subr.mxu0 0.0
        %3688 = vmatpush1.msra.mxu0 0.0
        %3689 = vmatprep.subr.mxu0 0.0
        %3690 = vmatpush1.msra.mxu0 0.0
        %3691 = vmatprep.subr.mxu0 0.0
        %3692 = vmatpush1.msra.mxu0 0.0
        %3693 = vmatprep.subr.mxu0 0.0
        %3694 = vmatpush1.msra.mxu0 0.0
        %3695 = vmatprep.subr.mxu0 0.0
        %3696 = vmatpush1.msra.mxu0 0.0
        %3697 = vmatprep.subr.mxu0 0.0
        %3698 = vmatpush1.msra.mxu0 0.0
        %3699 = vmatprep.subr.mxu0 0.0
        %3700 = vmatpush1.msra.mxu0 0.0
        %3701 = vmatprep.subr.mxu0 0.0
        %3702 = vmatpush1.msra.mxu0 0.0
        %3703 = vmatprep.subr.mxu0 0.0
        %3704 = vmatpush1.msra.mxu0 0.0
        %3705 = vmatprep.subr.mxu0 0.0
        %3706 = vmatpush1.msra.mxu0 0.0
        %3707 = vmatprep.subr.mxu0 0.0
        %3708 = vmatpush1.msra.mxu0 0.0
        %3709 = vmatprep.subr.mxu0 0.0
        %3710 = vmatpush1.msra.mxu0 0.0
        %3711 = vmatprep.subr.mxu0 0.0
        %3712 = vmatpush1.msra.mxu0 0.0
        %3713 = vmatprep.subr.mxu0 0.0
        %3714 = vmatpush1.msra.mxu0 0.0
        %3715 = vmatprep.subr.mxu0 0.0
        %3716 = vmatpush1.msra.mxu0 0.0
        %3717 = vmatprep.subr.mxu0 0.0
        %3718 = vmatpush1.msra.mxu0 0.0
        %3719 = vmatprep.subr.mxu0 0.0
        %3720 = vmatpush1.msra.mxu0 0.0
        %3721 = vmatprep.subr.mxu0 0.0
        %3722 = vmatpush1.msra.mxu0 0.0
        %3723 = vmatprep.subr.mxu0 0.0
        %3724 = vmatpush1.msra.mxu0 0.0
        %3725 = vmatprep.subr.mxu0 0.0
        %3726 = vmatpush1.msra.mxu0 0.0
        %3727 = vmatprep.subr.mxu0 0.0
        %3728 = vmatpush1.msra.mxu0 0.0
        %3729 = vmatprep.subr.mxu0 0.0
        %3730 = vmatpush1.msra.mxu0 0.0
        %3731 = vmatprep.subr.mxu0 0.0
        %3732 = vmatpush1.msra.mxu0 0.0
        %3733 = vmatprep.subr.mxu0 0.0
        %3734 = vmatpush1.msra.mxu0 0.0
        %3735 = vmatprep.subr.mxu0 0.0
        %3736 = vmatpush1.msra.mxu0 0.0
        %3737 = vmatprep.subr.mxu0 0.0
        %3738 = vmatpush1.msra.mxu0 0.0
        %3739 = vmatprep.subr.mxu0 0.0
        %3740 = vmatpush1.msra.mxu0 0.0
        %3741 = vmatprep.subr.mxu0 0.0
        %3742 = vmatpush1.msra.mxu0 0.0
        %3743 = vmatprep.mubr.f32.mxu0 0.0
        %v3744 = vand.u32 %v3136, 4294901760
        %3745 = vmatmul.mubr.f32.gmra.mrb[0].mxu0 %v3744
        %v3746 = vpop.f32.mrb[0].mxu0
        %v3747 = vadd.f32 %v3617, %v3746
        %v3748 = vpop.f32.mrb[0].mxu0
        %3749 = vmatprep.mubr.f32.mxu0 0.0
        %v3750 = vand.u32 %v3139, 4294901760
        %3751 = vmatmul.mubr.f32.gmra.mrb[0].mxu0 %v3750
        %v3752 = vpop.f32.mrb[0].mxu0
        %v3753 = vadd.f32 %v3625, %v3752
        %v3754 = vpop.f32.mrb[0].mxu0
        %3755 = vmatprep.mubr.f32.mxu0 0.0
        %v3756 = vand.u32 %v3142, 4294901760
        %3757 = vmatmul.mubr.f32.gmra.mrb[0].mxu0 %v3756
        %v3758 = vpop.f32.mrb[0].mxu0
        %v3759 = vadd.f32 %v3633, %v3758
        %v3760 = vpop.f32.mrb[0].mxu0
        %3761 = vmatprep.mubr.f32.mxu0 0.0
        %v3762 = vand.u32 %v3145, 4294901760
        %3763 = vmatmul.mubr.f32.gmra.mrb[0].mxu0 %v3762
        %v3764 = vpop.f32.mrb[0].mxu0
        %v3765 = vadd.f32 %v3641, %v3764
        %v3766 = vpop.f32.mrb[0].mxu0
        %3767 = vmatprep.mubr.f32.mxu0 0.0
        %v3768 = vand.u32 %v3148, 4294901760
        %3769 = vmatmul.mubr.f32.gmra.mrb[0].mxu0 %v3768
        %v3770 = vpop.f32.mrb[0].mxu0
        %v3771 = vadd.f32 %v3649, %v3770
        %v3772 = vpop.f32.mrb[0].mxu0
        %3773 = vmatprep.mubr.f32.mxu0 0.0
        %v3774 = vand.u32 %v3151, 4294901760
        %3775 = vmatmul.mubr.f32.gmra.mrb[0].mxu0 %v3774
        %v3776 = vpop.f32.mrb[0].mxu0
        %v3777 = vadd.f32 %v3657, %v3776
        %v3778 = vpop.f32.mrb[0].mxu0
        %3779 = vmatprep.mubr.f32.mxu0 0.0
        %v3780 = vand.u32 %v3154, 4294901760
        %3781 = vmatmul.mubr.f32.gmra.mrb[0].mxu0 %v3780
        %v3782 = vpop.f32.mrb[0].mxu0
        %v3783 = vadd.f32 %v3665, %v3782
        %v3784 = vpop.f32.mrb[0].mxu0
        %3785 = vmatprep.mubr.f32.mxu0 0.0
        %v3786 = vand.u32 %v3157, 4294901760
        %3787 = vmatmul.mubr.f32.gmra.mrb[0].mxu0 %v3786
        %v3788 = vpop.f32.mrb[0].mxu0
        %v3789 = vadd.f32 %v3673, %v3788
        %v3790 = vpop.f32.mrb[0].mxu0
        %3791 = vdwg.mxu0
        %3792 = vmatprep.subr.mxu0 0.0
        %v3793 = vand.u32 %v3129, 4294901760
        %3794 = vmatpush1.msra.mxu0 %v3793
        %3795 = vmatprep.subr.mxu0 0.0
        %3796 = vmatpush1.msra.mxu0 0.0
        %3797 = vmatprep.subr.mxu0 0.0
        %3798 = vmatpush1.msra.mxu0 0.0
        %3799 = vmatprep.subr.mxu0 0.0
        %3800 = vmatpush1.msra.mxu0 0.0
        %3801 = vmatprep.subr.mxu0 0.0
        %3802 = vmatpush1.msra.mxu0 0.0
        %3803 = vmatprep.subr.mxu0 0.0
        %3804 = vmatpush1.msra.mxu0 0.0
        %3805 = vmatprep.subr.mxu0 0.0
        %3806 = vmatpush1.msra.mxu0 0.0
        %3807 = vmatprep.subr.mxu0 0.0
        %3808 = vmatpush1.msra.mxu0 0.0
        %3809 = vmatprep.subr.mxu0 0.0
        %3810 = vmatpush1.msra.mxu0 0.0
        %3811 = vmatprep.subr.mxu0 0.0
        %3812 = vmatpush1.msra.mxu0 0.0
        %3813 = vmatprep.subr.mxu0 0.0
        %3814 = vmatpush1.msra.mxu0 0.0
        %3815 = vmatprep.subr.mxu0 0.0
        %3816 = vmatpush1.msra.mxu0 0.0
        %3817 = vmatprep.subr.mxu0 0.0
        %3818 = vmatpush1.msra.mxu0 0.0
        %3819 = vmatprep.subr.mxu0 0.0
        %3820 = vmatpush1.msra.mxu0 0.0
        %3821 = vmatprep.subr.mxu0 0.0
        %3822 = vmatpush1.msra.mxu0 0.0
        %3823 = vmatprep.subr.mxu0 0.0
        %3824 = vmatpush1.msra.mxu0 0.0
        %3825 = vmatprep.subr.mxu0 0.0
        %3826 = vmatpush1.msra.mxu0 0.0
        %3827 = vmatprep.subr.mxu0 0.0
        %3828 = vmatpush1.msra.mxu0 0.0
        %3829 = vmatprep.subr.mxu0 0.0
        %3830 = vmatpush1.msra.mxu0 0.0
        %3831 = vmatprep.subr.mxu0 0.0
        %3832 = vmatpush1.msra.mxu0 0.0
        %3833 = vmatprep.subr.mxu0 0.0
        %3834 = vmatpush1.msra.mxu0 0.0
        %3835 = vmatprep.subr.mxu0 0.0
        %3836 = vmatpush1.msra.mxu0 0.0
        %3837 = vmatprep.subr.mxu0 0.0
        %3838 = vmatpush1.msra.mxu0 0.0
        %3839 = vmatprep.subr.mxu0 0.0
        %3840 = vmatpush1.msra.mxu0 0.0
        %3841 = vmatprep.subr.mxu0 0.0
        %3842 = vmatpush1.msra.mxu0 0.0
        %3843 = vmatprep.subr.mxu0 0.0
        %3844 = vmatpush1.msra.mxu0 0.0
        %3845 = vmatprep.subr.mxu0 0.0
        %3846 = vmatpush1.msra.mxu0 0.0
        %3847 = vmatprep.subr.mxu0 0.0
        %3848 = vmatpush1.msra.mxu0 0.0
        %3849 = vmatprep.subr.mxu0 0.0
        %3850 = vmatpush1.msra.mxu0 0.0
        %3851 = vmatprep.subr.mxu0 0.0
        %3852 = vmatpush1.msra.mxu0 0.0
        %3853 = vmatprep.subr.mxu0 0.0
        %3854 = vmatpush1.msra.mxu0 0.0
        %3855 = vmatprep.subr.mxu0 0.0
        %3856 = vmatpush1.msra.mxu0 0.0
        %3857 = vmatprep.mubr.f32.mxu0 0.0
        %v3858 = vand.u32 %v3136, 4294901760
        %3859 = vmatmul.mubr.f32.gmra.mrb[0].mxu0 %v3858
        %v3860 = vpop.f32.mrb[0].mxu0
        %v3861 = vadd.f32 %v3747, %v3860
        %v3862 = vpop.f32.mrb[0].mxu0
        %3863 = vmatprep.mubr.f32.mxu0 0.0
        %v3864 = vand.u32 %v3139, 4294901760
        %3865 = vmatmul.mubr.f32.gmra.mrb[0].mxu0 %v3864
        %v3866 = vpop.f32.mrb[0].mxu0
        %v3867 = vadd.f32 %v3753, %v3866
        %v3868 = vpop.f32.mrb[0].mxu0
        %3869 = vmatprep.mubr.f32.mxu0 0.0
        %v3870 = vand.u32 %v3142, 4294901760
        %3871 = vmatmul.mubr.f32.gmra.mrb[0].mxu0 %v3870
        %v3872 = vpop.f32.mrb[0].mxu0
        %v3873 = vadd.f32 %v3759, %v3872
        %v3874 = vpop.f32.mrb[0].mxu0
        %3875 = vmatprep.mubr.f32.mxu0 0.0
        %v3876 = vand.u32 %v3145, 4294901760
        %3877 = vmatmul.mubr.f32.gmra.mrb[0].mxu0 %v3876
        %v3878 = vpop.f32.mrb[0].mxu0
        %v3879 = vadd.f32 %v3765, %v3878
        %v3880 = vpop.f32.mrb[0].mxu0
        %3881 = vmatprep.mubr.f32.mxu0 0.0
        %v3882 = vand.u32 %v3148, 4294901760
        %3883 = vmatmul.mubr.f32.gmra.mrb[0].mxu0 %v3882
        %v3884 = vpop.f32.mrb[0].mxu0
        %v3885 = vadd.f32 %v3771, %v3884
        %v3886 = vpop.f32.mrb[0].mxu0
        %3887 = vmatprep.mubr.f32.mxu0 0.0
        %v3888 = vand.u32 %v3151, 4294901760
        %3889 = vmatmul.mubr.f32.gmra.mrb[0].mxu0 %v3888
        %v3890 = vpop.f32.mrb[0].mxu0
        %v3891 = vadd.f32 %v3777, %v3890
        %v3892 = vpop.f32.mrb[0].mxu0
        %3893 = vmatprep.mubr.f32.mxu0 0.0
        %v3894 = vand.u32 %v3154, 4294901760
        %3895 = vmatmul.mubr.f32.gmra.mrb[0].mxu0 %v3894
        %v3896 = vpop.f32.mrb[0].mxu0
        %v3897 = vadd.f32 %v3783, %v3896
        %v3898 = vpop.f32.mrb[0].mxu0
        %3899 = vmatprep.mubr.f32.mxu0 0.0
        %v3900 = vand.u32 %v3157, 4294901760
        %3901 = vmatmul.mubr.f32.gmra.mrb[0].mxu0 %v3900
        %v3902 = vpop.f32.mrb[0].mxu0
        %v3903 = vadd.f32 %v3789, %v3902
        %v3904 = vpop.f32.mrb[0].mxu0
        %3905 = vdwg.mxu0
        %v3906 = vpack.c.bf16 %v2905, %v2902
        %v3907 = vpack.c.bf16 %v2913, %v2910
        %v3908 = vpack.c.bf16 %v2921, %v2918
        %v3909 = vpack.c.bf16 %v2929, %v2926
        %v3910 = vpack.c.bf16 %v3010, %v3007
        %v3911 = vpack.c.bf16 %v3018, %v3015
        %v3912 = vpack.c.bf16 %v3026, %v3023
        %v3913 = vpack.c.bf16 %v3034, %v3031
        %v3930 = vunpack.c.l.b16 %v1855
        %v3931 = vunpack.c.l.b16 %v1856
        %v3932 = vunpack.c.l.b16 %v1857
        %v3933 = vunpack.c.l.b16 %v1858
        %v3934 = vunpack.c.l.b16 %v1859
        %v3935 = vunpack.c.l.b16 %v1860
        %v3936 = vunpack.c.l.b16 %v1861
        %v3937 = vunpack.c.l.b16 %v1862
        %v3938 = vunpack.c.l.b16 %v1863
        %v3939 = vunpack.c.l.b16 %v1864
        %v3940 = vunpack.c.l.b16 %v1865
        %v3941 = vunpack.c.l.b16 %v1866
        %v3942 = vunpack.c.l.b16 %v1867
        %v3943 = vunpack.c.l.b16 %v1868
        %v3944 = vunpack.c.l.b16 %v1869
        %v3945 = vunpack.c.l.b16 %v1870
        %v3946 = vpack.c.b16 %v3931, %v3930
        %v3947 = vpack.c.b16 %v3933, %v3932
        %v3948 = vpack.c.b16 %v3935, %v3934
        %v3949 = vpack.c.b16 %v3937, %v3936
        %v3950 = vpack.c.b16 %v3939, %v3938
        %v3951 = vpack.c.b16 %v3941, %v3940
        %v3952 = vpack.c.b16 %v3943, %v3942
        %v3953 = vpack.c.b16 %v3945, %v3944
        %3962 = vmatprep.subr.bf16.mxu0 0
        %3963 = vmatpush1.bf16.msra.mxu0 %v3946
        %3964 = vmatprep.subr.bf16.mxu0 0
        %3965 = vmatpush1.bf16.msra.mxu0 %v3947
        %3966 = vmatprep.subr.bf16.mxu0 0
        %3967 = vmatpush1.bf16.msra.mxu0 %v3948
        %3968 = vmatprep.subr.bf16.mxu0 0
        %3969 = vmatpush1.bf16.msra.mxu0 %v3949
        %3970 = vmatprep.subr.bf16.mxu0 0
        %3971 = vmatpush1.bf16.msra.mxu0 %v3950
        %3972 = vmatprep.subr.bf16.mxu0 0
        %3973 = vmatpush1.bf16.msra.mxu0 %v3951
        %3974 = vmatprep.subr.bf16.mxu0 0
        %3975 = vmatpush1.bf16.msra.mxu0 %v3952
        %3976 = vmatprep.subr.bf16.mxu0 0
        %3977 = vmatpush1.bf16.msra.mxu0 %v3953
        %3978 = vmatprep.subr.bf16.mxu0 0
        %3979 = vmatpush1.bf16.msra.mxu0 0
        %3980 = vmatprep.subr.bf16.mxu0 0
        %3981 = vmatpush1.bf16.msra.mxu0 0
        %3982 = vmatprep.subr.bf16.mxu0 0
        %3983 = vmatpush1.bf16.msra.mxu0 0
        %3984 = vmatprep.subr.bf16.mxu0 0
        %3985 = vmatpush1.bf16.msra.mxu0 0
        %3986 = vmatprep.subr.bf16.mxu0 0
        %3987 = vmatpush1.bf16.msra.mxu0 0
        %3988 = vmatprep.subr.bf16.mxu0 0
        %3989 = vmatpush1.bf16.msra.mxu0 0
        %3990 = vmatprep.subr.bf16.mxu0 0
        %3991 = vmatpush1.bf16.msra.mxu0 0
        %3992 = vmatprep.subr.bf16.mxu0 0
        %3993 = vmatpush1.bf16.msra.mxu0 0
        %3994 = vmatprep.mubr.bf16.mxu0 0
        %3995 = vmatmul.mubr.bf16.gmra.mrb[0].mxu0 %v3910
        %v3996 = vpop.f32.mrb[0].mxu0
        %v3997 = vadd.f32 0.0, %v3996
        %v3998 = vpop.f32.mrb[0].mxu0
        %v3999 = vpop.f32.mrb[0].mxu0
        %v4000 = vadd.f32 0.0, %v3999
        %v4001 = vpop.f32.mrb[0].mxu0
        %4002 = vmatprep.mubr.bf16.mxu0 0
        %4003 = vmatmul.mubr.bf16.gmra.mrb[0].mxu0 %v3911
        %v4004 = vpop.f32.mrb[0].mxu0
        %v4005 = vadd.f32 0.0, %v4004
        %v4006 = vpop.f32.mrb[0].mxu0
        %v4007 = vpop.f32.mrb[0].mxu0
        %v4008 = vadd.f32 0.0, %v4007
        %v4009 = vpop.f32.mrb[0].mxu0
        %4010 = vmatprep.mubr.bf16.mxu0 0
        %4011 = vmatmul.mubr.bf16.gmra.mrb[0].mxu0 %v3912
        %v4012 = vpop.f32.mrb[0].mxu0
        %v4013 = vadd.f32 0.0, %v4012
        %v4014 = vpop.f32.mrb[0].mxu0
        %v4015 = vpop.f32.mrb[0].mxu0
        %v4016 = vadd.f32 0.0, %v4015
        %v4017 = vpop.f32.mrb[0].mxu0
        %4018 = vmatprep.mubr.bf16.mxu0 0
        %4019 = vmatmul.mubr.bf16.gmra.mrb[0].mxu0 %v3913
        %v4020 = vpop.f32.mrb[0].mxu0
        %v4021 = vadd.f32 0.0, %v4020
        %v4022 = vpop.f32.mrb[0].mxu0
        %v4023 = vpop.f32.mrb[0].mxu0
        %v4024 = vadd.f32 0.0, %v4023
        %v4025 = vpop.f32.mrb[0].mxu0
        %4026 = vdwg.mxu0
        %v4043 = vunpack.c.l.b16 %v1837
        %v4044 = vunpack.c.l.b16 %v1838
        %v4045 = vunpack.c.l.b16 %v1839
        %v4046 = vunpack.c.l.b16 %v1840
        %v4047 = vunpack.c.l.b16 %v1841
        %v4048 = vunpack.c.l.b16 %v1842
        %v4049 = vunpack.c.l.b16 %v1843
        %v4050 = vunpack.c.l.b16 %v1844
        %v4051 = vunpack.c.l.b16 %v1845
        %v4052 = vunpack.c.l.b16 %v1846
        %v4053 = vunpack.c.l.b16 %v1847
        %v4054 = vunpack.c.l.b16 %v1848
        %v4055 = vunpack.c.l.b16 %v1849
        %v4056 = vunpack.c.l.b16 %v1850
        %v4057 = vunpack.c.l.b16 %v1851
        %v4058 = vunpack.c.l.b16 %v1852
        %v4059 = vpack.c.b16 %v4044, %v4043
        %v4060 = vpack.c.b16 %v4046, %v4045
        %v4061 = vpack.c.b16 %v4048, %v4047
        %v4062 = vpack.c.b16 %v4050, %v4049
        %v4063 = vpack.c.b16 %v4052, %v4051
        %v4064 = vpack.c.b16 %v4054, %v4053
        %v4065 = vpack.c.b16 %v4056, %v4055
        %v4066 = vpack.c.b16 %v4058, %v4057
        %4075 = vmatprep.subr.bf16.mxu0 0
        %4076 = vmatpush1.bf16.msra.mxu0 %v4059
        %4077 = vmatprep.subr.bf16.mxu0 0
        %4078 = vmatpush1.bf16.msra.mxu0 %v4060
        %4079 = vmatprep.subr.bf16.mxu0 0
        %4080 = vmatpush1.bf16.msra.mxu0 %v4061
        %4081 = vmatprep.subr.bf16.mxu0 0
        %4082 = vmatpush1.bf16.msra.mxu0 %v4062
        %4083 = vmatprep.subr.bf16.mxu0 0
        %4084 = vmatpush1.bf16.msra.mxu0 %v4063
        %4085 = vmatprep.subr.bf16.mxu0 0
        %4086 = vmatpush1.bf16.msra.mxu0 %v4064
        %4087 = vmatprep.subr.bf16.mxu0 0
        %4088 = vmatpush1.bf16.msra.mxu0 %v4065
        %4089 = vmatprep.subr.bf16.mxu0 0
        %4090 = vmatpush1.bf16.msra.mxu0 %v4066
        %4091 = vmatprep.subr.bf16.mxu0 0
        %4092 = vmatpush1.bf16.msra.mxu0 0
        %4093 = vmatprep.subr.bf16.mxu0 0
        %4094 = vmatpush1.bf16.msra.mxu0 0
        %4095 = vmatprep.subr.bf16.mxu0 0
        %4096 = vmatpush1.bf16.msra.mxu0 0
        %4097 = vmatprep.subr.bf16.mxu0 0
        %4098 = vmatpush1.bf16.msra.mxu0 0
        %4099 = vmatprep.subr.bf16.mxu0 0
        %4100 = vmatpush1.bf16.msra.mxu0 0
        %4101 = vmatprep.subr.bf16.mxu0 0
        %4102 = vmatpush1.bf16.msra.mxu0 0
        %4103 = vmatprep.subr.bf16.mxu0 0
        %4104 = vmatpush1.bf16.msra.mxu0 0
        %4105 = vmatprep.subr.bf16.mxu0 0
        %4106 = vmatpush1.bf16.msra.mxu0 0
        %4107 = vmatprep.mubr.bf16.mxu0 0
        %4108 = vmatmul.mubr.bf16.gmra.mrb[0].mxu0 %v3906
        %v4109 = vpop.f32.mrb[0].mxu0
        %v4110 = vadd.f32 %v3997, %v4109
        %v4111 = vpop.f32.mrb[0].mxu0
        %v4112 = vpop.f32.mrb[0].mxu0
        %v4113 = vadd.f32 %v4000, %v4112
        %v4114 = vpop.f32.mrb[0].mxu0
        %4115 = vmatprep.mubr.bf16.mxu0 0
        %4116 = vmatmul.mubr.bf16.gmra.mrb[0].mxu0 %v3907
        %v4117 = vpop.f32.mrb[0].mxu0
        %v4118 = vadd.f32 %v4005, %v4117
        %v4119 = vpop.f32.mrb[0].mxu0
        %v4120 = vpop.f32.mrb[0].mxu0
        %v4121 = vadd.f32 %v4008, %v4120
        %v4122 = vpop.f32.mrb[0].mxu0
        %4123 = vmatprep.mubr.bf16.mxu0 0
        %4124 = vmatmul.mubr.bf16.gmra.mrb[0].mxu0 %v3908
        %v4125 = vpop.f32.mrb[0].mxu0
        %v4126 = vadd.f32 %v4013, %v4125
        %v4127 = vpop.f32.mrb[0].mxu0
        %v4128 = vpop.f32.mrb[0].mxu0
        %v4129 = vadd.f32 %v4016, %v4128
        %v4130 = vpop.f32.mrb[0].mxu0
        %4131 = vmatprep.mubr.bf16.mxu0 0
        %4132 = vmatmul.mubr.bf16.gmra.mrb[0].mxu0 %v3909
        %v4133 = vpop.f32.mrb[0].mxu0
        %v4134 = vadd.f32 %v4021, %v4133
        %v4135 = vpop.f32.mrb[0].mxu0
        %v4136 = vpop.f32.mrb[0].mxu0
        %v4137 = vadd.f32 %v4024, %v4136
        %v4138 = vpop.f32.mrb[0].mxu0
        %4139 = vdwg.mxu0
        %v4140 = vpack.c.bf16 %v2619, %v2618
        %v4141 = vpack.c.bf16 %v2621, %v2620
        %v4142 = vpack.c.bf16 %v2623, %v2622
        %v4143 = vpack.c.bf16 %v2625, %v2624
        %v4160 = vunpack.c.l.b16 %v1873
        %v4161 = vunpack.c.l.b16 %v1874
        %v4162 = vunpack.c.l.b16 %v1875
        %v4163 = vunpack.c.l.b16 %v1876
        %v4164 = vunpack.c.l.b16 %v1877
        %v4165 = vunpack.c.l.b16 %v1878
        %v4166 = vunpack.c.l.b16 %v1879
        %v4167 = vunpack.c.l.b16 %v1880
        %v4168 = vunpack.c.l.b16 %v1881
        %v4169 = vunpack.c.l.b16 %v1882
        %v4170 = vunpack.c.l.b16 %v1883
        %v4171 = vunpack.c.l.b16 %v1884
        %v4172 = vunpack.c.l.b16 %v1885
        %v4173 = vunpack.c.l.b16 %v1886
        %v4174 = vunpack.c.l.b16 %v1887
        %v4175 = vunpack.c.l.b16 %v1888
        %v4176 = vpack.c.b16 %v4161, %v4160
        %v4177 = vpack.c.b16 %v4163, %v4162
        %v4178 = vpack.c.b16 %v4165, %v4164
        %v4179 = vpack.c.b16 %v4167, %v4166
        %v4180 = vpack.c.b16 %v4169, %v4168
        %v4181 = vpack.c.b16 %v4171, %v4170
        %v4182 = vpack.c.b16 %v4173, %v4172
        %v4183 = vpack.c.b16 %v4175, %v4174
        %4192 = vmatprep.subr.bf16.mxu0 0
        %4193 = vmatpush1.bf16.msra.mxu0 %v4176
        %4194 = vmatprep.subr.bf16.mxu0 0
        %4195 = vmatpush1.bf16.msra.mxu0 %v4177
        %4196 = vmatprep.subr.bf16.mxu0 0
        %4197 = vmatpush1.bf16.msra.mxu0 %v4178
        %4198 = vmatprep.subr.bf16.mxu0 0
        %4199 = vmatpush1.bf16.msra.mxu0 %v4179
        %4200 = vmatprep.subr.bf16.mxu0 0
        %4201 = vmatpush1.bf16.msra.mxu0 %v4180
        %4202 = vmatprep.subr.bf16.mxu0 0
        %4203 = vmatpush1.bf16.msra.mxu0 %v4181
        %4204 = vmatprep.subr.bf16.mxu0 0
        %4205 = vmatpush1.bf16.msra.mxu0 %v4182
        %4206 = vmatprep.subr.bf16.mxu0 0
        %4207 = vmatpush1.bf16.msra.mxu0 %v4183
        %4208 = vmatprep.subr.bf16.mxu0 0
        %4209 = vmatpush1.bf16.msra.mxu0 0
        %4210 = vmatprep.subr.bf16.mxu0 0
        %4211 = vmatpush1.bf16.msra.mxu0 0
        %4212 = vmatprep.subr.bf16.mxu0 0
        %4213 = vmatpush1.bf16.msra.mxu0 0
        %4214 = vmatprep.subr.bf16.mxu0 0
        %4215 = vmatpush1.bf16.msra.mxu0 0
        %4216 = vmatprep.subr.bf16.mxu0 0
        %4217 = vmatpush1.bf16.msra.mxu0 0
        %4218 = vmatprep.subr.bf16.mxu0 0
        %4219 = vmatpush1.bf16.msra.mxu0 0
        %4220 = vmatprep.subr.bf16.mxu0 0
        %4221 = vmatpush1.bf16.msra.mxu0 0
        %4222 = vmatprep.subr.bf16.mxu0 0
        %4223 = vmatpush1.bf16.msra.mxu0 0
        %4224 = vmatprep.mubr.bf16.mxu0 0
        %4225 = vmatmul.mubr.bf16.gmra.mrb[0].mxu0 %v4140
        %v4226 = vpop.f32.mrb[0].mxu0
        %v4227 = vadd.f32 0.0, %v4226
        %v4228 = vpop.f32.mrb[0].mxu0
        %v4229 = vpop.f32.mrb[0].mxu0
        %v4230 = vadd.f32 0.0, %v4229
        %v4231 = vpop.f32.mrb[0].mxu0
        %4232 = vmatprep.mubr.bf16.mxu0 0
        %4233 = vmatmul.mubr.bf16.gmra.mrb[0].mxu0 %v4141
        %v4234 = vpop.f32.mrb[0].mxu0
        %v4235 = vadd.f32 0.0, %v4234
        %v4236 = vpop.f32.mrb[0].mxu0
        %v4237 = vpop.f32.mrb[0].mxu0
        %v4238 = vadd.f32 0.0, %v4237
        %v4239 = vpop.f32.mrb[0].mxu0
        %4240 = vmatprep.mubr.bf16.mxu0 0
        %4241 = vmatmul.mubr.bf16.gmra.mrb[0].mxu0 %v4142
        %v4242 = vpop.f32.mrb[0].mxu0
        %v4243 = vadd.f32 0.0, %v4242
        %v4244 = vpop.f32.mrb[0].mxu0
        %v4245 = vpop.f32.mrb[0].mxu0
        %v4246 = vadd.f32 0.0, %v4245
        %v4247 = vpop.f32.mrb[0].mxu0
        %4248 = vmatprep.mubr.bf16.mxu0 0
        %4249 = vmatmul.mubr.bf16.gmra.mrb[0].mxu0 %v4143
        %v4250 = vpop.f32.mrb[0].mxu0
        %v4251 = vadd.f32 0.0, %v4250
        %v4252 = vpop.f32.mrb[0].mxu0
        %v4253 = vpop.f32.mrb[0].mxu0
        %v4254 = vadd.f32 0.0, %v4253
        %v4255 = vpop.f32.mrb[0].mxu0
        %4256 = vdwg.mxu0
        %v4257 = vadd.f32 %v4110, %v4227
        %v4258 = vadd.f32 %v4113, %v4230
        %v4259 = vadd.f32 %v4118, %v4235
        %v4260 = vadd.f32 %v4121, %v4238
        %v4261 = vadd.f32 %v4126, %v4243
        %v4262 = vadd.f32 %v4129, %v4246
        %v4263 = vadd.f32 %v4134, %v4251
        %v4264 = vadd.f32 %v4137, %v4254
        %v4265 = vadd.f32 %v4257, %v3861
        %v4266 = vadd.f32 %v4258, %v3867
        %v4267 = vadd.f32 %v4259, %v3873
        %v4268 = vadd.f32 %v4260, %v3879
        %v4269 = vadd.f32 %v4261, %v3885
        %v4270 = vadd.f32 %v4262, %v3891
        %v4271 = vadd.f32 %v4263, %v3897
        %v4272 = vadd.f32 %v4264, %v3903
        %v4274 = vlaneseq
        %v4275 = vshrl.u32 %v4274, 7
        %v4276 = vsub.s32 0, %v4275
        %v4277 = vrot.slane %v1908, %v4276
        %v4279 = vadd.f32 %v4265, %v4277
        %v4280 = vadd.f32 %v4266, %v4277
        %v4281 = vadd.f32 %v4267, %v4277
        %v4282 = vadd.f32 %v4268, %v4277
        %v4283 = vadd.f32 %v4269, %v4277
        %v4284 = vadd.f32 %v4270, %v4277
        %v4285 = vadd.f32 %v4271, %v4277
        %v4286 = vadd.f32 %v4272, %v4277
        %vm4287 = vcmp.gt.f32.partialorder %v4279, 0.0
        %vm4288 = vcmp.gt.f32.partialorder %v4280, 0.0
        %vm4289 = vcmp.gt.f32.partialorder %v4281, 0.0
        %vm4290 = vcmp.gt.f32.partialorder %v4282, 0.0
        %vm4291 = vcmp.gt.f32.partialorder %v4283, 0.0
        %vm4292 = vcmp.gt.f32.partialorder %v4284, 0.0
        %vm4293 = vcmp.gt.f32.partialorder %v4285, 0.0
        %vm4294 = vcmp.gt.f32.partialorder %v4286, 0.0
        %v4295 = vmul.f32 %v4279, 0.01
        %v4296 = vmul.f32 %v4280, 0.01
        %v4297 = vmul.f32 %v4281, 0.01
        %v4298 = vmul.f32 %v4282, 0.01
        %v4299 = vmul.f32 %v4283, 0.01
        %v4300 = vmul.f32 %v4284, 0.01
        %v4301 = vmul.f32 %v4285, 0.01
        %v4302 = vmul.f32 %v4286, 0.01
        %v4303 = vsel %vm4287, %v4279, %v4295
        %v4304 = vsel %vm4288, %v4280, %v4296
        %v4305 = vsel %vm4289, %v4281, %v4297
        %v4306 = vsel %vm4290, %v4282, %v4298
        %v4307 = vsel %vm4291, %v4283, %v4299
        %v4308 = vsel %vm4292, %v4284, %v4300
        %v4309 = vsel %vm4293, %v4285, %v4301
        %v4310 = vsel %vm4294, %v4286, %v4302
        %v4311 = vld [vmem:[%s1436] sm:$0xff]
        %v4312 = vld [vmem:[%s1436 + $0x8] sm:$0xff]
        %v4313 = vld [vmem:[%s1436 + $0x10] sm:$0xff]
        %v4314 = vld [vmem:[%s1436 + $0x18] sm:$0xff]
        %v4315 = vld [vmem:[%s1436 + $0x20] sm:$0xff]
        %v4316 = vld [vmem:[%s1436 + $0x28] sm:$0xff]
        %v4317 = vld [vmem:[%s1436 + $0x30] sm:$0xff]
        %v4318 = vld [vmem:[%s1436 + $0x38] sm:$0xff]
        %v4320 = vsel %vm2854, %v4311, 0
        %v4323 = vsel %vm2854, %v4312, 0
        %v4326 = vsel %vm2854, %v4313, 0
        %v4329 = vsel %vm2854, %v4314, 0
        %v4332 = vsel %vm2854, %v4315, 0
        %v4335 = vsel %vm2854, %v4316, 0
        %v4338 = vsel %vm2854, %v4317, 0
        %v4341 = vsel %vm2854, %v4318, 0
        %4343 = vmatprep.subr.mxu0 0.0
        %v4344 = vand.u32 %v4303, 4294901760
        %4345 = vmatpush1.msra.mxu0 %v4344
        %4346 = vmatprep.subr.mxu0 0.0
        %v4347 = vand.u32 %v4304, 4294901760
        %4348 = vmatpush1.msra.mxu0 %v4347
        %4349 = vmatprep.subr.mxu0 0.0
        %v4350 = vand.u32 %v4305, 4294901760
        %4351 = vmatpush1.msra.mxu0 %v4350
        %4352 = vmatprep.subr.mxu0 0.0
        %v4353 = vand.u32 %v4306, 4294901760
        %4354 = vmatpush1.msra.mxu0 %v4353
        %4355 = vmatprep.subr.mxu0 0.0
        %v4356 = vand.u32 %v4307, 4294901760
        %4357 = vmatpush1.msra.mxu0 %v4356
        %4358 = vmatprep.subr.mxu0 0.0
        %v4359 = vand.u32 %v4308, 4294901760
        %4360 = vmatpush1.msra.mxu0 %v4359
        %4361 = vmatprep.subr.mxu0 0.0
        %v4362 = vand.u32 %v4309, 4294901760
        %4363 = vmatpush1.msra.mxu0 %v4362
        %4364 = vmatprep.subr.mxu0 0.0
        %v4365 = vand.u32 %v4310, 4294901760
        %4366 = vmatpush1.msra.mxu0 %v4365
        %4367 = vmatprep.subr.mxu0 0.0
        %4368 = vmatpush1.msra.mxu0 0.0
        %4369 = vmatprep.subr.mxu0 0.0
        %4370 = vmatpush1.msra.mxu0 0.0
        %4371 = vmatprep.subr.mxu0 0.0
        %4372 = vmatpush1.msra.mxu0 0.0
        %4373 = vmatprep.subr.mxu0 0.0
        %4374 = vmatpush1.msra.mxu0 0.0
        %4375 = vmatprep.subr.mxu0 0.0
        %4376 = vmatpush1.msra.mxu0 0.0
        %4377 = vmatprep.subr.mxu0 0.0
        %4378 = vmatpush1.msra.mxu0 0.0
        %4379 = vmatprep.subr.mxu0 0.0
        %4380 = vmatpush1.msra.mxu0 0.0
        %4381 = vmatprep.subr.mxu0 0.0
        %4382 = vmatpush1.msra.mxu0 0.0
        %4383 = vmatprep.subr.mxu0 0.0
        %4384 = vmatpush1.msra.mxu0 0.0
        %4385 = vmatprep.subr.mxu0 0.0
        %4386 = vmatpush1.msra.mxu0 0.0
        %4387 = vmatprep.subr.mxu0 0.0
        %4388 = vmatpush1.msra.mxu0 0.0
        %4389 = vmatprep.subr.mxu0 0.0
        %4390 = vmatpush1.msra.mxu0 0.0
        %4391 = vmatprep.subr.mxu0 0.0
        %4392 = vmatpush1.msra.mxu0 0.0
        %4393 = vmatprep.subr.mxu0 0.0
        %4394 = vmatpush1.msra.mxu0 0.0
        %4395 = vmatprep.subr.mxu0 0.0
        %4396 = vmatpush1.msra.mxu0 0.0
        %4397 = vmatprep.subr.mxu0 0.0
        %4398 = vmatpush1.msra.mxu0 0.0
        %4399 = vmatprep.subr.mxu0 0.0
        %4400 = vmatpush1.msra.mxu0 0.0
        %4401 = vmatprep.subr.mxu0 0.0
        %4402 = vmatpush1.msra.mxu0 0.0
        %4403 = vmatprep.subr.mxu0 0.0
        %4404 = vmatpush1.msra.mxu0 0.0
        %4405 = vmatprep.subr.mxu0 0.0
        %4406 = vmatpush1.msra.mxu0 0.0
        %4407 = vmatprep.subr.mxu0 0.0
        %4408 = vmatpush1.msra.mxu0 0.0
        %4409 = vmatprep.subr.mxu0 0.0
        %4410 = vmatpush1.msra.mxu0 0.0
        %4411 = vmatprep.subr.mxu0 0.0
        %4412 = vmatpush1.msra.mxu0 0.0
        %4413 = vmatprep.subr.mxu0 0.0
        %4414 = vmatpush1.msra.mxu0 0.0
        %4415 = vmatprep.mubr.f32.mxu0 0.0
        %v4416 = vand.u32 %v4320, 4294901760
        %v4417 = vsub.f32 %v4320, %v4416
        %v4418 = vand.u32 %v4417, 4294901760
        %v4419 = vsub.f32 %v4417, %v4418
        %v4420 = vand.u32 %v4419, 4294901760
        %4421 = vmatmul.mubr.f32.gmra.mrb[0].mxu0 %v4420
        %v4422 = vpop.f32.mrb[0].mxu0
        %v4423 = vadd.f32 0.0, %v4422
        %v4424 = vpop.f32.mrb[0].mxu0
        %4425 = vmatprep.mubr.f32.mxu0 0.0
        %v4426 = vand.u32 %v4323, 4294901760
        %v4427 = vsub.f32 %v4323, %v4426
        %v4428 = vand.u32 %v4427, 4294901760
        %v4429 = vsub.f32 %v4427, %v4428
        %v4430 = vand.u32 %v4429, 4294901760
        %4431 = vmatmul.mubr.f32.gmra.mrb[0].mxu0 %v4430
        %v4432 = vpop.f32.mrb[0].mxu0
        %v4433 = vadd.f32 0.0, %v4432
        %v4434 = vpop.f32.mrb[0].mxu0
        %4435 = vmatprep.mubr.f32.mxu0 0.0
        %v4436 = vand.u32 %v4326, 4294901760
        %v4437 = vsub.f32 %v4326, %v4436
        %v4438 = vand.u32 %v4437, 4294901760
        %v4439 = vsub.f32 %v4437, %v4438
        %v4440 = vand.u32 %v4439, 4294901760
        %4441 = vmatmul.mubr.f32.gmra.mrb[0].mxu0 %v4440
        %v4442 = vpop.f32.mrb[0].mxu0
        %v4443 = vadd.f32 0.0, %v4442
        %v4444 = vpop.f32.mrb[0].mxu0
        %4445 = vmatprep.mubr.f32.mxu0 0.0
        %v4446 = vand.u32 %v4329, 4294901760
        %v4447 = vsub.f32 %v4329, %v4446
        %v4448 = vand.u32 %v4447, 4294901760
        %v4449 = vsub.f32 %v4447, %v4448
        %v4450 = vand.u32 %v4449, 4294901760
        %4451 = vmatmul.mubr.f32.gmra.mrb[0].mxu0 %v4450
        %v4452 = vpop.f32.mrb[0].mxu0
        %v4453 = vadd.f32 0.0, %v4452
        %v4454 = vpop.f32.mrb[0].mxu0
        %4455 = vmatprep.mubr.f32.mxu0 0.0
        %v4456 = vand.u32 %v4332, 4294901760
        %v4457 = vsub.f32 %v4332, %v4456
        %v4458 = vand.u32 %v4457, 4294901760
        %v4459 = vsub.f32 %v4457, %v4458
        %v4460 = vand.u32 %v4459, 4294901760
        %4461 = vmatmul.mubr.f32.gmra.mrb[0].mxu0 %v4460
        %v4462 = vpop.f32.mrb[0].mxu0
        %v4463 = vadd.f32 0.0, %v4462
        %v4464 = vpop.f32.mrb[0].mxu0
        %4465 = vmatprep.mubr.f32.mxu0 0.0
        %v4466 = vand.u32 %v4335, 4294901760
        %v4467 = vsub.f32 %v4335, %v4466
        %v4468 = vand.u32 %v4467, 4294901760
        %v4469 = vsub.f32 %v4467, %v4468
        %v4470 = vand.u32 %v4469, 4294901760
        %4471 = vmatmul.mubr.f32.gmra.mrb[0].mxu0 %v4470
        %v4472 = vpop.f32.mrb[0].mxu0
        %v4473 = vadd.f32 0.0, %v4472
        %v4474 = vpop.f32.mrb[0].mxu0
        %4475 = vmatprep.mubr.f32.mxu0 0.0
        %v4476 = vand.u32 %v4338, 4294901760
        %v4477 = vsub.f32 %v4338, %v4476
        %v4478 = vand.u32 %v4477, 4294901760
        %v4479 = vsub.f32 %v4477, %v4478
        %v4480 = vand.u32 %v4479, 4294901760
        %4481 = vmatmul.mubr.f32.gmra.mrb[0].mxu0 %v4480
        %v4482 = vpop.f32.mrb[0].mxu0
        %v4483 = vadd.f32 0.0, %v4482
        %v4484 = vpop.f32.mrb[0].mxu0
        %4485 = vmatprep.mubr.f32.mxu0 0.0
        %v4486 = vand.u32 %v4341, 4294901760
        %v4487 = vsub.f32 %v4341, %v4486
        %v4488 = vand.u32 %v4487, 4294901760
        %v4489 = vsub.f32 %v4487, %v4488
        %v4490 = vand.u32 %v4489, 4294901760
        %4491 = vmatmul.mubr.f32.gmra.mrb[0].mxu0 %v4490
        %v4492 = vpop.f32.mrb[0].mxu0
        %v4493 = vadd.f32 0.0, %v4492
        %v4494 = vpop.f32.mrb[0].mxu0
        %4495 = vdwg.mxu0
        %4496 = vmatprep.subr.mxu0 0.0
        %v4497 = vand.u32 %v4303, 4294901760
        %v4498 = vsub.f32 %v4303, %v4497
        %v4499 = vand.u32 %v4498, 4294901760
        %v4500 = vsub.f32 %v4498, %v4499
        %v4501 = vand.u32 %v4500, 4294901760
        %4502 = vmatpush1.msra.mxu0 %v4501
        %4503 = vmatprep.subr.mxu0 0.0
        %v4504 = vand.u32 %v4304, 4294901760
        %v4505 = vsub.f32 %v4304, %v4504
        %v4506 = vand.u32 %v4505, 4294901760
        %v4507 = vsub.f32 %v4505, %v4506
        %v4508 = vand.u32 %v4507, 4294901760
        %4509 = vmatpush1.msra.mxu0 %v4508
        %4510 = vmatprep.subr.mxu0 0.0
        %v4511 = vand.u32 %v4305, 4294901760
        %v4512 = vsub.f32 %v4305, %v4511
        %v4513 = vand.u32 %v4512, 4294901760
        %v4514 = vsub.f32 %v4512, %v4513
        %v4515 = vand.u32 %v4514, 4294901760
        %4516 = vmatpush1.msra.mxu0 %v4515
        %4517 = vmatprep.subr.mxu0 0.0
        %v4518 = vand.u32 %v4306, 4294901760
        %v4519 = vsub.f32 %v4306, %v4518
        %v4520 = vand.u32 %v4519, 4294901760
        %v4521 = vsub.f32 %v4519, %v4520
        %v4522 = vand.u32 %v4521, 4294901760
        %4523 = vmatpush1.msra.mxu0 %v4522
        %4524 = vmatprep.subr.mxu0 0.0
        %v4525 = vand.u32 %v4307, 4294901760
        %v4526 = vsub.f32 %v4307, %v4525
        %v4527 = vand.u32 %v4526, 4294901760
        %v4528 = vsub.f32 %v4526, %v4527
        %v4529 = vand.u32 %v4528, 4294901760
        %4530 = vmatpush1.msra.mxu0 %v4529
        %4531 = vmatprep.subr.mxu0 0.0
        %v4532 = vand.u32 %v4308, 4294901760
        %v4533 = vsub.f32 %v4308, %v4532
        %v4534 = vand.u32 %v4533, 4294901760
        %v4535 = vsub.f32 %v4533, %v4534
        %v4536 = vand.u32 %v4535, 4294901760
        %4537 = vmatpush1.msra.mxu0 %v4536
        %4538 = vmatprep.subr.mxu0 0.0
        %v4539 = vand.u32 %v4309, 4294901760
        %v4540 = vsub.f32 %v4309, %v4539
        %v4541 = vand.u32 %v4540, 4294901760
        %v4542 = vsub.f32 %v4540, %v4541
        %v4543 = vand.u32 %v4542, 4294901760
        %4544 = vmatpush1.msra.mxu0 %v4543
        %4545 = vmatprep.subr.mxu0 0.0
        %v4546 = vand.u32 %v4310, 4294901760
        %v4547 = vsub.f32 %v4310, %v4546
        %v4548 = vand.u32 %v4547, 4294901760
        %v4549 = vsub.f32 %v4547, %v4548
        %v4550 = vand.u32 %v4549, 4294901760
        %4551 = vmatpush1.msra.mxu0 %v4550
        %4552 = vmatprep.subr.mxu0 0.0
        %4553 = vmatpush1.msra.mxu0 0.0
        %4554 = vmatprep.subr.mxu0 0.0
        %4555 = vmatpush1.msra.mxu0 0.0
        %4556 = vmatprep.subr.mxu0 0.0
        %4557 = vmatpush1.msra.mxu0 0.0
        %4558 = vmatprep.subr.mxu0 0.0
        %4559 = vmatpush1.msra.mxu0 0.0
        %4560 = vmatprep.subr.mxu0 0.0
        %4561 = vmatpush1.msra.mxu0 0.0
        %4562 = vmatprep.subr.mxu0 0.0
        %4563 = vmatpush1.msra.mxu0 0.0
        %4564 = vmatprep.subr.mxu0 0.0
        %4565 = vmatpush1.msra.mxu0 0.0
        %4566 = vmatprep.subr.mxu0 0.0
        %4567 = vmatpush1.msra.mxu0 0.0
        %4568 = vmatprep.subr.mxu0 0.0
        %4569 = vmatpush1.msra.mxu0 0.0
        %4570 = vmatprep.subr.mxu0 0.0
        %4571 = vmatpush1.msra.mxu0 0.0
        %4572 = vmatprep.subr.mxu0 0.0
        %4573 = vmatpush1.msra.mxu0 0.0
        %4574 = vmatprep.subr.mxu0 0.0
        %4575 = vmatpush1.msra.mxu0 0.0
        %4576 = vmatprep.subr.mxu0 0.0
        %4577 = vmatpush1.msra.mxu0 0.0
        %4578 = vmatprep.subr.mxu0 0.0
        %4579 = vmatpush1.msra.mxu0 0.0
        %4580 = vmatprep.subr.mxu0 0.0
        %4581 = vmatpush1.msra.mxu0 0.0
        %4582 = vmatprep.subr.mxu0 0.0
        %4583 = vmatpush1.msra.mxu0 0.0
        %4584 = vmatprep.subr.mxu0 0.0
        %4585 = vmatpush1.msra.mxu0 0.0
        %4586 = vmatprep.subr.mxu0 0.0
        %4587 = vmatpush1.msra.mxu0 0.0
        %4588 = vmatprep.subr.mxu0 0.0
        %4589 = vmatpush1.msra.mxu0 0.0
        %4590 = vmatprep.subr.mxu0 0.0
        %4591 = vmatpush1.msra.mxu0 0.0
        %4592 = vmatprep.subr.mxu0 0.0
        %4593 = vmatpush1.msra.mxu0 0.0
        %4594 = vmatprep.subr.mxu0 0.0
        %4595 = vmatpush1.msra.mxu0 0.0
        %4596 = vmatprep.subr.mxu0 0.0
        %4597 = vmatpush1.msra.mxu0 0.0
        %4598 = vmatprep.subr.mxu0 0.0
        %4599 = vmatpush1.msra.mxu0 0.0
        %4600 = vmatprep.mubr.f32.mxu0 0.0
        %v4601 = vand.u32 %v4320, 4294901760
        %4602 = vmatmul.mubr.f32.gmra.mrb[0].mxu0 %v4601
        %v4603 = vpop.f32.mrb[0].mxu0
        %v4604 = vadd.f32 %v4423, %v4603
        %v4605 = vpop.f32.mrb[0].mxu0
        %4606 = vmatprep.mubr.f32.mxu0 0.0
        %v4607 = vand.u32 %v4323, 4294901760
        %4608 = vmatmul.mubr.f32.gmra.mrb[0].mxu0 %v4607
        %v4609 = vpop.f32.mrb[0].mxu0
        %v4610 = vadd.f32 %v4433, %v4609
        %v4611 = vpop.f32.mrb[0].mxu0
        %4612 = vmatprep.mubr.f32.mxu0 0.0
        %v4613 = vand.u32 %v4326, 4294901760
        %4614 = vmatmul.mubr.f32.gmra.mrb[0].mxu0 %v4613
        %v4615 = vpop.f32.mrb[0].mxu0
        %v4616 = vadd.f32 %v4443, %v4615
        %v4617 = vpop.f32.mrb[0].mxu0
        %4618 = vmatprep.mubr.f32.mxu0 0.0
        %v4619 = vand.u32 %v4329, 4294901760
        %4620 = vmatmul.mubr.f32.gmra.mrb[0].mxu0 %v4619
        %v4621 = vpop.f32.mrb[0].mxu0
        %v4622 = vadd.f32 %v4453, %v4621
        %v4623 = vpop.f32.mrb[0].mxu0
        %4624 = vmatprep.mubr.f32.mxu0 0.0
        %v4625 = vand.u32 %v4332, 4294901760
        %4626 = vmatmul.mubr.f32.gmra.mrb[0].mxu0 %v4625
        %v4627 = vpop.f32.mrb[0].mxu0
        %v4628 = vadd.f32 %v4463, %v4627
        %v4629 = vpop.f32.mrb[0].mxu0
        %4630 = vmatprep.mubr.f32.mxu0 0.0
        %v4631 = vand.u32 %v4335, 4294901760
        %4632 = vmatmul.mubr.f32.gmra.mrb[0].mxu0 %v4631
        %v4633 = vpop.f32.mrb[0].mxu0
        %v4634 = vadd.f32 %v4473, %v4633
        %v4635 = vpop.f32.mrb[0].mxu0
        %4636 = vmatprep.mubr.f32.mxu0 0.0
        %v4637 = vand.u32 %v4338, 4294901760
        %4638 = vmatmul.mubr.f32.gmra.mrb[0].mxu0 %v4637
        %v4639 = vpop.f32.mrb[0].mxu0
        %v4640 = vadd.f32 %v4483, %v4639
        %v4641 = vpop.f32.mrb[0].mxu0
        %4642 = vmatprep.mubr.f32.mxu0 0.0
        %v4643 = vand.u32 %v4341, 4294901760
        %4644 = vmatmul.mubr.f32.gmra.mrb[0].mxu0 %v4643
        %v4645 = vpop.f32.mrb[0].mxu0
        %v4646 = vadd.f32 %v4493, %v4645
        %v4647 = vpop.f32.mrb[0].mxu0
        %4648 = vdwg.mxu0
        %4649 = vmatprep.subr.mxu0 0.0
        %v4650 = vand.u32 %v4303, 4294901760
        %v4651 = vsub.f32 %v4303, %v4650
        %4652 = vmatpush1.msra.mxu0 %v4651
        %4653 = vmatprep.subr.mxu0 0.0
        %v4654 = vand.u32 %v4304, 4294901760
        %v4655 = vsub.f32 %v4304, %v4654
        %4656 = vmatpush1.msra.mxu0 %v4655
        %4657 = vmatprep.subr.mxu0 0.0
        %v4658 = vand.u32 %v4305, 4294901760
        %v4659 = vsub.f32 %v4305, %v4658
        %4660 = vmatpush1.msra.mxu0 %v4659
        %4661 = vmatprep.subr.mxu0 0.0
        %v4662 = vand.u32 %v4306, 4294901760
        %v4663 = vsub.f32 %v4306, %v4662
        %4664 = vmatpush1.msra.mxu0 %v4663
        %4665 = vmatprep.subr.mxu0 0.0
        %v4666 = vand.u32 %v4307, 4294901760
        %v4667 = vsub.f32 %v4307, %v4666
        %4668 = vmatpush1.msra.mxu0 %v4667
        %4669 = vmatprep.subr.mxu0 0.0
        %v4670 = vand.u32 %v4308, 4294901760
        %v4671 = vsub.f32 %v4308, %v4670
        %4672 = vmatpush1.msra.mxu0 %v4671
        %4673 = vmatprep.subr.mxu0 0.0
        %v4674 = vand.u32 %v4309, 4294901760
        %v4675 = vsub.f32 %v4309, %v4674
        %4676 = vmatpush1.msra.mxu0 %v4675
        %4677 = vmatprep.subr.mxu0 0.0
        %v4678 = vand.u32 %v4310, 4294901760
        %v4679 = vsub.f32 %v4310, %v4678
        %4680 = vmatpush1.msra.mxu0 %v4679
        %4681 = vmatprep.subr.mxu0 0.0
        %4682 = vmatpush1.msra.mxu0 0.0
        %4683 = vmatprep.subr.mxu0 0.0
        %4684 = vmatpush1.msra.mxu0 0.0
        %4685 = vmatprep.subr.mxu0 0.0
        %4686 = vmatpush1.msra.mxu0 0.0
        %4687 = vmatprep.subr.mxu0 0.0
        %4688 = vmatpush1.msra.mxu0 0.0
        %4689 = vmatprep.subr.mxu0 0.0
        %4690 = vmatpush1.msra.mxu0 0.0
        %4691 = vmatprep.subr.mxu0 0.0
        %4692 = vmatpush1.msra.mxu0 0.0
        %4693 = vmatprep.subr.mxu0 0.0
        %4694 = vmatpush1.msra.mxu0 0.0
        %4695 = vmatprep.subr.mxu0 0.0
        %4696 = vmatpush1.msra.mxu0 0.0
        %4697 = vmatprep.subr.mxu0 0.0
        %4698 = vmatpush1.msra.mxu0 0.0
        %4699 = vmatprep.subr.mxu0 0.0
        %4700 = vmatpush1.msra.mxu0 0.0
        %4701 = vmatprep.subr.mxu0 0.0
        %4702 = vmatpush1.msra.mxu0 0.0
        %4703 = vmatprep.subr.mxu0 0.0
        %4704 = vmatpush1.msra.mxu0 0.0
        %4705 = vmatprep.subr.mxu0 0.0
        %4706 = vmatpush1.msra.mxu0 0.0
        %4707 = vmatprep.subr.mxu0 0.0
        %4708 = vmatpush1.msra.mxu0 0.0
        %4709 = vmatprep.subr.mxu0 0.0
        %4710 = vmatpush1.msra.mxu0 0.0
        %4711 = vmatprep.subr.mxu0 0.0
        %4712 = vmatpush1.msra.mxu0 0.0
        %4713 = vmatprep.subr.mxu0 0.0
        %4714 = vmatpush1.msra.mxu0 0.0
        %4715 = vmatprep.subr.mxu0 0.0
        %4716 = vmatpush1.msra.mxu0 0.0
        %4717 = vmatprep.subr.mxu0 0.0
        %4718 = vmatpush1.msra.mxu0 0.0
        %4719 = vmatprep.subr.mxu0 0.0
        %4720 = vmatpush1.msra.mxu0 0.0
        %4721 = vmatprep.subr.mxu0 0.0
        %4722 = vmatpush1.msra.mxu0 0.0
        %4723 = vmatprep.subr.mxu0 0.0
        %4724 = vmatpush1.msra.mxu0 0.0
        %4725 = vmatprep.subr.mxu0 0.0
        %4726 = vmatpush1.msra.mxu0 0.0
        %4727 = vmatprep.subr.mxu0 0.0
        %4728 = vmatpush1.msra.mxu0 0.0
        %4729 = vmatprep.mubr.f32.mxu0 0.0
        %v4730 = vand.u32 %v4320, 4294901760
        %v4731 = vsub.f32 %v4320, %v4730
        %4732 = vmatmul.mubr.f32.gmra.mrb[0].mxu0 %v4731
        %v4733 = vpop.f32.mrb[0].mxu0
        %v4734 = vadd.f32 %v4604, %v4733
        %v4735 = vpop.f32.mrb[0].mxu0
        %4736 = vmatprep.mubr.f32.mxu0 0.0
        %v4737 = vand.u32 %v4323, 4294901760
        %v4738 = vsub.f32 %v4323, %v4737
        %4739 = vmatmul.mubr.f32.gmra.mrb[0].mxu0 %v4738
        %v4740 = vpop.f32.mrb[0].mxu0
        %v4741 = vadd.f32 %v4610, %v4740
        %v4742 = vpop.f32.mrb[0].mxu0
        %4743 = vmatprep.mubr.f32.mxu0 0.0
        %v4744 = vand.u32 %v4326, 4294901760
        %v4745 = vsub.f32 %v4326, %v4744
        %4746 = vmatmul.mubr.f32.gmra.mrb[0].mxu0 %v4745
        %v4747 = vpop.f32.mrb[0].mxu0
        %v4748 = vadd.f32 %v4616, %v4747
        %v4749 = vpop.f32.mrb[0].mxu0
        %4750 = vmatprep.mubr.f32.mxu0 0.0
        %v4751 = vand.u32 %v4329, 4294901760
        %v4752 = vsub.f32 %v4329, %v4751
        %4753 = vmatmul.mubr.f32.gmra.mrb[0].mxu0 %v4752
        %v4754 = vpop.f32.mrb[0].mxu0
        %v4755 = vadd.f32 %v4622, %v4754
        %v4756 = vpop.f32.mrb[0].mxu0
        %4757 = vmatprep.mubr.f32.mxu0 0.0
        %v4758 = vand.u32 %v4332, 4294901760
        %v4759 = vsub.f32 %v4332, %v4758
        %4760 = vmatmul.mubr.f32.gmra.mrb[0].mxu0 %v4759
        %v4761 = vpop.f32.mrb[0].mxu0
        %v4762 = vadd.f32 %v4628, %v4761
        %v4763 = vpop.f32.mrb[0].mxu0
        %4764 = vmatprep.mubr.f32.mxu0 0.0
        %v4765 = vand.u32 %v4335, 4294901760
        %v4766 = vsub.f32 %v4335, %v4765
        %4767 = vmatmul.mubr.f32.gmra.mrb[0].mxu0 %v4766
        %v4768 = vpop.f32.mrb[0].mxu0
        %v4769 = vadd.f32 %v4634, %v4768
        %v4770 = vpop.f32.mrb[0].mxu0
        %4771 = vmatprep.mubr.f32.mxu0 0.0
        %v4772 = vand.u32 %v4338, 4294901760
        %v4773 = vsub.f32 %v4338, %v4772
        %4774 = vmatmul.mubr.f32.gmra.mrb[0].mxu0 %v4773
        %v4775 = vpop.f32.mrb[0].mxu0
        %v4776 = vadd.f32 %v4640, %v4775
        %v4777 = vpop.f32.mrb[0].mxu0
        %4778 = vmatprep.mubr.f32.mxu0 0.0
        %v4779 = vand.u32 %v4341, 4294901760
        %v4780 = vsub.f32 %v4341, %v4779
        %4781 = vmatmul.mubr.f32.gmra.mrb[0].mxu0 %v4780
        %v4782 = vpop.f32.mrb[0].mxu0
        %v4783 = vadd.f32 %v4646, %v4782
        %v4784 = vpop.f32.mrb[0].mxu0
        %4785 = vdwg.mxu0
        %4786 = vmatprep.subr.mxu0 0.0
        %v4787 = vand.u32 %v4303, 4294901760
        %4788 = vmatpush1.msra.mxu0 %v4787
        %4789 = vmatprep.subr.mxu0 0.0
        %v4790 = vand.u32 %v4304, 4294901760
        %4791 = vmatpush1.msra.mxu0 %v4790
        %4792 = vmatprep.subr.mxu0 0.0
        %v4793 = vand.u32 %v4305, 4294901760
        %4794 = vmatpush1.msra.mxu0 %v4793
        %4795 = vmatprep.subr.mxu0 0.0
        %v4796 = vand.u32 %v4306, 4294901760
        %4797 = vmatpush1.msra.mxu0 %v4796
        %4798 = vmatprep.subr.mxu0 0.0
        %v4799 = vand.u32 %v4307, 4294901760
        %4800 = vmatpush1.msra.mxu0 %v4799
        %4801 = vmatprep.subr.mxu0 0.0
        %v4802 = vand.u32 %v4308, 4294901760
        %4803 = vmatpush1.msra.mxu0 %v4802
        %4804 = vmatprep.subr.mxu0 0.0
        %v4805 = vand.u32 %v4309, 4294901760
        %4806 = vmatpush1.msra.mxu0 %v4805
        %4807 = vmatprep.subr.mxu0 0.0
        %v4808 = vand.u32 %v4310, 4294901760
        %4809 = vmatpush1.msra.mxu0 %v4808
        %4810 = vmatprep.subr.mxu0 0.0
        %4811 = vmatpush1.msra.mxu0 0.0
        %4812 = vmatprep.subr.mxu0 0.0
        %4813 = vmatpush1.msra.mxu0 0.0
        %4814 = vmatprep.subr.mxu0 0.0
        %4815 = vmatpush1.msra.mxu0 0.0
        %4816 = vmatprep.subr.mxu0 0.0
        %4817 = vmatpush1.msra.mxu0 0.0
        %4818 = vmatprep.subr.mxu0 0.0
        %4819 = vmatpush1.msra.mxu0 0.0
        %4820 = vmatprep.subr.mxu0 0.0
        %4821 = vmatpush1.msra.mxu0 0.0
        %4822 = vmatprep.subr.mxu0 0.0
        %4823 = vmatpush1.msra.mxu0 0.0
        %4824 = vmatprep.subr.mxu0 0.0
        %4825 = vmatpush1.msra.mxu0 0.0
        %4826 = vmatprep.subr.mxu0 0.0
        %4827 = vmatpush1.msra.mxu0 0.0
        %4828 = vmatprep.subr.mxu0 0.0
        %4829 = vmatpush1.msra.mxu0 0.0
        %4830 = vmatprep.subr.mxu0 0.0
        %4831 = vmatpush1.msra.mxu0 0.0
        %4832 = vmatprep.subr.mxu0 0.0
        %4833 = vmatpush1.msra.mxu0 0.0
        %4834 = vmatprep.subr.mxu0 0.0
        %4835 = vmatpush1.msra.mxu0 0.0
        %4836 = vmatprep.subr.mxu0 0.0
        %4837 = vmatpush1.msra.mxu0 0.0
        %4838 = vmatprep.subr.mxu0 0.0
        %4839 = vmatpush1.msra.mxu0 0.0
        %4840 = vmatprep.subr.mxu0 0.0
        %4841 = vmatpush1.msra.mxu0 0.0
        %4842 = vmatprep.subr.mxu0 0.0
        %4843 = vmatpush1.msra.mxu0 0.0
        %4844 = vmatprep.subr.mxu0 0.0
        %4845 = vmatpush1.msra.mxu0 0.0
        %4846 = vmatprep.subr.mxu0 0.0
        %4847 = vmatpush1.msra.mxu0 0.0
        %4848 = vmatprep.subr.mxu0 0.0
        %4849 = vmatpush1.msra.mxu0 0.0
        %4850 = vmatprep.subr.mxu0 0.0
        %4851 = vmatpush1.msra.mxu0 0.0
        %4852 = vmatprep.subr.mxu0 0.0
        %4853 = vmatpush1.msra.mxu0 0.0
        %4854 = vmatprep.subr.mxu0 0.0
        %4855 = vmatpush1.msra.mxu0 0.0
        %4856 = vmatprep.subr.mxu0 0.0
        %4857 = vmatpush1.msra.mxu0 0.0
        %4858 = vmatprep.mubr.f32.mxu0 0.0
        %v4859 = vand.u32 %v4320, 4294901760
        %v4860 = vsub.f32 %v4320, %v4859
        %v4861 = vand.u32 %v4860, 4294901760
        %4862 = vmatmul.mubr.f32.gmra.mrb[0].mxu0 %v4861
        %v4863 = vpop.f32.mrb[0].mxu0
        %v4864 = vadd.f32 %v4734, %v4863
        %v4865 = vpop.f32.mrb[0].mxu0
        %4866 = vmatprep.mubr.f32.mxu0 0.0
        %v4867 = vand.u32 %v4323, 4294901760
        %v4868 = vsub.f32 %v4323, %v4867
        %v4869 = vand.u32 %v4868, 4294901760
        %4870 = vmatmul.mubr.f32.gmra.mrb[0].mxu0 %v4869
        %v4871 = vpop.f32.mrb[0].mxu0
        %v4872 = vadd.f32 %v4741, %v4871
        %v4873 = vpop.f32.mrb[0].mxu0
        %4874 = vmatprep.mubr.f32.mxu0 0.0
        %v4875 = vand.u32 %v4326, 4294901760
        %v4876 = vsub.f32 %v4326, %v4875
        %v4877 = vand.u32 %v4876, 4294901760
        %4878 = vmatmul.mubr.f32.gmra.mrb[0].mxu0 %v4877
        %v4879 = vpop.f32.mrb[0].mxu0
        %v4880 = vadd.f32 %v4748, %v4879
        %v4881 = vpop.f32.mrb[0].mxu0
        %4882 = vmatprep.mubr.f32.mxu0 0.0
        %v4883 = vand.u32 %v4329, 4294901760
        %v4884 = vsub.f32 %v4329, %v4883
        %v4885 = vand.u32 %v4884, 4294901760
        %4886 = vmatmul.mubr.f32.gmra.mrb[0].mxu0 %v4885
        %v4887 = vpop.f32.mrb[0].mxu0
        %v4888 = vadd.f32 %v4755, %v4887
        %v4889 = vpop.f32.mrb[0].mxu0
        %4890 = vmatprep.mubr.f32.mxu0 0.0
        %v4891 = vand.u32 %v4332, 4294901760
        %v4892 = vsub.f32 %v4332, %v4891
        %v4893 = vand.u32 %v4892, 4294901760
        %4894 = vmatmul.mubr.f32.gmra.mrb[0].mxu0 %v4893
        %v4895 = vpop.f32.mrb[0].mxu0
        %v4896 = vadd.f32 %v4762, %v4895
        %v4897 = vpop.f32.mrb[0].mxu0
        %4898 = vmatprep.mubr.f32.mxu0 0.0
        %v4899 = vand.u32 %v4335, 4294901760
        %v4900 = vsub.f32 %v4335, %v4899
        %v4901 = vand.u32 %v4900, 4294901760
        %4902 = vmatmul.mubr.f32.gmra.mrb[0].mxu0 %v4901
        %v4903 = vpop.f32.mrb[0].mxu0
        %v4904 = vadd.f32 %v4769, %v4903
        %v4905 = vpop.f32.mrb[0].mxu0
        %4906 = vmatprep.mubr.f32.mxu0 0.0
        %v4907 = vand.u32 %v4338, 4294901760
        %v4908 = vsub.f32 %v4338, %v4907
        %v4909 = vand.u32 %v4908, 4294901760
        %4910 = vmatmul.mubr.f32.gmra.mrb[0].mxu0 %v4909
        %v4911 = vpop.f32.mrb[0].mxu0
        %v4912 = vadd.f32 %v4776, %v4911
        %v4913 = vpop.f32.mrb[0].mxu0
        %4914 = vmatprep.mubr.f32.mxu0 0.0
        %v4915 = vand.u32 %v4341, 4294901760
        %v4916 = vsub.f32 %v4341, %v4915
        %v4917 = vand.u32 %v4916, 4294901760
        %4918 = vmatmul.mubr.f32.gmra.mrb[0].mxu0 %v4917
        %v4919 = vpop.f32.mrb[0].mxu0
        %v4920 = vadd.f32 %v4783, %v4919
        %v4921 = vpop.f32.mrb[0].mxu0
        %4922 = vdwg.mxu0
        %4923 = vmatprep.subr.mxu0 0.0
        %v4924 = vand.u32 %v4303, 4294901760
        %v4925 = vsub.f32 %v4303, %v4924
        %v4926 = vand.u32 %v4925, 4294901760
        %4927 = vmatpush1.msra.mxu0 %v4926
        %4928 = vmatprep.subr.mxu0 0.0
        %v4929 = vand.u32 %v4304, 4294901760
        %v4930 = vsub.f32 %v4304, %v4929
        %v4931 = vand.u32 %v4930, 4294901760
        %4932 = vmatpush1.msra.mxu0 %v4931
        %4933 = vmatprep.subr.mxu0 0.0
        %v4934 = vand.u32 %v4305, 4294901760
        %v4935 = vsub.f32 %v4305, %v4934
        %v4936 = vand.u32 %v4935, 4294901760
        %4937 = vmatpush1.msra.mxu0 %v4936
        %4938 = vmatprep.subr.mxu0 0.0
        %v4939 = vand.u32 %v4306, 4294901760
        %v4940 = vsub.f32 %v4306, %v4939
        %v4941 = vand.u32 %v4940, 4294901760
        %4942 = vmatpush1.msra.mxu0 %v4941
        %4943 = vmatprep.subr.mxu0 0.0
        %v4944 = vand.u32 %v4307, 4294901760
        %v4945 = vsub.f32 %v4307, %v4944
        %v4946 = vand.u32 %v4945, 4294901760
        %4947 = vmatpush1.msra.mxu0 %v4946
        %4948 = vmatprep.subr.mxu0 0.0
        %v4949 = vand.u32 %v4308, 4294901760
        %v4950 = vsub.f32 %v4308, %v4949
        %v4951 = vand.u32 %v4950, 4294901760
        %4952 = vmatpush1.msra.mxu0 %v4951
        %4953 = vmatprep.subr.mxu0 0.0
        %v4954 = vand.u32 %v4309, 4294901760
        %v4955 = vsub.f32 %v4309, %v4954
        %v4956 = vand.u32 %v4955, 4294901760
        %4957 = vmatpush1.msra.mxu0 %v4956
        %4958 = vmatprep.subr.mxu0 0.0
        %v4959 = vand.u32 %v4310, 4294901760
        %v4960 = vsub.f32 %v4310, %v4959
        %v4961 = vand.u32 %v4960, 4294901760
        %4962 = vmatpush1.msra.mxu0 %v4961
        %4963 = vmatprep.subr.mxu0 0.0
        %4964 = vmatpush1.msra.mxu0 0.0
        %4965 = vmatprep.subr.mxu0 0.0
        %4966 = vmatpush1.msra.mxu0 0.0
        %4967 = vmatprep.subr.mxu0 0.0
        %4968 = vmatpush1.msra.mxu0 0.0
        %4969 = vmatprep.subr.mxu0 0.0
        %4970 = vmatpush1.msra.mxu0 0.0
        %4971 = vmatprep.subr.mxu0 0.0
        %4972 = vmatpush1.msra.mxu0 0.0
        %4973 = vmatprep.subr.mxu0 0.0
        %4974 = vmatpush1.msra.mxu0 0.0
        %4975 = vmatprep.subr.mxu0 0.0
        %4976 = vmatpush1.msra.mxu0 0.0
        %4977 = vmatprep.subr.mxu0 0.0
        %4978 = vmatpush1.msra.mxu0 0.0
        %4979 = vmatprep.subr.mxu0 0.0
        %4980 = vmatpush1.msra.mxu0 0.0
        %4981 = vmatprep.subr.mxu0 0.0
        %4982 = vmatpush1.msra.mxu0 0.0
        %4983 = vmatprep.subr.mxu0 0.0
        %4984 = vmatpush1.msra.mxu0 0.0
        %4985 = vmatprep.subr.mxu0 0.0
        %4986 = vmatpush1.msra.mxu0 0.0
        %4987 = vmatprep.subr.mxu0 0.0
        %4988 = vmatpush1.msra.mxu0 0.0
        %4989 = vmatprep.subr.mxu0 0.0
        %4990 = vmatpush1.msra.mxu0 0.0
        %4991 = vmatprep.subr.mxu0 0.0
        %4992 = vmatpush1.msra.mxu0 0.0
        %4993 = vmatprep.subr.mxu0 0.0
        %4994 = vmatpush1.msra.mxu0 0.0
        %4995 = vmatprep.subr.mxu0 0.0
        %4996 = vmatpush1.msra.mxu0 0.0
        %4997 = vmatprep.subr.mxu0 0.0
        %4998 = vmatpush1.msra.mxu0 0.0
        %4999 = vmatprep.subr.mxu0 0.0
        %5000 = vmatpush1.msra.mxu0 0.0
        %5001 = vmatprep.subr.mxu0 0.0
        %5002 = vmatpush1.msra.mxu0 0.0
        %5003 = vmatprep.subr.mxu0 0.0
        %5004 = vmatpush1.msra.mxu0 0.0
        %5005 = vmatprep.subr.mxu0 0.0
        %5006 = vmatpush1.msra.mxu0 0.0
        %5007 = vmatprep.subr.mxu0 0.0
        %5008 = vmatpush1.msra.mxu0 0.0
        %5009 = vmatprep.subr.mxu0 0.0
        %5010 = vmatpush1.msra.mxu0 0.0
        %5011 = vmatprep.mubr.f32.mxu0 0.0
        %v5012 = vand.u32 %v4320, 4294901760
        %5013 = vmatmul.mubr.f32.gmra.mrb[0].mxu0 %v5012
        %v5014 = vpop.f32.mrb[0].mxu0
        %v5015 = vadd.f32 %v4864, %v5014
        %v5016 = vpop.f32.mrb[0].mxu0
        %5017 = vmatprep.mubr.f32.mxu0 0.0
        %v5018 = vand.u32 %v4323, 4294901760
        %5019 = vmatmul.mubr.f32.gmra.mrb[0].mxu0 %v5018
        %v5020 = vpop.f32.mrb[0].mxu0
        %v5021 = vadd.f32 %v4872, %v5020
        %v5022 = vpop.f32.mrb[0].mxu0
        %5023 = vmatprep.mubr.f32.mxu0 0.0
        %v5024 = vand.u32 %v4326, 4294901760
        %5025 = vmatmul.mubr.f32.gmra.mrb[0].mxu0 %v5024
        %v5026 = vpop.f32.mrb[0].mxu0
        %v5027 = vadd.f32 %v4880, %v5026
        %v5028 = vpop.f32.mrb[0].mxu0
        %5029 = vmatprep.mubr.f32.mxu0 0.0
        %v5030 = vand.u32 %v4329, 4294901760
        %5031 = vmatmul.mubr.f32.gmra.mrb[0].mxu0 %v5030
        %v5032 = vpop.f32.mrb[0].mxu0
        %v5033 = vadd.f32 %v4888, %v5032
        %v5034 = vpop.f32.mrb[0].mxu0
        %5035 = vmatprep.mubr.f32.mxu0 0.0
        %v5036 = vand.u32 %v4332, 4294901760
        %5037 = vmatmul.mubr.f32.gmra.mrb[0].mxu0 %v5036
        %v5038 = vpop.f32.mrb[0].mxu0
        %v5039 = vadd.f32 %v4896, %v5038
        %v5040 = vpop.f32.mrb[0].mxu0
        %5041 = vmatprep.mubr.f32.mxu0 0.0
        %v5042 = vand.u32 %v4335, 4294901760
        %5043 = vmatmul.mubr.f32.gmra.mrb[0].mxu0 %v5042
        %v5044 = vpop.f32.mrb[0].mxu0
        %v5045 = vadd.f32 %v4904, %v5044
        %v5046 = vpop.f32.mrb[0].mxu0
        %5047 = vmatprep.mubr.f32.mxu0 0.0
        %v5048 = vand.u32 %v4338, 4294901760
        %5049 = vmatmul.mubr.f32.gmra.mrb[0].mxu0 %v5048
        %v5050 = vpop.f32.mrb[0].mxu0
        %v5051 = vadd.f32 %v4912, %v5050
        %v5052 = vpop.f32.mrb[0].mxu0
        %5053 = vmatprep.mubr.f32.mxu0 0.0
        %v5054 = vand.u32 %v4341, 4294901760
        %5055 = vmatmul.mubr.f32.gmra.mrb[0].mxu0 %v5054
        %v5056 = vpop.f32.mrb[0].mxu0
        %v5057 = vadd.f32 %v4920, %v5056
        %v5058 = vpop.f32.mrb[0].mxu0
        %5059 = vdwg.mxu0
        %5060 = vmatprep.subr.mxu0 0.0
        %v5061 = vand.u32 %v4303, 4294901760
        %5062 = vmatpush1.msra.mxu0 %v5061
        %5063 = vmatprep.subr.mxu0 0.0
        %v5064 = vand.u32 %v4304, 4294901760
        %5065 = vmatpush1.msra.mxu0 %v5064
        %5066 = vmatprep.subr.mxu0 0.0
        %v5067 = vand.u32 %v4305, 4294901760
        %5068 = vmatpush1.msra.mxu0 %v5067
        %5069 = vmatprep.subr.mxu0 0.0
        %v5070 = vand.u32 %v4306, 4294901760
        %5071 = vmatpush1.msra.mxu0 %v5070
        %5072 = vmatprep.subr.mxu0 0.0
        %v5073 = vand.u32 %v4307, 4294901760
        %5074 = vmatpush1.msra.mxu0 %v5073
        %5075 = vmatprep.subr.mxu0 0.0
        %v5076 = vand.u32 %v4308, 4294901760
        %5077 = vmatpush1.msra.mxu0 %v5076
        %5078 = vmatprep.subr.mxu0 0.0
        %v5079 = vand.u32 %v4309, 4294901760
        %5080 = vmatpush1.msra.mxu0 %v5079
        %5081 = vmatprep.subr.mxu0 0.0
        %v5082 = vand.u32 %v4310, 4294901760
        %5083 = vmatpush1.msra.mxu0 %v5082
        %5084 = vmatprep.subr.mxu0 0.0
        %5085 = vmatpush1.msra.mxu0 0.0
        %5086 = vmatprep.subr.mxu0 0.0
        %5087 = vmatpush1.msra.mxu0 0.0
        %5088 = vmatprep.subr.mxu0 0.0
        %5089 = vmatpush1.msra.mxu0 0.0
        %5090 = vmatprep.subr.mxu0 0.0
        %5091 = vmatpush1.msra.mxu0 0.0
        %5092 = vmatprep.subr.mxu0 0.0
        %5093 = vmatpush1.msra.mxu0 0.0
        %5094 = vmatprep.subr.mxu0 0.0
        %5095 = vmatpush1.msra.mxu0 0.0
        %5096 = vmatprep.subr.mxu0 0.0
        %5097 = vmatpush1.msra.mxu0 0.0
        %5098 = vmatprep.subr.mxu0 0.0
        %5099 = vmatpush1.msra.mxu0 0.0
        %5100 = vmatprep.subr.mxu0 0.0
        %5101 = vmatpush1.msra.mxu0 0.0
        %5102 = vmatprep.subr.mxu0 0.0
        %5103 = vmatpush1.msra.mxu0 0.0
        %5104 = vmatprep.subr.mxu0 0.0
        %5105 = vmatpush1.msra.mxu0 0.0
        %5106 = vmatprep.subr.mxu0 0.0
        %5107 = vmatpush1.msra.mxu0 0.0
        %5108 = vmatprep.subr.mxu0 0.0
        %5109 = vmatpush1.msra.mxu0 0.0
        %5110 = vmatprep.subr.mxu0 0.0
        %5111 = vmatpush1.msra.mxu0 0.0
        %5112 = vmatprep.subr.mxu0 0.0
        %5113 = vmatpush1.msra.mxu0 0.0
        %5114 = vmatprep.subr.mxu0 0.0
        %5115 = vmatpush1.msra.mxu0 0.0
        %5116 = vmatprep.subr.mxu0 0.0
        %5117 = vmatpush1.msra.mxu0 0.0
        %5118 = vmatprep.subr.mxu0 0.0
        %5119 = vmatpush1.msra.mxu0 0.0
        %5120 = vmatprep.subr.mxu0 0.0
        %5121 = vmatpush1.msra.mxu0 0.0
        %5122 = vmatprep.subr.mxu0 0.0
        %5123 = vmatpush1.msra.mxu0 0.0
        %5124 = vmatprep.subr.mxu0 0.0
        %5125 = vmatpush1.msra.mxu0 0.0
        %5126 = vmatprep.subr.mxu0 0.0
        %5127 = vmatpush1.msra.mxu0 0.0
        %5128 = vmatprep.subr.mxu0 0.0
        %5129 = vmatpush1.msra.mxu0 0.0
        %5130 = vmatprep.subr.mxu0 0.0
        %5131 = vmatpush1.msra.mxu0 0.0
        %5132 = vmatprep.mubr.f32.mxu0 0.0
        %v5133 = vand.u32 %v4320, 4294901760
        %5134 = vmatmul.mubr.f32.gmra.mrb[0].mxu0 %v5133
        %v5135 = vpop.f32.mrb[0].mxu0
        %v5136 = vadd.f32 %v5015, %v5135
        %v5137 = vpop.f32.mrb[0].mxu0
        %5138 = vmatprep.mubr.f32.mxu0 0.0
        %v5139 = vand.u32 %v4323, 4294901760
        %5140 = vmatmul.mubr.f32.gmra.mrb[0].mxu0 %v5139
        %v5141 = vpop.f32.mrb[0].mxu0
        %v5142 = vadd.f32 %v5021, %v5141
        %v5143 = vpop.f32.mrb[0].mxu0
        %5144 = vmatprep.mubr.f32.mxu0 0.0
        %v5145 = vand.u32 %v4326, 4294901760
        %5146 = vmatmul.mubr.f32.gmra.mrb[0].mxu0 %v5145
        %v5147 = vpop.f32.mrb[0].mxu0
        %v5148 = vadd.f32 %v5027, %v5147
        %v5149 = vpop.f32.mrb[0].mxu0
        %5150 = vmatprep.mubr.f32.mxu0 0.0
        %v5151 = vand.u32 %v4329, 4294901760
        %5152 = vmatmul.mubr.f32.gmra.mrb[0].mxu0 %v5151
        %v5153 = vpop.f32.mrb[0].mxu0
        %v5154 = vadd.f32 %v5033, %v5153
        %v5155 = vpop.f32.mrb[0].mxu0
        %5156 = vmatprep.mubr.f32.mxu0 0.0
        %v5157 = vand.u32 %v4332, 4294901760
        %5158 = vmatmul.mubr.f32.gmra.mrb[0].mxu0 %v5157
        %v5159 = vpop.f32.mrb[0].mxu0
        %v5160 = vadd.f32 %v5039, %v5159
        %v5161 = vpop.f32.mrb[0].mxu0
        %5162 = vmatprep.mubr.f32.mxu0 0.0
        %v5163 = vand.u32 %v4335, 4294901760
        %5164 = vmatmul.mubr.f32.gmra.mrb[0].mxu0 %v5163
        %v5165 = vpop.f32.mrb[0].mxu0
        %v5166 = vadd.f32 %v5045, %v5165
        %v5167 = vpop.f32.mrb[0].mxu0
        %5168 = vmatprep.mubr.f32.mxu0 0.0
        %v5169 = vand.u32 %v4338, 4294901760
        %5170 = vmatmul.mubr.f32.gmra.mrb[0].mxu0 %v5169
        %v5171 = vpop.f32.mrb[0].mxu0
        %v5172 = vadd.f32 %v5051, %v5171
        %v5173 = vpop.f32.mrb[0].mxu0
        %5174 = vmatprep.mubr.f32.mxu0 0.0
        %v5175 = vand.u32 %v4341, 4294901760
        %5176 = vmatmul.mubr.f32.gmra.mrb[0].mxu0 %v5175
        %v5177 = vpop.f32.mrb[0].mxu0
        %v5178 = vadd.f32 %v5057, %v5177
        %v5179 = vpop.f32.mrb[0].mxu0
        %5180 = vdwg.mxu0
        %v5181 = vld [vmem:[%s1669] sm:$0xff]
        %v5182 = vld [vmem:[%s1669 + $0x8] sm:$0xff]
        %v5183 = vld [vmem:[%s1669 + $0x10] sm:$0xff]
        %v5184 = vld [vmem:[%s1669 + $0x18] sm:$0xff]
        %v5185 = vld [vmem:[%s1669 + $0x20] sm:$0xff]
        %v5186 = vld [vmem:[%s1669 + $0x28] sm:$0xff]
        %v5187 = vld [vmem:[%s1669 + $0x30] sm:$0xff]
        %v5188 = vld [vmem:[%s1669 + $0x38] sm:$0xff]
        %v5205 = vunpack.c.l.b16 %v1947
        %v5206 = vunpack.c.l.b16 %v1948
        %v5207 = vunpack.c.l.b16 %v1949
        %v5208 = vunpack.c.l.b16 %v1950
        %v5209 = vunpack.c.l.b16 %v1951
        %v5210 = vunpack.c.l.b16 %v1952
        %v5211 = vunpack.c.l.b16 %v1953
        %v5212 = vunpack.c.l.b16 %v1954
        %v5213 = vunpack.c.l.b16 %v1955
        %v5214 = vunpack.c.l.b16 %v1956
        %v5215 = vunpack.c.l.b16 %v1957
        %v5216 = vunpack.c.l.b16 %v1958
        %v5217 = vunpack.c.l.b16 %v1959
        %v5218 = vunpack.c.l.b16 %v1960
        %v5219 = vunpack.c.l.b16 %v1961
        %v5220 = vunpack.c.l.b16 %v1962
        %v5221 = vpack.c.b16 %v5206, %v5205
        %v5222 = vpack.c.b16 %v5208, %v5207
        %v5223 = vpack.c.b16 %v5210, %v5209
        %v5224 = vpack.c.b16 %v5212, %v5211
        %v5225 = vpack.c.b16 %v5214, %v5213
        %v5226 = vpack.c.b16 %v5216, %v5215
        %v5227 = vpack.c.b16 %v5218, %v5217
        %v5228 = vpack.c.b16 %v5220, %v5219
        %5237 = vmatprep.subr.bf16.mxu0 0
        %5238 = vmatpush1.bf16.msra.mxu0 %v5221
        %5239 = vmatprep.subr.bf16.mxu0 0
        %5240 = vmatpush1.bf16.msra.mxu0 %v5222
        %5241 = vmatprep.subr.bf16.mxu0 0
        %5242 = vmatpush1.bf16.msra.mxu0 %v5223
        %5243 = vmatprep.subr.bf16.mxu0 0
        %5244 = vmatpush1.bf16.msra.mxu0 %v5224
        %5245 = vmatprep.subr.bf16.mxu0 0
        %5246 = vmatpush1.bf16.msra.mxu0 %v5225
        %5247 = vmatprep.subr.bf16.mxu0 0
        %5248 = vmatpush1.bf16.msra.mxu0 %v5226
        %5249 = vmatprep.subr.bf16.mxu0 0
        %5250 = vmatpush1.bf16.msra.mxu0 %v5227
        %5251 = vmatprep.subr.bf16.mxu0 0
        %5252 = vmatpush1.bf16.msra.mxu0 %v5228
        %5253 = vmatprep.subr.bf16.mxu0 0
        %5254 = vmatpush1.bf16.msra.mxu0 0
        %5255 = vmatprep.subr.bf16.mxu0 0
        %5256 = vmatpush1.bf16.msra.mxu0 0
        %5257 = vmatprep.subr.bf16.mxu0 0
        %5258 = vmatpush1.bf16.msra.mxu0 0
        %5259 = vmatprep.subr.bf16.mxu0 0
        %5260 = vmatpush1.bf16.msra.mxu0 0
        %5261 = vmatprep.subr.bf16.mxu0 0
        %5262 = vmatpush1.bf16.msra.mxu0 0
        %5263 = vmatprep.subr.bf16.mxu0 0
        %5264 = vmatpush1.bf16.msra.mxu0 0
        %5265 = vmatprep.subr.bf16.mxu0 0
        %5266 = vmatpush1.bf16.msra.mxu0 0
        %5267 = vmatprep.subr.bf16.mxu0 0
        %5268 = vmatpush1.bf16.msra.mxu0 0
        %5269 = vmatprep.mubr.bf16.mxu0 0
        %5270 = vmatmul.mubr.bf16.gmra.mrb[0].mxu0 %v3045
        %v5271 = vpop.f32.mrb[0].mxu0
        %v5272 = vadd.f32 0.0, %v5271
        %v5273 = vpop.f32.mrb[0].mxu0
        %v5274 = vpop.f32.mrb[0].mxu0
        %v5275 = vpop.f32.mrb[0].mxu0
        %5276 = vdwg.mxu0
        %v5278 = vsel %vm3134, %v5181, 0
        %v5281 = vsel %vm3134, %v5182, 0
        %v5284 = vsel %vm3134, %v5183, 0
        %v5287 = vsel %vm3134, %v5184, 0
        %v5290 = vsel %vm3134, %v5185, 0
        %v5293 = vsel %vm3134, %v5186, 0
        %v5296 = vsel %vm3134, %v5187, 0
        %v5299 = vsel %vm3134, %v5188, 0
        %5301 = vmatprep.subr.mxu0 0.0
        %v5302 = vand.u32 %v5272, 4294901760
        %5303 = vmatpush1.msra.mxu0 %v5302
        %5304 = vmatprep.subr.mxu0 0.0
        %5305 = vmatpush1.msra.mxu0 0.0
        %5306 = vmatprep.subr.mxu0 0.0
        %5307 = vmatpush1.msra.mxu0 0.0
        %5308 = vmatprep.subr.mxu0 0.0
        %5309 = vmatpush1.msra.mxu0 0.0
        %5310 = vmatprep.subr.mxu0 0.0
        %5311 = vmatpush1.msra.mxu0 0.0
        %5312 = vmatprep.subr.mxu0 0.0
        %5313 = vmatpush1.msra.mxu0 0.0
        %5314 = vmatprep.subr.mxu0 0.0
        %5315 = vmatpush1.msra.mxu0 0.0
        %5316 = vmatprep.subr.mxu0 0.0
        %5317 = vmatpush1.msra.mxu0 0.0
        %5318 = vmatprep.subr.mxu0 0.0
        %5319 = vmatpush1.msra.mxu0 0.0
        %5320 = vmatprep.subr.mxu0 0.0
        %5321 = vmatpush1.msra.mxu0 0.0
        %5322 = vmatprep.subr.mxu0 0.0
        %5323 = vmatpush1.msra.mxu0 0.0
        %5324 = vmatprep.subr.mxu0 0.0
        %5325 = vmatpush1.msra.mxu0 0.0
        %5326 = vmatprep.subr.mxu0 0.0
        %5327 = vmatpush1.msra.mxu0 0.0
        %5328 = vmatprep.subr.mxu0 0.0
        %5329 = vmatpush1.msra.mxu0 0.0
        %5330 = vmatprep.subr.mxu0 0.0
        %5331 = vmatpush1.msra.mxu0 0.0
        %5332 = vmatprep.subr.mxu0 0.0
        %5333 = vmatpush1.msra.mxu0 0.0
        %5334 = vmatprep.subr.mxu0 0.0
        %5335 = vmatpush1.msra.mxu0 0.0
        %5336 = vmatprep.subr.mxu0 0.0
        %5337 = vmatpush1.msra.mxu0 0.0
        %5338 = vmatprep.subr.mxu0 0.0
        %5339 = vmatpush1.msra.mxu0 0.0
        %5340 = vmatprep.subr.mxu0 0.0
        %5341 = vmatpush1.msra.mxu0 0.0
        %5342 = vmatprep.subr.mxu0 0.0
        %5343 = vmatpush1.msra.mxu0 0.0
        %5344 = vmatprep.subr.mxu0 0.0
        %5345 = vmatpush1.msra.mxu0 0.0
        %5346 = vmatprep.subr.mxu0 0.0
        %5347 = vmatpush1.msra.mxu0 0.0
        %5348 = vmatprep.subr.mxu0 0.0
        %5349 = vmatpush1.msra.mxu0 0.0
        %5350 = vmatprep.subr.mxu0 0.0
        %5351 = vmatpush1.msra.mxu0 0.0
        %5352 = vmatprep.subr.mxu0 0.0
        %5353 = vmatpush1.msra.mxu0 0.0
        %5354 = vmatprep.subr.mxu0 0.0
        %5355 = vmatpush1.msra.mxu0 0.0
        %5356 = vmatprep.subr.mxu0 0.0
        %5357 = vmatpush1.msra.mxu0 0.0
        %5358 = vmatprep.subr.mxu0 0.0
        %5359 = vmatpush1.msra.mxu0 0.0
        %5360 = vmatprep.subr.mxu0 0.0
        %5361 = vmatpush1.msra.mxu0 0.0
        %5362 = vmatprep.subr.mxu0 0.0
        %5363 = vmatpush1.msra.mxu0 0.0
        %5364 = vmatprep.subr.mxu0 0.0
        %5365 = vmatpush1.msra.mxu0 0.0
        %5366 = vmatprep.mubr.f32.mxu0 0.0
        %v5367 = vand.u32 %v5278, 4294901760
        %v5368 = vsub.f32 %v5278, %v5367
        %v5369 = vand.u32 %v5368, 4294901760
        %v5370 = vsub.f32 %v5368, %v5369
        %v5371 = vand.u32 %v5370, 4294901760
        %5372 = vmatmul.mubr.f32.gmra.mrb[0].mxu0 %v5371
        %v5373 = vpop.f32.mrb[0].mxu0
        %v5374 = vadd.f32 0.0, %v5373
        %v5375 = vpop.f32.mrb[0].mxu0
        %5376 = vmatprep.mubr.f32.mxu0 0.0
        %v5377 = vand.u32 %v5281, 4294901760
        %v5378 = vsub.f32 %v5281, %v5377
        %v5379 = vand.u32 %v5378, 4294901760
        %v5380 = vsub.f32 %v5378, %v5379
        %v5381 = vand.u32 %v5380, 4294901760
        %5382 = vmatmul.mubr.f32.gmra.mrb[0].mxu0 %v5381
        %v5383 = vpop.f32.mrb[0].mxu0
        %v5384 = vadd.f32 0.0, %v5383
        %v5385 = vpop.f32.mrb[0].mxu0
        %5386 = vmatprep.mubr.f32.mxu0 0.0
        %v5387 = vand.u32 %v5284, 4294901760
        %v5388 = vsub.f32 %v5284, %v5387
        %v5389 = vand.u32 %v5388, 4294901760
        %v5390 = vsub.f32 %v5388, %v5389
        %v5391 = vand.u32 %v5390, 4294901760
        %5392 = vmatmul.mubr.f32.gmra.mrb[0].mxu0 %v5391
        %v5393 = vpop.f32.mrb[0].mxu0
        %v5394 = vadd.f32 0.0, %v5393
        %v5395 = vpop.f32.mrb[0].mxu0
        %5396 = vmatprep.mubr.f32.mxu0 0.0
        %v5397 = vand.u32 %v5287, 4294901760
        %v5398 = vsub.f32 %v5287, %v5397
        %v5399 = vand.u32 %v5398, 4294901760
        %v5400 = vsub.f32 %v5398, %v5399
        %v5401 = vand.u32 %v5400, 4294901760
        %5402 = vmatmul.mubr.f32.gmra.mrb[0].mxu0 %v5401
        %v5403 = vpop.f32.mrb[0].mxu0
        %v5404 = vadd.f32 0.0, %v5403
        %v5405 = vpop.f32.mrb[0].mxu0
        %5406 = vmatprep.mubr.f32.mxu0 0.0
        %v5407 = vand.u32 %v5290, 4294901760
        %v5408 = vsub.f32 %v5290, %v5407
        %v5409 = vand.u32 %v5408, 4294901760
        %v5410 = vsub.f32 %v5408, %v5409
        %v5411 = vand.u32 %v5410, 4294901760
        %5412 = vmatmul.mubr.f32.gmra.mrb[0].mxu0 %v5411
        %v5413 = vpop.f32.mrb[0].mxu0
        %v5414 = vadd.f32 0.0, %v5413
        %v5415 = vpop.f32.mrb[0].mxu0
        %5416 = vmatprep.mubr.f32.mxu0 0.0
        %v5417 = vand.u32 %v5293, 4294901760
        %v5418 = vsub.f32 %v5293, %v5417
        %v5419 = vand.u32 %v5418, 4294901760
        %v5420 = vsub.f32 %v5418, %v5419
        %v5421 = vand.u32 %v5420, 4294901760
        %5422 = vmatmul.mubr.f32.gmra.mrb[0].mxu0 %v5421
        %v5423 = vpop.f32.mrb[0].mxu0
        %v5424 = vadd.f32 0.0, %v5423
        %v5425 = vpop.f32.mrb[0].mxu0
        %5426 = vmatprep.mubr.f32.mxu0 0.0
        %v5427 = vand.u32 %v5296, 4294901760
        %v5428 = vsub.f32 %v5296, %v5427
        %v5429 = vand.u32 %v5428, 4294901760
        %v5430 = vsub.f32 %v5428, %v5429
        %v5431 = vand.u32 %v5430, 4294901760
        %5432 = vmatmul.mubr.f32.gmra.mrb[0].mxu0 %v5431
        %v5433 = vpop.f32.mrb[0].mxu0
        %v5434 = vadd.f32 0.0, %v5433
        %v5435 = vpop.f32.mrb[0].mxu0
        %5436 = vmatprep.mubr.f32.mxu0 0.0
        %v5437 = vand.u32 %v5299, 4294901760
        %v5438 = vsub.f32 %v5299, %v5437
        %v5439 = vand.u32 %v5438, 4294901760
        %v5440 = vsub.f32 %v5438, %v5439
        %v5441 = vand.u32 %v5440, 4294901760
        %5442 = vmatmul.mubr.f32.gmra.mrb[0].mxu0 %v5441
        %v5443 = vpop.f32.mrb[0].mxu0
        %v5444 = vadd.f32 0.0, %v5443
        %v5445 = vpop.f32.mrb[0].mxu0
        %5446 = vdwg.mxu0
        %5447 = vmatprep.subr.mxu0 0.0
        %v5448 = vand.u32 %v5272, 4294901760
        %v5449 = vsub.f32 %v5272, %v5448
        %v5450 = vand.u32 %v5449, 4294901760
        %v5451 = vsub.f32 %v5449, %v5450
        %v5452 = vand.u32 %v5451, 4294901760
        %5453 = vmatpush1.msra.mxu0 %v5452
        %5454 = vmatprep.subr.mxu0 0.0
        %5455 = vmatpush1.msra.mxu0 0.0
        %5456 = vmatprep.subr.mxu0 0.0
        %5457 = vmatpush1.msra.mxu0 0.0
        %5458 = vmatprep.subr.mxu0 0.0
        %5459 = vmatpush1.msra.mxu0 0.0
        %5460 = vmatprep.subr.mxu0 0.0
        %5461 = vmatpush1.msra.mxu0 0.0
        %5462 = vmatprep.subr.mxu0 0.0
        %5463 = vmatpush1.msra.mxu0 0.0
        %5464 = vmatprep.subr.mxu0 0.0
        %5465 = vmatpush1.msra.mxu0 0.0
        %5466 = vmatprep.subr.mxu0 0.0
        %5467 = vmatpush1.msra.mxu0 0.0
        %5468 = vmatprep.subr.mxu0 0.0
        %5469 = vmatpush1.msra.mxu0 0.0
        %5470 = vmatprep.subr.mxu0 0.0
        %5471 = vmatpush1.msra.mxu0 0.0
        %5472 = vmatprep.subr.mxu0 0.0
        %5473 = vmatpush1.msra.mxu0 0.0
        %5474 = vmatprep.subr.mxu0 0.0
        %5475 = vmatpush1.msra.mxu0 0.0
        %5476 = vmatprep.subr.mxu0 0.0
        %5477 = vmatpush1.msra.mxu0 0.0
        %5478 = vmatprep.subr.mxu0 0.0
        %5479 = vmatpush1.msra.mxu0 0.0
        %5480 = vmatprep.subr.mxu0 0.0
        %5481 = vmatpush1.msra.mxu0 0.0
        %5482 = vmatprep.subr.mxu0 0.0
        %5483 = vmatpush1.msra.mxu0 0.0
        %5484 = vmatprep.subr.mxu0 0.0
        %5485 = vmatpush1.msra.mxu0 0.0
        %5486 = vmatprep.subr.mxu0 0.0
        %5487 = vmatpush1.msra.mxu0 0.0
        %5488 = vmatprep.subr.mxu0 0.0
        %5489 = vmatpush1.msra.mxu0 0.0
        %5490 = vmatprep.subr.mxu0 0.0
        %5491 = vmatpush1.msra.mxu0 0.0
        %5492 = vmatprep.subr.mxu0 0.0
        %5493 = vmatpush1.msra.mxu0 0.0
        %5494 = vmatprep.subr.mxu0 0.0
        %5495 = vmatpush1.msra.mxu0 0.0
        %5496 = vmatprep.subr.mxu0 0.0
        %5497 = vmatpush1.msra.mxu0 0.0
        %5498 = vmatprep.subr.mxu0 0.0
        %5499 = vmatpush1.msra.mxu0 0.0
        %5500 = vmatprep.subr.mxu0 0.0
        %5501 = vmatpush1.msra.mxu0 0.0
        %5502 = vmatprep.subr.mxu0 0.0
        %5503 = vmatpush1.msra.mxu0 0.0
        %5504 = vmatprep.subr.mxu0 0.0
        %5505 = vmatpush1.msra.mxu0 0.0
        %5506 = vmatprep.subr.mxu0 0.0
        %5507 = vmatpush1.msra.mxu0 0.0
        %5508 = vmatprep.subr.mxu0 0.0
        %5509 = vmatpush1.msra.mxu0 0.0
        %5510 = vmatprep.subr.mxu0 0.0
        %5511 = vmatpush1.msra.mxu0 0.0
        %5512 = vmatprep.subr.mxu0 0.0
        %5513 = vmatpush1.msra.mxu0 0.0
        %5514 = vmatprep.subr.mxu0 0.0
        %5515 = vmatpush1.msra.mxu0 0.0
        %5516 = vmatprep.mubr.f32.mxu0 0.0
        %v5517 = vand.u32 %v5278, 4294901760
        %5518 = vmatmul.mubr.f32.gmra.mrb[0].mxu0 %v5517
        %v5519 = vpop.f32.mrb[0].mxu0
        %v5520 = vadd.f32 %v5374, %v5519
        %v5521 = vpop.f32.mrb[0].mxu0
        %5522 = vmatprep.mubr.f32.mxu0 0.0
        %v5523 = vand.u32 %v5281, 4294901760
        %5524 = vmatmul.mubr.f32.gmra.mrb[0].mxu0 %v5523
        %v5525 = vpop.f32.mrb[0].mxu0
        %v5526 = vadd.f32 %v5384, %v5525
        %v5527 = vpop.f32.mrb[0].mxu0
        %5528 = vmatprep.mubr.f32.mxu0 0.0
        %v5529 = vand.u32 %v5284, 4294901760
        %5530 = vmatmul.mubr.f32.gmra.mrb[0].mxu0 %v5529
        %v5531 = vpop.f32.mrb[0].mxu0
        %v5532 = vadd.f32 %v5394, %v5531
        %v5533 = vpop.f32.mrb[0].mxu0
        %5534 = vmatprep.mubr.f32.mxu0 0.0
        %v5535 = vand.u32 %v5287, 4294901760
        %5536 = vmatmul.mubr.f32.gmra.mrb[0].mxu0 %v5535
        %v5537 = vpop.f32.mrb[0].mxu0
        %v5538 = vadd.f32 %v5404, %v5537
        %v5539 = vpop.f32.mrb[0].mxu0
        %5540 = vmatprep.mubr.f32.mxu0 0.0
        %v5541 = vand.u32 %v5290, 4294901760
        %5542 = vmatmul.mubr.f32.gmra.mrb[0].mxu0 %v5541
        %v5543 = vpop.f32.mrb[0].mxu0
        %v5544 = vadd.f32 %v5414, %v5543
        %v5545 = vpop.f32.mrb[0].mxu0
        %5546 = vmatprep.mubr.f32.mxu0 0.0
        %v5547 = vand.u32 %v5293, 4294901760
        %5548 = vmatmul.mubr.f32.gmra.mrb[0].mxu0 %v5547
        %v5549 = vpop.f32.mrb[0].mxu0
        %v5550 = vadd.f32 %v5424, %v5549
        %v5551 = vpop.f32.mrb[0].mxu0
        %5552 = vmatprep.mubr.f32.mxu0 0.0
        %v5553 = vand.u32 %v5296, 4294901760
        %5554 = vmatmul.mubr.f32.gmra.mrb[0].mxu0 %v5553
        %v5555 = vpop.f32.mrb[0].mxu0
        %v5556 = vadd.f32 %v5434, %v5555
        %v5557 = vpop.f32.mrb[0].mxu0
        %5558 = vmatprep.mubr.f32.mxu0 0.0
        %v5559 = vand.u32 %v5299, 4294901760
        %5560 = vmatmul.mubr.f32.gmra.mrb[0].mxu0 %v5559
        %v5561 = vpop.f32.mrb[0].mxu0
        %v5562 = vadd.f32 %v5444, %v5561
        %v5563 = vpop.f32.mrb[0].mxu0
        %5564 = vdwg.mxu0
        %5565 = vmatprep.subr.mxu0 0.0
        %v5566 = vand.u32 %v5272, 4294901760
        %v5567 = vsub.f32 %v5272, %v5566
        %5568 = vmatpush1.msra.mxu0 %v5567
        %5569 = vmatprep.subr.mxu0 0.0
        %5570 = vmatpush1.msra.mxu0 0.0
        %5571 = vmatprep.subr.mxu0 0.0
        %5572 = vmatpush1.msra.mxu0 0.0
        %5573 = vmatprep.subr.mxu0 0.0
        %5574 = vmatpush1.msra.mxu0 0.0
        %5575 = vmatprep.subr.mxu0 0.0
        %5576 = vmatpush1.msra.mxu0 0.0
        %5577 = vmatprep.subr.mxu0 0.0
        %5578 = vmatpush1.msra.mxu0 0.0
        %5579 = vmatprep.subr.mxu0 0.0
        %5580 = vmatpush1.msra.mxu0 0.0
        %5581 = vmatprep.subr.mxu0 0.0
        %5582 = vmatpush1.msra.mxu0 0.0
        %5583 = vmatprep.subr.mxu0 0.0
        %5584 = vmatpush1.msra.mxu0 0.0
        %5585 = vmatprep.subr.mxu0 0.0
        %5586 = vmatpush1.msra.mxu0 0.0
        %5587 = vmatprep.subr.mxu0 0.0
        %5588 = vmatpush1.msra.mxu0 0.0
        %5589 = vmatprep.subr.mxu0 0.0
        %5590 = vmatpush1.msra.mxu0 0.0
        %5591 = vmatprep.subr.mxu0 0.0
        %5592 = vmatpush1.msra.mxu0 0.0
        %5593 = vmatprep.subr.mxu0 0.0
        %5594 = vmatpush1.msra.mxu0 0.0
        %5595 = vmatprep.subr.mxu0 0.0
        %5596 = vmatpush1.msra.mxu0 0.0
        %5597 = vmatprep.subr.mxu0 0.0
        %5598 = vmatpush1.msra.mxu0 0.0
        %5599 = vmatprep.subr.mxu0 0.0
        %5600 = vmatpush1.msra.mxu0 0.0
        %5601 = vmatprep.subr.mxu0 0.0
        %5602 = vmatpush1.msra.mxu0 0.0
        %5603 = vmatprep.subr.mxu0 0.0
        %5604 = vmatpush1.msra.mxu0 0.0
        %5605 = vmatprep.subr.mxu0 0.0
        %5606 = vmatpush1.msra.mxu0 0.0
        %5607 = vmatprep.subr.mxu0 0.0
        %5608 = vmatpush1.msra.mxu0 0.0
        %5609 = vmatprep.subr.mxu0 0.0
        %5610 = vmatpush1.msra.mxu0 0.0
        %5611 = vmatprep.subr.mxu0 0.0
        %5612 = vmatpush1.msra.mxu0 0.0
        %5613 = vmatprep.subr.mxu0 0.0
        %5614 = vmatpush1.msra.mxu0 0.0
        %5615 = vmatprep.subr.mxu0 0.0
        %5616 = vmatpush1.msra.mxu0 0.0
        %5617 = vmatprep.subr.mxu0 0.0
        %5618 = vmatpush1.msra.mxu0 0.0
        %5619 = vmatprep.subr.mxu0 0.0
        %5620 = vmatpush1.msra.mxu0 0.0
        %5621 = vmatprep.subr.mxu0 0.0
        %5622 = vmatpush1.msra.mxu0 0.0
        %5623 = vmatprep.subr.mxu0 0.0
        %5624 = vmatpush1.msra.mxu0 0.0
        %5625 = vmatprep.subr.mxu0 0.0
        %5626 = vmatpush1.msra.mxu0 0.0
        %5627 = vmatprep.subr.mxu0 0.0
        %5628 = vmatpush1.msra.mxu0 0.0
        %5629 = vmatprep.subr.mxu0 0.0
        %5630 = vmatpush1.msra.mxu0 0.0
        %5631 = vmatprep.mubr.f32.mxu0 0.0
        %v5632 = vand.u32 %v5278, 4294901760
        %v5633 = vsub.f32 %v5278, %v5632
        %5634 = vmatmul.mubr.f32.gmra.mrb[0].mxu0 %v5633
        %v5635 = vpop.f32.mrb[0].mxu0
        %v5636 = vadd.f32 %v5520, %v5635
        %v5637 = vpop.f32.mrb[0].mxu0
        %5638 = vmatprep.mubr.f32.mxu0 0.0
        %v5639 = vand.u32 %v5281, 4294901760
        %v5640 = vsub.f32 %v5281, %v5639
        %5641 = vmatmul.mubr.f32.gmra.mrb[0].mxu0 %v5640
        %v5642 = vpop.f32.mrb[0].mxu0
        %v5643 = vadd.f32 %v5526, %v5642
        %v5644 = vpop.f32.mrb[0].mxu0
        %5645 = vmatprep.mubr.f32.mxu0 0.0
        %v5646 = vand.u32 %v5284, 4294901760
        %v5647 = vsub.f32 %v5284, %v5646
        %5648 = vmatmul.mubr.f32.gmra.mrb[0].mxu0 %v5647
        %v5649 = vpop.f32.mrb[0].mxu0
        %v5650 = vadd.f32 %v5532, %v5649
        %v5651 = vpop.f32.mrb[0].mxu0
        %5652 = vmatprep.mubr.f32.mxu0 0.0
        %v5653 = vand.u32 %v5287, 4294901760
        %v5654 = vsub.f32 %v5287, %v5653
        %5655 = vmatmul.mubr.f32.gmra.mrb[0].mxu0 %v5654
        %v5656 = vpop.f32.mrb[0].mxu0
        %v5657 = vadd.f32 %v5538, %v5656
        %v5658 = vpop.f32.mrb[0].mxu0
        %5659 = vmatprep.mubr.f32.mxu0 0.0
        %v5660 = vand.u32 %v5290, 4294901760
        %v5661 = vsub.f32 %v5290, %v5660
        %5662 = vmatmul.mubr.f32.gmra.mrb[0].mxu0 %v5661
        %v5663 = vpop.f32.mrb[0].mxu0
        %v5664 = vadd.f32 %v5544, %v5663
        %v5665 = vpop.f32.mrb[0].mxu0
        %5666 = vmatprep.mubr.f32.mxu0 0.0
        %v5667 = vand.u32 %v5293, 4294901760
        %v5668 = vsub.f32 %v5293, %v5667
        %5669 = vmatmul.mubr.f32.gmra.mrb[0].mxu0 %v5668
        %v5670 = vpop.f32.mrb[0].mxu0
        %v5671 = vadd.f32 %v5550, %v5670
        %v5672 = vpop.f32.mrb[0].mxu0
        %5673 = vmatprep.mubr.f32.mxu0 0.0
        %v5674 = vand.u32 %v5296, 4294901760
        %v5675 = vsub.f32 %v5296, %v5674
        %5676 = vmatmul.mubr.f32.gmra.mrb[0].mxu0 %v5675
        %v5677 = vpop.f32.mrb[0].mxu0
        %v5678 = vadd.f32 %v5556, %v5677
        %v5679 = vpop.f32.mrb[0].mxu0
        %5680 = vmatprep.mubr.f32.mxu0 0.0
        %v5681 = vand.u32 %v5299, 4294901760
        %v5682 = vsub.f32 %v5299, %v5681
        %5683 = vmatmul.mubr.f32.gmra.mrb[0].mxu0 %v5682
        %v5684 = vpop.f32.mrb[0].mxu0
        %v5685 = vadd.f32 %v5562, %v5684
        %v5686 = vpop.f32.mrb[0].mxu0
        %5687 = vdwg.mxu0
        %5688 = vmatprep.subr.mxu0 0.0
        %v5689 = vand.u32 %v5272, 4294901760
        %5690 = vmatpush1.msra.mxu0 %v5689
        %5691 = vmatprep.subr.mxu0 0.0
        %5692 = vmatpush1.msra.mxu0 0.0
        %5693 = vmatprep.subr.mxu0 0.0
        %5694 = vmatpush1.msra.mxu0 0.0
        %5695 = vmatprep.subr.mxu0 0.0
        %5696 = vmatpush1.msra.mxu0 0.0
        %5697 = vmatprep.subr.mxu0 0.0
        %5698 = vmatpush1.msra.mxu0 0.0
        %5699 = vmatprep.subr.mxu0 0.0
        %5700 = vmatpush1.msra.mxu0 0.0
        %5701 = vmatprep.subr.mxu0 0.0
        %5702 = vmatpush1.msra.mxu0 0.0
        %5703 = vmatprep.subr.mxu0 0.0
        %5704 = vmatpush1.msra.mxu0 0.0
        %5705 = vmatprep.subr.mxu0 0.0
        %5706 = vmatpush1.msra.mxu0 0.0
        %5707 = vmatprep.subr.mxu0 0.0
        %5708 = vmatpush1.msra.mxu0 0.0
        %5709 = vmatprep.subr.mxu0 0.0
        %5710 = vmatpush1.msra.mxu0 0.0
        %5711 = vmatprep.subr.mxu0 0.0
        %5712 = vmatpush1.msra.mxu0 0.0
        %5713 = vmatprep.subr.mxu0 0.0
        %5714 = vmatpush1.msra.mxu0 0.0
        %5715 = vmatprep.subr.mxu0 0.0
        %5716 = vmatpush1.msra.mxu0 0.0
        %5717 = vmatprep.subr.mxu0 0.0
        %5718 = vmatpush1.msra.mxu0 0.0
        %5719 = vmatprep.subr.mxu0 0.0
        %5720 = vmatpush1.msra.mxu0 0.0
        %5721 = vmatprep.subr.mxu0 0.0
        %5722 = vmatpush1.msra.mxu0 0.0
        %5723 = vmatprep.subr.mxu0 0.0
        %5724 = vmatpush1.msra.mxu0 0.0
        %5725 = vmatprep.subr.mxu0 0.0
        %5726 = vmatpush1.msra.mxu0 0.0
        %5727 = vmatprep.subr.mxu0 0.0
        %5728 = vmatpush1.msra.mxu0 0.0
        %5729 = vmatprep.subr.mxu0 0.0
        %5730 = vmatpush1.msra.mxu0 0.0
        %5731 = vmatprep.subr.mxu0 0.0
        %5732 = vmatpush1.msra.mxu0 0.0
        %5733 = vmatprep.subr.mxu0 0.0
        %5734 = vmatpush1.msra.mxu0 0.0
        %5735 = vmatprep.subr.mxu0 0.0
        %5736 = vmatpush1.msra.mxu0 0.0
        %5737 = vmatprep.subr.mxu0 0.0
        %5738 = vmatpush1.msra.mxu0 0.0
        %5739 = vmatprep.subr.mxu0 0.0
        %5740 = vmatpush1.msra.mxu0 0.0
        %5741 = vmatprep.subr.mxu0 0.0
        %5742 = vmatpush1.msra.mxu0 0.0
        %5743 = vmatprep.subr.mxu0 0.0
        %5744 = vmatpush1.msra.mxu0 0.0
        %5745 = vmatprep.subr.mxu0 0.0
        %5746 = vmatpush1.msra.mxu0 0.0
        %5747 = vmatprep.subr.mxu0 0.0
        %5748 = vmatpush1.msra.mxu0 0.0
        %5749 = vmatprep.subr.mxu0 0.0
        %5750 = vmatpush1.msra.mxu0 0.0
        %5751 = vmatprep.subr.mxu0 0.0
        %5752 = vmatpush1.msra.mxu0 0.0
        %5753 = vmatprep.mubr.f32.mxu0 0.0
        %v5754 = vand.u32 %v5278, 4294901760
        %v5755 = vsub.f32 %v5278, %v5754
        %v5756 = vand.u32 %v5755, 4294901760
        %5757 = vmatmul.mubr.f32.gmra.mrb[0].mxu0 %v5756
        %v5758 = vpop.f32.mrb[0].mxu0
        %v5759 = vadd.f32 %v5636, %v5758
        %v5760 = vpop.f32.mrb[0].mxu0
        %5761 = vmatprep.mubr.f32.mxu0 0.0
        %v5762 = vand.u32 %v5281, 4294901760
        %v5763 = vsub.f32 %v5281, %v5762
        %v5764 = vand.u32 %v5763, 4294901760
        %5765 = vmatmul.mubr.f32.gmra.mrb[0].mxu0 %v5764
        %v5766 = vpop.f32.mrb[0].mxu0
        %v5767 = vadd.f32 %v5643, %v5766
        %v5768 = vpop.f32.mrb[0].mxu0
        %5769 = vmatprep.mubr.f32.mxu0 0.0
        %v5770 = vand.u32 %v5284, 4294901760
        %v5771 = vsub.f32 %v5284, %v5770
        %v5772 = vand.u32 %v5771, 4294901760
        %5773 = vmatmul.mubr.f32.gmra.mrb[0].mxu0 %v5772
        %v5774 = vpop.f32.mrb[0].mxu0
        %v5775 = vadd.f32 %v5650, %v5774
        %v5776 = vpop.f32.mrb[0].mxu0
        %5777 = vmatprep.mubr.f32.mxu0 0.0
        %v5778 = vand.u32 %v5287, 4294901760
        %v5779 = vsub.f32 %v5287, %v5778
        %v5780 = vand.u32 %v5779, 4294901760
        %5781 = vmatmul.mubr.f32.gmra.mrb[0].mxu0 %v5780
        %v5782 = vpop.f32.mrb[0].mxu0
        %v5783 = vadd.f32 %v5657, %v5782
        %v5784 = vpop.f32.mrb[0].mxu0
        %5785 = vmatprep.mubr.f32.mxu0 0.0
        %v5786 = vand.u32 %v5290, 4294901760
        %v5787 = vsub.f32 %v5290, %v5786
        %v5788 = vand.u32 %v5787, 4294901760
        %5789 = vmatmul.mubr.f32.gmra.mrb[0].mxu0 %v5788
        %v5790 = vpop.f32.mrb[0].mxu0
        %v5791 = vadd.f32 %v5664, %v5790
        %v5792 = vpop.f32.mrb[0].mxu0
        %5793 = vmatprep.mubr.f32.mxu0 0.0
        %v5794 = vand.u32 %v5293, 4294901760
        %v5795 = vsub.f32 %v5293, %v5794
        %v5796 = vand.u32 %v5795, 4294901760
        %5797 = vmatmul.mubr.f32.gmra.mrb[0].mxu0 %v5796
        %v5798 = vpop.f32.mrb[0].mxu0
        %v5799 = vadd.f32 %v5671, %v5798
        %v5800 = vpop.f32.mrb[0].mxu0
        %5801 = vmatprep.mubr.f32.mxu0 0.0
        %v5802 = vand.u32 %v5296, 4294901760
        %v5803 = vsub.f32 %v5296, %v5802
        %v5804 = vand.u32 %v5803, 4294901760
        %5805 = vmatmul.mubr.f32.gmra.mrb[0].mxu0 %v5804
        %v5806 = vpop.f32.mrb[0].mxu0
        %v5807 = vadd.f32 %v5678, %v5806
        %v5808 = vpop.f32.mrb[0].mxu0
        %5809 = vmatprep.mubr.f32.mxu0 0.0
        %v5810 = vand.u32 %v5299, 4294901760
        %v5811 = vsub.f32 %v5299, %v5810
        %v5812 = vand.u32 %v5811, 4294901760
        %5813 = vmatmul.mubr.f32.gmra.mrb[0].mxu0 %v5812
        %v5814 = vpop.f32.mrb[0].mxu0
        %v5815 = vadd.f32 %v5685, %v5814
        %v5816 = vpop.f32.mrb[0].mxu0
        %5817 = vdwg.mxu0
        %5818 = vmatprep.subr.mxu0 0.0
        %v5819 = vand.u32 %v5272, 4294901760
        %v5820 = vsub.f32 %v5272, %v5819
        %v5821 = vand.u32 %v5820, 4294901760
        %5822 = vmatpush1.msra.mxu0 %v5821
        %5823 = vmatprep.subr.mxu0 0.0
        %5824 = vmatpush1.msra.mxu0 0.0
        %5825 = vmatprep.subr.mxu0 0.0
        %5826 = vmatpush1.msra.mxu0 0.0
        %5827 = vmatprep.subr.mxu0 0.0
        %5828 = vmatpush1.msra.mxu0 0.0
        %5829 = vmatprep.subr.mxu0 0.0
        %5830 = vmatpush1.msra.mxu0 0.0
        %5831 = vmatprep.subr.mxu0 0.0
        %5832 = vmatpush1.msra.mxu0 0.0
        %5833 = vmatprep.subr.mxu0 0.0
        %5834 = vmatpush1.msra.mxu0 0.0
        %5835 = vmatprep.subr.mxu0 0.0
        %5836 = vmatpush1.msra.mxu0 0.0
        %5837 = vmatprep.subr.mxu0 0.0
        %5838 = vmatpush1.msra.mxu0 0.0
        %5839 = vmatprep.subr.mxu0 0.0
        %5840 = vmatpush1.msra.mxu0 0.0
        %5841 = vmatprep.subr.mxu0 0.0
        %5842 = vmatpush1.msra.mxu0 0.0
        %5843 = vmatprep.subr.mxu0 0.0
        %5844 = vmatpush1.msra.mxu0 0.0
        %5845 = vmatprep.subr.mxu0 0.0
        %5846 = vmatpush1.msra.mxu0 0.0
        %5847 = vmatprep.subr.mxu0 0.0
        %5848 = vmatpush1.msra.mxu0 0.0
        %5849 = vmatprep.subr.mxu0 0.0
        %5850 = vmatpush1.msra.mxu0 0.0
        %5851 = vmatprep.subr.mxu0 0.0
        %5852 = vmatpush1.msra.mxu0 0.0
        %5853 = vmatprep.subr.mxu0 0.0
        %5854 = vmatpush1.msra.mxu0 0.0
        %5855 = vmatprep.subr.mxu0 0.0
        %5856 = vmatpush1.msra.mxu0 0.0
        %5857 = vmatprep.subr.mxu0 0.0
        %5858 = vmatpush1.msra.mxu0 0.0
        %5859 = vmatprep.subr.mxu0 0.0
        %5860 = vmatpush1.msra.mxu0 0.0
        %5861 = vmatprep.subr.mxu0 0.0
        %5862 = vmatpush1.msra.mxu0 0.0
        %5863 = vmatprep.subr.mxu0 0.0
        %5864 = vmatpush1.msra.mxu0 0.0
        %5865 = vmatprep.subr.mxu0 0.0
        %5866 = vmatpush1.msra.mxu0 0.0
        %5867 = vmatprep.subr.mxu0 0.0
        %5868 = vmatpush1.msra.mxu0 0.0
        %5869 = vmatprep.subr.mxu0 0.0
        %5870 = vmatpush1.msra.mxu0 0.0
        %5871 = vmatprep.subr.mxu0 0.0
        %5872 = vmatpush1.msra.mxu0 0.0
        %5873 = vmatprep.subr.mxu0 0.0
        %5874 = vmatpush1.msra.mxu0 0.0
        %5875 = vmatprep.subr.mxu0 0.0
        %5876 = vmatpush1.msra.mxu0 0.0
        %5877 = vmatprep.subr.mxu0 0.0
        %5878 = vmatpush1.msra.mxu0 0.0
        %5879 = vmatprep.subr.mxu0 0.0
        %5880 = vmatpush1.msra.mxu0 0.0
        %5881 = vmatprep.subr.mxu0 0.0
        %5882 = vmatpush1.msra.mxu0 0.0
        %5883 = vmatprep.subr.mxu0 0.0
        %5884 = vmatpush1.msra.mxu0 0.0
        %5885 = vmatprep.mubr.f32.mxu0 0.0
        %v5886 = vand.u32 %v5278, 4294901760
        %5887 = vmatmul.mubr.f32.gmra.mrb[0].mxu0 %v5886
        %v5888 = vpop.f32.mrb[0].mxu0
        %v5889 = vadd.f32 %v5759, %v5888
        %v5890 = vpop.f32.mrb[0].mxu0
        %5891 = vmatprep.mubr.f32.mxu0 0.0
        %v5892 = vand.u32 %v5281, 4294901760
        %5893 = vmatmul.mubr.f32.gmra.mrb[0].mxu0 %v5892
        %v5894 = vpop.f32.mrb[0].mxu0
        %v5895 = vadd.f32 %v5767, %v5894
        %v5896 = vpop.f32.mrb[0].mxu0
        %5897 = vmatprep.mubr.f32.mxu0 0.0
        %v5898 = vand.u32 %v5284, 4294901760
        %5899 = vmatmul.mubr.f32.gmra.mrb[0].mxu0 %v5898
        %v5900 = vpop.f32.mrb[0].mxu0
        %v5901 = vadd.f32 %v5775, %v5900
        %v5902 = vpop.f32.mrb[0].mxu0
        %5903 = vmatprep.mubr.f32.mxu0 0.0
        %v5904 = vand.u32 %v5287, 4294901760
        %5905 = vmatmul.mubr.f32.gmra.mrb[0].mxu0 %v5904
        %v5906 = vpop.f32.mrb[0].mxu0
        %v5907 = vadd.f32 %v5783, %v5906
        %v5908 = vpop.f32.mrb[0].mxu0
        %5909 = vmatprep.mubr.f32.mxu0 0.0
        %v5910 = vand.u32 %v5290, 4294901760
        %5911 = vmatmul.mubr.f32.gmra.mrb[0].mxu0 %v5910
        %v5912 = vpop.f32.mrb[0].mxu0
        %v5913 = vadd.f32 %v5791, %v5912
        %v5914 = vpop.f32.mrb[0].mxu0
        %5915 = vmatprep.mubr.f32.mxu0 0.0
        %v5916 = vand.u32 %v5293, 4294901760
        %5917 = vmatmul.mubr.f32.gmra.mrb[0].mxu0 %v5916
        %v5918 = vpop.f32.mrb[0].mxu0
        %v5919 = vadd.f32 %v5799, %v5918
        %v5920 = vpop.f32.mrb[0].mxu0
        %5921 = vmatprep.mubr.f32.mxu0 0.0
        %v5922 = vand.u32 %v5296, 4294901760
        %5923 = vmatmul.mubr.f32.gmra.mrb[0].mxu0 %v5922
        %v5924 = vpop.f32.mrb[0].mxu0
        %v5925 = vadd.f32 %v5807, %v5924
        %v5926 = vpop.f32.mrb[0].mxu0
        %5927 = vmatprep.mubr.f32.mxu0 0.0
        %v5928 = vand.u32 %v5299, 4294901760
        %5929 = vmatmul.mubr.f32.gmra.mrb[0].mxu0 %v5928
        %v5930 = vpop.f32.mrb[0].mxu0
        %v5931 = vadd.f32 %v5815, %v5930
        %v5932 = vpop.f32.mrb[0].mxu0
        %5933 = vdwg.mxu0
        %5934 = vmatprep.subr.mxu0 0.0
        %v5935 = vand.u32 %v5272, 4294901760
        %5936 = vmatpush1.msra.mxu0 %v5935
        %5937 = vmatprep.subr.mxu0 0.0
        %5938 = vmatpush1.msra.mxu0 0.0
        %5939 = vmatprep.subr.mxu0 0.0
        %5940 = vmatpush1.msra.mxu0 0.0
        %5941 = vmatprep.subr.mxu0 0.0
        %5942 = vmatpush1.msra.mxu0 0.0
        %5943 = vmatprep.subr.mxu0 0.0
        %5944 = vmatpush1.msra.mxu0 0.0
        %5945 = vmatprep.subr.mxu0 0.0
        %5946 = vmatpush1.msra.mxu0 0.0
        %5947 = vmatprep.subr.mxu0 0.0
        %5948 = vmatpush1.msra.mxu0 0.0
        %5949 = vmatprep.subr.mxu0 0.0
        %5950 = vmatpush1.msra.mxu0 0.0
        %5951 = vmatprep.subr.mxu0 0.0
        %5952 = vmatpush1.msra.mxu0 0.0
        %5953 = vmatprep.subr.mxu0 0.0
        %5954 = vmatpush1.msra.mxu0 0.0
        %5955 = vmatprep.subr.mxu0 0.0
        %5956 = vmatpush1.msra.mxu0 0.0
        %5957 = vmatprep.subr.mxu0 0.0
        %5958 = vmatpush1.msra.mxu0 0.0
        %5959 = vmatprep.subr.mxu0 0.0
        %5960 = vmatpush1.msra.mxu0 0.0
        %5961 = vmatprep.subr.mxu0 0.0
        %5962 = vmatpush1.msra.mxu0 0.0
        %5963 = vmatprep.subr.mxu0 0.0
        %5964 = vmatpush1.msra.mxu0 0.0
        %5965 = vmatprep.subr.mxu0 0.0
        %5966 = vmatpush1.msra.mxu0 0.0
        %5967 = vmatprep.subr.mxu0 0.0
        %5968 = vmatpush1.msra.mxu0 0.0
        %5969 = vmatprep.subr.mxu0 0.0
        %5970 = vmatpush1.msra.mxu0 0.0
        %5971 = vmatprep.subr.mxu0 0.0
        %5972 = vmatpush1.msra.mxu0 0.0
        %5973 = vmatprep.subr.mxu0 0.0
        %5974 = vmatpush1.msra.mxu0 0.0
        %5975 = vmatprep.subr.mxu0 0.0
        %5976 = vmatpush1.msra.mxu0 0.0
        %5977 = vmatprep.subr.mxu0 0.0
        %5978 = vmatpush1.msra.mxu0 0.0
        %5979 = vmatprep.subr.mxu0 0.0
        %5980 = vmatpush1.msra.mxu0 0.0
        %5981 = vmatprep.subr.mxu0 0.0
        %5982 = vmatpush1.msra.mxu0 0.0
        %5983 = vmatprep.subr.mxu0 0.0
        %5984 = vmatpush1.msra.mxu0 0.0
        %5985 = vmatprep.subr.mxu0 0.0
        %5986 = vmatpush1.msra.mxu0 0.0
        %5987 = vmatprep.subr.mxu0 0.0
        %5988 = vmatpush1.msra.mxu0 0.0
        %5989 = vmatprep.subr.mxu0 0.0
        %5990 = vmatpush1.msra.mxu0 0.0
        %5991 = vmatprep.subr.mxu0 0.0
        %5992 = vmatpush1.msra.mxu0 0.0
        %5993 = vmatprep.subr.mxu0 0.0
        %5994 = vmatpush1.msra.mxu0 0.0
        %5995 = vmatprep.subr.mxu0 0.0
        %5996 = vmatpush1.msra.mxu0 0.0
        %5997 = vmatprep.subr.mxu0 0.0
        %5998 = vmatpush1.msra.mxu0 0.0
        %5999 = vmatprep.mubr.f32.mxu0 0.0
        %v6000 = vand.u32 %v5278, 4294901760
        %6001 = vmatmul.mubr.f32.gmra.mrb[0].mxu0 %v6000
        %v6002 = vpop.f32.mrb[0].mxu0
        %v6003 = vadd.f32 %v5889, %v6002
        %v6004 = vpop.f32.mrb[0].mxu0
        %6005 = vmatprep.mubr.f32.mxu0 0.0
        %v6006 = vand.u32 %v5281, 4294901760
        %6007 = vmatmul.mubr.f32.gmra.mrb[0].mxu0 %v6006
        %v6008 = vpop.f32.mrb[0].mxu0
        %v6009 = vadd.f32 %v5895, %v6008
        %v6010 = vpop.f32.mrb[0].mxu0
        %6011 = vmatprep.mubr.f32.mxu0 0.0
        %v6012 = vand.u32 %v5284, 4294901760
        %6013 = vmatmul.mubr.f32.gmra.mrb[0].mxu0 %v6012
        %v6014 = vpop.f32.mrb[0].mxu0
        %v6015 = vadd.f32 %v5901, %v6014
        %v6016 = vpop.f32.mrb[0].mxu0
        %6017 = vmatprep.mubr.f32.mxu0 0.0
        %v6018 = vand.u32 %v5287, 4294901760
        %6019 = vmatmul.mubr.f32.gmra.mrb[0].mxu0 %v6018
        %v6020 = vpop.f32.mrb[0].mxu0
        %v6021 = vadd.f32 %v5907, %v6020
        %v6022 = vpop.f32.mrb[0].mxu0
        %6023 = vmatprep.mubr.f32.mxu0 0.0
        %v6024 = vand.u32 %v5290, 4294901760
        %6025 = vmatmul.mubr.f32.gmra.mrb[0].mxu0 %v6024
        %v6026 = vpop.f32.mrb[0].mxu0
        %v6027 = vadd.f32 %v5913, %v6026
        %v6028 = vpop.f32.mrb[0].mxu0
        %6029 = vmatprep.mubr.f32.mxu0 0.0
        %v6030 = vand.u32 %v5293, 4294901760
        %6031 = vmatmul.mubr.f32.gmra.mrb[0].mxu0 %v6030
        %v6032 = vpop.f32.mrb[0].mxu0
        %v6033 = vadd.f32 %v5919, %v6032
        %v6034 = vpop.f32.mrb[0].mxu0
        %6035 = vmatprep.mubr.f32.mxu0 0.0
        %v6036 = vand.u32 %v5296, 4294901760
        %6037 = vmatmul.mubr.f32.gmra.mrb[0].mxu0 %v6036
        %v6038 = vpop.f32.mrb[0].mxu0
        %v6039 = vadd.f32 %v5925, %v6038
        %v6040 = vpop.f32.mrb[0].mxu0
        %6041 = vmatprep.mubr.f32.mxu0 0.0
        %v6042 = vand.u32 %v5299, 4294901760
        %6043 = vmatmul.mubr.f32.gmra.mrb[0].mxu0 %v6042
        %v6044 = vpop.f32.mrb[0].mxu0
        %v6045 = vadd.f32 %v5931, %v6044
        %v6046 = vpop.f32.mrb[0].mxu0
        %6047 = vdwg.mxu0
        %v6048 = vpack.c.bf16 %v5142, %v5136
        %v6049 = vpack.c.bf16 %v5154, %v5148
        %v6050 = vpack.c.bf16 %v5166, %v5160
        %v6051 = vpack.c.bf16 %v5178, %v5172
        %v6068 = vunpack.c.l.b16 %v1929
        %v6069 = vunpack.c.l.b16 %v1930
        %v6070 = vunpack.c.l.b16 %v1931
        %v6071 = vunpack.c.l.b16 %v1932
        %v6072 = vunpack.c.l.b16 %v1933
        %v6073 = vunpack.c.l.b16 %v1934
        %v6074 = vunpack.c.l.b16 %v1935
        %v6075 = vunpack.c.l.b16 %v1936
        %v6076 = vunpack.c.l.b16 %v1937
        %v6077 = vunpack.c.l.b16 %v1938
        %v6078 = vunpack.c.l.b16 %v1939
        %v6079 = vunpack.c.l.b16 %v1940
        %v6080 = vunpack.c.l.b16 %v1941
        %v6081 = vunpack.c.l.b16 %v1942
        %v6082 = vunpack.c.l.b16 %v1943
        %v6083 = vunpack.c.l.b16 %v1944
        %v6084 = vpack.c.b16 %v6069, %v6068
        %v6085 = vpack.c.b16 %v6071, %v6070
        %v6086 = vpack.c.b16 %v6073, %v6072
        %v6087 = vpack.c.b16 %v6075, %v6074
        %v6088 = vpack.c.b16 %v6077, %v6076
        %v6089 = vpack.c.b16 %v6079, %v6078
        %v6090 = vpack.c.b16 %v6081, %v6080
        %v6091 = vpack.c.b16 %v6083, %v6082
        %6100 = vmatprep.subr.bf16.mxu0 0
        %6101 = vmatpush1.bf16.msra.mxu0 %v6084
        %6102 = vmatprep.subr.bf16.mxu0 0
        %6103 = vmatpush1.bf16.msra.mxu0 %v6085
        %6104 = vmatprep.subr.bf16.mxu0 0
        %6105 = vmatpush1.bf16.msra.mxu0 %v6086
        %6106 = vmatprep.subr.bf16.mxu0 0
        %6107 = vmatpush1.bf16.msra.mxu0 %v6087
        %6108 = vmatprep.subr.bf16.mxu0 0
        %6109 = vmatpush1.bf16.msra.mxu0 %v6088
        %6110 = vmatprep.subr.bf16.mxu0 0
        %6111 = vmatpush1.bf16.msra.mxu0 %v6089
        %6112 = vmatprep.subr.bf16.mxu0 0
        %6113 = vmatpush1.bf16.msra.mxu0 %v6090
        %6114 = vmatprep.subr.bf16.mxu0 0
        %6115 = vmatpush1.bf16.msra.mxu0 %v6091
        %6116 = vmatprep.subr.bf16.mxu0 0
        %6117 = vmatpush1.bf16.msra.mxu0 0
        %6118 = vmatprep.subr.bf16.mxu0 0
        %6119 = vmatpush1.bf16.msra.mxu0 0
        %6120 = vmatprep.subr.bf16.mxu0 0
        %6121 = vmatpush1.bf16.msra.mxu0 0
        %6122 = vmatprep.subr.bf16.mxu0 0
        %6123 = vmatpush1.bf16.msra.mxu0 0
        %6124 = vmatprep.subr.bf16.mxu0 0
        %6125 = vmatpush1.bf16.msra.mxu0 0
        %6126 = vmatprep.subr.bf16.mxu0 0
        %6127 = vmatpush1.bf16.msra.mxu0 0
        %6128 = vmatprep.subr.bf16.mxu0 0
        %6129 = vmatpush1.bf16.msra.mxu0 0
        %6130 = vmatprep.subr.bf16.mxu0 0
        %6131 = vmatpush1.bf16.msra.mxu0 0
        %6132 = vmatprep.mubr.bf16.mxu0 0
        %6133 = vmatmul.mubr.bf16.gmra.mrb[0].mxu0 %v6048
        %v6134 = vpop.f32.mrb[0].mxu0
        %v6135 = vadd.f32 0.0, %v6134
        %v6136 = vpop.f32.mrb[0].mxu0
        %v6137 = vpop.f32.mrb[0].mxu0
        %v6138 = vadd.f32 0.0, %v6137
        %v6139 = vpop.f32.mrb[0].mxu0
        %6140 = vmatprep.mubr.bf16.mxu0 0
        %6141 = vmatmul.mubr.bf16.gmra.mrb[0].mxu0 %v6049
        %v6142 = vpop.f32.mrb[0].mxu0
        %v6143 = vadd.f32 0.0, %v6142
        %v6144 = vpop.f32.mrb[0].mxu0
        %v6145 = vpop.f32.mrb[0].mxu0
        %v6146 = vadd.f32 0.0, %v6145
        %v6147 = vpop.f32.mrb[0].mxu0
        %6148 = vmatprep.mubr.bf16.mxu0 0
        %6149 = vmatmul.mubr.bf16.gmra.mrb[0].mxu0 %v6050
        %v6150 = vpop.f32.mrb[0].mxu0
        %v6151 = vadd.f32 0.0, %v6150
        %v6152 = vpop.f32.mrb[0].mxu0
        %v6153 = vpop.f32.mrb[0].mxu0
        %v6154 = vadd.f32 0.0, %v6153
        %v6155 = vpop.f32.mrb[0].mxu0
        %6156 = vmatprep.mubr.bf16.mxu0 0
        %6157 = vmatmul.mubr.bf16.gmra.mrb[0].mxu0 %v6051
        %v6158 = vpop.f32.mrb[0].mxu0
        %v6159 = vadd.f32 0.0, %v6158
        %v6160 = vpop.f32.mrb[0].mxu0
        %v6161 = vpop.f32.mrb[0].mxu0
        %v6162 = vadd.f32 0.0, %v6161
        %v6163 = vpop.f32.mrb[0].mxu0
        %6164 = vdwg.mxu0
        %v6181 = vunpack.c.l.b16 %v1911
        %v6182 = vunpack.c.l.b16 %v1912
        %v6183 = vunpack.c.l.b16 %v1913
        %v6184 = vunpack.c.l.b16 %v1914
        %v6185 = vunpack.c.l.b16 %v1915
        %v6186 = vunpack.c.l.b16 %v1916
        %v6187 = vunpack.c.l.b16 %v1917
        %v6188 = vunpack.c.l.b16 %v1918
        %v6189 = vunpack.c.l.b16 %v1919
        %v6190 = vunpack.c.l.b16 %v1920
        %v6191 = vunpack.c.l.b16 %v1921
        %v6192 = vunpack.c.l.b16 %v1922
        %v6193 = vunpack.c.l.b16 %v1923
        %v6194 = vunpack.c.l.b16 %v1924
        %v6195 = vunpack.c.l.b16 %v1925
        %v6196 = vunpack.c.l.b16 %v1926
        %v6197 = vpack.c.b16 %v6182, %v6181
        %v6198 = vpack.c.b16 %v6184, %v6183
        %v6199 = vpack.c.b16 %v6186, %v6185
        %v6200 = vpack.c.b16 %v6188, %v6187
        %v6201 = vpack.c.b16 %v6190, %v6189
        %v6202 = vpack.c.b16 %v6192, %v6191
        %v6203 = vpack.c.b16 %v6194, %v6193
        %v6204 = vpack.c.b16 %v6196, %v6195
        %6213 = vmatprep.subr.bf16.mxu0 0
        %6214 = vmatpush1.bf16.msra.mxu0 %v6197
        %6215 = vmatprep.subr.bf16.mxu0 0
        %6216 = vmatpush1.bf16.msra.mxu0 %v6198
        %6217 = vmatprep.subr.bf16.mxu0 0
        %6218 = vmatpush1.bf16.msra.mxu0 %v6199
        %6219 = vmatprep.subr.bf16.mxu0 0
        %6220 = vmatpush1.bf16.msra.mxu0 %v6200
        %6221 = vmatprep.subr.bf16.mxu0 0
        %6222 = vmatpush1.bf16.msra.mxu0 %v6201
        %6223 = vmatprep.subr.bf16.mxu0 0
        %6224 = vmatpush1.bf16.msra.mxu0 %v6202
        %6225 = vmatprep.subr.bf16.mxu0 0
        %6226 = vmatpush1.bf16.msra.mxu0 %v6203
        %6227 = vmatprep.subr.bf16.mxu0 0
        %6228 = vmatpush1.bf16.msra.mxu0 %v6204
        %6229 = vmatprep.subr.bf16.mxu0 0
        %6230 = vmatpush1.bf16.msra.mxu0 0
        %6231 = vmatprep.subr.bf16.mxu0 0
        %6232 = vmatpush1.bf16.msra.mxu0 0
        %6233 = vmatprep.subr.bf16.mxu0 0
        %6234 = vmatpush1.bf16.msra.mxu0 0
        %6235 = vmatprep.subr.bf16.mxu0 0
        %6236 = vmatpush1.bf16.msra.mxu0 0
        %6237 = vmatprep.subr.bf16.mxu0 0
        %6238 = vmatpush1.bf16.msra.mxu0 0
        %6239 = vmatprep.subr.bf16.mxu0 0
        %6240 = vmatpush1.bf16.msra.mxu0 0
        %6241 = vmatprep.subr.bf16.mxu0 0
        %6242 = vmatpush1.bf16.msra.mxu0 0
        %6243 = vmatprep.subr.bf16.mxu0 0
        %6244 = vmatpush1.bf16.msra.mxu0 0
        %6245 = vmatprep.mubr.bf16.mxu0 0
        %6246 = vmatmul.mubr.bf16.gmra.mrb[0].mxu0 %v2822
        %v6247 = vpop.f32.mrb[0].mxu0
        %v6248 = vadd.f32 %v6135, %v6247
        %v6249 = vpop.f32.mrb[0].mxu0
        %v6250 = vpop.f32.mrb[0].mxu0
        %v6251 = vadd.f32 %v6138, %v6250
        %v6252 = vpop.f32.mrb[0].mxu0
        %6253 = vmatprep.mubr.bf16.mxu0 0
        %6254 = vmatmul.mubr.bf16.gmra.mrb[0].mxu0 %v2823
        %v6255 = vpop.f32.mrb[0].mxu0
        %v6256 = vadd.f32 %v6143, %v6255
        %v6257 = vpop.f32.mrb[0].mxu0
        %v6258 = vpop.f32.mrb[0].mxu0
        %v6259 = vadd.f32 %v6146, %v6258
        %v6260 = vpop.f32.mrb[0].mxu0
        %6261 = vmatprep.mubr.bf16.mxu0 0
        %6262 = vmatmul.mubr.bf16.gmra.mrb[0].mxu0 %v2824
        %v6263 = vpop.f32.mrb[0].mxu0
        %v6264 = vadd.f32 %v6151, %v6263
        %v6265 = vpop.f32.mrb[0].mxu0
        %v6266 = vpop.f32.mrb[0].mxu0
        %v6267 = vadd.f32 %v6154, %v6266
        %v6268 = vpop.f32.mrb[0].mxu0
        %6269 = vmatprep.mubr.bf16.mxu0 0
        %6270 = vmatmul.mubr.bf16.gmra.mrb[0].mxu0 %v2825
        %v6271 = vpop.f32.mrb[0].mxu0
        %v6272 = vadd.f32 %v6159, %v6271
        %v6273 = vpop.f32.mrb[0].mxu0
        %v6274 = vpop.f32.mrb[0].mxu0
        %v6275 = vadd.f32 %v6162, %v6274
        %v6276 = vpop.f32.mrb[0].mxu0
        %6277 = vdwg.mxu0
        %v6278 = vadd.f32 %v6248, %v6003
        %v6279 = vadd.f32 %v6251, %v6009
        %v6280 = vadd.f32 %v6256, %v6015
        %v6281 = vadd.f32 %v6259, %v6021
        %v6282 = vadd.f32 %v6264, %v6027
        %v6283 = vadd.f32 %v6267, %v6033
        %v6284 = vadd.f32 %v6272, %v6039
        %v6285 = vadd.f32 %v6275, %v6045
        %v6287 = vlaneseq
        %v6288 = vshrl.u32 %v6287, 7
        %v6289 = vsub.s32 0, %v6288
        %v6290 = vrot.slane %v1964, %v6289
        %v6292 = vadd.f32 %v6278, %v6290
        %v6293 = vadd.f32 %v6279, %v6290
        %v6294 = vadd.f32 %v6280, %v6290
        %v6295 = vadd.f32 %v6281, %v6290
        %v6296 = vadd.f32 %v6282, %v6290
        %v6297 = vadd.f32 %v6283, %v6290
        %v6298 = vadd.f32 %v6284, %v6290
        %v6299 = vadd.f32 %v6285, %v6290
        %vm6300 = vcmp.gt.f32.partialorder %v6292, 0.0
        %vm6301 = vcmp.gt.f32.partialorder %v6293, 0.0
        %vm6302 = vcmp.gt.f32.partialorder %v6294, 0.0
        %vm6303 = vcmp.gt.f32.partialorder %v6295, 0.0
        %vm6304 = vcmp.gt.f32.partialorder %v6296, 0.0
        %vm6305 = vcmp.gt.f32.partialorder %v6297, 0.0
        %vm6306 = vcmp.gt.f32.partialorder %v6298, 0.0
        %vm6307 = vcmp.gt.f32.partialorder %v6299, 0.0
        %v6308 = vmul.f32 %v6292, 0.01
        %v6309 = vmul.f32 %v6293, 0.01
        %v6310 = vmul.f32 %v6294, 0.01
        %v6311 = vmul.f32 %v6295, 0.01
        %v6312 = vmul.f32 %v6296, 0.01
        %v6313 = vmul.f32 %v6297, 0.01
        %v6314 = vmul.f32 %v6298, 0.01
        %v6315 = vmul.f32 %v6299, 0.01
        %v6316 = vsel %vm6300, %v6292, %v6308
        %v6317 = vsel %vm6301, %v6293, %v6309
        %v6318 = vsel %vm6302, %v6294, %v6310
        %v6319 = vsel %vm6303, %v6295, %v6311
        %v6320 = vsel %vm6304, %v6296, %v6312
        %v6321 = vsel %vm6305, %v6297, %v6313
        %v6322 = vsel %vm6306, %v6298, %v6314
        %v6323 = vsel %vm6307, %v6299, %v6315
        %v6324 = vld [vmem:[%s1445] sm:$0xff]
        %v6326 = vsel %vm2854, %v6324, 0
        %6328 = vmatprep.subr.mxu0 0.0
        %v6329 = vand.u32 %v6316, 4294901760
        %6330 = vmatpush1.msra.mxu0 %v6329
        %6331 = vmatprep.subr.mxu0 0.0
        %v6332 = vand.u32 %v6317, 4294901760
        %6333 = vmatpush1.msra.mxu0 %v6332
        %6334 = vmatprep.subr.mxu0 0.0
        %v6335 = vand.u32 %v6318, 4294901760
        %6336 = vmatpush1.msra.mxu0 %v6335
        %6337 = vmatprep.subr.mxu0 0.0
        %v6338 = vand.u32 %v6319, 4294901760
        %6339 = vmatpush1.msra.mxu0 %v6338
        %6340 = vmatprep.subr.mxu0 0.0
        %v6341 = vand.u32 %v6320, 4294901760
        %6342 = vmatpush1.msra.mxu0 %v6341
        %6343 = vmatprep.subr.mxu0 0.0
        %v6344 = vand.u32 %v6321, 4294901760
        %6345 = vmatpush1.msra.mxu0 %v6344
        %6346 = vmatprep.subr.mxu0 0.0
        %v6347 = vand.u32 %v6322, 4294901760
        %6348 = vmatpush1.msra.mxu0 %v6347
        %6349 = vmatprep.subr.mxu0 0.0
        %v6350 = vand.u32 %v6323, 4294901760
        %6351 = vmatpush1.msra.mxu0 %v6350
        %6352 = vmatprep.subr.mxu0 0.0
        %6353 = vmatpush1.msra.mxu0 0.0
        %6354 = vmatprep.subr.mxu0 0.0
        %6355 = vmatpush1.msra.mxu0 0.0
        %6356 = vmatprep.subr.mxu0 0.0
        %6357 = vmatpush1.msra.mxu0 0.0
        %6358 = vmatprep.subr.mxu0 0.0
        %6359 = vmatpush1.msra.mxu0 0.0
        %6360 = vmatprep.subr.mxu0 0.0
        %6361 = vmatpush1.msra.mxu0 0.0
        %6362 = vmatprep.subr.mxu0 0.0
        %6363 = vmatpush1.msra.mxu0 0.0
        %6364 = vmatprep.subr.mxu0 0.0
        %6365 = vmatpush1.msra.mxu0 0.0
        %6366 = vmatprep.subr.mxu0 0.0
        %6367 = vmatpush1.msra.mxu0 0.0
        %6368 = vmatprep.subr.mxu0 0.0
        %6369 = vmatpush1.msra.mxu0 0.0
        %6370 = vmatprep.subr.mxu0 0.0
        %6371 = vmatpush1.msra.mxu0 0.0
        %6372 = vmatprep.subr.mxu0 0.0
        %6373 = vmatpush1.msra.mxu0 0.0
        %6374 = vmatprep.subr.mxu0 0.0
        %6375 = vmatpush1.msra.mxu0 0.0
        %6376 = vmatprep.subr.mxu0 0.0
        %6377 = vmatpush1.msra.mxu0 0.0
        %6378 = vmatprep.subr.mxu0 0.0
        %6379 = vmatpush1.msra.mxu0 0.0
        %6380 = vmatprep.subr.mxu0 0.0
        %6381 = vmatpush1.msra.mxu0 0.0
        %6382 = vmatprep.subr.mxu0 0.0
        %6383 = vmatpush1.msra.mxu0 0.0
        %6384 = vmatprep.subr.mxu0 0.0
        %6385 = vmatpush1.msra.mxu0 0.0
        %6386 = vmatprep.subr.mxu0 0.0
        %6387 = vmatpush1.msra.mxu0 0.0
        %6388 = vmatprep.subr.mxu0 0.0
        %6389 = vmatpush1.msra.mxu0 0.0
        %6390 = vmatprep.subr.mxu0 0.0
        %6391 = vmatpush1.msra.mxu0 0.0
        %6392 = vmatprep.subr.mxu0 0.0
        %6393 = vmatpush1.msra.mxu0 0.0
        %6394 = vmatprep.subr.mxu0 0.0
        %6395 = vmatpush1.msra.mxu0 0.0
        %6396 = vmatprep.subr.mxu0 0.0
        %6397 = vmatpush1.msra.mxu0 0.0
        %6398 = vmatprep.subr.mxu0 0.0
        %6399 = vmatpush1.msra.mxu0 0.0
        %6400 = vmatprep.mubr.f32.mxu0 0.0
        %v6401 = vand.u32 %v6326, 4294901760
        %v6402 = vsub.f32 %v6326, %v6401
        %v6403 = vand.u32 %v6402, 4294901760
        %v6404 = vsub.f32 %v6402, %v6403
        %v6405 = vand.u32 %v6404, 4294901760
        %6406 = vmatmul.mubr.f32.gmra.mrb[0].mxu0 %v6405
        %v6407 = vpop.f32.mrb[0].mxu0
        %v6408 = vadd.f32 0.0, %v6407
        %v6409 = vpop.f32.mrb[0].mxu0
        %6410 = vdwg.mxu0
        %6411 = vmatprep.subr.mxu0 0.0
        %v6412 = vand.u32 %v6316, 4294901760
        %v6413 = vsub.f32 %v6316, %v6412
        %v6414 = vand.u32 %v6413, 4294901760
        %v6415 = vsub.f32 %v6413, %v6414
        %v6416 = vand.u32 %v6415, 4294901760
        %6417 = vmatpush1.msra.mxu0 %v6416
        %6418 = vmatprep.subr.mxu0 0.0
        %v6419 = vand.u32 %v6317, 4294901760
        %v6420 = vsub.f32 %v6317, %v6419
        %v6421 = vand.u32 %v6420, 4294901760
        %v6422 = vsub.f32 %v6420, %v6421
        %v6423 = vand.u32 %v6422, 4294901760
        %6424 = vmatpush1.msra.mxu0 %v6423
        %6425 = vmatprep.subr.mxu0 0.0
        %v6426 = vand.u32 %v6318, 4294901760
        %v6427 = vsub.f32 %v6318, %v6426
        %v6428 = vand.u32 %v6427, 4294901760
        %v6429 = vsub.f32 %v6427, %v6428
        %v6430 = vand.u32 %v6429, 4294901760
        %6431 = vmatpush1.msra.mxu0 %v6430
        %6432 = vmatprep.subr.mxu0 0.0
        %v6433 = vand.u32 %v6319, 4294901760
        %v6434 = vsub.f32 %v6319, %v6433
        %v6435 = vand.u32 %v6434, 4294901760
        %v6436 = vsub.f32 %v6434, %v6435
        %v6437 = vand.u32 %v6436, 4294901760
        %6438 = vmatpush1.msra.mxu0 %v6437
        %6439 = vmatprep.subr.mxu0 0.0
        %v6440 = vand.u32 %v6320, 4294901760
        %v6441 = vsub.f32 %v6320, %v6440
        %v6442 = vand.u32 %v6441, 4294901760
        %v6443 = vsub.f32 %v6441, %v6442
        %v6444 = vand.u32 %v6443, 4294901760
        %6445 = vmatpush1.msra.mxu0 %v6444
        %6446 = vmatprep.subr.mxu0 0.0
        %v6447 = vand.u32 %v6321, 4294901760
        %v6448 = vsub.f32 %v6321, %v6447
        %v6449 = vand.u32 %v6448, 4294901760
        %v6450 = vsub.f32 %v6448, %v6449
        %v6451 = vand.u32 %v6450, 4294901760
        %6452 = vmatpush1.msra.mxu0 %v6451
        %6453 = vmatprep.subr.mxu0 0.0
        %v6454 = vand.u32 %v6322, 4294901760
        %v6455 = vsub.f32 %v6322, %v6454
        %v6456 = vand.u32 %v6455, 4294901760
        %v6457 = vsub.f32 %v6455, %v6456
        %v6458 = vand.u32 %v6457, 4294901760
        %6459 = vmatpush1.msra.mxu0 %v6458
        %6460 = vmatprep.subr.mxu0 0.0
        %v6461 = vand.u32 %v6323, 4294901760
        %v6462 = vsub.f32 %v6323, %v6461
        %v6463 = vand.u32 %v6462, 4294901760
        %v6464 = vsub.f32 %v6462, %v6463
        %v6465 = vand.u32 %v6464, 4294901760
        %6466 = vmatpush1.msra.mxu0 %v6465
        %6467 = vmatprep.subr.mxu0 0.0
        %6468 = vmatpush1.msra.mxu0 0.0
        %6469 = vmatprep.subr.mxu0 0.0
        %6470 = vmatpush1.msra.mxu0 0.0
        %6471 = vmatprep.subr.mxu0 0.0
        %6472 = vmatpush1.msra.mxu0 0.0
        %6473 = vmatprep.subr.mxu0 0.0
        %6474 = vmatpush1.msra.mxu0 0.0
        %6475 = vmatprep.subr.mxu0 0.0
        %6476 = vmatpush1.msra.mxu0 0.0
        %6477 = vmatprep.subr.mxu0 0.0
        %6478 = vmatpush1.msra.mxu0 0.0
        %6479 = vmatprep.subr.mxu0 0.0
        %6480 = vmatpush1.msra.mxu0 0.0
        %6481 = vmatprep.subr.mxu0 0.0
        %6482 = vmatpush1.msra.mxu0 0.0
        %6483 = vmatprep.subr.mxu0 0.0
        %6484 = vmatpush1.msra.mxu0 0.0
        %6485 = vmatprep.subr.mxu0 0.0
        %6486 = vmatpush1.msra.mxu0 0.0
        %6487 = vmatprep.subr.mxu0 0.0
        %6488 = vmatpush1.msra.mxu0 0.0
        %6489 = vmatprep.subr.mxu0 0.0
        %6490 = vmatpush1.msra.mxu0 0.0
        %6491 = vmatprep.subr.mxu0 0.0
        %6492 = vmatpush1.msra.mxu0 0.0
        %6493 = vmatprep.subr.mxu0 0.0
        %6494 = vmatpush1.msra.mxu0 0.0
        %6495 = vmatprep.subr.mxu0 0.0
        %6496 = vmatpush1.msra.mxu0 0.0
        %6497 = vmatprep.subr.mxu0 0.0
        %6498 = vmatpush1.msra.mxu0 0.0
        %6499 = vmatprep.subr.mxu0 0.0
        %6500 = vmatpush1.msra.mxu0 0.0
        %6501 = vmatprep.subr.mxu0 0.0
        %6502 = vmatpush1.msra.mxu0 0.0
        %6503 = vmatprep.subr.mxu0 0.0
        %6504 = vmatpush1.msra.mxu0 0.0
        %6505 = vmatprep.subr.mxu0 0.0
        %6506 = vmatpush1.msra.mxu0 0.0
        %6507 = vmatprep.subr.mxu0 0.0
        %6508 = vmatpush1.msra.mxu0 0.0
        %6509 = vmatprep.subr.mxu0 0.0
        %6510 = vmatpush1.msra.mxu0 0.0
        %6511 = vmatprep.subr.mxu0 0.0
        %6512 = vmatpush1.msra.mxu0 0.0
        %6513 = vmatprep.subr.mxu0 0.0
        %6514 = vmatpush1.msra.mxu0 0.0
        %6515 = vmatprep.mubr.f32.mxu0 0.0
        %v6516 = vand.u32 %v6326, 4294901760
        %6517 = vmatmul.mubr.f32.gmra.mrb[0].mxu0 %v6516
        %v6518 = vpop.f32.mrb[0].mxu0
        %v6519 = vadd.f32 %v6408, %v6518
        %v6520 = vpop.f32.mrb[0].mxu0
        %6521 = vdwg.mxu0
        %6522 = vmatprep.subr.mxu0 0.0
        %v6523 = vand.u32 %v6316, 4294901760
        %v6524 = vsub.f32 %v6316, %v6523
        %6525 = vmatpush1.msra.mxu0 %v6524
        %6526 = vmatprep.subr.mxu0 0.0
        %v6527 = vand.u32 %v6317, 4294901760
        %v6528 = vsub.f32 %v6317, %v6527
        %6529 = vmatpush1.msra.mxu0 %v6528
        %6530 = vmatprep.subr.mxu0 0.0
        %v6531 = vand.u32 %v6318, 4294901760
        %v6532 = vsub.f32 %v6318, %v6531
        %6533 = vmatpush1.msra.mxu0 %v6532
        %6534 = vmatprep.subr.mxu0 0.0
        %v6535 = vand.u32 %v6319, 4294901760
        %v6536 = vsub.f32 %v6319, %v6535
        %6537 = vmatpush1.msra.mxu0 %v6536
        %6538 = vmatprep.subr.mxu0 0.0
        %v6539 = vand.u32 %v6320, 4294901760
        %v6540 = vsub.f32 %v6320, %v6539
        %6541 = vmatpush1.msra.mxu0 %v6540
        %6542 = vmatprep.subr.mxu0 0.0
        %v6543 = vand.u32 %v6321, 4294901760
        %v6544 = vsub.f32 %v6321, %v6543
        %6545 = vmatpush1.msra.mxu0 %v6544
        %6546 = vmatprep.subr.mxu0 0.0
        %v6547 = vand.u32 %v6322, 4294901760
        %v6548 = vsub.f32 %v6322, %v6547
        %6549 = vmatpush1.msra.mxu0 %v6548
        %6550 = vmatprep.subr.mxu0 0.0
        %v6551 = vand.u32 %v6323, 4294901760
        %v6552 = vsub.f32 %v6323, %v6551
        %6553 = vmatpush1.msra.mxu0 %v6552
        %6554 = vmatprep.subr.mxu0 0.0
        %6555 = vmatpush1.msra.mxu0 0.0
        %6556 = vmatprep.subr.mxu0 0.0
        %6557 = vmatpush1.msra.mxu0 0.0
        %6558 = vmatprep.subr.mxu0 0.0
        %6559 = vmatpush1.msra.mxu0 0.0
        %6560 = vmatprep.subr.mxu0 0.0
        %6561 = vmatpush1.msra.mxu0 0.0
        %6562 = vmatprep.subr.mxu0 0.0
        %6563 = vmatpush1.msra.mxu0 0.0
        %6564 = vmatprep.subr.mxu0 0.0
        %6565 = vmatpush1.msra.mxu0 0.0
        %6566 = vmatprep.subr.mxu0 0.0
        %6567 = vmatpush1.msra.mxu0 0.0
        %6568 = vmatprep.subr.mxu0 0.0
        %6569 = vmatpush1.msra.mxu0 0.0
        %6570 = vmatprep.subr.mxu0 0.0
        %6571 = vmatpush1.msra.mxu0 0.0
        %6572 = vmatprep.subr.mxu0 0.0
        %6573 = vmatpush1.msra.mxu0 0.0
        %6574 = vmatprep.subr.mxu0 0.0
        %6575 = vmatpush1.msra.mxu0 0.0
        %6576 = vmatprep.subr.mxu0 0.0
        %6577 = vmatpush1.msra.mxu0 0.0
        %6578 = vmatprep.subr.mxu0 0.0
        %6579 = vmatpush1.msra.mxu0 0.0
        %6580 = vmatprep.subr.mxu0 0.0
        %6581 = vmatpush1.msra.mxu0 0.0
        %6582 = vmatprep.subr.mxu0 0.0
        %6583 = vmatpush1.msra.mxu0 0.0
        %6584 = vmatprep.subr.mxu0 0.0
        %6585 = vmatpush1.msra.mxu0 0.0
        %6586 = vmatprep.subr.mxu0 0.0
        %6587 = vmatpush1.msra.mxu0 0.0
        %6588 = vmatprep.subr.mxu0 0.0
        %6589 = vmatpush1.msra.mxu0 0.0
        %6590 = vmatprep.subr.mxu0 0.0
        %6591 = vmatpush1.msra.mxu0 0.0
        %6592 = vmatprep.subr.mxu0 0.0
        %6593 = vmatpush1.msra.mxu0 0.0
        %6594 = vmatprep.subr.mxu0 0.0
        %6595 = vmatpush1.msra.mxu0 0.0
        %6596 = vmatprep.subr.mxu0 0.0
        %6597 = vmatpush1.msra.mxu0 0.0
        %6598 = vmatprep.subr.mxu0 0.0
        %6599 = vmatpush1.msra.mxu0 0.0
        %6600 = vmatprep.subr.mxu0 0.0
        %6601 = vmatpush1.msra.mxu0 0.0
        %6602 = vmatprep.mubr.f32.mxu0 0.0
        %v6603 = vand.u32 %v6326, 4294901760
        %v6604 = vsub.f32 %v6326, %v6603
        %6605 = vmatmul.mubr.f32.gmra.mrb[0].mxu0 %v6604
        %v6606 = vpop.f32.mrb[0].mxu0
        %v6607 = vadd.f32 %v6519, %v6606
        %v6608 = vpop.f32.mrb[0].mxu0
        %6609 = vdwg.mxu0
        %6610 = vmatprep.subr.mxu0 0.0
        %v6611 = vand.u32 %v6316, 4294901760
        %6612 = vmatpush1.msra.mxu0 %v6611
        %6613 = vmatprep.subr.mxu0 0.0
        %v6614 = vand.u32 %v6317, 4294901760
        %6615 = vmatpush1.msra.mxu0 %v6614
        %6616 = vmatprep.subr.mxu0 0.0
        %v6617 = vand.u32 %v6318, 4294901760
        %6618 = vmatpush1.msra.mxu0 %v6617
        %6619 = vmatprep.subr.mxu0 0.0
        %v6620 = vand.u32 %v6319, 4294901760
        %6621 = vmatpush1.msra.mxu0 %v6620
        %6622 = vmatprep.subr.mxu0 0.0
        %v6623 = vand.u32 %v6320, 4294901760
        %6624 = vmatpush1.msra.mxu0 %v6623
        %6625 = vmatprep.subr.mxu0 0.0
        %v6626 = vand.u32 %v6321, 4294901760
        %6627 = vmatpush1.msra.mxu0 %v6626
        %6628 = vmatprep.subr.mxu0 0.0
        %v6629 = vand.u32 %v6322, 4294901760
        %6630 = vmatpush1.msra.mxu0 %v6629
        %6631 = vmatprep.subr.mxu0 0.0
        %v6632 = vand.u32 %v6323, 4294901760
        %6633 = vmatpush1.msra.mxu0 %v6632
        %6634 = vmatprep.subr.mxu0 0.0
        %6635 = vmatpush1.msra.mxu0 0.0
        %6636 = vmatprep.subr.mxu0 0.0
        %6637 = vmatpush1.msra.mxu0 0.0
        %6638 = vmatprep.subr.mxu0 0.0
        %6639 = vmatpush1.msra.mxu0 0.0
        %6640 = vmatprep.subr.mxu0 0.0
        %6641 = vmatpush1.msra.mxu0 0.0
        %6642 = vmatprep.subr.mxu0 0.0
        %6643 = vmatpush1.msra.mxu0 0.0
        %6644 = vmatprep.subr.mxu0 0.0
        %6645 = vmatpush1.msra.mxu0 0.0
        %6646 = vmatprep.subr.mxu0 0.0
        %6647 = vmatpush1.msra.mxu0 0.0
        %6648 = vmatprep.subr.mxu0 0.0
        %6649 = vmatpush1.msra.mxu0 0.0
        %6650 = vmatprep.subr.mxu0 0.0
        %6651 = vmatpush1.msra.mxu0 0.0
        %6652 = vmatprep.subr.mxu0 0.0
        %6653 = vmatpush1.msra.mxu0 0.0
        %6654 = vmatprep.subr.mxu0 0.0
        %6655 = vmatpush1.msra.mxu0 0.0
        %6656 = vmatprep.subr.mxu0 0.0
        %6657 = vmatpush1.msra.mxu0 0.0
        %6658 = vmatprep.subr.mxu0 0.0
        %6659 = vmatpush1.msra.mxu0 0.0
        %6660 = vmatprep.subr.mxu0 0.0
        %6661 = vmatpush1.msra.mxu0 0.0
        %6662 = vmatprep.subr.mxu0 0.0
        %6663 = vmatpush1.msra.mxu0 0.0
        %6664 = vmatprep.subr.mxu0 0.0
        %6665 = vmatpush1.msra.mxu0 0.0
        %6666 = vmatprep.subr.mxu0 0.0
        %6667 = vmatpush1.msra.mxu0 0.0
        %6668 = vmatprep.subr.mxu0 0.0
        %6669 = vmatpush1.msra.mxu0 0.0
        %6670 = vmatprep.subr.mxu0 0.0
        %6671 = vmatpush1.msra.mxu0 0.0
        %6672 = vmatprep.subr.mxu0 0.0
        %6673 = vmatpush1.msra.mxu0 0.0
        %6674 = vmatprep.subr.mxu0 0.0
        %6675 = vmatpush1.msra.mxu0 0.0
        %6676 = vmatprep.subr.mxu0 0.0
        %6677 = vmatpush1.msra.mxu0 0.0
        %6678 = vmatprep.subr.mxu0 0.0
        %6679 = vmatpush1.msra.mxu0 0.0
        %6680 = vmatprep.subr.mxu0 0.0
        %6681 = vmatpush1.msra.mxu0 0.0
        %6682 = vmatprep.mubr.f32.mxu0 0.0
        %v6683 = vand.u32 %v6326, 4294901760
        %v6684 = vsub.f32 %v6326, %v6683
        %v6685 = vand.u32 %v6684, 4294901760
        %6686 = vmatmul.mubr.f32.gmra.mrb[0].mxu0 %v6685
        %v6687 = vpop.f32.mrb[0].mxu0
        %v6688 = vadd.f32 %v6607, %v6687
        %v6689 = vpop.f32.mrb[0].mxu0
        %6690 = vdwg.mxu0
        %6691 = vmatprep.subr.mxu0 0.0
        %v6692 = vand.u32 %v6316, 4294901760
        %v6693 = vsub.f32 %v6316, %v6692
        %v6694 = vand.u32 %v6693, 4294901760
        %6695 = vmatpush1.msra.mxu0 %v6694
        %6696 = vmatprep.subr.mxu0 0.0
        %v6697 = vand.u32 %v6317, 4294901760
        %v6698 = vsub.f32 %v6317, %v6697
        %v6699 = vand.u32 %v6698, 4294901760
        %6700 = vmatpush1.msra.mxu0 %v6699
        %6701 = vmatprep.subr.mxu0 0.0
        %v6702 = vand.u32 %v6318, 4294901760
        %v6703 = vsub.f32 %v6318, %v6702
        %v6704 = vand.u32 %v6703, 4294901760
        %6705 = vmatpush1.msra.mxu0 %v6704
        %6706 = vmatprep.subr.mxu0 0.0
        %v6707 = vand.u32 %v6319, 4294901760
        %v6708 = vsub.f32 %v6319, %v6707
        %v6709 = vand.u32 %v6708, 4294901760
        %6710 = vmatpush1.msra.mxu0 %v6709
        %6711 = vmatprep.subr.mxu0 0.0
        %v6712 = vand.u32 %v6320, 4294901760
        %v6713 = vsub.f32 %v6320, %v6712
        %v6714 = vand.u32 %v6713, 4294901760
        %6715 = vmatpush1.msra.mxu0 %v6714
        %6716 = vmatprep.subr.mxu0 0.0
        %v6717 = vand.u32 %v6321, 4294901760
        %v6718 = vsub.f32 %v6321, %v6717
        %v6719 = vand.u32 %v6718, 4294901760
        %6720 = vmatpush1.msra.mxu0 %v6719
        %6721 = vmatprep.subr.mxu0 0.0
        %v6722 = vand.u32 %v6322, 4294901760
        %v6723 = vsub.f32 %v6322, %v6722
        %v6724 = vand.u32 %v6723, 4294901760
        %6725 = vmatpush1.msra.mxu0 %v6724
        %6726 = vmatprep.subr.mxu0 0.0
        %v6727 = vand.u32 %v6323, 4294901760
        %v6728 = vsub.f32 %v6323, %v6727
        %v6729 = vand.u32 %v6728, 4294901760
        %6730 = vmatpush1.msra.mxu0 %v6729
        %6731 = vmatprep.subr.mxu0 0.0
        %6732 = vmatpush1.msra.mxu0 0.0
        %6733 = vmatprep.subr.mxu0 0.0
        %6734 = vmatpush1.msra.mxu0 0.0
        %6735 = vmatprep.subr.mxu0 0.0
        %6736 = vmatpush1.msra.mxu0 0.0
        %6737 = vmatprep.subr.mxu0 0.0
        %6738 = vmatpush1.msra.mxu0 0.0
        %6739 = vmatprep.subr.mxu0 0.0
        %6740 = vmatpush1.msra.mxu0 0.0
        %6741 = vmatprep.subr.mxu0 0.0
        %6742 = vmatpush1.msra.mxu0 0.0
        %6743 = vmatprep.subr.mxu0 0.0
        %6744 = vmatpush1.msra.mxu0 0.0
        %6745 = vmatprep.subr.mxu0 0.0
        %6746 = vmatpush1.msra.mxu0 0.0
        %6747 = vmatprep.subr.mxu0 0.0
        %6748 = vmatpush1.msra.mxu0 0.0
        %6749 = vmatprep.subr.mxu0 0.0
        %6750 = vmatpush1.msra.mxu0 0.0
        %6751 = vmatprep.subr.mxu0 0.0
        %6752 = vmatpush1.msra.mxu0 0.0
        %6753 = vmatprep.subr.mxu0 0.0
        %6754 = vmatpush1.msra.mxu0 0.0
        %6755 = vmatprep.subr.mxu0 0.0
        %6756 = vmatpush1.msra.mxu0 0.0
        %6757 = vmatprep.subr.mxu0 0.0
        %6758 = vmatpush1.msra.mxu0 0.0
        %6759 = vmatprep.subr.mxu0 0.0
        %6760 = vmatpush1.msra.mxu0 0.0
        %6761 = vmatprep.subr.mxu0 0.0
        %6762 = vmatpush1.msra.mxu0 0.0
        %6763 = vmatprep.subr.mxu0 0.0
        %6764 = vmatpush1.msra.mxu0 0.0
        %6765 = vmatprep.subr.mxu0 0.0
        %6766 = vmatpush1.msra.mxu0 0.0
        %6767 = vmatprep.subr.mxu0 0.0
        %6768 = vmatpush1.msra.mxu0 0.0
        %6769 = vmatprep.subr.mxu0 0.0
        %6770 = vmatpush1.msra.mxu0 0.0
        %6771 = vmatprep.subr.mxu0 0.0
        %6772 = vmatpush1.msra.mxu0 0.0
        %6773 = vmatprep.subr.mxu0 0.0
        %6774 = vmatpush1.msra.mxu0 0.0
        %6775 = vmatprep.subr.mxu0 0.0
        %6776 = vmatpush1.msra.mxu0 0.0
        %6777 = vmatprep.subr.mxu0 0.0
        %6778 = vmatpush1.msra.mxu0 0.0
        %6779 = vmatprep.mubr.f32.mxu0 0.0
        %v6780 = vand.u32 %v6326, 4294901760
        %6781 = vmatmul.mubr.f32.gmra.mrb[0].mxu0 %v6780
        %v6782 = vpop.f32.mrb[0].mxu0
        %v6783 = vadd.f32 %v6688, %v6782
        %v6784 = vpop.f32.mrb[0].mxu0
        %6785 = vdwg.mxu0
        %6786 = vmatprep.subr.mxu0 0.0
        %v6787 = vand.u32 %v6316, 4294901760
        %6788 = vmatpush1.msra.mxu0 %v6787
        %6789 = vmatprep.subr.mxu0 0.0
        %v6790 = vand.u32 %v6317, 4294901760
        %6791 = vmatpush1.msra.mxu0 %v6790
        %6792 = vmatprep.subr.mxu0 0.0
        %v6793 = vand.u32 %v6318, 4294901760
        %6794 = vmatpush1.msra.mxu0 %v6793
        %6795 = vmatprep.subr.mxu0 0.0
        %v6796 = vand.u32 %v6319, 4294901760
        %6797 = vmatpush1.msra.mxu0 %v6796
        %6798 = vmatprep.subr.mxu0 0.0
        %v6799 = vand.u32 %v6320, 4294901760
        %6800 = vmatpush1.msra.mxu0 %v6799
        %6801 = vmatprep.subr.mxu0 0.0
        %v6802 = vand.u32 %v6321, 4294901760
        %6803 = vmatpush1.msra.mxu0 %v6802
        %6804 = vmatprep.subr.mxu0 0.0
        %v6805 = vand.u32 %v6322, 4294901760
        %6806 = vmatpush1.msra.mxu0 %v6805
        %6807 = vmatprep.subr.mxu0 0.0
        %v6808 = vand.u32 %v6323, 4294901760
        %6809 = vmatpush1.msra.mxu0 %v6808
        %6810 = vmatprep.subr.mxu0 0.0
        %6811 = vmatpush1.msra.mxu0 0.0
        %6812 = vmatprep.subr.mxu0 0.0
        %6813 = vmatpush1.msra.mxu0 0.0
        %6814 = vmatprep.subr.mxu0 0.0
        %6815 = vmatpush1.msra.mxu0 0.0
        %6816 = vmatprep.subr.mxu0 0.0
        %6817 = vmatpush1.msra.mxu0 0.0
        %6818 = vmatprep.subr.mxu0 0.0
        %6819 = vmatpush1.msra.mxu0 0.0
        %6820 = vmatprep.subr.mxu0 0.0
        %6821 = vmatpush1.msra.mxu0 0.0
        %6822 = vmatprep.subr.mxu0 0.0
        %6823 = vmatpush1.msra.mxu0 0.0
        %6824 = vmatprep.subr.mxu0 0.0
        %6825 = vmatpush1.msra.mxu0 0.0
        %6826 = vmatprep.subr.mxu0 0.0
        %6827 = vmatpush1.msra.mxu0 0.0
        %6828 = vmatprep.subr.mxu0 0.0
        %6829 = vmatpush1.msra.mxu0 0.0
        %6830 = vmatprep.subr.mxu0 0.0
        %6831 = vmatpush1.msra.mxu0 0.0
        %6832 = vmatprep.subr.mxu0 0.0
        %6833 = vmatpush1.msra.mxu0 0.0
        %6834 = vmatprep.subr.mxu0 0.0
        %6835 = vmatpush1.msra.mxu0 0.0
        %6836 = vmatprep.subr.mxu0 0.0
        %6837 = vmatpush1.msra.mxu0 0.0
        %6838 = vmatprep.subr.mxu0 0.0
        %6839 = vmatpush1.msra.mxu0 0.0
        %6840 = vmatprep.subr.mxu0 0.0
        %6841 = vmatpush1.msra.mxu0 0.0
        %6842 = vmatprep.subr.mxu0 0.0
        %6843 = vmatpush1.msra.mxu0 0.0
        %6844 = vmatprep.subr.mxu0 0.0
        %6845 = vmatpush1.msra.mxu0 0.0
        %6846 = vmatprep.subr.mxu0 0.0
        %6847 = vmatpush1.msra.mxu0 0.0
        %6848 = vmatprep.subr.mxu0 0.0
        %6849 = vmatpush1.msra.mxu0 0.0
        %6850 = vmatprep.subr.mxu0 0.0
        %6851 = vmatpush1.msra.mxu0 0.0
        %6852 = vmatprep.subr.mxu0 0.0
        %6853 = vmatpush1.msra.mxu0 0.0
        %6854 = vmatprep.subr.mxu0 0.0
        %6855 = vmatpush1.msra.mxu0 0.0
        %6856 = vmatprep.subr.mxu0 0.0
        %6857 = vmatpush1.msra.mxu0 0.0
        %6858 = vmatprep.mubr.f32.mxu0 0.0
        %v6859 = vand.u32 %v6326, 4294901760
        %6860 = vmatmul.mubr.f32.gmra.mrb[0].mxu0 %v6859
        %v6861 = vpop.f32.mrb[0].mxu0
        %v6862 = vadd.f32 %v6783, %v6861
        %v6863 = vpop.f32.mrb[0].mxu0
        %6864 = vdwg.mxu0
        %v6865 = vld [vmem:[%s1454] sm:$0xff]
        %v6867 = vsel %vm2854, %v6865, 0
        %6869 = vmatprep.subr.mxu0 0.0
        %v6870 = vand.u32 %v4303, 4294901760
        %6871 = vmatpush1.msra.mxu0 %v6870
        %6872 = vmatprep.subr.mxu0 0.0
        %v6873 = vand.u32 %v4304, 4294901760
        %6874 = vmatpush1.msra.mxu0 %v6873
        %6875 = vmatprep.subr.mxu0 0.0
        %v6876 = vand.u32 %v4305, 4294901760
        %6877 = vmatpush1.msra.mxu0 %v6876
        %6878 = vmatprep.subr.mxu0 0.0
        %v6879 = vand.u32 %v4306, 4294901760
        %6880 = vmatpush1.msra.mxu0 %v6879
        %6881 = vmatprep.subr.mxu0 0.0
        %v6882 = vand.u32 %v4307, 4294901760
        %6883 = vmatpush1.msra.mxu0 %v6882
        %6884 = vmatprep.subr.mxu0 0.0
        %v6885 = vand.u32 %v4308, 4294901760
        %6886 = vmatpush1.msra.mxu0 %v6885
        %6887 = vmatprep.subr.mxu0 0.0
        %v6888 = vand.u32 %v4309, 4294901760
        %6889 = vmatpush1.msra.mxu0 %v6888
        %6890 = vmatprep.subr.mxu0 0.0
        %v6891 = vand.u32 %v4310, 4294901760
        %6892 = vmatpush1.msra.mxu0 %v6891
        %6893 = vmatprep.subr.mxu0 0.0
        %6894 = vmatpush1.msra.mxu0 0.0
        %6895 = vmatprep.subr.mxu0 0.0
        %6896 = vmatpush1.msra.mxu0 0.0
        %6897 = vmatprep.subr.mxu0 0.0
        %6898 = vmatpush1.msra.mxu0 0.0
        %6899 = vmatprep.subr.mxu0 0.0
        %6900 = vmatpush1.msra.mxu0 0.0
        %6901 = vmatprep.subr.mxu0 0.0
        %6902 = vmatpush1.msra.mxu0 0.0
        %6903 = vmatprep.subr.mxu0 0.0
        %6904 = vmatpush1.msra.mxu0 0.0
        %6905 = vmatprep.subr.mxu0 0.0
        %6906 = vmatpush1.msra.mxu0 0.0
        %6907 = vmatprep.subr.mxu0 0.0
        %6908 = vmatpush1.msra.mxu0 0.0
        %6909 = vmatprep.subr.mxu0 0.0
        %6910 = vmatpush1.msra.mxu0 0.0
        %6911 = vmatprep.subr.mxu0 0.0
        %6912 = vmatpush1.msra.mxu0 0.0
        %6913 = vmatprep.subr.mxu0 0.0
        %6914 = vmatpush1.msra.mxu0 0.0
        %6915 = vmatprep.subr.mxu0 0.0
        %6916 = vmatpush1.msra.mxu0 0.0
        %6917 = vmatprep.subr.mxu0 0.0
        %6918 = vmatpush1.msra.mxu0 0.0
        %6919 = vmatprep.subr.mxu0 0.0
        %6920 = vmatpush1.msra.mxu0 0.0
        %6921 = vmatprep.subr.mxu0 0.0
        %6922 = vmatpush1.msra.mxu0 0.0
        %6923 = vmatprep.subr.mxu0 0.0
        %6924 = vmatpush1.msra.mxu0 0.0
        %6925 = vmatprep.subr.mxu0 0.0
        %6926 = vmatpush1.msra.mxu0 0.0
        %6927 = vmatprep.subr.mxu0 0.0
        %6928 = vmatpush1.msra.mxu0 0.0
        %6929 = vmatprep.subr.mxu0 0.0
        %6930 = vmatpush1.msra.mxu0 0.0
        %6931 = vmatprep.subr.mxu0 0.0
        %6932 = vmatpush1.msra.mxu0 0.0
        %6933 = vmatprep.subr.mxu0 0.0
        %6934 = vmatpush1.msra.mxu0 0.0
        %6935 = vmatprep.subr.mxu0 0.0
        %6936 = vmatpush1.msra.mxu0 0.0
        %6937 = vmatprep.subr.mxu0 0.0
        %6938 = vmatpush1.msra.mxu0 0.0
        %6939 = vmatprep.subr.mxu0 0.0
        %6940 = vmatpush1.msra.mxu0 0.0
        %6941 = vmatprep.mubr.f32.mxu0 0.0
        %v6942 = vand.u32 %v6867, 4294901760
        %v6943 = vsub.f32 %v6867, %v6942
        %v6944 = vand.u32 %v6943, 4294901760
        %v6945 = vsub.f32 %v6943, %v6944
        %v6946 = vand.u32 %v6945, 4294901760
        %6947 = vmatmul.mubr.f32.gmra.mrb[0].mxu0 %v6946
        %v6948 = vpop.f32.mrb[0].mxu0
        %v6949 = vadd.f32 0.0, %v6948
        %v6950 = vpop.f32.mrb[0].mxu0
        %6951 = vdwg.mxu0
        %6952 = vmatprep.subr.mxu0 0.0
        %v6953 = vand.u32 %v4303, 4294901760
        %v6954 = vsub.f32 %v4303, %v6953
        %v6955 = vand.u32 %v6954, 4294901760
        %v6956 = vsub.f32 %v6954, %v6955
        %v6957 = vand.u32 %v6956, 4294901760
        %6958 = vmatpush1.msra.mxu0 %v6957
        %6959 = vmatprep.subr.mxu0 0.0
        %v6960 = vand.u32 %v4304, 4294901760
        %v6961 = vsub.f32 %v4304, %v6960
        %v6962 = vand.u32 %v6961, 4294901760
        %v6963 = vsub.f32 %v6961, %v6962
        %v6964 = vand.u32 %v6963, 4294901760
        %6965 = vmatpush1.msra.mxu0 %v6964
        %6966 = vmatprep.subr.mxu0 0.0
        %v6967 = vand.u32 %v4305, 4294901760
        %v6968 = vsub.f32 %v4305, %v6967
        %v6969 = vand.u32 %v6968, 4294901760
        %v6970 = vsub.f32 %v6968, %v6969
        %v6971 = vand.u32 %v6970, 4294901760
        %6972 = vmatpush1.msra.mxu0 %v6971
        %6973 = vmatprep.subr.mxu0 0.0
        %v6974 = vand.u32 %v4306, 4294901760
        %v6975 = vsub.f32 %v4306, %v6974
        %v6976 = vand.u32 %v6975, 4294901760
        %v6977 = vsub.f32 %v6975, %v6976
        %v6978 = vand.u32 %v6977, 4294901760
        %6979 = vmatpush1.msra.mxu0 %v6978
        %6980 = vmatprep.subr.mxu0 0.0
        %v6981 = vand.u32 %v4307, 4294901760
        %v6982 = vsub.f32 %v4307, %v6981
        %v6983 = vand.u32 %v6982, 4294901760
        %v6984 = vsub.f32 %v6982, %v6983
        %v6985 = vand.u32 %v6984, 4294901760
        %6986 = vmatpush1.msra.mxu0 %v6985
        %6987 = vmatprep.subr.mxu0 0.0
        %v6988 = vand.u32 %v4308, 4294901760
        %v6989 = vsub.f32 %v4308, %v6988
        %v6990 = vand.u32 %v6989, 4294901760
        %v6991 = vsub.f32 %v6989, %v6990
        %v6992 = vand.u32 %v6991, 4294901760
        %6993 = vmatpush1.msra.mxu0 %v6992
        %6994 = vmatprep.subr.mxu0 0.0
        %v6995 = vand.u32 %v4309, 4294901760
        %v6996 = vsub.f32 %v4309, %v6995
        %v6997 = vand.u32 %v6996, 4294901760
        %v6998 = vsub.f32 %v6996, %v6997
        %v6999 = vand.u32 %v6998, 4294901760
        %7000 = vmatpush1.msra.mxu0 %v6999
        %7001 = vmatprep.subr.mxu0 0.0
        %v7002 = vand.u32 %v4310, 4294901760
        %v7003 = vsub.f32 %v4310, %v7002
        %v7004 = vand.u32 %v7003, 4294901760
        %v7005 = vsub.f32 %v7003, %v7004
        %v7006 = vand.u32 %v7005, 4294901760
        %7007 = vmatpush1.msra.mxu0 %v7006
        %7008 = vmatprep.subr.mxu0 0.0
        %7009 = vmatpush1.msra.mxu0 0.0
        %7010 = vmatprep.subr.mxu0 0.0
        %7011 = vmatpush1.msra.mxu0 0.0
        %7012 = vmatprep.subr.mxu0 0.0
        %7013 = vmatpush1.msra.mxu0 0.0
        %7014 = vmatprep.subr.mxu0 0.0
        %7015 = vmatpush1.msra.mxu0 0.0
        %7016 = vmatprep.subr.mxu0 0.0
        %7017 = vmatpush1.msra.mxu0 0.0
        %7018 = vmatprep.subr.mxu0 0.0
        %7019 = vmatpush1.msra.mxu0 0.0
        %7020 = vmatprep.subr.mxu0 0.0
        %7021 = vmatpush1.msra.mxu0 0.0
        %7022 = vmatprep.subr.mxu0 0.0
        %7023 = vmatpush1.msra.mxu0 0.0
        %7024 = vmatprep.subr.mxu0 0.0
        %7025 = vmatpush1.msra.mxu0 0.0
        %7026 = vmatprep.subr.mxu0 0.0
        %7027 = vmatpush1.msra.mxu0 0.0
        %7028 = vmatprep.subr.mxu0 0.0
        %7029 = vmatpush1.msra.mxu0 0.0
        %7030 = vmatprep.subr.mxu0 0.0
        %7031 = vmatpush1.msra.mxu0 0.0
        %7032 = vmatprep.subr.mxu0 0.0
        %7033 = vmatpush1.msra.mxu0 0.0
        %7034 = vmatprep.subr.mxu0 0.0
        %7035 = vmatpush1.msra.mxu0 0.0
        %7036 = vmatprep.subr.mxu0 0.0
        %7037 = vmatpush1.msra.mxu0 0.0
        %7038 = vmatprep.subr.mxu0 0.0
        %7039 = vmatpush1.msra.mxu0 0.0
        %7040 = vmatprep.subr.mxu0 0.0
        %7041 = vmatpush1.msra.mxu0 0.0
        %7042 = vmatprep.subr.mxu0 0.0
        %7043 = vmatpush1.msra.mxu0 0.0
        %7044 = vmatprep.subr.mxu0 0.0
        %7045 = vmatpush1.msra.mxu0 0.0
        %7046 = vmatprep.subr.mxu0 0.0
        %7047 = vmatpush1.msra.mxu0 0.0
        %7048 = vmatprep.subr.mxu0 0.0
        %7049 = vmatpush1.msra.mxu0 0.0
        %7050 = vmatprep.subr.mxu0 0.0
        %7051 = vmatpush1.msra.mxu0 0.0
        %7052 = vmatprep.subr.mxu0 0.0
        %7053 = vmatpush1.msra.mxu0 0.0
        %7054 = vmatprep.subr.mxu0 0.0
        %7055 = vmatpush1.msra.mxu0 0.0
        %7056 = vmatprep.mubr.f32.mxu0 0.0
        %v7057 = vand.u32 %v6867, 4294901760
        %7058 = vmatmul.mubr.f32.gmra.mrb[0].mxu0 %v7057
        %v7059 = vpop.f32.mrb[0].mxu0
        %v7060 = vadd.f32 %v6949, %v7059
        %v7061 = vpop.f32.mrb[0].mxu0
        %7062 = vdwg.mxu0
        %7063 = vmatprep.subr.mxu0 0.0
        %v7064 = vand.u32 %v4303, 4294901760
        %v7065 = vsub.f32 %v4303, %v7064
        %7066 = vmatpush1.msra.mxu0 %v7065
        %7067 = vmatprep.subr.mxu0 0.0
        %v7068 = vand.u32 %v4304, 4294901760
        %v7069 = vsub.f32 %v4304, %v7068
        %7070 = vmatpush1.msra.mxu0 %v7069
        %7071 = vmatprep.subr.mxu0 0.0
        %v7072 = vand.u32 %v4305, 4294901760
        %v7073 = vsub.f32 %v4305, %v7072
        %7074 = vmatpush1.msra.mxu0 %v7073
        %7075 = vmatprep.subr.mxu0 0.0
        %v7076 = vand.u32 %v4306, 4294901760
        %v7077 = vsub.f32 %v4306, %v7076
        %7078 = vmatpush1.msra.mxu0 %v7077
        %7079 = vmatprep.subr.mxu0 0.0
        %v7080 = vand.u32 %v4307, 4294901760
        %v7081 = vsub.f32 %v4307, %v7080
        %7082 = vmatpush1.msra.mxu0 %v7081
        %7083 = vmatprep.subr.mxu0 0.0
        %v7084 = vand.u32 %v4308, 4294901760
        %v7085 = vsub.f32 %v4308, %v7084
        %7086 = vmatpush1.msra.mxu0 %v7085
        %7087 = vmatprep.subr.mxu0 0.0
        %v7088 = vand.u32 %v4309, 4294901760
        %v7089 = vsub.f32 %v4309, %v7088
        %7090 = vmatpush1.msra.mxu0 %v7089
        %7091 = vmatprep.subr.mxu0 0.0
        %v7092 = vand.u32 %v4310, 4294901760
        %v7093 = vsub.f32 %v4310, %v7092
        %7094 = vmatpush1.msra.mxu0 %v7093
        %7095 = vmatprep.subr.mxu0 0.0
        %7096 = vmatpush1.msra.mxu0 0.0
        %7097 = vmatprep.subr.mxu0 0.0
        %7098 = vmatpush1.msra.mxu0 0.0
        %7099 = vmatprep.subr.mxu0 0.0
        %7100 = vmatpush1.msra.mxu0 0.0
        %7101 = vmatprep.subr.mxu0 0.0
        %7102 = vmatpush1.msra.mxu0 0.0
        %7103 = vmatprep.subr.mxu0 0.0
        %7104 = vmatpush1.msra.mxu0 0.0
        %7105 = vmatprep.subr.mxu0 0.0
        %7106 = vmatpush1.msra.mxu0 0.0
        %7107 = vmatprep.subr.mxu0 0.0
        %7108 = vmatpush1.msra.mxu0 0.0
        %7109 = vmatprep.subr.mxu0 0.0
        %7110 = vmatpush1.msra.mxu0 0.0
        %7111 = vmatprep.subr.mxu0 0.0
        %7112 = vmatpush1.msra.mxu0 0.0
        %7113 = vmatprep.subr.mxu0 0.0
        %7114 = vmatpush1.msra.mxu0 0.0
        %7115 = vmatprep.subr.mxu0 0.0
        %7116 = vmatpush1.msra.mxu0 0.0
        %7117 = vmatprep.subr.mxu0 0.0
        %7118 = vmatpush1.msra.mxu0 0.0
        %7119 = vmatprep.subr.mxu0 0.0
        %7120 = vmatpush1.msra.mxu0 0.0
        %7121 = vmatprep.subr.mxu0 0.0
        %7122 = vmatpush1.msra.mxu0 0.0
        %7123 = vmatprep.subr.mxu0 0.0
        %7124 = vmatpush1.msra.mxu0 0.0
        %7125 = vmatprep.subr.mxu0 0.0
        %7126 = vmatpush1.msra.mxu0 0.0
        %7127 = vmatprep.subr.mxu0 0.0
        %7128 = vmatpush1.msra.mxu0 0.0
        %7129 = vmatprep.subr.mxu0 0.0
        %7130 = vmatpush1.msra.mxu0 0.0
        %7131 = vmatprep.subr.mxu0 0.0
        %7132 = vmatpush1.msra.mxu0 0.0
        %7133 = vmatprep.subr.mxu0 0.0
        %7134 = vmatpush1.msra.mxu0 0.0
        %7135 = vmatprep.subr.mxu0 0.0
        %7136 = vmatpush1.msra.mxu0 0.0
        %7137 = vmatprep.subr.mxu0 0.0
        %7138 = vmatpush1.msra.mxu0 0.0
        %7139 = vmatprep.subr.mxu0 0.0
        %7140 = vmatpush1.msra.mxu0 0.0
        %7141 = vmatprep.subr.mxu0 0.0
        %7142 = vmatpush1.msra.mxu0 0.0
        %7143 = vmatprep.mubr.f32.mxu0 0.0
        %v7144 = vand.u32 %v6867, 4294901760
        %v7145 = vsub.f32 %v6867, %v7144
        %7146 = vmatmul.mubr.f32.gmra.mrb[0].mxu0 %v7145
        %v7147 = vpop.f32.mrb[0].mxu0
        %v7148 = vadd.f32 %v7060, %v7147
        %v7149 = vpop.f32.mrb[0].mxu0
        %7150 = vdwg.mxu0
        %7151 = vmatprep.subr.mxu0 0.0
        %v7152 = vand.u32 %v4303, 4294901760
        %7153 = vmatpush1.msra.mxu0 %v7152
        %7154 = vmatprep.subr.mxu0 0.0
        %v7155 = vand.u32 %v4304, 4294901760
        %7156 = vmatpush1.msra.mxu0 %v7155
        %7157 = vmatprep.subr.mxu0 0.0
        %v7158 = vand.u32 %v4305, 4294901760
        %7159 = vmatpush1.msra.mxu0 %v7158
        %7160 = vmatprep.subr.mxu0 0.0
        %v7161 = vand.u32 %v4306, 4294901760
        %7162 = vmatpush1.msra.mxu0 %v7161
        %7163 = vmatprep.subr.mxu0 0.0
        %v7164 = vand.u32 %v4307, 4294901760
        %7165 = vmatpush1.msra.mxu0 %v7164
        %7166 = vmatprep.subr.mxu0 0.0
        %v7167 = vand.u32 %v4308, 4294901760
        %7168 = vmatpush1.msra.mxu0 %v7167
        %7169 = vmatprep.subr.mxu0 0.0
        %v7170 = vand.u32 %v4309, 4294901760
        %7171 = vmatpush1.msra.mxu0 %v7170
        %7172 = vmatprep.subr.mxu0 0.0
        %v7173 = vand.u32 %v4310, 4294901760
        %7174 = vmatpush1.msra.mxu0 %v7173
        %7175 = vmatprep.subr.mxu0 0.0
        %7176 = vmatpush1.msra.mxu0 0.0
        %7177 = vmatprep.subr.mxu0 0.0
        %7178 = vmatpush1.msra.mxu0 0.0
        %7179 = vmatprep.subr.mxu0 0.0
        %7180 = vmatpush1.msra.mxu0 0.0
        %7181 = vmatprep.subr.mxu0 0.0
        %7182 = vmatpush1.msra.mxu0 0.0
        %7183 = vmatprep.subr.mxu0 0.0
        %7184 = vmatpush1.msra.mxu0 0.0
        %7185 = vmatprep.subr.mxu0 0.0
        %7186 = vmatpush1.msra.mxu0 0.0
        %7187 = vmatprep.subr.mxu0 0.0
        %7188 = vmatpush1.msra.mxu0 0.0
        %7189 = vmatprep.subr.mxu0 0.0
        %7190 = vmatpush1.msra.mxu0 0.0
        %7191 = vmatprep.subr.mxu0 0.0
        %7192 = vmatpush1.msra.mxu0 0.0
        %7193 = vmatprep.subr.mxu0 0.0
        %7194 = vmatpush1.msra.mxu0 0.0
        %7195 = vmatprep.subr.mxu0 0.0
        %7196 = vmatpush1.msra.mxu0 0.0
        %7197 = vmatprep.subr.mxu0 0.0
        %7198 = vmatpush1.msra.mxu0 0.0
        %7199 = vmatprep.subr.mxu0 0.0
        %7200 = vmatpush1.msra.mxu0 0.0
        %7201 = vmatprep.subr.mxu0 0.0
        %7202 = vmatpush1.msra.mxu0 0.0
        %7203 = vmatprep.subr.mxu0 0.0
        %7204 = vmatpush1.msra.mxu0 0.0
        %7205 = vmatprep.subr.mxu0 0.0
        %7206 = vmatpush1.msra.mxu0 0.0
        %7207 = vmatprep.subr.mxu0 0.0
        %7208 = vmatpush1.msra.mxu0 0.0
        %7209 = vmatprep.subr.mxu0 0.0
        %7210 = vmatpush1.msra.mxu0 0.0
        %7211 = vmatprep.subr.mxu0 0.0
        %7212 = vmatpush1.msra.mxu0 0.0
        %7213 = vmatprep.subr.mxu0 0.0
        %7214 = vmatpush1.msra.mxu0 0.0
        %7215 = vmatprep.subr.mxu0 0.0
        %7216 = vmatpush1.msra.mxu0 0.0
        %7217 = vmatprep.subr.mxu0 0.0
        %7218 = vmatpush1.msra.mxu0 0.0
        %7219 = vmatprep.subr.mxu0 0.0
        %7220 = vmatpush1.msra.mxu0 0.0
        %7221 = vmatprep.subr.mxu0 0.0
        %7222 = vmatpush1.msra.mxu0 0.0
        %7223 = vmatprep.mubr.f32.mxu0 0.0
        %v7224 = vand.u32 %v6867, 4294901760
        %v7225 = vsub.f32 %v6867, %v7224
        %v7226 = vand.u32 %v7225, 4294901760
        %7227 = vmatmul.mubr.f32.gmra.mrb[0].mxu0 %v7226
        %v7228 = vpop.f32.mrb[0].mxu0
        %v7229 = vadd.f32 %v7148, %v7228
        %v7230 = vpop.f32.mrb[0].mxu0
        %7231 = vdwg.mxu0
        %7232 = vmatprep.subr.mxu0 0.0
        %v7233 = vand.u32 %v4303, 4294901760
        %v7234 = vsub.f32 %v4303, %v7233
        %v7235 = vand.u32 %v7234, 4294901760
        %7236 = vmatpush1.msra.mxu0 %v7235
        %7237 = vmatprep.subr.mxu0 0.0
        %v7238 = vand.u32 %v4304, 4294901760
        %v7239 = vsub.f32 %v4304, %v7238
        %v7240 = vand.u32 %v7239, 4294901760
        %7241 = vmatpush1.msra.mxu0 %v7240
        %7242 = vmatprep.subr.mxu0 0.0
        %v7243 = vand.u32 %v4305, 4294901760
        %v7244 = vsub.f32 %v4305, %v7243
        %v7245 = vand.u32 %v7244, 4294901760
        %7246 = vmatpush1.msra.mxu0 %v7245
        %7247 = vmatprep.subr.mxu0 0.0
        %v7248 = vand.u32 %v4306, 4294901760
        %v7249 = vsub.f32 %v4306, %v7248
        %v7250 = vand.u32 %v7249, 4294901760
        %7251 = vmatpush1.msra.mxu0 %v7250
        %7252 = vmatprep.subr.mxu0 0.0
        %v7253 = vand.u32 %v4307, 4294901760
        %v7254 = vsub.f32 %v4307, %v7253
        %v7255 = vand.u32 %v7254, 4294901760
        %7256 = vmatpush1.msra.mxu0 %v7255
        %7257 = vmatprep.subr.mxu0 0.0
        %v7258 = vand.u32 %v4308, 4294901760
        %v7259 = vsub.f32 %v4308, %v7258
        %v7260 = vand.u32 %v7259, 4294901760
        %7261 = vmatpush1.msra.mxu0 %v7260
        %7262 = vmatprep.subr.mxu0 0.0
        %v7263 = vand.u32 %v4309, 4294901760
        %v7264 = vsub.f32 %v4309, %v7263
        %v7265 = vand.u32 %v7264, 4294901760
        %7266 = vmatpush1.msra.mxu0 %v7265
        %7267 = vmatprep.subr.mxu0 0.0
        %v7268 = vand.u32 %v4310, 4294901760
        %v7269 = vsub.f32 %v4310, %v7268
        %v7270 = vand.u32 %v7269, 4294901760
        %7271 = vmatpush1.msra.mxu0 %v7270
        %7272 = vmatprep.subr.mxu0 0.0
        %7273 = vmatpush1.msra.mxu0 0.0
        %7274 = vmatprep.subr.mxu0 0.0
        %7275 = vmatpush1.msra.mxu0 0.0
        %7276 = vmatprep.subr.mxu0 0.0
        %7277 = vmatpush1.msra.mxu0 0.0
        %7278 = vmatprep.subr.mxu0 0.0
        %7279 = vmatpush1.msra.mxu0 0.0
        %7280 = vmatprep.subr.mxu0 0.0
        %7281 = vmatpush1.msra.mxu0 0.0
        %7282 = vmatprep.subr.mxu0 0.0
        %7283 = vmatpush1.msra.mxu0 0.0
        %7284 = vmatprep.subr.mxu0 0.0
        %7285 = vmatpush1.msra.mxu0 0.0
        %7286 = vmatprep.subr.mxu0 0.0
        %7287 = vmatpush1.msra.mxu0 0.0
        %7288 = vmatprep.subr.mxu0 0.0
        %7289 = vmatpush1.msra.mxu0 0.0
        %7290 = vmatprep.subr.mxu0 0.0
        %7291 = vmatpush1.msra.mxu0 0.0
        %7292 = vmatprep.subr.mxu0 0.0
        %7293 = vmatpush1.msra.mxu0 0.0
        %7294 = vmatprep.subr.mxu0 0.0
        %7295 = vmatpush1.msra.mxu0 0.0
        %7296 = vmatprep.subr.mxu0 0.0
        %7297 = vmatpush1.msra.mxu0 0.0
        %7298 = vmatprep.subr.mxu0 0.0
        %7299 = vmatpush1.msra.mxu0 0.0
        %7300 = vmatprep.subr.mxu0 0.0
        %7301 = vmatpush1.msra.mxu0 0.0
        %7302 = vmatprep.subr.mxu0 0.0
        %7303 = vmatpush1.msra.mxu0 0.0
        %7304 = vmatprep.subr.mxu0 0.0
        %7305 = vmatpush1.msra.mxu0 0.0
        %7306 = vmatprep.subr.mxu0 0.0
        %7307 = vmatpush1.msra.mxu0 0.0
        %7308 = vmatprep.subr.mxu0 0.0
        %7309 = vmatpush1.msra.mxu0 0.0
        %7310 = vmatprep.subr.mxu0 0.0
        %7311 = vmatpush1.msra.mxu0 0.0
        %7312 = vmatprep.subr.mxu0 0.0
        %7313 = vmatpush1.msra.mxu0 0.0
        %7314 = vmatprep.subr.mxu0 0.0
        %7315 = vmatpush1.msra.mxu0 0.0
        %7316 = vmatprep.subr.mxu0 0.0
        %7317 = vmatpush1.msra.mxu0 0.0
        %7318 = vmatprep.subr.mxu0 0.0
        %7319 = vmatpush1.msra.mxu0 0.0
        %7320 = vmatprep.mubr.f32.mxu0 0.0
        %v7321 = vand.u32 %v6867, 4294901760
        %7322 = vmatmul.mubr.f32.gmra.mrb[0].mxu0 %v7321
        %v7323 = vpop.f32.mrb[0].mxu0
        %v7324 = vadd.f32 %v7229, %v7323
        %v7325 = vpop.f32.mrb[0].mxu0
        %7326 = vdwg.mxu0
        %7327 = vmatprep.subr.mxu0 0.0
        %v7328 = vand.u32 %v4303, 4294901760
        %7329 = vmatpush1.msra.mxu0 %v7328
        %7330 = vmatprep.subr.mxu0 0.0
        %v7331 = vand.u32 %v4304, 4294901760
        %7332 = vmatpush1.msra.mxu0 %v7331
        %7333 = vmatprep.subr.mxu0 0.0
        %v7334 = vand.u32 %v4305, 4294901760
        %7335 = vmatpush1.msra.mxu0 %v7334
        %7336 = vmatprep.subr.mxu0 0.0
        %v7337 = vand.u32 %v4306, 4294901760
        %7338 = vmatpush1.msra.mxu0 %v7337
        %7339 = vmatprep.subr.mxu0 0.0
        %v7340 = vand.u32 %v4307, 4294901760
        %7341 = vmatpush1.msra.mxu0 %v7340
        %7342 = vmatprep.subr.mxu0 0.0
        %v7343 = vand.u32 %v4308, 4294901760
        %7344 = vmatpush1.msra.mxu0 %v7343
        %7345 = vmatprep.subr.mxu0 0.0
        %v7346 = vand.u32 %v4309, 4294901760
        %7347 = vmatpush1.msra.mxu0 %v7346
        %7348 = vmatprep.subr.mxu0 0.0
        %v7349 = vand.u32 %v4310, 4294901760
        %7350 = vmatpush1.msra.mxu0 %v7349
        %7351 = vmatprep.subr.mxu0 0.0
        %7352 = vmatpush1.msra.mxu0 0.0
        %7353 = vmatprep.subr.mxu0 0.0
        %7354 = vmatpush1.msra.mxu0 0.0
        %7355 = vmatprep.subr.mxu0 0.0
        %7356 = vmatpush1.msra.mxu0 0.0
        %7357 = vmatprep.subr.mxu0 0.0
        %7358 = vmatpush1.msra.mxu0 0.0
        %7359 = vmatprep.subr.mxu0 0.0
        %7360 = vmatpush1.msra.mxu0 0.0
        %7361 = vmatprep.subr.mxu0 0.0
        %7362 = vmatpush1.msra.mxu0 0.0
        %7363 = vmatprep.subr.mxu0 0.0
        %7364 = vmatpush1.msra.mxu0 0.0
        %7365 = vmatprep.subr.mxu0 0.0
        %7366 = vmatpush1.msra.mxu0 0.0
        %7367 = vmatprep.subr.mxu0 0.0
        %7368 = vmatpush1.msra.mxu0 0.0
        %7369 = vmatprep.subr.mxu0 0.0
        %7370 = vmatpush1.msra.mxu0 0.0
        %7371 = vmatprep.subr.mxu0 0.0
        %7372 = vmatpush1.msra.mxu0 0.0
        %7373 = vmatprep.subr.mxu0 0.0
        %7374 = vmatpush1.msra.mxu0 0.0
        %7375 = vmatprep.subr.mxu0 0.0
        %7376 = vmatpush1.msra.mxu0 0.0
        %7377 = vmatprep.subr.mxu0 0.0
        %7378 = vmatpush1.msra.mxu0 0.0
        %7379 = vmatprep.subr.mxu0 0.0
        %7380 = vmatpush1.msra.mxu0 0.0
        %7381 = vmatprep.subr.mxu0 0.0
        %7382 = vmatpush1.msra.mxu0 0.0
        %7383 = vmatprep.subr.mxu0 0.0
        %7384 = vmatpush1.msra.mxu0 0.0
        %7385 = vmatprep.subr.mxu0 0.0
        %7386 = vmatpush1.msra.mxu0 0.0
        %7387 = vmatprep.subr.mxu0 0.0
        %7388 = vmatpush1.msra.mxu0 0.0
        %7389 = vmatprep.subr.mxu0 0.0
        %7390 = vmatpush1.msra.mxu0 0.0
        %7391 = vmatprep.subr.mxu0 0.0
        %7392 = vmatpush1.msra.mxu0 0.0
        %7393 = vmatprep.subr.mxu0 0.0
        %7394 = vmatpush1.msra.mxu0 0.0
        %7395 = vmatprep.subr.mxu0 0.0
        %7396 = vmatpush1.msra.mxu0 0.0
        %7397 = vmatprep.subr.mxu0 0.0
        %7398 = vmatpush1.msra.mxu0 0.0
        %7399 = vmatprep.mubr.f32.mxu0 0.0
        %v7400 = vand.u32 %v6867, 4294901760
        %7401 = vmatmul.mubr.f32.gmra.mrb[0].mxu0 %v7400
        %v7402 = vpop.f32.mrb[0].mxu0
        %v7403 = vadd.f32 %v7324, %v7402
        %v7404 = vpop.f32.mrb[0].mxu0
        %7405 = vdwg.mxu0
        %v7406 = vpack.c.bf16 %v6862, %v6862
        %v7407 = vpack.c.bf16 %v7403, %v7403
        %v7424 = vunpack.c.l.b16 %v1985
        %v7425 = vunpack.c.l.b16 %v1986
        %v7426 = vunpack.c.l.b16 %v1987
        %v7427 = vunpack.c.l.b16 %v1988
        %v7428 = vunpack.c.l.b16 %v1989
        %v7429 = vunpack.c.l.b16 %v1990
        %v7430 = vunpack.c.l.b16 %v1991
        %v7431 = vunpack.c.l.b16 %v1992
        %v7432 = vunpack.c.l.b16 %v1993
        %v7433 = vunpack.c.l.b16 %v1994
        %v7434 = vunpack.c.l.b16 %v1995
        %v7435 = vunpack.c.l.b16 %v1996
        %v7436 = vunpack.c.l.b16 %v1997
        %v7437 = vunpack.c.l.b16 %v1998
        %v7438 = vunpack.c.l.b16 %v1999
        %v7439 = vunpack.c.l.b16 %v2000
        %v7440 = vpack.c.b16 %v7425, %v7424
        %v7441 = vpack.c.b16 %v7427, %v7426
        %v7442 = vpack.c.b16 %v7429, %v7428
        %v7443 = vpack.c.b16 %v7431, %v7430
        %v7444 = vpack.c.b16 %v7433, %v7432
        %v7445 = vpack.c.b16 %v7435, %v7434
        %v7446 = vpack.c.b16 %v7437, %v7436
        %v7447 = vpack.c.b16 %v7439, %v7438
        %7456 = vmatprep.subr.bf16.mxu0 0
        %7457 = vmatpush1.bf16.msra.mxu0 %v7440
        %7458 = vmatprep.subr.bf16.mxu0 0
        %7459 = vmatpush1.bf16.msra.mxu0 %v7441
        %7460 = vmatprep.subr.bf16.mxu0 0
        %7461 = vmatpush1.bf16.msra.mxu0 %v7442
        %7462 = vmatprep.subr.bf16.mxu0 0
        %7463 = vmatpush1.bf16.msra.mxu0 %v7443
        %7464 = vmatprep.subr.bf16.mxu0 0
        %7465 = vmatpush1.bf16.msra.mxu0 %v7444
        %7466 = vmatprep.subr.bf16.mxu0 0
        %7467 = vmatpush1.bf16.msra.mxu0 %v7445
        %7468 = vmatprep.subr.bf16.mxu0 0
        %7469 = vmatpush1.bf16.msra.mxu0 %v7446
        %7470 = vmatprep.subr.bf16.mxu0 0
        %7471 = vmatpush1.bf16.msra.mxu0 %v7447
        %7472 = vmatprep.subr.bf16.mxu0 0
        %7473 = vmatpush1.bf16.msra.mxu0 0
        %7474 = vmatprep.subr.bf16.mxu0 0
        %7475 = vmatpush1.bf16.msra.mxu0 0
        %7476 = vmatprep.subr.bf16.mxu0 0
        %7477 = vmatpush1.bf16.msra.mxu0 0
        %7478 = vmatprep.subr.bf16.mxu0 0
        %7479 = vmatpush1.bf16.msra.mxu0 0
        %7480 = vmatprep.subr.bf16.mxu0 0
        %7481 = vmatpush1.bf16.msra.mxu0 0
        %7482 = vmatprep.subr.bf16.mxu0 0
        %7483 = vmatpush1.bf16.msra.mxu0 0
        %7484 = vmatprep.subr.bf16.mxu0 0
        %7485 = vmatpush1.bf16.msra.mxu0 0
        %7486 = vmatprep.subr.bf16.mxu0 0
        %7487 = vmatpush1.bf16.msra.mxu0 0
        %7488 = vmatprep.mubr.bf16.mxu0 0
        %7489 = vmatmul.mubr.bf16.gmra.mrb[0].mxu0 %v7407
        %v7490 = vpop.f32.mrb[0].mxu0
        %v7491 = vadd.f32 0.0, %v7490
        %v7492 = vpop.f32.mrb[0].mxu0
        %v7493 = vpop.f32.mrb[0].mxu0
        %v7494 = vpop.f32.mrb[0].mxu0
        %7495 = vdwg.mxu0
        %v7512 = vunpack.c.l.b16 %v1967
        %v7513 = vunpack.c.l.b16 %v1968
        %v7514 = vunpack.c.l.b16 %v1969
        %v7515 = vunpack.c.l.b16 %v1970
        %v7516 = vunpack.c.l.b16 %v1971
        %v7517 = vunpack.c.l.b16 %v1972
        %v7518 = vunpack.c.l.b16 %v1973
        %v7519 = vunpack.c.l.b16 %v1974
        %v7520 = vunpack.c.l.b16 %v1975
        %v7521 = vunpack.c.l.b16 %v1976
        %v7522 = vunpack.c.l.b16 %v1977
        %v7523 = vunpack.c.l.b16 %v1978
        %v7524 = vunpack.c.l.b16 %v1979
        %v7525 = vunpack.c.l.b16 %v1980
        %v7526 = vunpack.c.l.b16 %v1981
        %v7527 = vunpack.c.l.b16 %v1982
        %v7528 = vpack.c.b16 %v7513, %v7512
        %v7529 = vpack.c.b16 %v7515, %v7514
        %v7530 = vpack.c.b16 %v7517, %v7516
        %v7531 = vpack.c.b16 %v7519, %v7518
        %v7532 = vpack.c.b16 %v7521, %v7520
        %v7533 = vpack.c.b16 %v7523, %v7522
        %v7534 = vpack.c.b16 %v7525, %v7524
        %v7535 = vpack.c.b16 %v7527, %v7526
        %7544 = vmatprep.subr.bf16.mxu0 0
        %7545 = vmatpush1.bf16.msra.mxu0 %v7528
        %7546 = vmatprep.subr.bf16.mxu0 0
        %7547 = vmatpush1.bf16.msra.mxu0 %v7529
        %7548 = vmatprep.subr.bf16.mxu0 0
        %7549 = vmatpush1.bf16.msra.mxu0 %v7530
        %7550 = vmatprep.subr.bf16.mxu0 0
        %7551 = vmatpush1.bf16.msra.mxu0 %v7531
        %7552 = vmatprep.subr.bf16.mxu0 0
        %7553 = vmatpush1.bf16.msra.mxu0 %v7532
        %7554 = vmatprep.subr.bf16.mxu0 0
        %7555 = vmatpush1.bf16.msra.mxu0 %v7533
        %7556 = vmatprep.subr.bf16.mxu0 0
        %7557 = vmatpush1.bf16.msra.mxu0 %v7534
        %7558 = vmatprep.subr.bf16.mxu0 0
        %7559 = vmatpush1.bf16.msra.mxu0 %v7535
        %7560 = vmatprep.subr.bf16.mxu0 0
        %7561 = vmatpush1.bf16.msra.mxu0 0
        %7562 = vmatprep.subr.bf16.mxu0 0
        %7563 = vmatpush1.bf16.msra.mxu0 0
        %7564 = vmatprep.subr.bf16.mxu0 0
        %7565 = vmatpush1.bf16.msra.mxu0 0
        %7566 = vmatprep.subr.bf16.mxu0 0
        %7567 = vmatpush1.bf16.msra.mxu0 0
        %7568 = vmatprep.subr.bf16.mxu0 0
        %7569 = vmatpush1.bf16.msra.mxu0 0
        %7570 = vmatprep.subr.bf16.mxu0 0
        %7571 = vmatpush1.bf16.msra.mxu0 0
        %7572 = vmatprep.subr.bf16.mxu0 0
        %7573 = vmatpush1.bf16.msra.mxu0 0
        %7574 = vmatprep.subr.bf16.mxu0 0
        %7575 = vmatpush1.bf16.msra.mxu0 0
        %7576 = vmatprep.mubr.bf16.mxu0 0
        %7577 = vmatmul.mubr.bf16.gmra.mrb[0].mxu0 %v7406
        %v7578 = vpop.f32.mrb[0].mxu0
        %v7579 = vadd.f32 %v7491, %v7578
        %v7580 = vpop.f32.mrb[0].mxu0
        %v7581 = vpop.f32.mrb[0].mxu0
        %v7582 = vpop.f32.mrb[0].mxu0
        %7583 = vdwg.mxu0
        %v7600 = vunpack.c.l.b16 %v2003
        %v7601 = vunpack.c.l.b16 %v2004
        %v7602 = vunpack.c.l.b16 %v2005
        %v7603 = vunpack.c.l.b16 %v2006
        %v7604 = vunpack.c.l.b16 %v2007
        %v7605 = vunpack.c.l.b16 %v2008
        %v7606 = vunpack.c.l.b16 %v2009
        %v7607 = vunpack.c.l.b16 %v2010
        %v7608 = vunpack.c.l.b16 %v2011
        %v7609 = vunpack.c.l.b16 %v2012
        %v7610 = vunpack.c.l.b16 %v2013
        %v7611 = vunpack.c.l.b16 %v2014
        %v7612 = vunpack.c.l.b16 %v2015
        %v7613 = vunpack.c.l.b16 %v2016
        %v7614 = vunpack.c.l.b16 %v2017
        %v7615 = vunpack.c.l.b16 %v2018
        %v7616 = vpack.c.b16 %v7601, %v7600
        %v7617 = vpack.c.b16 %v7603, %v7602
        %v7618 = vpack.c.b16 %v7605, %v7604
        %v7619 = vpack.c.b16 %v7607, %v7606
        %v7620 = vpack.c.b16 %v7609, %v7608
        %v7621 = vpack.c.b16 %v7611, %v7610
        %v7622 = vpack.c.b16 %v7613, %v7612
        %v7623 = vpack.c.b16 %v7615, %v7614
        %7632 = vmatprep.subr.bf16.mxu0 0
        %7633 = vmatpush1.bf16.msra.mxu0 %v7616
        %7634 = vmatprep.subr.bf16.mxu0 0
        %7635 = vmatpush1.bf16.msra.mxu0 %v7617
        %7636 = vmatprep.subr.bf16.mxu0 0
        %7637 = vmatpush1.bf16.msra.mxu0 %v7618
        %7638 = vmatprep.subr.bf16.mxu0 0
        %7639 = vmatpush1.bf16.msra.mxu0 %v7619
        %7640 = vmatprep.subr.bf16.mxu0 0
        %7641 = vmatpush1.bf16.msra.mxu0 %v7620
        %7642 = vmatprep.subr.bf16.mxu0 0
        %7643 = vmatpush1.bf16.msra.mxu0 %v7621
        %7644 = vmatprep.subr.bf16.mxu0 0
        %7645 = vmatpush1.bf16.msra.mxu0 %v7622
        %7646 = vmatprep.subr.bf16.mxu0 0
        %7647 = vmatpush1.bf16.msra.mxu0 %v7623
        %7648 = vmatprep.subr.bf16.mxu0 0
        %7649 = vmatpush1.bf16.msra.mxu0 0
        %7650 = vmatprep.subr.bf16.mxu0 0
        %7651 = vmatpush1.bf16.msra.mxu0 0
        %7652 = vmatprep.subr.bf16.mxu0 0
        %7653 = vmatpush1.bf16.msra.mxu0 0
        %7654 = vmatprep.subr.bf16.mxu0 0
        %7655 = vmatpush1.bf16.msra.mxu0 0
        %7656 = vmatprep.subr.bf16.mxu0 0
        %7657 = vmatpush1.bf16.msra.mxu0 0
        %7658 = vmatprep.subr.bf16.mxu0 0
        %7659 = vmatpush1.bf16.msra.mxu0 0
        %7660 = vmatprep.subr.bf16.mxu0 0
        %7661 = vmatpush1.bf16.msra.mxu0 0
        %7662 = vmatprep.subr.bf16.mxu0 0
        %7663 = vmatpush1.bf16.msra.mxu0 0
        %7664 = vmatprep.mubr.bf16.mxu0 0
        %7665 = vmatmul.mubr.bf16.gmra.mrb[0].mxu0 %v3045
        %v7666 = vpop.f32.mrb[0].mxu0
        %v7667 = vadd.f32 0.0, %v7666
        %v7668 = vpop.f32.mrb[0].mxu0
        %v7669 = vpop.f32.mrb[0].mxu0
        %v7670 = vpop.f32.mrb[0].mxu0
        %7671 = vdwg.mxu0
        %v7672 = vadd.f32 %v7579, %v7667
        %v7674 = vlaneseq
        %v7675 = vshrl.u32 %v7674, 7
        %v7676 = vsub.s32 0, %v7675
        %v7677 = vrot.slane %v2020, %v7676
        %v7679 = vadd.f32 %v7672, %v7677
        %vm7680 = vcmp.gt.f32.partialorder %v7679, 0.0
        %v7681 = vmul.f32 %v7679, 0.01
        %v7682 = vsel %vm7680, %v7679, %v7681
        %v7683 = vadd.f32 %v6316, %v2021
        %v7684 = vadd.f32 %v6317, %v2022
        %v7685 = vadd.f32 %v6318, %v2023
        %v7686 = vadd.f32 %v6319, %v2024
        %v7687 = vadd.f32 %v6320, %v2025
        %v7688 = vadd.f32 %v6321, %v2026
        %v7689 = vadd.f32 %v6322, %v2027
        %v7690 = vadd.f32 %v6323, %v2028
        %7691 = vst [vmem:[%s1645] sm:$0xff] %v7683
        %7692 = vst [vmem:[%s1645 + $0x8] sm:$0xff] %v7684
        %7693 = vst [vmem:[%s1645 + $0x10] sm:$0xff] %v7685
        %7694 = vst [vmem:[%s1645 + $0x18] sm:$0xff] %v7686
        %7695 = vst [vmem:[%s1645 + $0x20] sm:$0xff] %v7687
        %7696 = vst [vmem:[%s1645 + $0x28] sm:$0xff] %v7688
        %7697 = vst [vmem:[%s1645 + $0x30] sm:$0xff] %v7689
        %7698 = vst [vmem:[%s1645 + $0x38] sm:$0xff] %v7690
        %v7699 = vadd.f32 %v4303, %v2029
        %v7700 = vadd.f32 %v4304, %v2030
        %v7701 = vadd.f32 %v4305, %v2031
        %v7702 = vadd.f32 %v4306, %v2032
        %v7703 = vadd.f32 %v4307, %v2033
        %v7704 = vadd.f32 %v4308, %v2034
        %v7705 = vadd.f32 %v4309, %v2035
        %v7706 = vadd.f32 %v4310, %v2036
        %7707 = vst [vmem:[%s1652] sm:$0xff] %v7699
        %7708 = vst [vmem:[%s1652 + $0x8] sm:$0xff] %v7700
        %7709 = vst [vmem:[%s1652 + $0x10] sm:$0xff] %v7701
        %7710 = vst [vmem:[%s1652 + $0x18] sm:$0xff] %v7702
        %7711 = vst [vmem:[%s1652 + $0x20] sm:$0xff] %v7703
        %7712 = vst [vmem:[%s1652 + $0x28] sm:$0xff] %v7704
        %7713 = vst [vmem:[%s1652 + $0x30] sm:$0xff] %v7705
        %7714 = vst [vmem:[%s1652 + $0x38] sm:$0xff] %v7706
        %v7715 = vadd.f32 %v7682, %v2037
        %7716 = vst [vmem:[%s1659] sm:$0xff] %v7715
        %s7717 = sand.u32 %s918, 1
        %s7718 = scalar_lea.sflag [#allocation4], %s7717
        %s7719 = sand.u32 %s918, 1
        %s7720 = smul.addr %s7719, 64
        %s7721 = scalar_lea.vmem [#allocation37], %s7720
        %s7722 = sand.u32 %s113, 1
        %s7723 = scalar_lea.sflag [#allocation39], %s7722
        %s7724 = sand.u32 %s944, 1
        %s7725 = smul.addr %s7724, 64
        %s7726 = scalar_lea.vmem [#allocation38], %s7725
        %s7727 = sand.u32 %s113, 1
        %s7728 = scalar_lea.sflag [#allocation39], %s7727
        %s7729 = sand.u32 %s970, 1
        %s7730 = smul.addr %s7729, 8
        %s7731 = scalar_lea.vmem [#allocation40], %s7730
        // Predicated region
        $region253: #{tpu_custom_call.1} parent=159 // pred_check
          %p7732 = pneg %p928
        $region254: #{tpu_custom_call.1} parent=159 // pred_check_branch
          %7734 = sbr.rel (%p7732) target = $region256
        $region255: #{tpu_custom_call.1} parent=159 // pred_region
          %s7736 = ssub.s32 1024, 1024
          %7737 = vsyncadd %s7718, %s7736
          %s7738 = smul.addr %s117, 8
          %s7739 = smul.addr %s7738, 128
          %s7740 = scalar_lea.hbm %s71, %s7739
          %s7741 = sshll.u32 %s7721, 4
          %s7742 = int_to_ptr.vmem [resolvable:$true] %s7741
          %7747 = dma.vmem_to_hbm [thread:$0]  %s7742, 1024, %s7740, %s7718, 128, 128, 8
        $region256: #{tpu_custom_call.1} parent=159 // pred_fallthru
          _
        // Predicated region
        $region257: #{tpu_custom_call.1} parent=159 // pred_check
          %p7748 = pneg %p954
        $region258: #{tpu_custom_call.1} parent=159 // pred_check_branch
          %7750 = sbr.rel (%p7748) target = $region260
        $region259: #{tpu_custom_call.1} parent=159 // pred_region
          %s7752 = ssub.s32 1024, 1024
          %7753 = vsyncadd %s7723, %s7752
          %s7754 = smul.addr %s117, 8
          %s7755 = smul.addr %s7754, 128
          %s7756 = scalar_lea.hbm %s73, %s7755
          %s7757 = sshll.u32 %s7726, 4
          %s7758 = int_to_ptr.vmem [resolvable:$true] %s7757
          %7763 = dma.vmem_to_hbm [thread:$0]  %s7758, 1024, %s7756, %s7723, 128, 128, 8
        $region260: #{tpu_custom_call.1} parent=159 // pred_fallthru
          _
        // Predicated region
        $region261: #{tpu_custom_call.1} parent=159 // pred_check
          %p7764 = pneg %p980
        $region262: #{tpu_custom_call.1} parent=159 // pred_check_branch
          %7766 = sbr.rel (%p7764) target = $region264
        $region263: #{tpu_custom_call.1} parent=159 // pred_region
          %s7768 = ssub.s32 128, 128
          %7769 = vsyncadd %s7728, %s7768
          %s7770 = smul.addr %s117, 128
          %s7771 = scalar_lea.hbm %s75, %s7770
          %s7773 = sshll.u32 %s7731, 4
          %s7774 = int_to_ptr.vmem [resolvable:$true] %s7773
          %7776 = dma.vmem_to_hbm [thread:$0]  %s7774, 128, %s7771, %s7728
        $region264: #{tpu_custom_call.1} parent=159 // pred_fallthru
          _
      $region160: #{tpu_custom_call.1} parent=5 // pred_fallthru
        _
      %p7777 = scmp.le.s32.totalorder 2, %s108
      // Predicated region
      $region265: #{tpu_custom_call.1} parent=5 // pred_check
        %p7778 = pneg %p7777
      $region266: #{tpu_custom_call.1} parent=5 // pred_check_branch
        %7780 = sbr.rel (%p7778) target = $region268
      $region267: #{tpu_custom_call.1} parent=5 // pred_region
        %s7781 = ssub.s32 %s108, 2
        // Predicated region
        $region269: #{tpu_custom_call.1} parent=267 // pred_check
          %p7782 = pneg %p934
        $region270: #{tpu_custom_call.1} parent=267 // pred_check_branch
          %7784 = sbr.rel (%p7782) target = $region272
        $region271: #{tpu_custom_call.1} parent=267 // pred_region
          %s7785 = sand.u32 %s919, 1
          %s7786 = scalar_lea.sflag [#allocation4], %s7785
          %s7787 = sand.u32 %s919, 1
          %s7788 = smul.addr %s7787, 64
          %s7789 = scalar_lea.vmem [#allocation37], %s7788
          %7790 = dma.done %s7786, 1024
        $region272: #{tpu_custom_call.1} parent=267 // pred_fallthru
          _
        // Predicated region
        $region273: #{tpu_custom_call.1} parent=267 // pred_check
          %p7791 = pneg %p960
        $region274: #{tpu_custom_call.1} parent=267 // pred_check_branch
          %7793 = sbr.rel (%p7791) target = $region276
        $region275: #{tpu_custom_call.1} parent=267 // pred_region
          %s7794 = sand.u32 %s114, 1
          %s7795 = scalar_lea.sflag [#allocation39], %s7794
          %s7796 = sand.u32 %s945, 1
          %s7797 = smul.addr %s7796, 64
          %s7798 = scalar_lea.vmem [#allocation38], %s7797
          %7799 = dma.done %s7795, 1024
        $region276: #{tpu_custom_call.1} parent=267 // pred_fallthru
          _
        // Predicated region
        $region277: #{tpu_custom_call.1} parent=267 // pred_check
          %p7800 = pneg %p986
        $region278: #{tpu_custom_call.1} parent=267 // pred_check_branch
          %7802 = sbr.rel (%p7800) target = $region280
        $region279: #{tpu_custom_call.1} parent=267 // pred_region
          %s7803 = sand.u32 %s114, 1
          %s7804 = scalar_lea.sflag [#allocation39], %s7803
          %s7805 = sand.u32 %s971, 1
          %s7806 = smul.addr %s7805, 8
          %s7807 = scalar_lea.vmem [#allocation40], %s7806
          %7808 = dma.done %s7804, 128
        $region280: #{tpu_custom_call.1} parent=267 // pred_fallthru
          _
      $region268: #{tpu_custom_call.1} parent=5 // pred_fallthru
        _
    $region6: #{tpu_custom_call.1} parent=1 // loop_footer
      %s112 = sadd.s32 1, %s108
    $region7: #{tpu_custom_call.1} parent=1 // loop_footer_branch
      %107 = sbr.rel target = $region3
    $region8: #{tpu_custom_call.1} parent=1 // loop_exit
      _
    %7809 = vsyncpa [#allocation3], 1
    %s7810 = scalar_lea.sflag [#allocation3], 1
    %7811 = vsyncpa %s7810, 1
    %7812 = vsyncpa [#allocation6], 1
    %s7813 = scalar_lea.sflag [#allocation6], 1
    %7814 = vsyncpa %s7813, 1
    %7815 = vsyncpa [#allocation9], 1
    %s7816 = scalar_lea.sflag [#allocation9], 1
    %7817 = vsyncpa %s7816, 1
    %7818 = vsyncpa [#allocation12], 1
    %s7819 = scalar_lea.sflag [#allocation12], 1
    %7820 = vsyncpa %s7819, 1
    %7821 = vsyncpa [#allocation15], 1
    %7822 = vsyncpa [#allocation18], 1
    %7823 = vsyncpa [#allocation21], 1
    %7824 = vsyncpa [#allocation24], 1
    %7825 = vsyncpa [#allocation27], 1
    %7826 = vsyncpa [#allocation30], 1
    %7827 = vsyncpa [#allocation33], 1
    %7828 = vsyncpa [#allocation36], 1
    %7829 = vsyncpa [#allocation4], 1
    %s7830 = scalar_lea.sflag [#allocation4], 1
    %7831 = vsyncpa %s7830, 1
    %7832 = vsyncpa [#allocation39], 1
    %s7833 = scalar_lea.sflag [#allocation39], 1
    %7834 = vsyncpa %s7833, 1

</llo_original>
